<compile_context>
chip_gen: v6e
topology: v6e:2x2x1
jax: 0.10.0
libtpu: 0.0.40
codegen_flags: <defaults>
</compile_context>

<pallas_src>
import functools

import numpy as np

import jax
import jax.numpy as jnp
from jax.experimental import pallas as pl
from jax.experimental.pallas import tpu as pltpu


# MXU operand dtype: bf16 doubles MXU throughput on v6e/v7x and halves the
# resident weight footprint; accumulation is always f32.
_MXU_DTYPE = jnp.bfloat16


# ----------------------------------------------------------------------------
# Pallas kernels
# ----------------------------------------------------------------------------
def _conv_relu_pool_kernel(x_ref, wb_ref, b_ref, o_ref, *, H, out_rows, row_off):
    """Fused 3x3 same-conv + bias + ReLU + 2x2/2 max-pool for ONE image.

    x_ref : (1, H+2, (W+2)*Cin)  zero-padded NHWC rows (lane = w*Cin + c)
    wb_ref: (6, (W+2)*Cin, N)    block-banded conv weights, index = dw*3 + kh
                                  (dw = horizontal pool parity, kh = vertical tap)
    b_ref : (1, N)               per-output-lane bias (zero in halo lanes)
    o_ref : (1, out_rows, N)     pooled rows (lane = w_out*Cout + f), optionally
                                  with a zero halo for the next conv stage.
    """
    Ho = H // 2
    N = b_ref.shape[1]

    # Conv taps + horizontal (W) pooling: the even/odd banded matrices directly
    # produce the two horizontal pool candidates; accumulate in f32 on the MXU.
    mw = None
    for dw in range(2):
        acc = jnp.zeros((H, N), jnp.float32)
        for kh in range(3):
            xs = x_ref[0, kh:kh + H, :].astype(wb_ref.dtype)
            acc = acc + jnp.dot(xs, wb_ref[dw * 3 + kh],
                                preferred_element_type=jnp.float32)
        mw = acc if mw is None else jnp.maximum(mw, acc)

    # Bias + ReLU (halo lanes have zero weight columns and zero bias -> stay 0).
    z = jnp.maximum(mw + b_ref[...], 0.0)                      # (H, N)

    # Vertical (H) pooling + optional zero halo rows via 0/1 selection matmuls
    # (keeps the kernel fully 2-D / lane-dense; the matrices are tiny).
    ri = jax.lax.broadcasted_iota(jnp.int32, (out_rows, H), 0)
    ci = jax.lax.broadcasted_iota(jnp.int32, (out_rows, H), 1)
    valid = (ri >= row_off) & (ri < row_off + Ho)
    sel_e = (valid & (ci == 2 * (ri - row_off))).astype(jnp.float32)
    sel_o = (valid & (ci == 2 * (ri - row_off) + 1)).astype(jnp.float32)
    pooled = jnp.maximum(
        jnp.dot(sel_e, z, preferred_element_type=jnp.float32),
        jnp.dot(sel_o, z, preferred_element_type=jnp.float32))  # (out_rows, N)

    o_ref[0] = pooled.astype(o_ref.dtype)


def _fc1_fc2_kernel(x_ref, w1_ref, b1_ref, w2_ref, b2_ref, o_ref):
    """Fused fc1 + ReLU + fc2 on a row tile of the flattened features."""
    h = jnp.dot(x_ref[...].astype(w1_ref.dtype), w1_ref[...],
                preferred_element_type=jnp.float32)
    h = jnp.maximum(h + b1_ref[...], 0.0)
    y = jnp.dot(h.astype(w2_ref.dtype), w2_ref[...],
                preferred_element_type=jnp.float32)
    o_ref[...] = (y + b2_ref[...]).astype(o_ref.dtype)


# ----------------------------------------------------------------------------
# pallas_call wrappers
# ----------------------------------------------------------------------------
def _conv_relu_pool(xp, wb, brow, *, pad_output):
    """xp: (B, H+2, (W+2)*Cin) padded NHWC rows -> (B, out_rows, N) pooled."""
    B, Hp, K = xp.shape
    H = Hp - 2
    Ho = H // 2
    row_off = 1 if pad_output else 0
    out_rows = Ho + 2 * row_off
    N = wb.shape[2]
    assert wb.shape == (6, K, N) and brow.shape == (1, N)

    kernel = functools.partial(_conv_relu_pool_kernel,
                               H=H, out_rows=out_rows, row_off=row_off)
    flops = 2 * B * N * H * (6 * K + 2 * out_rows)
    bytes_acc = (B * Hp * K * 4 + 6 * K * N * wb.dtype.itemsize
                 + N * 4 + B * out_rows * N * 4)
    return pl.pallas_call(
        kernel,
        out_shape=jax.ShapeDtypeStruct((B, out_rows, N), jnp.float32),
        grid=(B,),
        in_specs=[
            pl.BlockSpec((1, Hp, K), lambda b: (b, 0, 0)),
            pl.BlockSpec((6, K, N), lambda b: (0, 0, 0)),
            pl.BlockSpec((1, N), lambda b: (0, 0)),
        ],
        out_specs=pl.BlockSpec((1, out_rows, N), lambda b: (b, 0, 0)),
        compiler_params=pltpu.CompilerParams(
            dimension_semantics=("parallel",)),
        cost_estimate=pl.CostEstimate(flops=flops, transcendentals=0,
                                      bytes_accessed=bytes_acc),
    )(xp, wb, brow)


def _pick_row_tile(M):
    # Largest tile from a ladder that divides M while keeping >= 2 grid steps
    # (so both v7x TensorCores get work); falls back to the whole batch.
    for t in (256, 128, 64, 32, 16, 8):
        if M % t == 0 and M // t >= 2:
            return t
    return M


def _fc1_fc2(x, w1, b1, w2, b2):
    """x: (B, 3136) NHWC-flat features -> (B, 128) padded logits."""
    M, K = x.shape
    Nh = w1.shape[1]        # 128 hidden units
    N = w2.shape[1]         # 128 (fc2 output padded to a full lane tile)
    tm = _pick_row_tile(M)
    flops = 2 * M * (K * Nh + Nh * N)
    bytes_acc = (M * K * 4 + K * Nh * w1.dtype.itemsize
                 + Nh * N * w2.dtype.itemsize + (Nh + N) * 4 + M * N * 4)
    return pl.pallas_call(
        _fc1_fc2_kernel,
        out_shape=jax.ShapeDtypeStruct((M, N), jnp.float32),
        grid=(M // tm,),
        in_specs=[
            pl.BlockSpec((tm, K), lambda i: (i, 0)),
            pl.BlockSpec((K, Nh), lambda i: (0, 0)),
            pl.BlockSpec((1, Nh), lambda i: (0, 0)),
            pl.BlockSpec((Nh, N), lambda i: (0, 0)),
            pl.BlockSpec((1, N), lambda i: (0, 0)),
        ],
        out_specs=pl.BlockSpec((tm, N), lambda i: (i, 0)),
        compiler_params=pltpu.CompilerParams(
            dimension_semantics=("parallel",)),
        cost_estimate=pl.CostEstimate(flops=flops, transcendentals=0,
                                      bytes_accessed=bytes_acc),
    )(x, w1, b1, w2, b2)


# ----------------------------------------------------------------------------
# Parameter preparation (torch-convention weights -> kernel-ready weights)
# ----------------------------------------------------------------------------
def _build_conv_pool_weights(w_hwio, W, pad_output):
    """Block-banded matrices realizing conv-3x3(pad=1) + horizontal 2x pooling.

    w_hwio: (3, 3, Cin, Cout).  Returns (6, (W+2)*Cin, N) with
    N = (W//2 + 2*halo)*Cout; entry [dw*3+kh] maps a padded NHWC input row to
    the dw-parity horizontal pool candidate of the conv output row (column
    layout w_out*Cout + f, with zero halo columns if pad_output).
    """
    _, _, Cin, Cout = w_hwio.shape
    Wp, Wo = W + 2, W // 2
    off = 1 if pad_output else 0
    K, N = Wp * Cin, (Wo + 2 * off) * Cout
    wb = np.zeros((2, 3, K, N), np.float32)
    for dw in range(2):
        for kh in range(3):
            for kw in range(3):
                for wo in range(Wo):
                    r0 = (2 * wo + dw + kw) * Cin
                    c0 = (wo + off) * Cout
                    wb[dw, kh, r0:r0 + Cin, c0:c0 + Cout] += w_hwio[kh, kw]
    return jnp.asarray(wb.reshape(6, K, N))


def _build_bias_row(b, W, pad_output):
    Cout = b.shape[0]
    Wo = W // 2
    off = 1 if pad_output else 0
    row = np.zeros(((Wo + 2 * off) * Cout,), np.float32)
    row[off * Cout:(off + Wo) * Cout] = np.tile(np.asarray(b, np.float32), Wo)
    return jnp.asarray(row.reshape(1, -1))


def init_params(key):
    """Parameters in PyTorch conventions: conv (Cout,Cin,3,3), fc (out,in)."""
    ks = jax.random.split(key, 8)
    return {
        "conv1_w": 0.1 * jax.random.normal(ks[0], (32, 1, 3, 3), jnp.float32),
        "conv1_b": 0.01 * jax.random.normal(ks[1], (32,), jnp.float32),
        "conv2_w": 0.05 * jax.random.normal(ks[2], (64, 32, 3, 3), jnp.float32),
        "conv2_b": 0.01 * jax.random.normal(ks[3], (64,), jnp.float32),
        "fc1_w": 0.02 * jax.random.normal(ks[4], (128, 64 * 7 * 7), jnp.float32),
        "fc1_b": 0.01 * jax.random.normal(ks[5], (128,), jnp.float32),
        "fc2_w": 0.05 * jax.random.normal(ks[6], (10, 128), jnp.float32),
        "fc2_b": 0.01 * jax.random.normal(ks[7], (10,), jnp.float32),
    }


def prepare_params(p):
    """One-time host-side transform of torch-convention params to kernel form."""
    kp = {}
    w1_hwio = np.asarray(p["conv1_w"]).transpose(2, 3, 1, 0)   # OIHW -> HWIO
    w2_hwio = np.asarray(p["conv2_w"]).transpose(2, 3, 1, 0)
    kp["wb1"] = _build_conv_pool_weights(w1_hwio, W=28,
                                         pad_output=True).astype(_MXU_DTYPE)
    kp["b1row"] = _build_bias_row(np.asarray(p["conv1_b"]), W=28, pad_output=True)
    kp["wb2"] = _build_conv_pool_weights(w2_hwio, W=14,
                                         pad_output=False).astype(_MXU_DTYPE)
    kp["b2row"] = _build_bias_row(np.asarray(p["conv2_b"]), W=14, pad_output=False)

    # fc1: fold torch.flatten's NCHW order (f*49 + h*7 + w) into the weight so
    # fc1 reads our NHWC-flat features (h*448 + w*64 + f) directly.
    idx = np.arange(64 * 7 * 7)
    h, rem = idx // (7 * 64), idx % (7 * 64)
    w, f = rem // 64, rem % 64
    perm = f * 49 + h * 7 + w
    kp["wfc1"] = jnp.asarray(np.asarray(p["fc1_w"]).T[perm, :]).astype(_MXU_DTYPE)
    kp["bfc1"] = jnp.asarray(np.asarray(p["fc1_b"]).reshape(1, 128))

    # fc2: pad the 10-wide output to a full 128-lane tile (sliced outside).
    w2p = np.zeros((128, 128), np.float32)
    w2p[:, :10] = np.asarray(p["fc2_w"]).T
    b2p = np.zeros((1, 128), np.float32)
    b2p[0, :10] = np.asarray(p["fc2_b"])
    kp["wfc2"] = jnp.asarray(w2p).astype(_MXU_DTYPE)
    kp["bfc2"] = jnp.asarray(b2p)
    return kp


# ----------------------------------------------------------------------------
# Forward pass
# ----------------------------------------------------------------------------
def cnn_forward(x_nchw, kp):
    B = x_nchw.shape[0]
    x = x_nchw.reshape(B, 28, 28)                      # Cin = 1
    xp = jnp.pad(x, ((0, 0), (1, 1), (1, 1)))          # (B, 30, 30) zero halo

    # conv1 + ReLU + pool -> (B, 16, 512): pooled 14x14x32 NHWC rows with the
    # zero halo conv2 needs already in place.
    a1 = _conv_relu_pool(xp, kp["wb1"], kp["b1row"], pad_output=True)
    # conv2 + ReLU + pool -> (B, 7, 448): pooled 7x7x64 NHWC rows.
    a2 = _conv_relu_pool(a1, kp["wb2"], kp["b2row"], pad_output=False)

    feat = a2.reshape(B, 7 * 7 * 64)                   # NHWC-flat (free reshape)
    logits = _fc1_fc2(feat, kp["wfc1"], kp["bfc1"], kp["wfc2"], kp["bfc2"])
    return logits[:, :10]


def _reference_forward(x, p):
    """Plain-XLA f32 reference mirroring the PyTorch module."""
    hi = jax.lax.Precision.HIGHEST

    def conv(v, w, b):
        y = jax.lax.conv_general_dilated(
            v, w, window_strides=(1, 1), padding=((1, 1), (1, 1)),
            dimension_numbers=("NCHW", "OIHW", "NCHW"), precision=hi)
        return y + b[None, :, None, None]

    def pool(v):
        return jax.lax.reduce_window(v, -jnp.inf, jax.lax.max,
                                     (1, 1, 2, 2), (1, 1, 2, 2), "VALID")

    y = pool(jax.nn.relu(conv(x, p["conv1_w"], p["conv1_b"])))
    y = pool(jax.nn.relu(conv(y, p["conv2_w"], p["conv2_b"])))
    y = y.reshape(y.shape[0], -1)
    y = jax.nn.relu(jnp.dot(y, p["fc1_w"].T, precision=hi) + p["fc1_b"])
    return jnp.dot(y, p["fc2_w"].T, precision=hi) + p["fc2_b"]


if __name__ == "__main__":
    key = jax.random.PRNGKey(0)
    k_x, k_p = jax.random.split(key)
    # Spatial size 28x28 is fixed by fc1 expecting 64*7*7 features.
    x = jax.random.normal(k_x, (2, 1, 28, 28), dtype=jnp.float32)

    params = init_params(k_p)           # torch-convention weights
    kparams = prepare_params(params)    # kernel-ready (banded / permuted / padded)

    out = jax.jit(cnn_forward)(x, kparams)
    out = jax.block_until_ready(out)
    assert out.shape == (2, 10) and out.dtype == jnp.float32

    # Sanity check vs. a plain-XLA f32 reference (loose tolerance: the Pallas
    # kernels use bf16 MXU operands with f32 accumulation).
    ref = jax.jit(_reference_forward)(x, params)
    np.testing.assert_allclose(np.asarray(out), np.asarray(ref),
                               atol=7.5e-2, rtol=7.5e-2)
    print("KERNEL_OK")
</pallas_src>

<mosaic_0001>
module attributes {stable_mosaic.version = 11 : i64} {
  func.func @_conv_relu_pool_kernel(%arg0: i32, %arg1: memref<1x30x30xf32, #tpu.memory_space<vmem>>, %arg2: memref<6x30x512xbf16, #tpu.memory_space<vmem>>, %arg3: memref<1x512xf32, #tpu.memory_space<vmem>>, %arg4: memref<1x16x512xf32, #tpu.memory_space<vmem>>) attributes {dimension_semantics = [#tpu.dimension_semantics<parallel>], iteration_bounds = array<i64: 2>, scalar_prefetch = 0 : i64, scratch_operands = 0 : i64, tpu.core_type = #tpu.core_type<tc>, window_params = [{transform_indices = @transform_0, window_bounds = array<i64: 1, 30, 30>}, {pipeline_mode = #tpu.pipeline_mode<synchronous>, transform_indices = @transform_1, window_bounds = array<i64: 6, 30, 512>}, {pipeline_mode = #tpu.pipeline_mode<synchronous>, transform_indices = @transform_2, window_bounds = array<i64: 1, 512>}, {transform_indices = @transform_3, window_bounds = array<i64: 1, 16, 512>}]} {
    %cst = arith.constant 0.000000e+00 : f32
    %0 = vector.broadcast %cst : f32 to vector<28x512xf32>
    %c0 = arith.constant 0 : index
    %c0_0 = arith.constant 0 : index
    %c0_1 = arith.constant 0 : index
    %1 = vector.load %arg1[%c0, %c0_0, %c0_1] : memref<1x30x30xf32, #tpu.memory_space<vmem>>, vector<1x28x30xf32>
    %2 = vector.shape_cast %1 : vector<1x28x30xf32> to vector<28x30xf32>
    %3 = arith.truncf %2 : vector<28x30xf32> to vector<28x30xbf16>
    %c0_2 = arith.constant 0 : index
    %c0_3 = arith.constant 0 : index
    %c0_4 = arith.constant 0 : index
    %4 = vector.load %arg2[%c0_2, %c0_3, %c0_4] : memref<6x30x512xbf16, #tpu.memory_space<vmem>>, vector<1x30x512xbf16>
    %5 = vector.shape_cast %4 : vector<1x30x512xbf16> to vector<30x512xbf16>
    %cst_5 = arith.constant dense<0.000000e+00> : vector<28x512xf32>
    %6 = tpu.matmul %3, %5, %cst_5 {dimension_numbers = #tpu.dot_dimension_numbers<[1], [0], [0], [1], [0, 0, 1, 1], [], []>} : vector<28x30xbf16>, vector<30x512xbf16>, vector<28x512xf32> -> vector<28x512xf32>
    %7 = arith.addf %0, %6 : vector<28x512xf32>
    %c0_6 = arith.constant 0 : index
    %c1 = arith.constant 1 : index
    %c0_7 = arith.constant 0 : index
    %8 = vector.load %arg1[%c0_6, %c1, %c0_7] : memref<1x30x30xf32, #tpu.memory_space<vmem>>, vector<1x28x30xf32>
    %9 = vector.shape_cast %8 : vector<1x28x30xf32> to vector<28x30xf32>
    %10 = arith.truncf %9 : vector<28x30xf32> to vector<28x30xbf16>
    %c1_8 = arith.constant 1 : index
    %c0_9 = arith.constant 0 : index
    %c0_10 = arith.constant 0 : index
    %11 = vector.load %arg2[%c1_8, %c0_9, %c0_10] : memref<6x30x512xbf16, #tpu.memory_space<vmem>>, vector<1x30x512xbf16>
    %12 = vector.shape_cast %11 : vector<1x30x512xbf16> to vector<30x512xbf16>
    %cst_11 = arith.constant dense<0.000000e+00> : vector<28x512xf32>
    %13 = tpu.matmul %10, %12, %cst_11 {dimension_numbers = #tpu.dot_dimension_numbers<[1], [0], [0], [1], [0, 0, 1, 1], [], []>} : vector<28x30xbf16>, vector<30x512xbf16>, vector<28x512xf32> -> vector<28x512xf32>
    %14 = arith.addf %7, %13 : vector<28x512xf32>
    %c0_12 = arith.constant 0 : index
    %c2 = arith.constant 2 : index
    %c0_13 = arith.constant 0 : index
    %15 = vector.load %arg1[%c0_12, %c2, %c0_13] : memref<1x30x30xf32, #tpu.memory_space<vmem>>, vector<1x28x30xf32>
    %16 = vector.shape_cast %15 : vector<1x28x30xf32> to vector<28x30xf32>
    %17 = arith.truncf %16 : vector<28x30xf32> to vector<28x30xbf16>
    %c2_14 = arith.constant 2 : index
    %c0_15 = arith.constant 0 : index
    %c0_16 = arith.constant 0 : index
    %18 = vector.load %arg2[%c2_14, %c0_15, %c0_16] : memref<6x30x512xbf16, #tpu.memory_space<vmem>>, vector<1x30x512xbf16>
    %19 = vector.shape_cast %18 : vector<1x30x512xbf16> to vector<30x512xbf16>
    %cst_17 = arith.constant dense<0.000000e+00> : vector<28x512xf32>
    %20 = tpu.matmul %17, %19, %cst_17 {dimension_numbers = #tpu.dot_dimension_numbers<[1], [0], [0], [1], [0, 0, 1, 1], [], []>} : vector<28x30xbf16>, vector<30x512xbf16>, vector<28x512xf32> -> vector<28x512xf32>
    %21 = arith.addf %14, %20 : vector<28x512xf32>
    %cst_18 = arith.constant 0.000000e+00 : f32
    %22 = vector.broadcast %cst_18 : f32 to vector<28x512xf32>
    %c0_19 = arith.constant 0 : index
    %c0_20 = arith.constant 0 : index
    %c0_21 = arith.constant 0 : index
    %23 = vector.load %arg1[%c0_19, %c0_20, %c0_21] : memref<1x30x30xf32, #tpu.memory_space<vmem>>, vector<1x28x30xf32>
    %24 = vector.shape_cast %23 : vector<1x28x30xf32> to vector<28x30xf32>
    %25 = arith.truncf %24 : vector<28x30xf32> to vector<28x30xbf16>
    %c3 = arith.constant 3 : index
    %c0_22 = arith.constant 0 : index
    %c0_23 = arith.constant 0 : index
    %26 = vector.load %arg2[%c3, %c0_22, %c0_23] : memref<6x30x512xbf16, #tpu.memory_space<vmem>>, vector<1x30x512xbf16>
    %27 = vector.shape_cast %26 : vector<1x30x512xbf16> to vector<30x512xbf16>
    %cst_24 = arith.constant dense<0.000000e+00> : vector<28x512xf32>
    %28 = tpu.matmul %25, %27, %cst_24 {dimension_numbers = #tpu.dot_dimension_numbers<[1], [0], [0], [1], [0, 0, 1, 1], [], []>} : vector<28x30xbf16>, vector<30x512xbf16>, vector<28x512xf32> -> vector<28x512xf32>
    %29 = arith.addf %22, %28 : vector<28x512xf32>
    %c0_25 = arith.constant 0 : index
    %c1_26 = arith.constant 1 : index
    %c0_27 = arith.constant 0 : index
    %30 = vector.load %arg1[%c0_25, %c1_26, %c0_27] : memref<1x30x30xf32, #tpu.memory_space<vmem>>, vector<1x28x30xf32>
    %31 = vector.shape_cast %30 : vector<1x28x30xf32> to vector<28x30xf32>
    %32 = arith.truncf %31 : vector<28x30xf32> to vector<28x30xbf16>
    %c4 = arith.constant 4 : index
    %c0_28 = arith.constant 0 : index
    %c0_29 = arith.constant 0 : index
    %33 = vector.load %arg2[%c4, %c0_28, %c0_29] : memref<6x30x512xbf16, #tpu.memory_space<vmem>>, vector<1x30x512xbf16>
    %34 = vector.shape_cast %33 : vector<1x30x512xbf16> to vector<30x512xbf16>
    %cst_30 = arith.constant dense<0.000000e+00> : vector<28x512xf32>
    %35 = tpu.matmul %32, %34, %cst_30 {dimension_numbers = #tpu.dot_dimension_numbers<[1], [0], [0], [1], [0, 0, 1, 1], [], []>} : vector<28x30xbf16>, vector<30x512xbf16>, vector<28x512xf32> -> vector<28x512xf32>
    %36 = arith.addf %29, %35 : vector<28x512xf32>
    %c0_31 = arith.constant 0 : index
    %c2_32 = arith.constant 2 : index
    %c0_33 = arith.constant 0 : index
    %37 = vector.load %arg1[%c0_31, %c2_32, %c0_33] : memref<1x30x30xf32, #tpu.memory_space<vmem>>, vector<1x28x30xf32>
    %38 = vector.shape_cast %37 : vector<1x28x30xf32> to vector<28x30xf32>
    %39 = arith.truncf %38 : vector<28x30xf32> to vector<28x30xbf16>
    %c5 = arith.constant 5 : index
    %c0_34 = arith.constant 0 : index
    %c0_35 = arith.constant 0 : index
    %40 = vector.load %arg2[%c5, %c0_34, %c0_35] : memref<6x30x512xbf16, #tpu.memory_space<vmem>>, vector<1x30x512xbf16>
    %41 = vector.shape_cast %40 : vector<1x30x512xbf16> to vector<30x512xbf16>
    %cst_36 = arith.constant dense<0.000000e+00> : vector<28x512xf32>
    %42 = tpu.matmul %39, %41, %cst_36 {dimension_numbers = #tpu.dot_dimension_numbers<[1], [0], [0], [1], [0, 0, 1, 1], [], []>} : vector<28x30xbf16>, vector<30x512xbf16>, vector<28x512xf32> -> vector<28x512xf32>
    %43 = arith.addf %36, %42 : vector<28x512xf32>
    %44 = arith.maximumf %21, %43 : vector<28x512xf32>
    %c0_37 = arith.constant 0 : index
    %c0_38 = arith.constant 0 : index
    %45 = vector.load %arg3[%c0_37, %c0_38] : memref<1x512xf32, #tpu.memory_space<vmem>>, vector<1x512xf32>
    %46 = vector.broadcast %45 : vector<1x512xf32> to vector<28x512xf32>
    %47 = arith.addf %44, %46 : vector<28x512xf32>
    %cst_39 = arith.constant 0.000000e+00 : f32
    %48 = vector.broadcast %cst_39 : f32 to vector<28x512xf32>
    %49 = arith.maximumf %47, %48 : vector<28x512xf32>
    %50 = tpu.iota {dimensions = array<i32: 0>} : vector<16x28xi32>
    %51 = tpu.iota {dimensions = array<i32: 1>} : vector<16x28xi32>
    %c1_i32 = arith.constant 1 : i32
    %52 = vector.broadcast %c1_i32 : i32 to vector<16x28xi32>
    %53 = arith.cmpi sge, %50, %52 : vector<16x28xi32>
    %c15_i32 = arith.constant 15 : i32
    %54 = vector.broadcast %c15_i32 : i32 to vector<16x28xi32>
    %55 = arith.cmpi slt, %50, %54 : vector<16x28xi32>
    %56 = arith.andi %53, %55 : vector<16x28xi1>
    %c1_i32_40 = arith.constant 1 : i32
    %57 = vector.broadcast %c1_i32_40 : i32 to vector<16x28xi32>
    %58 = arith.subi %50, %57 : vector<16x28xi32>
    %c2_i32 = arith.constant 2 : i32
    %59 = vector.broadcast %c2_i32 : i32 to vector<16x28xi32>
    %60 = arith.muli %59, %58 : vector<16x28xi32>
    %61 = arith.cmpi eq, %51, %60 : vector<16x28xi32>
    %62 = arith.andi %56, %61 : vector<16x28xi1>
    %63 = arith.extui %62 : vector<16x28xi1> to vector<16x28xi32>
    %64 = arith.sitofp %63 : vector<16x28xi32> to vector<16x28xf32>
    %c1_i32_41 = arith.constant 1 : i32
    %65 = vector.broadcast %c1_i32_41 : i32 to vector<16x28xi32>
    %66 = arith.subi %50, %65 : vector<16x28xi32>
    %c2_i32_42 = arith.constant 2 : i32
    %67 = vector.broadcast %c2_i32_42 : i32 to vector<16x28xi32>
    %68 = arith.muli %67, %66 : vector<16x28xi32>
    %c1_i32_43 = arith.constant 1 : i32
    %69 = vector.broadcast %c1_i32_43 : i32 to vector<16x28xi32>
    %70 = arith.addi %68, %69 : vector<16x28xi32>
    %71 = arith.cmpi eq, %51, %70 : vector<16x28xi32>
    %72 = arith.andi %56, %71 : vector<16x28xi1>
    %73 = arith.extui %72 : vector<16x28xi1> to vector<16x28xi32>
    %74 = arith.sitofp %73 : vector<16x28xi32> to vector<16x28xf32>
    %cst_44 = arith.constant dense<0.000000e+00> : vector<16x512xf32>
    %75 = tpu.matmul %64, %49, %cst_44 {dimension_numbers = #tpu.dot_dimension_numbers<[1], [0], [0], [1], [0, 0, 1, 1], [], []>} : vector<16x28xf32>, vector<28x512xf32>, vector<16x512xf32> -> vector<16x512xf32>
    %cst_45 = arith.constant dense<0.000000e+00> : vector<16x512xf32>
    %76 = tpu.matmul %74, %49, %cst_45 {dimension_numbers = #tpu.dot_dimension_numbers<[1], [0], [0], [1], [0, 0, 1, 1], [], []>} : vector<16x28xf32>, vector<28x512xf32>, vector<16x512xf32> -> vector<16x512xf32>
    %77 = arith.maximumf %75, %76 : vector<16x512xf32>
    %c0_46 = arith.constant 0 : index
    %c0_47 = arith.constant 0 : index
    %c0_48 = arith.constant 0 : index
    %78 = vector.load %arg4[%c0_46, %c0_47, %c0_48] : memref<1x16x512xf32, #tpu.memory_space<vmem>>, vector<1x16x512xf32>
    %79 = vector.shape_cast %78 : vector<1x16x512xf32> to vector<16x512xf32>
    %80 = vector.shape_cast %77 : vector<16x512xf32> to vector<1x16x512xf32>
    tpu.vector_store %arg4[%c0_46, %c0_47, %c0_48], %80 {strides = array<i32>} : memref<1x16x512xf32, #tpu.memory_space<vmem>>, vector<1x16x512xf32>,
    return
  }
  func.func @transform_0(%arg0: i32) -> (i32, i32, i32) {
    %c0_i32 = arith.constant 0 : i32
    %c0_i32_0 = arith.constant 0 : i32
    %c0_i32_1 = arith.constant 0 : i32
    return %arg0, %c0_i32, %c0_i32_0 : i32, i32, i32
  }
  func.func @transform_1(%arg0: i32) -> (i32, i32, i32) {
    %c0_i32 = arith.constant 0 : i32
    %c0_i32_0 = arith.constant 0 : i32
    %c0_i32_1 = arith.constant 0 : i32
    %c0_i32_2 = arith.constant 0 : i32
    return %c0_i32, %c0_i32_0, %c0_i32_1 : i32, i32, i32
  }
  func.func @transform_2(%arg0: i32) -> (i32, i32) {
    %c0_i32 = arith.constant 0 : i32
    %c0_i32_0 = arith.constant 0 : i32
    %c0_i32_1 = arith.constant 0 : i32
    return %c0_i32, %c0_i32_0 : i32, i32
  }
  func.func @transform_3(%arg0: i32) -> (i32, i32, i32) {
    %c0_i32 = arith.constant 0 : i32
    %c0_i32_0 = arith.constant 0 : i32
    %c0_i32_1 = arith.constant 0 : i32
    return %arg0, %c0_i32, %c0_i32_0 : i32, i32, i32
  }
}

module attributes {stable_mosaic.version = 11 : i64} {
  func.func @_conv_relu_pool_kernel(%arg0: i32, %arg1: memref<1x16x512xf32, #tpu.memory_space<vmem>>, %arg2: memref<6x512x448xbf16, #tpu.memory_space<vmem>>, %arg3: memref<1x448xf32, #tpu.memory_space<vmem>>, %arg4: memref<1x7x448xf32, #tpu.memory_space<vmem>>) attributes {dimension_semantics = [#tpu.dimension_semantics<parallel>], iteration_bounds = array<i64: 2>, scalar_prefetch = 0 : i64, scratch_operands = 0 : i64, tpu.core_type = #tpu.core_type<tc>, window_params = [{transform_indices = @transform_0, window_bounds = array<i64: 1, 16, 512>}, {pipeline_mode = #tpu.pipeline_mode<synchronous>, transform_indices = @transform_1, window_bounds = array<i64: 6, 512, 448>}, {pipeline_mode = #tpu.pipeline_mode<synchronous>, transform_indices = @transform_2, window_bounds = array<i64: 1, 448>}, {transform_indices = @transform_3, window_bounds = array<i64: 1, 7, 448>}]} {
    %cst = arith.constant 0.000000e+00 : f32
    %0 = vector.broadcast %cst : f32 to vector<14x448xf32>
    %c0 = arith.constant 0 : index
    %c0_0 = arith.constant 0 : index
    %c0_1 = arith.constant 0 : index
    %1 = vector.load %arg1[%c0, %c0_0, %c0_1] : memref<1x16x512xf32, #tpu.memory_space<vmem>>, vector<1x14x512xf32>
    %2 = vector.shape_cast %1 : vector<1x14x512xf32> to vector<14x512xf32>
    %3 = arith.truncf %2 : vector<14x512xf32> to vector<14x512xbf16>
    %c0_2 = arith.constant 0 : index
    %c0_3 = arith.constant 0 : index
    %c0_4 = arith.constant 0 : index
    %4 = vector.load %arg2[%c0_2, %c0_3, %c0_4] : memref<6x512x448xbf16, #tpu.memory_space<vmem>>, vector<1x512x448xbf16>
    %5 = vector.shape_cast %4 : vector<1x512x448xbf16> to vector<512x448xbf16>
    %cst_5 = arith.constant dense<0.000000e+00> : vector<14x448xf32>
    %6 = tpu.matmul %3, %5, %cst_5 {dimension_numbers = #tpu.dot_dimension_numbers<[1], [0], [0], [1], [0, 0, 1, 1], [], []>} : vector<14x512xbf16>, vector<512x448xbf16>, vector<14x448xf32> -> vector<14x448xf32>
    %7 = arith.addf %0, %6 : vector<14x448xf32>
    %c0_6 = arith.constant 0 : index
    %c1 = arith.constant 1 : index
    %c0_7 = arith.constant 0 : index
    %8 = vector.load %arg1[%c0_6, %c1, %c0_7] : memref<1x16x512xf32, #tpu.memory_space<vmem>>, vector<1x14x512xf32>
    %9 = vector.shape_cast %8 : vector<1x14x512xf32> to vector<14x512xf32>
    %10 = arith.truncf %9 : vector<14x512xf32> to vector<14x512xbf16>
    %c1_8 = arith.constant 1 : index
    %c0_9 = arith.constant 0 : index
    %c0_10 = arith.constant 0 : index
    %11 = vector.load %arg2[%c1_8, %c0_9, %c0_10] : memref<6x512x448xbf16, #tpu.memory_space<vmem>>, vector<1x512x448xbf16>
    %12 = vector.shape_cast %11 : vector<1x512x448xbf16> to vector<512x448xbf16>
    %cst_11 = arith.constant dense<0.000000e+00> : vector<14x448xf32>
    %13 = tpu.matmul %10, %12, %cst_11 {dimension_numbers = #tpu.dot_dimension_numbers<[1], [0], [0], [1], [0, 0, 1, 1], [], []>} : vector<14x512xbf16>, vector<512x448xbf16>, vector<14x448xf32> -> vector<14x448xf32>
    %14 = arith.addf %7, %13 : vector<14x448xf32>
    %c0_12 = arith.constant 0 : index
    %c2 = arith.constant 2 : index
    %c0_13 = arith.constant 0 : index
    %15 = vector.load %arg1[%c0_12, %c2, %c0_13] : memref<1x16x512xf32, #tpu.memory_space<vmem>>, vector<1x14x512xf32>
    %16 = vector.shape_cast %15 : vector<1x14x512xf32> to vector<14x512xf32>
    %17 = arith.truncf %16 : vector<14x512xf32> to vector<14x512xbf16>
    %c2_14 = arith.constant 2 : index
    %c0_15 = arith.constant 0 : index
    %c0_16 = arith.constant 0 : index
    %18 = vector.load %arg2[%c2_14, %c0_15, %c0_16] : memref<6x512x448xbf16, #tpu.memory_space<vmem>>, vector<1x512x448xbf16>
    %19 = vector.shape_cast %18 : vector<1x512x448xbf16> to vector<512x448xbf16>
    %cst_17 = arith.constant dense<0.000000e+00> : vector<14x448xf32>
    %20 = tpu.matmul %17, %19, %cst_17 {dimension_numbers = #tpu.dot_dimension_numbers<[1], [0], [0], [1], [0, 0, 1, 1], [], []>} : vector<14x512xbf16>, vector<512x448xbf16>, vector<14x448xf32> -> vector<14x448xf32>
    %21 = arith.addf %14, %20 : vector<14x448xf32>
    %cst_18 = arith.constant 0.000000e+00 : f32
    %22 = vector.broadcast %cst_18 : f32 to vector<14x448xf32>
    %c0_19 = arith.constant 0 : index
    %c0_20 = arith.constant 0 : index
    %c0_21 = arith.constant 0 : index
    %23 = vector.load %arg1[%c0_19, %c0_20, %c0_21] : memref<1x16x512xf32, #tpu.memory_space<vmem>>, vector<1x14x512xf32>
    %24 = vector.shape_cast %23 : vector<1x14x512xf32> to vector<14x512xf32>
    %25 = arith.truncf %24 : vector<14x512xf32> to vector<14x512xbf16>
    %c3 = arith.constant 3 : index
    %c0_22 = arith.constant 0 : index
    %c0_23 = arith.constant 0 : index
    %26 = vector.load %arg2[%c3, %c0_22, %c0_23] : memref<6x512x448xbf16, #tpu.memory_space<vmem>>, vector<1x512x448xbf16>
    %27 = vector.shape_cast %26 : vector<1x512x448xbf16> to vector<512x448xbf16>
    %cst_24 = arith.constant dense<0.000000e+00> : vector<14x448xf32>
    %28 = tpu.matmul %25, %27, %cst_24 {dimension_numbers = #tpu.dot_dimension_numbers<[1], [0], [0], [1], [0, 0, 1, 1], [], []>} : vector<14x512xbf16>, vector<512x448xbf16>, vector<14x448xf32> -> vector<14x448xf32>
    %29 = arith.addf %22, %28 : vector<14x448xf32>
    %c0_25 = arith.constant 0 : index
    %c1_26 = arith.constant 1 : index
    %c0_27 = arith.constant 0 : index
    %30 = vector.load %arg1[%c0_25, %c1_26, %c0_27] : memref<1x16x512xf32, #tpu.memory_space<vmem>>, vector<1x14x512xf32>
    %31 = vector.shape_cast %30 : vector<1x14x512xf32> to vector<14x512xf32>
    %32 = arith.truncf %31 : vector<14x512xf32> to vector<14x512xbf16>
    %c4 = arith.constant 4 : index
    %c0_28 = arith.constant 0 : index
    %c0_29 = arith.constant 0 : index
    %33 = vector.load %arg2[%c4, %c0_28, %c0_29] : memref<6x512x448xbf16, #tpu.memory_space<vmem>>, vector<1x512x448xbf16>
    %34 = vector.shape_cast %33 : vector<1x512x448xbf16> to vector<512x448xbf16>
    %cst_30 = arith.constant dense<0.000000e+00> : vector<14x448xf32>
    %35 = tpu.matmul %32, %34, %cst_30 {dimension_numbers = #tpu.dot_dimension_numbers<[1], [0], [0], [1], [0, 0, 1, 1], [], []>} : vector<14x512xbf16>, vector<512x448xbf16>, vector<14x448xf32> -> vector<14x448xf32>
    %36 = arith.addf %29, %35 : vector<14x448xf32>
    %c0_31 = arith.constant 0 : index
    %c2_32 = arith.constant 2 : index
    %c0_33 = arith.constant 0 : index
    %37 = vector.load %arg1[%c0_31, %c2_32, %c0_33] : memref<1x16x512xf32, #tpu.memory_space<vmem>>, vector<1x14x512xf32>
    %38 = vector.shape_cast %37 : vector<1x14x512xf32> to vector<14x512xf32>
    %39 = arith.truncf %38 : vector<14x512xf32> to vector<14x512xbf16>
    %c5 = arith.constant 5 : index
    %c0_34 = arith.constant 0 : index
    %c0_35 = arith.constant 0 : index
    %40 = vector.load %arg2[%c5, %c0_34, %c0_35] : memref<6x512x448xbf16, #tpu.memory_space<vmem>>, vector<1x512x448xbf16>
    %41 = vector.shape_cast %40 : vector<1x512x448xbf16> to vector<512x448xbf16>
    %cst_36 = arith.constant dense<0.000000e+00> : vector<14x448xf32>
    %42 = tpu.matmul %39, %41, %cst_36 {dimension_numbers = #tpu.dot_dimension_numbers<[1], [0], [0], [1], [0, 0, 1, 1], [], []>} : vector<14x512xbf16>, vector<512x448xbf16>, vector<14x448xf32> -> vector<14x448xf32>
    %43 = arith.addf %36, %42 : vector<14x448xf32>
    %44 = arith.maximumf %21, %43 : vector<14x448xf32>
    %c0_37 = arith.constant 0 : index
    %c0_38 = arith.constant 0 : index
    %45 = vector.load %arg3[%c0_37, %c0_38] : memref<1x448xf32, #tpu.memory_space<vmem>>, vector<1x448xf32>
    %46 = vector.broadcast %45 : vector<1x448xf32> to vector<14x448xf32>
    %47 = arith.addf %44, %46 : vector<14x448xf32>
    %cst_39 = arith.constant 0.000000e+00 : f32
    %48 = vector.broadcast %cst_39 : f32 to vector<14x448xf32>
    %49 = arith.maximumf %47, %48 : vector<14x448xf32>
    %50 = tpu.iota {dimensions = array<i32: 0>} : vector<7x14xi32>
    %51 = tpu.iota {dimensions = array<i32: 1>} : vector<7x14xi32>
    %c0_i32 = arith.constant 0 : i32
    %52 = vector.broadcast %c0_i32 : i32 to vector<7x14xi32>
    %53 = arith.cmpi sge, %50, %52 : vector<7x14xi32>
    %c7_i32 = arith.constant 7 : i32
    %54 = vector.broadcast %c7_i32 : i32 to vector<7x14xi32>
    %55 = arith.cmpi slt, %50, %54 : vector<7x14xi32>
    %56 = arith.andi %53, %55 : vector<7x14xi1>
    %c0_i32_40 = arith.constant 0 : i32
    %57 = vector.broadcast %c0_i32_40 : i32 to vector<7x14xi32>
    %58 = arith.subi %50, %57 : vector<7x14xi32>
    %c2_i32 = arith.constant 2 : i32
    %59 = vector.broadcast %c2_i32 : i32 to vector<7x14xi32>
    %60 = arith.muli %59, %58 : vector<7x14xi32>
    %61 = arith.cmpi eq, %51, %60 : vector<7x14xi32>
    %62 = arith.andi %56, %61 : vector<7x14xi1>
    %63 = arith.extui %62 : vector<7x14xi1> to vector<7x14xi32>
    %64 = arith.sitofp %63 : vector<7x14xi32> to vector<7x14xf32>
    %c0_i32_41 = arith.constant 0 : i32
    %65 = vector.broadcast %c0_i32_41 : i32 to vector<7x14xi32>
    %66 = arith.subi %50, %65 : vector<7x14xi32>
    %c2_i32_42 = arith.constant 2 : i32
    %67 = vector.broadcast %c2_i32_42 : i32 to vector<7x14xi32>
    %68 = arith.muli %67, %66 : vector<7x14xi32>
    %c1_i32 = arith.constant 1 : i32
    %69 = vector.broadcast %c1_i32 : i32 to vector<7x14xi32>
    %70 = arith.addi %68, %69 : vector<7x14xi32>
    %71 = arith.cmpi eq, %51, %70 : vector<7x14xi32>
    %72 = arith.andi %56, %71 : vector<7x14xi1>
    %73 = arith.extui %72 : vector<7x14xi1> to vector<7x14xi32>
    %74 = arith.sitofp %73 : vector<7x14xi32> to vector<7x14xf32>
    %cst_43 = arith.constant dense<0.000000e+00> : vector<7x448xf32>
    %75 = tpu.matmul %64, %49, %cst_43 {dimension_numbers = #tpu.dot_dimension_numbers<[1], [0], [0], [1], [0, 0, 1, 1], [], []>} : vector<7x14xf32>, vector<14x448xf32>, vector<7x448xf32> -> vector<7x448xf32>
    %cst_44 = arith.constant dense<0.000000e+00> : vector<7x448xf32>
    %76 = tpu.matmul %74, %49, %cst_44 {dimension_numbers = #tpu.dot_dimension_numbers<[1], [0], [0], [1], [0, 0, 1, 1], [], []>} : vector<7x14xf32>, vector<14x448xf32>, vector<7x448xf32> -> vector<7x448xf32>
    %77 = arith.maximumf %75, %76 : vector<7x448xf32>
    %c0_45 = arith.constant 0 : index
    %c0_46 = arith.constant 0 : index
    %c0_47 = arith.constant 0 : index
    %78 = vector.load %arg4[%c0_45, %c0_46, %c0_47] : memref<1x7x448xf32, #tpu.memory_space<vmem>>, vector<1x7x448xf32>
    %79 = vector.shape_cast %78 : vector<1x7x448xf32> to vector<7x448xf32>
    %80 = vector.shape_cast %77 : vector<7x448xf32> to vector<1x7x448xf32>
    tpu.vector_store %arg4[%c0_45, %c0_46, %c0_47], %80 {strides = array<i32>} : memref<1x7x448xf32, #tpu.memory_space<vmem>>, vector<1x7x448xf32>,
    return
  }
  func.func @transform_0(%arg0: i32) -> (i32, i32, i32) {
    %c0_i32 = arith.constant 0 : i32
    %c0_i32_0 = arith.constant 0 : i32
    %c0_i32_1 = arith.constant 0 : i32
    return %arg0, %c0_i32, %c0_i32_0 : i32, i32, i32
  }
  func.func @transform_1(%arg0: i32) -> (i32, i32, i32) {
    %c0_i32 = arith.constant 0 : i32
    %c0_i32_0 = arith.constant 0 : i32
    %c0_i32_1 = arith.constant 0 : i32
    %c0_i32_2 = arith.constant 0 : i32
    return %c0_i32, %c0_i32_0, %c0_i32_1 : i32, i32, i32
  }
  func.func @transform_2(%arg0: i32) -> (i32, i32) {
    %c0_i32 = arith.constant 0 : i32
    %c0_i32_0 = arith.constant 0 : i32
    %c0_i32_1 = arith.constant 0 : i32
    return %c0_i32, %c0_i32_0 : i32, i32
  }
  func.func @transform_3(%arg0: i32) -> (i32, i32, i32) {
    %c0_i32 = arith.constant 0 : i32
    %c0_i32_0 = arith.constant 0 : i32
    %c0_i32_1 = arith.constant 0 : i32
    return %arg0, %c0_i32, %c0_i32_0 : i32, i32, i32
  }
}

module attributes {stable_mosaic.version = 11 : i64} {
  func.func @_fc1_fc2_kernel(%arg0: i32, %arg1: memref<2x3136xf32, #tpu.memory_space<vmem>>, %arg2: memref<3136x128xbf16, #tpu.memory_space<vmem>>, %arg3: memref<1x128xf32, #tpu.memory_space<vmem>>, %arg4: memref<128x128xbf16, #tpu.memory_space<vmem>>, %arg5: memref<1x128xf32, #tpu.memory_space<vmem>>, %arg6: memref<2x128xf32, #tpu.memory_space<vmem>>) attributes {dimension_semantics = [#tpu.dimension_semantics<parallel>], iteration_bounds = array<i64: 1>, scalar_prefetch = 0 : i64, scratch_operands = 0 : i64, tpu.core_type = #tpu.core_type<tc>, window_params = [{transform_indices = @transform_0, window_bounds = array<i64: 2, 3136>}, {pipeline_mode = #tpu.pipeline_mode<synchronous>, transform_indices = @transform_1, window_bounds = array<i64: 3136, 128>}, {pipeline_mode = #tpu.pipeline_mode<synchronous>, transform_indices = @transform_2, window_bounds = array<i64: 1, 128>}, {pipeline_mode = #tpu.pipeline_mode<synchronous>, transform_indices = @transform_3, window_bounds = array<i64: 128, 128>}, {pipeline_mode = #tpu.pipeline_mode<synchronous>, transform_indices = @transform_4, window_bounds = array<i64: 1, 128>}, {transform_indices = @transform_5, window_bounds = array<i64: 2, 128>}]} {
    %c0 = arith.constant 0 : index
    %c0_0 = arith.constant 0 : index
    %0 = vector.load %arg1[%c0, %c0_0] : memref<2x3136xf32, #tpu.memory_space<vmem>>, vector<2x3136xf32>
    %1 = arith.truncf %0 : vector<2x3136xf32> to vector<2x3136xbf16>
    %c0_1 = arith.constant 0 : index
    %c0_2 = arith.constant 0 : index
    %2 = vector.load %arg2[%c0_1, %c0_2] : memref<3136x128xbf16, #tpu.memory_space<vmem>>, vector<3136x128xbf16>
    %cst = arith.constant dense<0.000000e+00> : vector<2x128xf32>
    %3 = tpu.matmul %1, %2, %cst {dimension_numbers = #tpu.dot_dimension_numbers<[1], [0], [0], [1], [0, 0, 1, 1], [], []>} : vector<2x3136xbf16>, vector<3136x128xbf16>, vector<2x128xf32> -> vector<2x128xf32>
    %c0_3 = arith.constant 0 : index
    %c0_4 = arith.constant 0 : index
    %4 = vector.load %arg3[%c0_3, %c0_4] : memref<1x128xf32, #tpu.memory_space<vmem>>, vector<1x128xf32>
    %5 = vector.broadcast %4 : vector<1x128xf32> to vector<2x128xf32>
    %6 = arith.addf %3, %5 : vector<2x128xf32>
    %cst_5 = arith.constant 0.000000e+00 : f32
    %7 = vector.broadcast %cst_5 : f32 to vector<2x128xf32>
    %8 = arith.maximumf %6, %7 : vector<2x128xf32>
    %9 = arith.truncf %8 : vector<2x128xf32> to vector<2x128xbf16>
    %c0_6 = arith.constant 0 : index
    %c0_7 = arith.constant 0 : index
    %10 = vector.load %arg4[%c0_6, %c0_7] : memref<128x128xbf16, #tpu.memory_space<vmem>>, vector<128x128xbf16>
    %cst_8 = arith.constant dense<0.000000e+00> : vector<2x128xf32>
    %11 = tpu.matmul %9, %10, %cst_8 {dimension_numbers = #tpu.dot_dimension_numbers<[1], [0], [0], [1], [0, 0, 1, 1], [], []>} : vector<2x128xbf16>, vector<128x128xbf16>, vector<2x128xf32> -> vector<2x128xf32>
    %c0_9 = arith.constant 0 : index
    %c0_10 = arith.constant 0 : index
    %12 = vector.load %arg5[%c0_9, %c0_10] : memref<1x128xf32, #tpu.memory_space<vmem>>, vector<1x128xf32>
    %13 = vector.broadcast %12 : vector<1x128xf32> to vector<2x128xf32>
    %14 = arith.addf %11, %13 : vector<2x128xf32>
    %c0_11 = arith.constant 0 : index
    %c0_12 = arith.constant 0 : index
    %15 = vector.load %arg6[%c0_11, %c0_12] : memref<2x128xf32, #tpu.memory_space<vmem>>, vector<2x128xf32>
    tpu.vector_store %arg6[%c0_11, %c0_12], %14 {strides = array<i32>} : memref<2x128xf32, #tpu.memory_space<vmem>>, vector<2x128xf32>,
    return
  }
  func.func @transform_0(%arg0: i32) -> (i32, i32) {
    %c0_i32 = arith.constant 0 : i32
    %c0_i32_0 = arith.constant 0 : i32
    return %arg0, %c0_i32 : i32, i32
  }
  func.func @transform_1(%arg0: i32) -> (i32, i32) {
    %c0_i32 = arith.constant 0 : i32
    %c0_i32_0 = arith.constant 0 : i32
    %c0_i32_1 = arith.constant 0 : i32
    return %c0_i32, %c0_i32_0 : i32, i32
  }
  func.func @transform_2(%arg0: i32) -> (i32, i32) {
    %c0_i32 = arith.constant 0 : i32
    %c0_i32_0 = arith.constant 0 : i32
    %c0_i32_1 = arith.constant 0 : i32
    return %c0_i32, %c0_i32_0 : i32, i32
  }
  func.func @transform_3(%arg0: i32) -> (i32, i32) {
    %c0_i32 = arith.constant 0 : i32
    %c0_i32_0 = arith.constant 0 : i32
    %c0_i32_1 = arith.constant 0 : i32
    return %c0_i32, %c0_i32_0 : i32, i32
  }
  func.func @transform_4(%arg0: i32) -> (i32, i32) {
    %c0_i32 = arith.constant 0 : i32
    %c0_i32_0 = arith.constant 0 : i32
    %c0_i32_1 = arith.constant 0 : i32
    return %c0_i32, %c0_i32_0 : i32, i32
  }
  func.func @transform_5(%arg0: i32) -> (i32, i32) {
    %c0_i32 = arith.constant 0 : i32
    %c0_i32_0 = arith.constant 0 : i32
    return %arg0, %c0_i32 : i32, i32
  }
}

</mosaic_0001>

<llo_original>
// kernel: cnn_forward.3
$region0: #{cnn_forward.3}
  #allocation0 [shape = 'u32[]', space=smem, size = 0x4, offset = 0x4, fixed_abs, tag = 'smem constant byte address 0x4 - core index']
  #allocation1 [shape = 'u32[144,128]{1,0:T(1,128)}', space=vmem, size = 0x12000, scoped, tag = 'internal scratch']
  %s0 = inlined_call_operand.vmem [shape: f32[2,30,30], index: 0, kind: input, shape index: {}]
  %s1 = inlined_call_operand.hbm [shape: bf16[6,30,512], index: 1, kind: input, shape index: {}]
  %s2 = inlined_call_operand.hbm [shape: f32[1,512], index: 2, kind: input, shape index: {}]
  %s3 = inlined_call_operand.vmem [shape: f32[2,16,512], index: 3, kind: output, shape index: {}]
  %s4 = sld [smem:[#allocation0]]
  $region53: #{cnn_forward.3} parent=0
    _
  %s6 = ssub.s32 1, %s4
  %s7 = scalar_select 0, %s6, %s4
  $region1: #{cnn_forward.3} parent=0
    #allocation2 [shape = 'u8[196608]{0}', space=vmem, size = 0x30000, scoped, tag = 'input window, operand 1, single buffered']
    #allocation3 [shape = 's32[2]{0}', space=sflag, size = 0x8, scoped, tag = 'scoped memory for cnn_forward.3']
    #allocation4 [shape = 'u8[2048]{0}', space=vmem, size = 0x800, scoped, tag = 'input window, operand 2, single buffered']
    #allocation5 [shape = 's32[1]{0}', space=sflag, size = 0x4, scoped, tag = 'scoped memory for cnn_forward.3']
    %8 = vsyncpa [#allocation3], 0
    %9 = vsyncpa [#allocation5], 0
    loop: start=0, step=1, limit=4
    $region2: #{cnn_forward.3} parent=1 // loop_pre_header
      _
    $region3: #{cnn_forward.3} parent=1 // loop_header
      %s11 = sphi 0, %s15
      %p12 = scmp.ge.s32.totalorder %s11, 4
      %s21 = sphi 0, %s23
      %s24 = sphi 0, %s21
      %s25 = sphi 0, %s24
      %s41 = sphi 0, %s25
      %s45 = sphi 0, %s45
      %s47 = sphi 0, %s45
      %s48 = sphi 0, %s47
      %s62 = sphi 0, %s48
      %s66 = sphi 0, %s66
      %s68 = sphi 0, %s66
      %s69 = sphi 0, %s68
      %s83 = sphi 0, %s69
      %s89 = sphi 0, %s91
      %s92 = sphi 0, %s89
      %s93 = sphi 0, %s92
      %s109 = sphi 0, %s93
    $region4: #{cnn_forward.3} parent=1 // loop_header_branch
      %14 = sbr.rel (%p12) target = $region8
    $region5: #{cnn_forward.3} parent=1 // loop_body
      %s16 = ssub.s32 %s11, 1
      %s17 = ssub.s32 %s11, 2
      %s18 = sadd.s32 %s11, 1
      %s19 = ssub.s32 %s11, %s18
      %p20 = scmp.eq.s32.totalorder %s19, 0
      %s22 = sadd.s32 %s21, 1
      %s23 = scalar_select %p20, %s21, %s22
      %p26 = pneg %p20
      %p27 = scmp.eq.s32.totalorder %s11, 1
      %p28 = por %p26, %p27
      %p29 = scmp.ne.s32.totalorder %s21, %s24
      %p30 = scmp.eq.s32.totalorder %s11, 0
      %p31 = por %p29, %p30
      %p32 = scmp.ne.s32.totalorder %s21, %s24
      %p33 = scmp.eq.s32.totalorder %s16, 1
      %p34 = por %p32, %p33
      %p35 = scmp.ne.s32.totalorder %s24, %s25
      %p36 = scmp.eq.s32.totalorder %s16, 0
      %p37 = por %p35, %p36
      %p38 = scmp.ne.s32.totalorder %s24, %s25
      %p39 = scmp.eq.s32.totalorder %s17, 1
      %p40 = por %p38, %p39
      %p42 = scmp.ne.s32.totalorder %s25, %s41
      %p43 = scmp.eq.s32.totalorder %s17, 0
      %p44 = por %p42, %p43
      %s46 = sadd.s32 %s45, 1
      %p49 = scmp.eq.s32.totalorder %s11, 1
      %p50 = scmp.ne.s32.totalorder %s45, %s47
      %p51 = scmp.eq.s32.totalorder %s11, 0
      %p52 = por %p50, %p51
      %p53 = scmp.ne.s32.totalorder %s45, %s47
      %p54 = scmp.eq.s32.totalorder %s16, 1
      %p55 = por %p53, %p54
      %p56 = scmp.ne.s32.totalorder %s47, %s48
      %p57 = scmp.eq.s32.totalorder %s16, 0
      %p58 = por %p56, %p57
      %p59 = scmp.ne.s32.totalorder %s47, %s48
      %p60 = scmp.eq.s32.totalorder %s17, 1
      %p61 = por %p59, %p60
      %p63 = scmp.ne.s32.totalorder %s48, %s62
      %p64 = scmp.eq.s32.totalorder %s17, 0
      %p65 = por %p63, %p64
      %s67 = sadd.s32 %s66, 1
      %p70 = scmp.eq.s32.totalorder %s11, 1
      %p71 = scmp.ne.s32.totalorder %s66, %s68
      %p72 = scmp.eq.s32.totalorder %s11, 0
      %p73 = por %p71, %p72
      %p74 = scmp.ne.s32.totalorder %s66, %s68
      %p75 = scmp.eq.s32.totalorder %s16, 1
      %p76 = por %p74, %p75
      %p77 = scmp.ne.s32.totalorder %s68, %s69
      %p78 = scmp.eq.s32.totalorder %s16, 0
      %p79 = por %p77, %p78
      %p80 = scmp.ne.s32.totalorder %s68, %s69
      %p81 = scmp.eq.s32.totalorder %s17, 1
      %p82 = por %p80, %p81
      %p84 = scmp.ne.s32.totalorder %s69, %s83
      %p85 = scmp.eq.s32.totalorder %s17, 0
      %p86 = por %p84, %p85
      %s87 = ssub.s32 %s11, %s18
      %p88 = scmp.eq.s32.totalorder %s87, 0
      %s90 = sadd.s32 %s89, 1
      %s91 = scalar_select %p88, %s89, %s90
      %p94 = pneg %p88
      %p95 = scmp.eq.s32.totalorder %s11, 1
      %p96 = por %p94, %p95
      %p97 = scmp.ne.s32.totalorder %s89, %s92
      %p98 = scmp.eq.s32.totalorder %s11, 0
      %p99 = por %p97, %p98
      %p100 = scmp.ne.s32.totalorder %s89, %s92
      %p101 = scmp.eq.s32.totalorder %s16, 1
      %p102 = por %p100, %p101
      %p103 = scmp.ne.s32.totalorder %s92, %s93
      %p104 = scmp.eq.s32.totalorder %s16, 0
      %p105 = por %p103, %p104
      %p106 = scmp.ne.s32.totalorder %s92, %s93
      %p107 = scmp.eq.s32.totalorder %s17, 1
      %p108 = por %p106, %p107
      %p110 = scmp.ne.s32.totalorder %s93, %s109
      %p111 = scmp.eq.s32.totalorder %s17, 0
      %p112 = por %p110, %p111
      %p113 = scmp.le.s32.totalorder 1, %s11
      %p114 = scmp.lt.s32.totalorder %s11, 3
      %p115 = pnand %p113, %p114
      %p116 = pneg %p115
      // Predicated region
      $region9: #{cnn_forward.3} parent=5 // pred_check
        _
      $region10: #{cnn_forward.3} parent=5 // pred_check_branch
        %118 = sbr.rel (%p115) target = $region12
      $region11: #{cnn_forward.3} parent=5 // pred_region
        %s119 = ssub.s32 %s11, 1
        // Predicated region
        $region13: #{cnn_forward.3} parent=11 // pred_check
          %p120 = pneg %p58
        $region14: #{cnn_forward.3} parent=11 // pred_check_branch
          %122 = sbr.rel (%p120) target = $region16
        $region15: #{cnn_forward.3} parent=11 // pred_region
          %s124 = ssub.s32 6144, 6144
          %125 = vsyncadd [#allocation3], %s124
          %s126 = sshll.u32 [#allocation2], 4
          %s127 = int_to_ptr.vmem [resolvable:$true] %s126
          %132 = dma.hbm_to_vmem [thread:$0]  %s1, 6144, %s127, [#allocation3], 256, 256, 16
        $region16: #{cnn_forward.3} parent=11 // pred_fallthru
          _
        // Predicated region
        $region17: #{cnn_forward.3} parent=11 // pred_check
          %p133 = pneg %p79
        $region18: #{cnn_forward.3} parent=11 // pred_check_branch
          %135 = sbr.rel (%p133) target = $region20
        $region19: #{cnn_forward.3} parent=11 // pred_region
          %s137 = ssub.s32 64, 64
          %138 = vsyncadd [#allocation5], %s137
          %s140 = sshll.u32 [#allocation4], 4
          %s141 = int_to_ptr.vmem [resolvable:$true] %s140
          %143 = dma.hbm_to_vmem [thread:$0]  %s2, 64, %s141, [#allocation5]
        $region20: #{cnn_forward.3} parent=11 // pred_fallthru
          _
      $region12: #{cnn_forward.3} parent=5 // pred_fallthru
        _
      %p144 = scmp.lt.s32.totalorder %s11, 2
      // Predicated region
      $region21: #{cnn_forward.3} parent=5 // pred_check
        %p145 = pneg %p144
      $region22: #{cnn_forward.3} parent=5 // pred_check_branch
        %147 = sbr.rel (%p145) target = $region24
      $region23: #{cnn_forward.3} parent=5 // pred_region
        // Predicated region
        $region25: #{cnn_forward.3} parent=23 // pred_check
          %p148 = pneg %p31
        $region26: #{cnn_forward.3} parent=23 // pred_check_branch
          %150 = sbr.rel (%p148) target = $region28
        $region27: #{cnn_forward.3} parent=23 // pred_region
          %p151 = scmp.lt.s32.totalorder %s11, 1
          %s152 = scalar_select %p151, %s11, 1
          %s153 = smul.addr %s152, 4
          %s154 = smul.addr %s153, 8
          %s155 = scalar_lea.vmem %s0, %s154
        $region28: #{cnn_forward.3} parent=23 // pred_fallthru
          _
      $region24: #{cnn_forward.3} parent=5 // pred_fallthru
        _
      %p156 = scmp.le.s32.totalorder 1, %s11
      %p157 = scmp.lt.s32.totalorder %s11, 3
      %p158 = pnand %p156, %p157
      %p159 = pneg %p158
      // Predicated region
      $region29: #{cnn_forward.3} parent=5 // pred_check
        _
      $region30: #{cnn_forward.3} parent=5 // pred_check_branch
        %161 = sbr.rel (%p158) target = $region32
      $region31: #{cnn_forward.3} parent=5 // pred_region
        %s162 = ssub.s32 %s11, 1
        // Predicated region
        $region33: #{cnn_forward.3} parent=31 // pred_check
          %p163 = pneg %p58
        $region34: #{cnn_forward.3} parent=31 // pred_check_branch
          %165 = sbr.rel (%p163) target = $region36
        $region35: #{cnn_forward.3} parent=31 // pred_region
          %166 = dma.done [#allocation3], 6144
        $region36: #{cnn_forward.3} parent=31 // pred_fallthru
          _
        // Predicated region
        $region37: #{cnn_forward.3} parent=31 // pred_check
          %p167 = pneg %p79
        $region38: #{cnn_forward.3} parent=31 // pred_check_branch
          %169 = sbr.rel (%p167) target = $region40
        $region39: #{cnn_forward.3} parent=31 // pred_region
          %170 = dma.done [#allocation5], 64
        $region40: #{cnn_forward.3} parent=31 // pred_fallthru
          _
        %p171 = scmp.lt.s32.totalorder %s16, 1
        %s172 = scalar_select %p171, %s16, 1
        %s173 = smul.addr %s172, 4
        %s174 = smul.addr %s173, 8
        %s175 = scalar_lea.vmem %s0, %s174
        %p176 = pneg %p37
        %p177 = pneg %p34
        %p178 = pneg %p58
        %p179 = pneg %p55
        %p180 = pneg %p79
        %p181 = pneg %p76
        %p182 = pneg %p105
        %p183 = pneg %p102
        %p184 = scmp.lt.s32.totalorder %s16, 1
        %s185 = scalar_select %p184, %s16, 1
        %s186 = smul.addr %s185, 8
        %s187 = smul.addr %s186, 8
        %s188 = scalar_lea.vmem %s3, %s187
        %p189 = scmp.lt.s32.totalorder %s16, 1
        %s190 = scalar_select %p189, %s16, 1
        %s191 = smul.addr %s190, 4
        %s192 = smul.addr %s191, 8
        %s193 = scalar_lea.vmem %s0, %s192
        %p194 = scmp.lt.s32.totalorder %s16, 1
        %s195 = scalar_select %p194, %s16, 1
        %s196 = smul.addr %s195, 8
        %s197 = smul.addr %s196, 8
        %s198 = scalar_lea.vmem %s3, %s197
        %v200 = vld [vmem:[%s193] sm:$0xff]
        %v201 = vld [vmem:[%s193 + $0x8] sm:$0xff]
        %v202 = vld [vmem:[%s193 + $0x10] sm:$0xff]
        %v203 = vld [vmem:[%s193 + $0x18] sm:$0xf]
        %v204 = vpack.c.bf16 %v201, %v200
        %v205 = vpack.c.bf16 %v203, %v202
        %v206 = vld [vmem:[#allocation2] sm:$0xff]
        %v207 = vld [vmem:[#allocation2 + $0x8] sm:$0xff]
        %v208 = vld [vmem:[#allocation2 + $0x10] sm:$0xff]
        %v209 = vld [vmem:[#allocation2 + $0x18] sm:$0xff]
        %v210 = vld [vmem:[#allocation2 + $0x20] sm:$0xff]
        %v211 = vld [vmem:[#allocation2 + $0x28] sm:$0xff]
        %v212 = vld [vmem:[#allocation2 + $0x30] sm:$0x77]
        %v213 = vld [vmem:[#allocation2 + $0x38] sm:$0x77]
        %v214 = vld [vmem:[%s193 + $0x1] sm:$0xff]
        %v215 = vld [vmem:[%s193 + $0x9] sm:$0xff]
        %v216 = vld [vmem:[%s193 + $0x11] sm:$0xff]
        %v217 = vld [vmem:[%s193 + $0x19] sm:$0xf]
        %v218 = vpack.c.bf16 %v215, %v214
        %v219 = vpack.c.bf16 %v217, %v216
        %s220 = scalar_lea.vmem [#allocation2], 64
        %v221 = vld [vmem:[%s220] sm:$0xff]
        %v222 = vld [vmem:[%s220 + $0x8] sm:$0xff]
        %v223 = vld [vmem:[%s220 + $0x10] sm:$0xff]
        %v224 = vld [vmem:[%s220 + $0x18] sm:$0xff]
        %v225 = vld [vmem:[%s220 + $0x20] sm:$0xff]
        %v226 = vld [vmem:[%s220 + $0x28] sm:$0xff]
        %v227 = vld [vmem:[%s220 + $0x30] sm:$0x77]
        %v228 = vld [vmem:[%s220 + $0x38] sm:$0x77]
        %v237 = vunpack.c.l.b16 %v221
        %v238 = vunpack.c.h.b16 %v221
        %v239 = vunpack.c.l.b16 %v222
        %v240 = vunpack.c.h.b16 %v222
        %v241 = vunpack.c.l.b16 %v223
        %v242 = vunpack.c.h.b16 %v223
        %v243 = vunpack.c.l.b16 %v224
        %v244 = vunpack.c.h.b16 %v224
        %v245 = vunpack.c.l.b16 %v225
        %v246 = vunpack.c.h.b16 %v225
        %v247 = vunpack.c.l.b16 %v226
        %v248 = vunpack.c.h.b16 %v226
        %v249 = vunpack.c.l.b16 %v227
        %v250 = vunpack.c.h.b16 %v227
        %v251 = vunpack.c.l.b16 %v228
        %v252 = vunpack.c.h.b16 %v228
        %v253 = vpack.c.b16 %v241, %v237
        %v254 = vpack.c.b16 %v242, %v238
        %v255 = vpack.c.b16 %v243, %v239
        %v256 = vpack.c.b16 %v244, %v240
        %v257 = vpack.c.b16 %v249, %v245
        %v258 = vpack.c.b16 %v250, %v246
        %v259 = vpack.c.b16 %v251, %v247
        %v260 = vpack.c.b16 %v252, %v248
        %vm265 = vcmask 244736
        %v267 = vsel %vm265, %v218, 0
        %v270 = vsel %vm265, %v219, 0
        %vm272 = vcmask 1046528
        %v274 = vsel %vm272, %v257, 0
        %v277 = vsel %vm272, %v258, 0
        %v280 = vsel %vm272, %v259, 0
        %v283 = vsel %vm272, %v260, 0
        %285 = vmatprep.subr.bf16.mxu0 0
        %286 = vmatpush1.bf16.msra.mxu0 0
        %287 = vmatprep.subr.bf16.mxu0 0
        %288 = vmatpush1.bf16.msra.mxu0 0
        %289 = vmatprep.subr.bf16.mxu0 0
        %290 = vmatpush1.bf16.msra.mxu0 0
        %291 = vmatprep.subr.bf16.mxu0 0
        %292 = vmatpush1.bf16.msra.mxu0 0
        %293 = vmatprep.subr.bf16.mxu0 0
        %294 = vmatpush1.bf16.msra.mxu0 0
        %295 = vmatprep.subr.bf16.mxu0 0
        %296 = vmatpush1.bf16.msra.mxu0 0
        %297 = vmatprep.subr.bf16.mxu0 %v277
        %298 = vmatpush1.bf16.msra.mxu0 %v274
        %299 = vmatprep.subr.bf16.mxu0 %v254
        %300 = vmatpush1.bf16.msra.mxu0 %v253
        %301 = vmatprep.subr.bf16.mxu0 0
        %302 = vmatpush2.bf16.msra.mxu0 0
        %303 = vmatprep.subr.bf16.mxu0 0
        %304 = vmatpush2.bf16.msra.mxu0 0
        %305 = vmatprep.subr.bf16.mxu0 0
        %306 = vmatpush2.bf16.msra.mxu0 0
        %307 = vmatprep.subr.bf16.mxu0 0
        %308 = vmatpush2.bf16.msra.mxu0 0
        %309 = vmatprep.subr.bf16.mxu0 0
        %310 = vmatpush2.bf16.msra.mxu0 0
        %311 = vmatprep.subr.bf16.mxu0 0
        %312 = vmatpush2.bf16.msra.mxu0 0
        %313 = vmatprep.subr.bf16.mxu0 0
        %314 = vmatpush2.bf16.msra.mxu0 0
        %315 = vmatprep.subr.bf16.mxu0 0
        %316 = vmatpush2.bf16.msra.mxu0 0
        %317 = vmatprep.mubr.bf16.mxu0 0
        %318 = vmatmul.mubr.bf16.gmra.mxu0 %v267
        %v319 = vpop.f32.mrf.mxu0
        %v320 = vadd.f32 0.0, %v319
        %v321 = vpop.f32.mrf.mxu0
        %v322 = vadd.f32 0.0, %v321
        %v323 = vpop.f32.mrf.mxu0
        %v324 = vadd.f32 0.0, %v323
        %v325 = vpop.f32.mrf.mxu0
        %v326 = vadd.f32 0.0, %v325
        %327 = vmatprep.mubr.bf16.mxu0 0
        %328 = vmatmul.mubr.bf16.gmra.mxu0 %v270
        %v329 = vpop.f32.mrf.mxu0
        %v330 = vadd.f32 0.0, %v329
        %v331 = vpop.f32.mrf.mxu0
        %v332 = vadd.f32 0.0, %v331
        %v333 = vpop.f32.mrf.mxu0
        %v334 = vadd.f32 0.0, %v333
        %v335 = vpop.f32.mrf.mxu0
        %v336 = vadd.f32 0.0, %v335
        %337 = vdwg.mxu0
        %338 = vmatprep.subr.bf16.mxu0 0
        %339 = vmatpush1.bf16.msra.mxu0 0
        %340 = vmatprep.subr.bf16.mxu0 0
        %341 = vmatpush1.bf16.msra.mxu0 0
        %342 = vmatprep.subr.bf16.mxu0 0
        %343 = vmatpush1.bf16.msra.mxu0 0
        %344 = vmatprep.subr.bf16.mxu0 0
        %345 = vmatpush1.bf16.msra.mxu0 0
        %346 = vmatprep.subr.bf16.mxu0 0
        %347 = vmatpush1.bf16.msra.mxu0 0
        %348 = vmatprep.subr.bf16.mxu0 0
        %349 = vmatpush1.bf16.msra.mxu0 0
        %350 = vmatprep.subr.bf16.mxu0 %v283
        %351 = vmatpush1.bf16.msra.mxu0 %v280
        %352 = vmatprep.subr.bf16.mxu0 %v256
        %353 = vmatpush1.bf16.msra.mxu0 %v255
        %354 = vmatprep.subr.bf16.mxu0 0
        %355 = vmatpush2.bf16.msra.mxu0 0
        %356 = vmatprep.subr.bf16.mxu0 0
        %357 = vmatpush2.bf16.msra.mxu0 0
        %358 = vmatprep.subr.bf16.mxu0 0
        %359 = vmatpush2.bf16.msra.mxu0 0
        %360 = vmatprep.subr.bf16.mxu0 0
        %361 = vmatpush2.bf16.msra.mxu0 0
        %362 = vmatprep.subr.bf16.mxu0 0
        %363 = vmatpush2.bf16.msra.mxu0 0
        %364 = vmatprep.subr.bf16.mxu0 0
        %365 = vmatpush2.bf16.msra.mxu0 0
        %366 = vmatprep.subr.bf16.mxu0 0
        %367 = vmatpush2.bf16.msra.mxu0 0
        %368 = vmatprep.subr.bf16.mxu0 0
        %369 = vmatpush2.bf16.msra.mxu0 0
        %370 = vmatprep.mubr.bf16.mxu0 0
        %371 = vmatmul.mubr.bf16.gmra.mxu0 %v267
        %v372 = vpop.f32.mrf.mxu0
        %v373 = vadd.f32 0.0, %v372
        %v374 = vpop.f32.mrf.mxu0
        %v375 = vadd.f32 0.0, %v374
        %v376 = vpop.f32.mrf.mxu0
        %v377 = vadd.f32 0.0, %v376
        %v378 = vpop.f32.mrf.mxu0
        %v379 = vadd.f32 0.0, %v378
        %380 = vmatprep.mubr.bf16.mxu0 0
        %381 = vmatmul.mubr.bf16.gmra.mxu0 %v270
        %v382 = vpop.f32.mrf.mxu0
        %v383 = vadd.f32 0.0, %v382
        %v384 = vpop.f32.mrf.mxu0
        %v385 = vadd.f32 0.0, %v384
        %v386 = vpop.f32.mrf.mxu0
        %v387 = vadd.f32 0.0, %v386
        %v388 = vpop.f32.mrf.mxu0
        %v389 = vadd.f32 0.0, %v388
        %390 = vdwg.mxu0
        %v399 = vunpack.c.l.b16 %v206
        %v400 = vunpack.c.h.b16 %v206
        %v401 = vunpack.c.l.b16 %v207
        %v402 = vunpack.c.h.b16 %v207
        %v403 = vunpack.c.l.b16 %v208
        %v404 = vunpack.c.h.b16 %v208
        %v405 = vunpack.c.l.b16 %v209
        %v406 = vunpack.c.h.b16 %v209
        %v407 = vunpack.c.l.b16 %v210
        %v408 = vunpack.c.h.b16 %v210
        %v409 = vunpack.c.l.b16 %v211
        %v410 = vunpack.c.h.b16 %v211
        %v411 = vunpack.c.l.b16 %v212
        %v412 = vunpack.c.h.b16 %v212
        %v413 = vunpack.c.l.b16 %v213
        %v414 = vunpack.c.h.b16 %v213
        %v415 = vpack.c.b16 %v403, %v399
        %v416 = vpack.c.b16 %v404, %v400
        %v417 = vpack.c.b16 %v405, %v401
        %v418 = vpack.c.b16 %v406, %v402
        %v419 = vpack.c.b16 %v411, %v407
        %v420 = vpack.c.b16 %v412, %v408
        %v421 = vpack.c.b16 %v413, %v409
        %v422 = vpack.c.b16 %v414, %v410
        %v428 = vsel %vm265, %v204, 0
        %v431 = vsel %vm265, %v205, 0
        %v434 = vsel %vm272, %v419, 0
        %v437 = vsel %vm272, %v420, 0
        %v440 = vsel %vm272, %v421, 0
        %v443 = vsel %vm272, %v422, 0
        %445 = vmatprep.subr.bf16.mxu0 0
        %446 = vmatpush1.bf16.msra.mxu0 0
        %447 = vmatprep.subr.bf16.mxu0 0
        %448 = vmatpush1.bf16.msra.mxu0 0
        %449 = vmatprep.subr.bf16.mxu0 0
        %450 = vmatpush1.bf16.msra.mxu0 0
        %451 = vmatprep.subr.bf16.mxu0 0
        %452 = vmatpush1.bf16.msra.mxu0 0
        %453 = vmatprep.subr.bf16.mxu0 0
        %454 = vmatpush1.bf16.msra.mxu0 0
        %455 = vmatprep.subr.bf16.mxu0 0
        %456 = vmatpush1.bf16.msra.mxu0 0
        %457 = vmatprep.subr.bf16.mxu0 %v437
        %458 = vmatpush1.bf16.msra.mxu0 %v434
        %459 = vmatprep.subr.bf16.mxu0 %v416
        %460 = vmatpush1.bf16.msra.mxu0 %v415
        %461 = vmatprep.subr.bf16.mxu0 0
        %462 = vmatpush2.bf16.msra.mxu0 0
        %463 = vmatprep.subr.bf16.mxu0 0
        %464 = vmatpush2.bf16.msra.mxu0 0
        %465 = vmatprep.subr.bf16.mxu0 0
        %466 = vmatpush2.bf16.msra.mxu0 0
        %467 = vmatprep.subr.bf16.mxu0 0
        %468 = vmatpush2.bf16.msra.mxu0 0
        %469 = vmatprep.subr.bf16.mxu0 0
        %470 = vmatpush2.bf16.msra.mxu0 0
        %471 = vmatprep.subr.bf16.mxu0 0
        %472 = vmatpush2.bf16.msra.mxu0 0
        %473 = vmatprep.subr.bf16.mxu0 0
        %474 = vmatpush2.bf16.msra.mxu0 0
        %475 = vmatprep.subr.bf16.mxu0 0
        %476 = vmatpush2.bf16.msra.mxu0 0
        %477 = vmatprep.mubr.bf16.mxu0 0
        %478 = vmatmul.mubr.bf16.gmra.mxu0 %v428
        %v479 = vpop.f32.mrf.mxu0
        %v480 = vadd.f32 %v320, %v479
        %v481 = vpop.f32.mrf.mxu0
        %v482 = vadd.f32 %v322, %v481
        %v483 = vpop.f32.mrf.mxu0
        %v484 = vadd.f32 %v324, %v483
        %v485 = vpop.f32.mrf.mxu0
        %v486 = vadd.f32 %v326, %v485
        %487 = vmatprep.mubr.bf16.mxu0 0
        %488 = vmatmul.mubr.bf16.gmra.mxu0 %v431
        %v489 = vpop.f32.mrf.mxu0
        %v490 = vadd.f32 %v330, %v489
        %v491 = vpop.f32.mrf.mxu0
        %v492 = vadd.f32 %v332, %v491
        %v493 = vpop.f32.mrf.mxu0
        %v494 = vadd.f32 %v334, %v493
        %v495 = vpop.f32.mrf.mxu0
        %v496 = vadd.f32 %v336, %v495
        %497 = vdwg.mxu0
        %498 = vmatprep.subr.bf16.mxu0 0
        %499 = vmatpush1.bf16.msra.mxu0 0
        %500 = vmatprep.subr.bf16.mxu0 0
        %501 = vmatpush1.bf16.msra.mxu0 0
        %502 = vmatprep.subr.bf16.mxu0 0
        %503 = vmatpush1.bf16.msra.mxu0 0
        %504 = vmatprep.subr.bf16.mxu0 0
        %505 = vmatpush1.bf16.msra.mxu0 0
        %506 = vmatprep.subr.bf16.mxu0 0
        %507 = vmatpush1.bf16.msra.mxu0 0
        %508 = vmatprep.subr.bf16.mxu0 0
        %509 = vmatpush1.bf16.msra.mxu0 0
        %510 = vmatprep.subr.bf16.mxu0 %v443
        %511 = vmatpush1.bf16.msra.mxu0 %v440
        %512 = vmatprep.subr.bf16.mxu0 %v418
        %513 = vmatpush1.bf16.msra.mxu0 %v417
        %514 = vmatprep.subr.bf16.mxu0 0
        %515 = vmatpush2.bf16.msra.mxu0 0
        %516 = vmatprep.subr.bf16.mxu0 0
        %517 = vmatpush2.bf16.msra.mxu0 0
        %518 = vmatprep.subr.bf16.mxu0 0
        %519 = vmatpush2.bf16.msra.mxu0 0
        %520 = vmatprep.subr.bf16.mxu0 0
        %521 = vmatpush2.bf16.msra.mxu0 0
        %522 = vmatprep.subr.bf16.mxu0 0
        %523 = vmatpush2.bf16.msra.mxu0 0
        %524 = vmatprep.subr.bf16.mxu0 0
        %525 = vmatpush2.bf16.msra.mxu0 0
        %526 = vmatprep.subr.bf16.mxu0 0
        %527 = vmatpush2.bf16.msra.mxu0 0
        %528 = vmatprep.subr.bf16.mxu0 0
        %529 = vmatpush2.bf16.msra.mxu0 0
        %530 = vmatprep.mubr.bf16.mxu0 0
        %531 = vmatmul.mubr.bf16.gmra.mxu0 %v428
        %v532 = vpop.f32.mrf.mxu0
        %v533 = vadd.f32 %v373, %v532
        %v534 = vpop.f32.mrf.mxu0
        %v535 = vadd.f32 %v375, %v534
        %v536 = vpop.f32.mrf.mxu0
        %v537 = vadd.f32 %v377, %v536
        %v538 = vpop.f32.mrf.mxu0
        %v539 = vadd.f32 %v379, %v538
        %540 = vmatprep.mubr.bf16.mxu0 0
        %541 = vmatmul.mubr.bf16.gmra.mxu0 %v431
        %v542 = vpop.f32.mrf.mxu0
        %v543 = vadd.f32 %v383, %v542
        %v544 = vpop.f32.mrf.mxu0
        %v545 = vadd.f32 %v385, %v544
        %v546 = vpop.f32.mrf.mxu0
        %v547 = vadd.f32 %v387, %v546
        %v548 = vpop.f32.mrf.mxu0
        %v549 = vadd.f32 %v389, %v548
        %550 = vdwg.mxu0
        %v551 = vld [vmem:[%s193 + $0x2] sm:$0xff]
        %v552 = vld [vmem:[%s193 + $0xa] sm:$0xff]
        %v553 = vld [vmem:[%s193 + $0x12] sm:$0xff]
        %v554 = vld [vmem:[%s193 + $0x1a] sm:$0xf]
        %v555 = vpack.c.bf16 %v552, %v551
        %v556 = vpack.c.bf16 %v554, %v553
        %s557 = scalar_lea.vmem [#allocation2], 128
        %v558 = vld [vmem:[%s557] sm:$0xff]
        %v559 = vld [vmem:[%s557 + $0x8] sm:$0xff]
        %v560 = vld [vmem:[%s557 + $0x10] sm:$0xff]
        %v561 = vld [vmem:[%s557 + $0x18] sm:$0xff]
        %v562 = vld [vmem:[%s557 + $0x20] sm:$0xff]
        %v563 = vld [vmem:[%s557 + $0x28] sm:$0xff]
        %v564 = vld [vmem:[%s557 + $0x30] sm:$0x77]
        %v565 = vld [vmem:[%s557 + $0x38] sm:$0x77]
        %v574 = vunpack.c.l.b16 %v558
        %v575 = vunpack.c.h.b16 %v558
        %v576 = vunpack.c.l.b16 %v559
        %v577 = vunpack.c.h.b16 %v559
        %v578 = vunpack.c.l.b16 %v560
        %v579 = vunpack.c.h.b16 %v560
        %v580 = vunpack.c.l.b16 %v561
        %v581 = vunpack.c.h.b16 %v561
        %v582 = vunpack.c.l.b16 %v562
        %v583 = vunpack.c.h.b16 %v562
        %v584 = vunpack.c.l.b16 %v563
        %v585 = vunpack.c.h.b16 %v563
        %v586 = vunpack.c.l.b16 %v564
        %v587 = vunpack.c.h.b16 %v564
        %v588 = vunpack.c.l.b16 %v565
        %v589 = vunpack.c.h.b16 %v565
        %v590 = vpack.c.b16 %v578, %v574
        %v591 = vpack.c.b16 %v579, %v575
        %v592 = vpack.c.b16 %v580, %v576
        %v593 = vpack.c.b16 %v581, %v577
        %v594 = vpack.c.b16 %v586, %v582
        %v595 = vpack.c.b16 %v587, %v583
        %v596 = vpack.c.b16 %v588, %v584
        %v597 = vpack.c.b16 %v589, %v585
        %v603 = vsel %vm265, %v555, 0
        %v606 = vsel %vm265, %v556, 0
        %v609 = vsel %vm272, %v594, 0
        %v612 = vsel %vm272, %v595, 0
        %v615 = vsel %vm272, %v596, 0
        %v618 = vsel %vm272, %v597, 0
        %620 = vmatprep.subr.bf16.mxu0 0
        %621 = vmatpush1.bf16.msra.mxu0 0
        %622 = vmatprep.subr.bf16.mxu0 0
        %623 = vmatpush1.bf16.msra.mxu0 0
        %624 = vmatprep.subr.bf16.mxu0 0
        %625 = vmatpush1.bf16.msra.mxu0 0
        %626 = vmatprep.subr.bf16.mxu0 0
        %627 = vmatpush1.bf16.msra.mxu0 0
        %628 = vmatprep.subr.bf16.mxu0 0
        %629 = vmatpush1.bf16.msra.mxu0 0
        %630 = vmatprep.subr.bf16.mxu0 0
        %631 = vmatpush1.bf16.msra.mxu0 0
        %632 = vmatprep.subr.bf16.mxu0 %v612
        %633 = vmatpush1.bf16.msra.mxu0 %v609
        %634 = vmatprep.subr.bf16.mxu0 %v591
        %635 = vmatpush1.bf16.msra.mxu0 %v590
        %636 = vmatprep.subr.bf16.mxu0 0
        %637 = vmatpush2.bf16.msra.mxu0 0
        %638 = vmatprep.subr.bf16.mxu0 0
        %639 = vmatpush2.bf16.msra.mxu0 0
        %640 = vmatprep.subr.bf16.mxu0 0
        %641 = vmatpush2.bf16.msra.mxu0 0
        %642 = vmatprep.subr.bf16.mxu0 0
        %643 = vmatpush2.bf16.msra.mxu0 0
        %644 = vmatprep.subr.bf16.mxu0 0
        %645 = vmatpush2.bf16.msra.mxu0 0
        %646 = vmatprep.subr.bf16.mxu0 0
        %647 = vmatpush2.bf16.msra.mxu0 0
        %648 = vmatprep.subr.bf16.mxu0 0
        %649 = vmatpush2.bf16.msra.mxu0 0
        %650 = vmatprep.subr.bf16.mxu0 0
        %651 = vmatpush2.bf16.msra.mxu0 0
        %652 = vmatprep.mubr.bf16.mxu0 0
        %653 = vmatmul.mubr.bf16.gmra.mxu0 %v603
        %v654 = vpop.f32.mrf.mxu0
        %v655 = vadd.f32 0.0, %v654
        %v656 = vpop.f32.mrf.mxu0
        %v657 = vadd.f32 0.0, %v656
        %v658 = vpop.f32.mrf.mxu0
        %v659 = vadd.f32 0.0, %v658
        %v660 = vpop.f32.mrf.mxu0
        %v661 = vadd.f32 0.0, %v660
        %662 = vmatprep.mubr.bf16.mxu0 0
        %663 = vmatmul.mubr.bf16.gmra.mxu0 %v606
        %v664 = vpop.f32.mrf.mxu0
        %v665 = vadd.f32 0.0, %v664
        %v666 = vpop.f32.mrf.mxu0
        %v667 = vadd.f32 0.0, %v666
        %v668 = vpop.f32.mrf.mxu0
        %v669 = vadd.f32 0.0, %v668
        %v670 = vpop.f32.mrf.mxu0
        %v671 = vadd.f32 0.0, %v670
        %672 = vdwg.mxu0
        %673 = vmatprep.subr.bf16.mxu0 0
        %674 = vmatpush1.bf16.msra.mxu0 0
        %675 = vmatprep.subr.bf16.mxu0 0
        %676 = vmatpush1.bf16.msra.mxu0 0
        %677 = vmatprep.subr.bf16.mxu0 0
        %678 = vmatpush1.bf16.msra.mxu0 0
        %679 = vmatprep.subr.bf16.mxu0 0
        %680 = vmatpush1.bf16.msra.mxu0 0
        %681 = vmatprep.subr.bf16.mxu0 0
        %682 = vmatpush1.bf16.msra.mxu0 0
        %683 = vmatprep.subr.bf16.mxu0 0
        %684 = vmatpush1.bf16.msra.mxu0 0
        %685 = vmatprep.subr.bf16.mxu0 %v618
        %686 = vmatpush1.bf16.msra.mxu0 %v615
        %687 = vmatprep.subr.bf16.mxu0 %v593
        %688 = vmatpush1.bf16.msra.mxu0 %v592
        %689 = vmatprep.subr.bf16.mxu0 0
        %690 = vmatpush2.bf16.msra.mxu0 0
        %691 = vmatprep.subr.bf16.mxu0 0
        %692 = vmatpush2.bf16.msra.mxu0 0
        %693 = vmatprep.subr.bf16.mxu0 0
        %694 = vmatpush2.bf16.msra.mxu0 0
        %695 = vmatprep.subr.bf16.mxu0 0
        %696 = vmatpush2.bf16.msra.mxu0 0
        %697 = vmatprep.subr.bf16.mxu0 0
        %698 = vmatpush2.bf16.msra.mxu0 0
        %699 = vmatprep.subr.bf16.mxu0 0
        %700 = vmatpush2.bf16.msra.mxu0 0
        %701 = vmatprep.subr.bf16.mxu0 0
        %702 = vmatpush2.bf16.msra.mxu0 0
        %703 = vmatprep.subr.bf16.mxu0 0
        %704 = vmatpush2.bf16.msra.mxu0 0
        %705 = vmatprep.mubr.bf16.mxu0 0
        %706 = vmatmul.mubr.bf16.gmra.mxu0 %v603
        %v707 = vpop.f32.mrf.mxu0
        %v708 = vadd.f32 0.0, %v707
        %v709 = vpop.f32.mrf.mxu0
        %v710 = vadd.f32 0.0, %v709
        %v711 = vpop.f32.mrf.mxu0
        %v712 = vadd.f32 0.0, %v711
        %v713 = vpop.f32.mrf.mxu0
        %v714 = vadd.f32 0.0, %v713
        %715 = vmatprep.mubr.bf16.mxu0 0
        %716 = vmatmul.mubr.bf16.gmra.mxu0 %v606
        %v717 = vpop.f32.mrf.mxu0
        %v718 = vadd.f32 0.0, %v717
        %v719 = vpop.f32.mrf.mxu0
        %v720 = vadd.f32 0.0, %v719
        %v721 = vpop.f32.mrf.mxu0
        %v722 = vadd.f32 0.0, %v721
        %v723 = vpop.f32.mrf.mxu0
        %v724 = vadd.f32 0.0, %v723
        %725 = vdwg.mxu0
        %v726 = vadd.f32 %v480, %v655
        %v727 = vadd.f32 %v482, %v657
        %v728 = vadd.f32 %v533, %v708
        %v729 = vadd.f32 %v535, %v710
        %v730 = vadd.f32 %v484, %v659
        %v731 = vadd.f32 %v486, %v661
        %v732 = vadd.f32 %v537, %v712
        %v733 = vadd.f32 %v539, %v714
        %v734 = vadd.f32 %v490, %v665
        %v735 = vadd.f32 %v492, %v667
        %v736 = vadd.f32 %v543, %v718
        %v737 = vadd.f32 %v545, %v720
        %v738 = vadd.f32 %v494, %v669
        %v739 = vadd.f32 %v496, %v671
        %v740 = vadd.f32 %v547, %v722
        %v741 = vadd.f32 %v549, %v724
        %s742 = scalar_lea.vmem [#allocation2], 192
        %v743 = vld [vmem:[%s742] sm:$0xff]
        %v744 = vld [vmem:[%s742 + $0x8] sm:$0xff]
        %v745 = vld [vmem:[%s742 + $0x10] sm:$0xff]
        %v746 = vld [vmem:[%s742 + $0x18] sm:$0xff]
        %v747 = vld [vmem:[%s742 + $0x20] sm:$0xff]
        %v748 = vld [vmem:[%s742 + $0x28] sm:$0xff]
        %v749 = vld [vmem:[%s742 + $0x30] sm:$0x77]
        %v750 = vld [vmem:[%s742 + $0x38] sm:$0x77]
        %s751 = scalar_lea.vmem [#allocation2], 256
        %v752 = vld [vmem:[%s751] sm:$0xff]
        %v753 = vld [vmem:[%s751 + $0x8] sm:$0xff]
        %v754 = vld [vmem:[%s751 + $0x10] sm:$0xff]
        %v755 = vld [vmem:[%s751 + $0x18] sm:$0xff]
        %v756 = vld [vmem:[%s751 + $0x20] sm:$0xff]
        %v757 = vld [vmem:[%s751 + $0x28] sm:$0xff]
        %v758 = vld [vmem:[%s751 + $0x30] sm:$0x77]
        %v759 = vld [vmem:[%s751 + $0x38] sm:$0x77]
        %v768 = vunpack.c.l.b16 %v752
        %v769 = vunpack.c.h.b16 %v752
        %v770 = vunpack.c.l.b16 %v753
        %v771 = vunpack.c.h.b16 %v753
        %v772 = vunpack.c.l.b16 %v754
        %v773 = vunpack.c.h.b16 %v754
        %v774 = vunpack.c.l.b16 %v755
        %v775 = vunpack.c.h.b16 %v755
        %v776 = vunpack.c.l.b16 %v756
        %v777 = vunpack.c.h.b16 %v756
        %v778 = vunpack.c.l.b16 %v757
        %v779 = vunpack.c.h.b16 %v757
        %v780 = vunpack.c.l.b16 %v758
        %v781 = vunpack.c.h.b16 %v758
        %v782 = vunpack.c.l.b16 %v759
        %v783 = vunpack.c.h.b16 %v759
        %v784 = vpack.c.b16 %v772, %v768
        %v785 = vpack.c.b16 %v773, %v769
        %v786 = vpack.c.b16 %v774, %v770
        %v787 = vpack.c.b16 %v775, %v771
        %v788 = vpack.c.b16 %v780, %v776
        %v789 = vpack.c.b16 %v781, %v777
        %v790 = vpack.c.b16 %v782, %v778
        %v791 = vpack.c.b16 %v783, %v779
        %v797 = vsel %vm272, %v788, 0
        %v800 = vsel %vm272, %v789, 0
        %v803 = vsel %vm272, %v790, 0
        %v806 = vsel %vm272, %v791, 0
        %808 = vmatprep.subr.bf16.mxu0 0
        %809 = vmatpush1.bf16.msra.mxu0 0
        %810 = vmatprep.subr.bf16.mxu0 0
        %811 = vmatpush1.bf16.msra.mxu0 0
        %812 = vmatprep.subr.bf16.mxu0 0
        %813 = vmatpush1.bf16.msra.mxu0 0
        %814 = vmatprep.subr.bf16.mxu0 0
        %815 = vmatpush1.bf16.msra.mxu0 0
        %816 = vmatprep.subr.bf16.mxu0 0
        %817 = vmatpush1.bf16.msra.mxu0 0
        %818 = vmatprep.subr.bf16.mxu0 0
        %819 = vmatpush1.bf16.msra.mxu0 0
        %820 = vmatprep.subr.bf16.mxu0 %v800
        %821 = vmatpush1.bf16.msra.mxu0 %v797
        %822 = vmatprep.subr.bf16.mxu0 %v785
        %823 = vmatpush1.bf16.msra.mxu0 %v784
        %824 = vmatprep.subr.bf16.mxu0 0
        %825 = vmatpush2.bf16.msra.mxu0 0
        %826 = vmatprep.subr.bf16.mxu0 0
        %827 = vmatpush2.bf16.msra.mxu0 0
        %828 = vmatprep.subr.bf16.mxu0 0
        %829 = vmatpush2.bf16.msra.mxu0 0
        %830 = vmatprep.subr.bf16.mxu0 0
        %831 = vmatpush2.bf16.msra.mxu0 0
        %832 = vmatprep.subr.bf16.mxu0 0
        %833 = vmatpush2.bf16.msra.mxu0 0
        %834 = vmatprep.subr.bf16.mxu0 0
        %835 = vmatpush2.bf16.msra.mxu0 0
        %836 = vmatprep.subr.bf16.mxu0 0
        %837 = vmatpush2.bf16.msra.mxu0 0
        %838 = vmatprep.subr.bf16.mxu0 0
        %839 = vmatpush2.bf16.msra.mxu0 0
        %840 = vmatprep.mubr.bf16.mxu0 0
        %841 = vmatmul.mubr.bf16.gmra.mxu0 %v267
        %v842 = vpop.f32.mrf.mxu0
        %v843 = vadd.f32 0.0, %v842
        %v844 = vpop.f32.mrf.mxu0
        %v845 = vadd.f32 0.0, %v844
        %v846 = vpop.f32.mrf.mxu0
        %v847 = vadd.f32 0.0, %v846
        %v848 = vpop.f32.mrf.mxu0
        %v849 = vadd.f32 0.0, %v848
        %850 = vmatprep.mubr.bf16.mxu0 0
        %851 = vmatmul.mubr.bf16.gmra.mxu0 %v270
        %v852 = vpop.f32.mrf.mxu0
        %v853 = vadd.f32 0.0, %v852
        %v854 = vpop.f32.mrf.mxu0
        %v855 = vadd.f32 0.0, %v854
        %v856 = vpop.f32.mrf.mxu0
        %v857 = vadd.f32 0.0, %v856
        %v858 = vpop.f32.mrf.mxu0
        %v859 = vadd.f32 0.0, %v858
        %860 = vdwg.mxu0
        %861 = vmatprep.subr.bf16.mxu0 0
        %862 = vmatpush1.bf16.msra.mxu0 0
        %863 = vmatprep.subr.bf16.mxu0 0
        %864 = vmatpush1.bf16.msra.mxu0 0
        %865 = vmatprep.subr.bf16.mxu0 0
        %866 = vmatpush1.bf16.msra.mxu0 0
        %867 = vmatprep.subr.bf16.mxu0 0
        %868 = vmatpush1.bf16.msra.mxu0 0
        %869 = vmatprep.subr.bf16.mxu0 0
        %870 = vmatpush1.bf16.msra.mxu0 0
        %871 = vmatprep.subr.bf16.mxu0 0
        %872 = vmatpush1.bf16.msra.mxu0 0
        %873 = vmatprep.subr.bf16.mxu0 %v806
        %874 = vmatpush1.bf16.msra.mxu0 %v803
        %875 = vmatprep.subr.bf16.mxu0 %v787
        %876 = vmatpush1.bf16.msra.mxu0 %v786
        %877 = vmatprep.subr.bf16.mxu0 0
        %878 = vmatpush2.bf16.msra.mxu0 0
        %879 = vmatprep.subr.bf16.mxu0 0
        %880 = vmatpush2.bf16.msra.mxu0 0
        %881 = vmatprep.subr.bf16.mxu0 0
        %882 = vmatpush2.bf16.msra.mxu0 0
        %883 = vmatprep.subr.bf16.mxu0 0
        %884 = vmatpush2.bf16.msra.mxu0 0
        %885 = vmatprep.subr.bf16.mxu0 0
        %886 = vmatpush2.bf16.msra.mxu0 0
        %887 = vmatprep.subr.bf16.mxu0 0
        %888 = vmatpush2.bf16.msra.mxu0 0
        %889 = vmatprep.subr.bf16.mxu0 0
        %890 = vmatpush2.bf16.msra.mxu0 0
        %891 = vmatprep.subr.bf16.mxu0 0
        %892 = vmatpush2.bf16.msra.mxu0 0
        %893 = vmatprep.mubr.bf16.mxu0 0
        %894 = vmatmul.mubr.bf16.gmra.mxu0 %v267
        %v895 = vpop.f32.mrf.mxu0
        %v896 = vadd.f32 0.0, %v895
        %v897 = vpop.f32.mrf.mxu0
        %v898 = vadd.f32 0.0, %v897
        %v899 = vpop.f32.mrf.mxu0
        %v900 = vadd.f32 0.0, %v899
        %v901 = vpop.f32.mrf.mxu0
        %v902 = vadd.f32 0.0, %v901
        %903 = vmatprep.mubr.bf16.mxu0 0
        %904 = vmatmul.mubr.bf16.gmra.mxu0 %v270
        %v905 = vpop.f32.mrf.mxu0
        %v906 = vadd.f32 0.0, %v905
        %v907 = vpop.f32.mrf.mxu0
        %v908 = vadd.f32 0.0, %v907
        %v909 = vpop.f32.mrf.mxu0
        %v910 = vadd.f32 0.0, %v909
        %v911 = vpop.f32.mrf.mxu0
        %v912 = vadd.f32 0.0, %v911
        %913 = vdwg.mxu0
        %v922 = vunpack.c.l.b16 %v743
        %v923 = vunpack.c.h.b16 %v743
        %v924 = vunpack.c.l.b16 %v744
        %v925 = vunpack.c.h.b16 %v744
        %v926 = vunpack.c.l.b16 %v745
        %v927 = vunpack.c.h.b16 %v745
        %v928 = vunpack.c.l.b16 %v746
        %v929 = vunpack.c.h.b16 %v746
        %v930 = vunpack.c.l.b16 %v747
        %v931 = vunpack.c.h.b16 %v747
        %v932 = vunpack.c.l.b16 %v748
        %v933 = vunpack.c.h.b16 %v748
        %v934 = vunpack.c.l.b16 %v749
        %v935 = vunpack.c.h.b16 %v749
        %v936 = vunpack.c.l.b16 %v750
        %v937 = vunpack.c.h.b16 %v750
        %v938 = vpack.c.b16 %v926, %v922
        %v939 = vpack.c.b16 %v927, %v923
        %v940 = vpack.c.b16 %v928, %v924
        %v941 = vpack.c.b16 %v929, %v925
        %v942 = vpack.c.b16 %v934, %v930
        %v943 = vpack.c.b16 %v935, %v931
        %v944 = vpack.c.b16 %v936, %v932
        %v945 = vpack.c.b16 %v937, %v933
        %v951 = vsel %vm272, %v942, 0
        %v954 = vsel %vm272, %v943, 0
        %v957 = vsel %vm272, %v944, 0
        %v960 = vsel %vm272, %v945, 0
        %962 = vmatprep.subr.bf16.mxu0 0
        %963 = vmatpush1.bf16.msra.mxu0 0
        %964 = vmatprep.subr.bf16.mxu0 0
        %965 = vmatpush1.bf16.msra.mxu0 0
        %966 = vmatprep.subr.bf16.mxu0 0
        %967 = vmatpush1.bf16.msra.mxu0 0
        %968 = vmatprep.subr.bf16.mxu0 0
        %969 = vmatpush1.bf16.msra.mxu0 0
        %970 = vmatprep.subr.bf16.mxu0 0
        %971 = vmatpush1.bf16.msra.mxu0 0
        %972 = vmatprep.subr.bf16.mxu0 0
        %973 = vmatpush1.bf16.msra.mxu0 0
        %974 = vmatprep.subr.bf16.mxu0 %v954
        %975 = vmatpush1.bf16.msra.mxu0 %v951
        %976 = vmatprep.subr.bf16.mxu0 %v939
        %977 = vmatpush1.bf16.msra.mxu0 %v938
        %978 = vmatprep.subr.bf16.mxu0 0
        %979 = vmatpush2.bf16.msra.mxu0 0
        %980 = vmatprep.subr.bf16.mxu0 0
        %981 = vmatpush2.bf16.msra.mxu0 0
        %982 = vmatprep.subr.bf16.mxu0 0
        %983 = vmatpush2.bf16.msra.mxu0 0
        %984 = vmatprep.subr.bf16.mxu0 0
        %985 = vmatpush2.bf16.msra.mxu0 0
        %986 = vmatprep.subr.bf16.mxu0 0
        %987 = vmatpush2.bf16.msra.mxu0 0
        %988 = vmatprep.subr.bf16.mxu0 0
        %989 = vmatpush2.bf16.msra.mxu0 0
        %990 = vmatprep.subr.bf16.mxu0 0
        %991 = vmatpush2.bf16.msra.mxu0 0
        %992 = vmatprep.subr.bf16.mxu0 0
        %993 = vmatpush2.bf16.msra.mxu0 0
        %994 = vmatprep.mubr.bf16.mxu0 0
        %995 = vmatmul.mubr.bf16.gmra.mxu0 %v428
        %v996 = vpop.f32.mrf.mxu0
        %v997 = vadd.f32 %v843, %v996
        %v998 = vpop.f32.mrf.mxu0
        %v999 = vadd.f32 %v845, %v998
        %v1000 = vpop.f32.mrf.mxu0
        %v1001 = vadd.f32 %v847, %v1000
        %v1002 = vpop.f32.mrf.mxu0
        %v1003 = vadd.f32 %v849, %v1002
        %1004 = vmatprep.mubr.bf16.mxu0 0
        %1005 = vmatmul.mubr.bf16.gmra.mxu0 %v431
        %v1006 = vpop.f32.mrf.mxu0
        %v1007 = vadd.f32 %v853, %v1006
        %v1008 = vpop.f32.mrf.mxu0
        %v1009 = vadd.f32 %v855, %v1008
        %v1010 = vpop.f32.mrf.mxu0
        %v1011 = vadd.f32 %v857, %v1010
        %v1012 = vpop.f32.mrf.mxu0
        %v1013 = vadd.f32 %v859, %v1012
        %1014 = vdwg.mxu0
        %1015 = vmatprep.subr.bf16.mxu0 0
        %1016 = vmatpush1.bf16.msra.mxu0 0
        %1017 = vmatprep.subr.bf16.mxu0 0
        %1018 = vmatpush1.bf16.msra.mxu0 0
        %1019 = vmatprep.subr.bf16.mxu0 0
        %1020 = vmatpush1.bf16.msra.mxu0 0
        %1021 = vmatprep.subr.bf16.mxu0 0
        %1022 = vmatpush1.bf16.msra.mxu0 0
        %1023 = vmatprep.subr.bf16.mxu0 0
        %1024 = vmatpush1.bf16.msra.mxu0 0
        %1025 = vmatprep.subr.bf16.mxu0 0
        %1026 = vmatpush1.bf16.msra.mxu0 0
        %1027 = vmatprep.subr.bf16.mxu0 %v960
        %1028 = vmatpush1.bf16.msra.mxu0 %v957
        %1029 = vmatprep.subr.bf16.mxu0 %v941
        %1030 = vmatpush1.bf16.msra.mxu0 %v940
        %1031 = vmatprep.subr.bf16.mxu0 0
        %1032 = vmatpush2.bf16.msra.mxu0 0
        %1033 = vmatprep.subr.bf16.mxu0 0
        %1034 = vmatpush2.bf16.msra.mxu0 0
        %1035 = vmatprep.subr.bf16.mxu0 0
        %1036 = vmatpush2.bf16.msra.mxu0 0
        %1037 = vmatprep.subr.bf16.mxu0 0
        %1038 = vmatpush2.bf16.msra.mxu0 0
        %1039 = vmatprep.subr.bf16.mxu0 0
        %1040 = vmatpush2.bf16.msra.mxu0 0
        %1041 = vmatprep.subr.bf16.mxu0 0
        %1042 = vmatpush2.bf16.msra.mxu0 0
        %1043 = vmatprep.subr.bf16.mxu0 0
        %1044 = vmatpush2.bf16.msra.mxu0 0
        %1045 = vmatprep.subr.bf16.mxu0 0
        %1046 = vmatpush2.bf16.msra.mxu0 0
        %1047 = vmatprep.mubr.bf16.mxu0 0
        %1048 = vmatmul.mubr.bf16.gmra.mxu0 %v428
        %v1049 = vpop.f32.mrf.mxu0
        %v1050 = vadd.f32 %v896, %v1049
        %v1051 = vpop.f32.mrf.mxu0
        %v1052 = vadd.f32 %v898, %v1051
        %v1053 = vpop.f32.mrf.mxu0
        %v1054 = vadd.f32 %v900, %v1053
        %v1055 = vpop.f32.mrf.mxu0
        %v1056 = vadd.f32 %v902, %v1055
        %1057 = vmatprep.mubr.bf16.mxu0 0
        %1058 = vmatmul.mubr.bf16.gmra.mxu0 %v431
        %v1059 = vpop.f32.mrf.mxu0
        %v1060 = vadd.f32 %v906, %v1059
        %v1061 = vpop.f32.mrf.mxu0
        %v1062 = vadd.f32 %v908, %v1061
        %v1063 = vpop.f32.mrf.mxu0
        %v1064 = vadd.f32 %v910, %v1063
        %v1065 = vpop.f32.mrf.mxu0
        %v1066 = vadd.f32 %v912, %v1065
        %1067 = vdwg.mxu0
        %s1068 = scalar_lea.vmem [#allocation2], 320
        %v1069 = vld [vmem:[%s1068] sm:$0xff]
        %v1070 = vld [vmem:[%s1068 + $0x8] sm:$0xff]
        %v1071 = vld [vmem:[%s1068 + $0x10] sm:$0xff]
        %v1072 = vld [vmem:[%s1068 + $0x18] sm:$0xff]
        %v1073 = vld [vmem:[%s1068 + $0x20] sm:$0xff]
        %v1074 = vld [vmem:[%s1068 + $0x28] sm:$0xff]
        %v1075 = vld [vmem:[%s1068 + $0x30] sm:$0x77]
        %v1076 = vld [vmem:[%s1068 + $0x38] sm:$0x77]
        %v1085 = vunpack.c.l.b16 %v1069
        %v1086 = vunpack.c.h.b16 %v1069
        %v1087 = vunpack.c.l.b16 %v1070
        %v1088 = vunpack.c.h.b16 %v1070
        %v1089 = vunpack.c.l.b16 %v1071
        %v1090 = vunpack.c.h.b16 %v1071
        %v1091 = vunpack.c.l.b16 %v1072
        %v1092 = vunpack.c.h.b16 %v1072
        %v1093 = vunpack.c.l.b16 %v1073
        %v1094 = vunpack.c.h.b16 %v1073
        %v1095 = vunpack.c.l.b16 %v1074
        %v1096 = vunpack.c.h.b16 %v1074
        %v1097 = vunpack.c.l.b16 %v1075
        %v1098 = vunpack.c.h.b16 %v1075
        %v1099 = vunpack.c.l.b16 %v1076
        %v1100 = vunpack.c.h.b16 %v1076
        %v1101 = vpack.c.b16 %v1089, %v1085
        %v1102 = vpack.c.b16 %v1090, %v1086
        %v1103 = vpack.c.b16 %v1091, %v1087
        %v1104 = vpack.c.b16 %v1092, %v1088
        %v1105 = vpack.c.b16 %v1097, %v1093
        %v1106 = vpack.c.b16 %v1098, %v1094
        %v1107 = vpack.c.b16 %v1099, %v1095
        %v1108 = vpack.c.b16 %v1100, %v1096
        %v1114 = vsel %vm272, %v1105, 0
        %v1117 = vsel %vm272, %v1106, 0
        %v1120 = vsel %vm272, %v1107, 0
        %v1123 = vsel %vm272, %v1108, 0
        %1125 = vmatprep.subr.bf16.mxu0 0
        %1126 = vmatpush1.bf16.msra.mxu0 0
        %1127 = vmatprep.subr.bf16.mxu0 0
        %1128 = vmatpush1.bf16.msra.mxu0 0
        %1129 = vmatprep.subr.bf16.mxu0 0
        %1130 = vmatpush1.bf16.msra.mxu0 0
        %1131 = vmatprep.subr.bf16.mxu0 0
        %1132 = vmatpush1.bf16.msra.mxu0 0
        %1133 = vmatprep.subr.bf16.mxu0 0
        %1134 = vmatpush1.bf16.msra.mxu0 0
        %1135 = vmatprep.subr.bf16.mxu0 0
        %1136 = vmatpush1.bf16.msra.mxu0 0
        %1137 = vmatprep.subr.bf16.mxu0 %v1117
        %1138 = vmatpush1.bf16.msra.mxu0 %v1114
        %1139 = vmatprep.subr.bf16.mxu0 %v1102
        %1140 = vmatpush1.bf16.msra.mxu0 %v1101
        %1141 = vmatprep.subr.bf16.mxu0 0
        %1142 = vmatpush2.bf16.msra.mxu0 0
        %1143 = vmatprep.subr.bf16.mxu0 0
        %1144 = vmatpush2.bf16.msra.mxu0 0
        %1145 = vmatprep.subr.bf16.mxu0 0
        %1146 = vmatpush2.bf16.msra.mxu0 0
        %1147 = vmatprep.subr.bf16.mxu0 0
        %1148 = vmatpush2.bf16.msra.mxu0 0
        %1149 = vmatprep.subr.bf16.mxu0 0
        %1150 = vmatpush2.bf16.msra.mxu0 0
        %1151 = vmatprep.subr.bf16.mxu0 0
        %1152 = vmatpush2.bf16.msra.mxu0 0
        %1153 = vmatprep.subr.bf16.mxu0 0
        %1154 = vmatpush2.bf16.msra.mxu0 0
        %1155 = vmatprep.subr.bf16.mxu0 0
        %1156 = vmatpush2.bf16.msra.mxu0 0
        %1157 = vmatprep.mubr.bf16.mxu0 0
        %1158 = vmatmul.mubr.bf16.gmra.mxu0 %v603
        %v1159 = vpop.f32.mrf.mxu0
        %v1160 = vadd.f32 0.0, %v1159
        %v1161 = vpop.f32.mrf.mxu0
        %v1162 = vadd.f32 0.0, %v1161
        %v1163 = vpop.f32.mrf.mxu0
        %v1164 = vadd.f32 0.0, %v1163
        %v1165 = vpop.f32.mrf.mxu0
        %v1166 = vadd.f32 0.0, %v1165
        %1167 = vmatprep.mubr.bf16.mxu0 0
        %1168 = vmatmul.mubr.bf16.gmra.mxu0 %v606
        %v1169 = vpop.f32.mrf.mxu0
        %v1170 = vadd.f32 0.0, %v1169
        %v1171 = vpop.f32.mrf.mxu0
        %v1172 = vadd.f32 0.0, %v1171
        %v1173 = vpop.f32.mrf.mxu0
        %v1174 = vadd.f32 0.0, %v1173
        %v1175 = vpop.f32.mrf.mxu0
        %v1176 = vadd.f32 0.0, %v1175
        %1177 = vdwg.mxu0
        %1178 = vmatprep.subr.bf16.mxu0 0
        %1179 = vmatpush1.bf16.msra.mxu0 0
        %1180 = vmatprep.subr.bf16.mxu0 0
        %1181 = vmatpush1.bf16.msra.mxu0 0
        %1182 = vmatprep.subr.bf16.mxu0 0
        %1183 = vmatpush1.bf16.msra.mxu0 0
        %1184 = vmatprep.subr.bf16.mxu0 0
        %1185 = vmatpush1.bf16.msra.mxu0 0
        %1186 = vmatprep.subr.bf16.mxu0 0
        %1187 = vmatpush1.bf16.msra.mxu0 0
        %1188 = vmatprep.subr.bf16.mxu0 0
        %1189 = vmatpush1.bf16.msra.mxu0 0
        %1190 = vmatprep.subr.bf16.mxu0 %v1123
        %1191 = vmatpush1.bf16.msra.mxu0 %v1120
        %1192 = vmatprep.subr.bf16.mxu0 %v1104
        %1193 = vmatpush1.bf16.msra.mxu0 %v1103
        %1194 = vmatprep.subr.bf16.mxu0 0
        %1195 = vmatpush2.bf16.msra.mxu0 0
        %1196 = vmatprep.subr.bf16.mxu0 0
        %1197 = vmatpush2.bf16.msra.mxu0 0
        %1198 = vmatprep.subr.bf16.mxu0 0
        %1199 = vmatpush2.bf16.msra.mxu0 0
        %1200 = vmatprep.subr.bf16.mxu0 0
        %1201 = vmatpush2.bf16.msra.mxu0 0
        %1202 = vmatprep.subr.bf16.mxu0 0
        %1203 = vmatpush2.bf16.msra.mxu0 0
        %1204 = vmatprep.subr.bf16.mxu0 0
        %1205 = vmatpush2.bf16.msra.mxu0 0
        %1206 = vmatprep.subr.bf16.mxu0 0
        %1207 = vmatpush2.bf16.msra.mxu0 0
        %1208 = vmatprep.subr.bf16.mxu0 0
        %1209 = vmatpush2.bf16.msra.mxu0 0
        %1210 = vmatprep.mubr.bf16.mxu0 0
        %1211 = vmatmul.mubr.bf16.gmra.mxu0 %v603
        %v1212 = vpop.f32.mrf.mxu0
        %v1213 = vadd.f32 0.0, %v1212
        %v1214 = vpop.f32.mrf.mxu0
        %v1215 = vadd.f32 0.0, %v1214
        %v1216 = vpop.f32.mrf.mxu0
        %v1217 = vadd.f32 0.0, %v1216
        %v1218 = vpop.f32.mrf.mxu0
        %v1219 = vadd.f32 0.0, %v1218
        %1220 = vmatprep.mubr.bf16.mxu0 0
        %1221 = vmatmul.mubr.bf16.gmra.mxu0 %v606
        %v1222 = vpop.f32.mrf.mxu0
        %v1223 = vadd.f32 0.0, %v1222
        %v1224 = vpop.f32.mrf.mxu0
        %v1225 = vadd.f32 0.0, %v1224
        %v1226 = vpop.f32.mrf.mxu0
        %v1227 = vadd.f32 0.0, %v1226
        %v1228 = vpop.f32.mrf.mxu0
        %v1229 = vadd.f32 0.0, %v1228
        %1230 = vdwg.mxu0
        %v1231 = vadd.f32 %v997, %v1160
        %v1232 = vadd.f32 %v999, %v1162
        %v1233 = vadd.f32 %v1050, %v1213
        %v1234 = vadd.f32 %v1052, %v1215
        %v1235 = vadd.f32 %v1001, %v1164
        %v1236 = vadd.f32 %v1003, %v1166
        %v1237 = vadd.f32 %v1054, %v1217
        %v1238 = vadd.f32 %v1056, %v1219
        %v1239 = vadd.f32 %v1007, %v1170
        %v1240 = vadd.f32 %v1009, %v1172
        %v1241 = vadd.f32 %v1060, %v1223
        %v1242 = vadd.f32 %v1062, %v1225
        %v1243 = vadd.f32 %v1011, %v1174
        %v1244 = vadd.f32 %v1013, %v1176
        %v1245 = vadd.f32 %v1064, %v1227
        %v1246 = vadd.f32 %v1066, %v1229
        %v1247 = vmax.f32 %v726, %v1231
        %v1248 = vmax.f32 %v727, %v1232
        %v1249 = vmax.f32 %v728, %v1233
        %v1250 = vmax.f32 %v729, %v1234
        %v1251 = vmax.f32 %v730, %v1235
        %v1252 = vmax.f32 %v731, %v1236
        %v1253 = vmax.f32 %v732, %v1237
        %v1254 = vmax.f32 %v733, %v1238
        %v1255 = vmax.f32 %v734, %v1239
        %v1256 = vmax.f32 %v735, %v1240
        %v1257 = vmax.f32 %v736, %v1241
        %v1258 = vmax.f32 %v737, %v1242
        %v1259 = vmax.f32 %v738, %v1243
        %v1260 = vmax.f32 %v739, %v1244
        %v1261 = vmax.f32 %v740, %v1245
        %v1262 = vmax.f32 %v741, %v1246
        %v1263 = vld [vmem:[#allocation4] sm:$0xf]
        %v1265 = vlaneseq
        %v1266 = vshrl.u32 %v1265, 7
        %v1267 = vsub.s32 0, %v1266
        %v1268 = vrot.slane %v1263, %v1267
        %v1269 = vlaneseq
        %v1270 = vshrl.u32 %v1269, 7
        %v1271 = vsub.s32 1, %v1270
        %v1272 = vrot.slane %v1263, %v1271
        %v1273 = vlaneseq
        %v1274 = vshrl.u32 %v1273, 7
        %v1275 = vsub.s32 2, %v1274
        %v1276 = vrot.slane %v1263, %v1275
        %v1277 = vlaneseq
        %v1278 = vshrl.u32 %v1277, 7
        %v1279 = vsub.s32 3, %v1278
        %v1280 = vrot.slane %v1263, %v1279
        %v1285 = vadd.f32 %v1247, %v1268
        %v1286 = vadd.f32 %v1248, %v1272
        %v1287 = vadd.f32 %v1249, %v1276
        %v1288 = vadd.f32 %v1250, %v1280
        %v1289 = vadd.f32 %v1251, %v1268
        %v1290 = vadd.f32 %v1252, %v1272
        %v1291 = vadd.f32 %v1253, %v1276
        %v1292 = vadd.f32 %v1254, %v1280
        %v1293 = vadd.f32 %v1255, %v1268
        %v1294 = vadd.f32 %v1256, %v1272
        %v1295 = vadd.f32 %v1257, %v1276
        %v1296 = vadd.f32 %v1258, %v1280
        %v1297 = vadd.f32 %v1259, %v1268
        %v1298 = vadd.f32 %v1260, %v1272
        %v1299 = vadd.f32 %v1261, %v1276
        %v1300 = vadd.f32 %v1262, %v1280
        %v1301 = vmax.f32 %v1285, 0.0
        %v1302 = vmax.f32 %v1286, 0.0
        %v1303 = vmax.f32 %v1287, 0.0
        %v1304 = vmax.f32 %v1288, 0.0
        %v1305 = vmax.f32 %v1289, 0.0
        %v1306 = vmax.f32 %v1290, 0.0
        %v1307 = vmax.f32 %v1291, 0.0
        %v1308 = vmax.f32 %v1292, 0.0
        %v1309 = vmax.f32 %v1293, 0.0
        %v1310 = vmax.f32 %v1294, 0.0
        %v1311 = vmax.f32 %v1295, 0.0
        %v1312 = vmax.f32 %v1296, 0.0
        %v1313 = vmax.f32 %v1297, 0.0
        %v1314 = vmax.f32 %v1298, 0.0
        %v1315 = vmax.f32 %v1299, 0.0
        %v1316 = vmax.f32 %v1300, 0.0
        %v1317 = vlaneseq
        %v1318 = vshrl.u32 %v1317, 7
        %v1319 = vadd.s32 %v1318, 8
        %v1320 = vlaneseq
        %v1321 = vand.u32 %v1320, 127
        %vm1322 = vcmp.ge.s32.totalorder %v1318, 1
        %vm1323 = vcmp.ge.s32.totalorder %v1319, 1
        %vm1324 = vcmp.lt.s32.totalorder %v1318, 15
        %vm1325 = vcmp.lt.s32.totalorder %v1319, 15
        %vm1326 = vmand %vm1322, %vm1324
        %vm1327 = vmand %vm1323, %vm1325
        %v1328 = vsub.s32 %v1318, 1
        %v1329 = vsub.s32 %v1319, 1
        %v1330 = vmul.u32 %v1328, 2
        %v1331 = vmul.u32 %v1329, 2
        %vm1332 = vcmp.eq.s32.totalorder %v1321, %v1330
        %vm1333 = vcmp.eq.s32.totalorder %v1321, %v1331
        %vm1334 = vmand %vm1326, %vm1332
        %vm1335 = vmand %vm1327, %vm1333
        %v1336 = vsel %vm1334, 1, 0
        %v1337 = vsel %vm1335, 1, 0
        %v1338 = vcvt.s32.f32 %v1336
        %v1339 = vcvt.s32.f32 %v1337
        %v1340 = vadd.s32 %v1330, 1
        %v1341 = vadd.s32 %v1331, 1
        %vm1342 = vcmp.eq.s32.totalorder %v1321, %v1340
        %vm1343 = vcmp.eq.s32.totalorder %v1321, %v1341
        %vm1344 = vmand %vm1326, %vm1342
        %vm1345 = vmand %vm1327, %vm1343
        %v1346 = vsel %vm1344, 1, 0
        %v1347 = vsel %vm1345, 1, 0
        %v1348 = vcvt.s32.f32 %v1346
        %v1349 = vcvt.s32.f32 %v1347
        %vm1350 = vcmask 228352
        %v1352 = vsel %vm1350, %v1338, 0
        %v1355 = vsel %vm1350, %v1339, 0
        %vm1357 = vcmask 1043456
        %v1359 = vsel %vm1357, %v1313, 0
        %v1362 = vsel %vm1357, %v1314, 0
        %v1365 = vsel %vm1357, %v1315, 0
        %v1368 = vsel %vm1357, %v1316, 0
        %1370 = vmatprep.subr.mxu0 0.0
        %1371 = vmatpush1.msra.mxu0 0.0
        %1372 = vmatprep.subr.mxu0 0.0
        %1373 = vmatpush1.msra.mxu0 0.0
        %1374 = vmatprep.subr.mxu0 0.0
        %1375 = vmatpush1.msra.mxu0 0.0
        %1376 = vmatprep.subr.mxu0 0.0
        %1377 = vmatpush1.msra.mxu0 0.0
        %1378 = vmatprep.subr.mxu0 0.0
        %1379 = vmatpush1.msra.mxu0 0.0
        %1380 = vmatprep.subr.mxu0 0.0
        %1381 = vmatpush1.msra.mxu0 0.0
        %1382 = vmatprep.subr.mxu0 0.0
        %1383 = vmatpush1.msra.mxu0 0.0
        %1384 = vmatprep.subr.mxu0 0.0
        %1385 = vmatpush1.msra.mxu0 0.0
        %1386 = vmatprep.subr.mxu0 0.0
        %1387 = vmatpush1.msra.mxu0 0.0
        %1388 = vmatprep.subr.mxu0 0.0
        %1389 = vmatpush1.msra.mxu0 0.0
        %1390 = vmatprep.subr.mxu0 0.0
        %1391 = vmatpush1.msra.mxu0 0.0
        %1392 = vmatprep.subr.mxu0 0.0
        %1393 = vmatpush1.msra.mxu0 0.0
        %1394 = vmatprep.subr.mxu0 %v1362
        %1395 = vmatpush1.msra.mxu0 %v1359
        %1396 = vmatprep.subr.mxu0 %v1310
        %1397 = vmatpush1.msra.mxu0 %v1309
        %1398 = vmatprep.subr.mxu0 %v1306
        %1399 = vmatpush1.msra.mxu0 %v1305
        %1400 = vmatprep.subr.mxu0 %v1302
        %1401 = vmatpush1.msra.mxu0 %v1301
        %1402 = vmatprep.subr.mxu0 0.0
        %1403 = vmatpush2.msra.mxu0 0.0
        %1404 = vmatprep.subr.mxu0 0.0
        %1405 = vmatpush2.msra.mxu0 0.0
        %1406 = vmatprep.subr.mxu0 0.0
        %1407 = vmatpush2.msra.mxu0 0.0
        %1408 = vmatprep.subr.mxu0 0.0
        %1409 = vmatpush2.msra.mxu0 0.0
        %1410 = vmatprep.subr.mxu0 0.0
        %1411 = vmatpush2.msra.mxu0 0.0
        %1412 = vmatprep.subr.mxu0 0.0
        %1413 = vmatpush2.msra.mxu0 0.0
        %1414 = vmatprep.subr.mxu0 0.0
        %1415 = vmatpush2.msra.mxu0 0.0
        %1416 = vmatprep.subr.mxu0 0.0
        %1417 = vmatpush2.msra.mxu0 0.0
        %1418 = vmatprep.subr.mxu0 0.0
        %1419 = vmatpush2.msra.mxu0 0.0
        %1420 = vmatprep.subr.mxu0 0.0
        %1421 = vmatpush2.msra.mxu0 0.0
        %1422 = vmatprep.subr.mxu0 0.0
        %1423 = vmatpush2.msra.mxu0 0.0
        %1424 = vmatprep.subr.mxu0 0.0
        %1425 = vmatpush2.msra.mxu0 0.0
        %1426 = vmatprep.subr.mxu0 0.0
        %1427 = vmatpush2.msra.mxu0 0.0
        %1428 = vmatprep.subr.mxu0 0.0
        %1429 = vmatpush2.msra.mxu0 0.0
        %1430 = vmatprep.subr.mxu0 0.0
        %1431 = vmatpush2.msra.mxu0 0.0
        %1432 = vmatprep.subr.mxu0 0.0
        %1433 = vmatpush2.msra.mxu0 0.0
        %1434 = vmatprep.mubr.f32.mxu0 0.0
        %1435 = vmatmul.mubr.f32.gmra.mxu0 %v1352
        %v1436 = vpop.f32.mrf.mxu0
        %v1437 = vadd.f32 0.0, %v1436
        %v1438 = vpop.f32.mrf.mxu0
        %v1439 = vadd.f32 0.0, %v1438
        %1440 = vmatprep.mubr.f32.mxu0 0.0
        %1441 = vmatmul.mubr.f32.gmra.mxu0 %v1355
        %v1442 = vpop.f32.mrf.mxu0
        %v1443 = vadd.f32 0.0, %v1442
        %v1444 = vpop.f32.mrf.mxu0
        %v1445 = vadd.f32 0.0, %v1444
        %1446 = vdwg.mxu0
        %1447 = vmatprep.subr.mxu0 0.0
        %1448 = vmatpush1.msra.mxu0 0.0
        %1449 = vmatprep.subr.mxu0 0.0
        %1450 = vmatpush1.msra.mxu0 0.0
        %1451 = vmatprep.subr.mxu0 0.0
        %1452 = vmatpush1.msra.mxu0 0.0
        %1453 = vmatprep.subr.mxu0 0.0
        %1454 = vmatpush1.msra.mxu0 0.0
        %1455 = vmatprep.subr.mxu0 0.0
        %1456 = vmatpush1.msra.mxu0 0.0
        %1457 = vmatprep.subr.mxu0 0.0
        %1458 = vmatpush1.msra.mxu0 0.0
        %1459 = vmatprep.subr.mxu0 0.0
        %1460 = vmatpush1.msra.mxu0 0.0
        %1461 = vmatprep.subr.mxu0 0.0
        %1462 = vmatpush1.msra.mxu0 0.0
        %1463 = vmatprep.subr.mxu0 0.0
        %1464 = vmatpush1.msra.mxu0 0.0
        %1465 = vmatprep.subr.mxu0 0.0
        %1466 = vmatpush1.msra.mxu0 0.0
        %1467 = vmatprep.subr.mxu0 0.0
        %1468 = vmatpush1.msra.mxu0 0.0
        %1469 = vmatprep.subr.mxu0 0.0
        %1470 = vmatpush1.msra.mxu0 0.0
        %1471 = vmatprep.subr.mxu0 %v1368
        %1472 = vmatpush1.msra.mxu0 %v1365
        %1473 = vmatprep.subr.mxu0 %v1312
        %1474 = vmatpush1.msra.mxu0 %v1311
        %1475 = vmatprep.subr.mxu0 %v1308
        %1476 = vmatpush1.msra.mxu0 %v1307
        %1477 = vmatprep.subr.mxu0 %v1304
        %1478 = vmatpush1.msra.mxu0 %v1303
        %1479 = vmatprep.subr.mxu0 0.0
        %1480 = vmatpush2.msra.mxu0 0.0
        %1481 = vmatprep.subr.mxu0 0.0
        %1482 = vmatpush2.msra.mxu0 0.0
        %1483 = vmatprep.subr.mxu0 0.0
        %1484 = vmatpush2.msra.mxu0 0.0
        %1485 = vmatprep.subr.mxu0 0.0
        %1486 = vmatpush2.msra.mxu0 0.0
        %1487 = vmatprep.subr.mxu0 0.0
        %1488 = vmatpush2.msra.mxu0 0.0
        %1489 = vmatprep.subr.mxu0 0.0
        %1490 = vmatpush2.msra.mxu0 0.0
        %1491 = vmatprep.subr.mxu0 0.0
        %1492 = vmatpush2.msra.mxu0 0.0
        %1493 = vmatprep.subr.mxu0 0.0
        %1494 = vmatpush2.msra.mxu0 0.0
        %1495 = vmatprep.subr.mxu0 0.0
        %1496 = vmatpush2.msra.mxu0 0.0
        %1497 = vmatprep.subr.mxu0 0.0
        %1498 = vmatpush2.msra.mxu0 0.0
        %1499 = vmatprep.subr.mxu0 0.0
        %1500 = vmatpush2.msra.mxu0 0.0
        %1501 = vmatprep.subr.mxu0 0.0
        %1502 = vmatpush2.msra.mxu0 0.0
        %1503 = vmatprep.subr.mxu0 0.0
        %1504 = vmatpush2.msra.mxu0 0.0
        %1505 = vmatprep.subr.mxu0 0.0
        %1506 = vmatpush2.msra.mxu0 0.0
        %1507 = vmatprep.subr.mxu0 0.0
        %1508 = vmatpush2.msra.mxu0 0.0
        %1509 = vmatprep.subr.mxu0 0.0
        %1510 = vmatpush2.msra.mxu0 0.0
        %1511 = vmatprep.mubr.f32.mxu0 0.0
        %1512 = vmatmul.mubr.f32.gmra.mxu0 %v1352
        %v1513 = vpop.f32.mrf.mxu0
        %v1514 = vadd.f32 0.0, %v1513
        %v1515 = vpop.f32.mrf.mxu0
        %v1516 = vadd.f32 0.0, %v1515
        %1517 = vmatprep.mubr.f32.mxu0 0.0
        %1518 = vmatmul.mubr.f32.gmra.mxu0 %v1355
        %v1519 = vpop.f32.mrf.mxu0
        %v1520 = vadd.f32 0.0, %v1519
        %v1521 = vpop.f32.mrf.mxu0
        %v1522 = vadd.f32 0.0, %v1521
        %1523 = vdwg.mxu0
        %v1525 = vsel %vm1350, %v1348, 0
        %v1528 = vsel %vm1350, %v1349, 0
        %1530 = vmatprep.subr.mxu0 0.0
        %1531 = vmatpush1.msra.mxu0 0.0
        %1532 = vmatprep.subr.mxu0 0.0
        %1533 = vmatpush1.msra.mxu0 0.0
        %1534 = vmatprep.subr.mxu0 0.0
        %1535 = vmatpush1.msra.mxu0 0.0
        %1536 = vmatprep.subr.mxu0 0.0
        %1537 = vmatpush1.msra.mxu0 0.0
        %1538 = vmatprep.subr.mxu0 0.0
        %1539 = vmatpush1.msra.mxu0 0.0
        %1540 = vmatprep.subr.mxu0 0.0
        %1541 = vmatpush1.msra.mxu0 0.0
        %1542 = vmatprep.subr.mxu0 0.0
        %1543 = vmatpush1.msra.mxu0 0.0
        %1544 = vmatprep.subr.mxu0 0.0
        %1545 = vmatpush1.msra.mxu0 0.0
        %1546 = vmatprep.subr.mxu0 0.0
        %1547 = vmatpush1.msra.mxu0 0.0
        %1548 = vmatprep.subr.mxu0 0.0
        %1549 = vmatpush1.msra.mxu0 0.0
        %1550 = vmatprep.subr.mxu0 0.0
        %1551 = vmatpush1.msra.mxu0 0.0
        %1552 = vmatprep.subr.mxu0 0.0
        %1553 = vmatpush1.msra.mxu0 0.0
        %1554 = vmatprep.subr.mxu0 %v1362
        %1555 = vmatpush1.msra.mxu0 %v1359
        %1556 = vmatprep.subr.mxu0 %v1310
        %1557 = vmatpush1.msra.mxu0 %v1309
        %1558 = vmatprep.subr.mxu0 %v1306
        %1559 = vmatpush1.msra.mxu0 %v1305
        %1560 = vmatprep.subr.mxu0 %v1302
        %1561 = vmatpush1.msra.mxu0 %v1301
        %1562 = vmatprep.subr.mxu0 0.0
        %1563 = vmatpush2.msra.mxu0 0.0
        %1564 = vmatprep.subr.mxu0 0.0
        %1565 = vmatpush2.msra.mxu0 0.0
        %1566 = vmatprep.subr.mxu0 0.0
        %1567 = vmatpush2.msra.mxu0 0.0
        %1568 = vmatprep.subr.mxu0 0.0
        %1569 = vmatpush2.msra.mxu0 0.0
        %1570 = vmatprep.subr.mxu0 0.0
        %1571 = vmatpush2.msra.mxu0 0.0
        %1572 = vmatprep.subr.mxu0 0.0
        %1573 = vmatpush2.msra.mxu0 0.0
        %1574 = vmatprep.subr.mxu0 0.0
        %1575 = vmatpush2.msra.mxu0 0.0
        %1576 = vmatprep.subr.mxu0 0.0
        %1577 = vmatpush2.msra.mxu0 0.0
        %1578 = vmatprep.subr.mxu0 0.0
        %1579 = vmatpush2.msra.mxu0 0.0
        %1580 = vmatprep.subr.mxu0 0.0
        %1581 = vmatpush2.msra.mxu0 0.0
        %1582 = vmatprep.subr.mxu0 0.0
        %1583 = vmatpush2.msra.mxu0 0.0
        %1584 = vmatprep.subr.mxu0 0.0
        %1585 = vmatpush2.msra.mxu0 0.0
        %1586 = vmatprep.subr.mxu0 0.0
        %1587 = vmatpush2.msra.mxu0 0.0
        %1588 = vmatprep.subr.mxu0 0.0
        %1589 = vmatpush2.msra.mxu0 0.0
        %1590 = vmatprep.subr.mxu0 0.0
        %1591 = vmatpush2.msra.mxu0 0.0
        %1592 = vmatprep.subr.mxu0 0.0
        %1593 = vmatpush2.msra.mxu0 0.0
        %1594 = vmatprep.mubr.f32.mxu0 0.0
        %1595 = vmatmul.mubr.f32.gmra.mxu0 %v1525
        %v1596 = vpop.f32.mrf.mxu0
        %v1597 = vadd.f32 0.0, %v1596
        %v1598 = vpop.f32.mrf.mxu0
        %v1599 = vadd.f32 0.0, %v1598
        %1600 = vmatprep.mubr.f32.mxu0 0.0
        %1601 = vmatmul.mubr.f32.gmra.mxu0 %v1528
        %v1602 = vpop.f32.mrf.mxu0
        %v1603 = vadd.f32 0.0, %v1602
        %v1604 = vpop.f32.mrf.mxu0
        %v1605 = vadd.f32 0.0, %v1604
        %1606 = vdwg.mxu0
        %1607 = vmatprep.subr.mxu0 0.0
        %1608 = vmatpush1.msra.mxu0 0.0
        %1609 = vmatprep.subr.mxu0 0.0
        %1610 = vmatpush1.msra.mxu0 0.0
        %1611 = vmatprep.subr.mxu0 0.0
        %1612 = vmatpush1.msra.mxu0 0.0
        %1613 = vmatprep.subr.mxu0 0.0
        %1614 = vmatpush1.msra.mxu0 0.0
        %1615 = vmatprep.subr.mxu0 0.0
        %1616 = vmatpush1.msra.mxu0 0.0
        %1617 = vmatprep.subr.mxu0 0.0
        %1618 = vmatpush1.msra.mxu0 0.0
        %1619 = vmatprep.subr.mxu0 0.0
        %1620 = vmatpush1.msra.mxu0 0.0
        %1621 = vmatprep.subr.mxu0 0.0
        %1622 = vmatpush1.msra.mxu0 0.0
        %1623 = vmatprep.subr.mxu0 0.0
        %1624 = vmatpush1.msra.mxu0 0.0
        %1625 = vmatprep.subr.mxu0 0.0
        %1626 = vmatpush1.msra.mxu0 0.0
        %1627 = vmatprep.subr.mxu0 0.0
        %1628 = vmatpush1.msra.mxu0 0.0
        %1629 = vmatprep.subr.mxu0 0.0
        %1630 = vmatpush1.msra.mxu0 0.0
        %1631 = vmatprep.subr.mxu0 %v1368
        %1632 = vmatpush1.msra.mxu0 %v1365
        %1633 = vmatprep.subr.mxu0 %v1312
        %1634 = vmatpush1.msra.mxu0 %v1311
        %1635 = vmatprep.subr.mxu0 %v1308
        %1636 = vmatpush1.msra.mxu0 %v1307
        %1637 = vmatprep.subr.mxu0 %v1304
        %1638 = vmatpush1.msra.mxu0 %v1303
        %1639 = vmatprep.subr.mxu0 0.0
        %1640 = vmatpush2.msra.mxu0 0.0
        %1641 = vmatprep.subr.mxu0 0.0
        %1642 = vmatpush2.msra.mxu0 0.0
        %1643 = vmatprep.subr.mxu0 0.0
        %1644 = vmatpush2.msra.mxu0 0.0
        %1645 = vmatprep.subr.mxu0 0.0
        %1646 = vmatpush2.msra.mxu0 0.0
        %1647 = vmatprep.subr.mxu0 0.0
        %1648 = vmatpush2.msra.mxu0 0.0
        %1649 = vmatprep.subr.mxu0 0.0
        %1650 = vmatpush2.msra.mxu0 0.0
        %1651 = vmatprep.subr.mxu0 0.0
        %1652 = vmatpush2.msra.mxu0 0.0
        %1653 = vmatprep.subr.mxu0 0.0
        %1654 = vmatpush2.msra.mxu0 0.0
        %1655 = vmatprep.subr.mxu0 0.0
        %1656 = vmatpush2.msra.mxu0 0.0
        %1657 = vmatprep.subr.mxu0 0.0
        %1658 = vmatpush2.msra.mxu0 0.0
        %1659 = vmatprep.subr.mxu0 0.0
        %1660 = vmatpush2.msra.mxu0 0.0
        %1661 = vmatprep.subr.mxu0 0.0
        %1662 = vmatpush2.msra.mxu0 0.0
        %1663 = vmatprep.subr.mxu0 0.0
        %1664 = vmatpush2.msra.mxu0 0.0
        %1665 = vmatprep.subr.mxu0 0.0
        %1666 = vmatpush2.msra.mxu0 0.0
        %1667 = vmatprep.subr.mxu0 0.0
        %1668 = vmatpush2.msra.mxu0 0.0
        %1669 = vmatprep.subr.mxu0 0.0
        %1670 = vmatpush2.msra.mxu0 0.0
        %1671 = vmatprep.mubr.f32.mxu0 0.0
        %1672 = vmatmul.mubr.f32.gmra.mxu0 %v1525
        %v1673 = vpop.f32.mrf.mxu0
        %v1674 = vadd.f32 0.0, %v1673
        %v1675 = vpop.f32.mrf.mxu0
        %v1676 = vadd.f32 0.0, %v1675
        %1677 = vmatprep.mubr.f32.mxu0 0.0
        %1678 = vmatmul.mubr.f32.gmra.mxu0 %v1528
        %v1679 = vpop.f32.mrf.mxu0
        %v1680 = vadd.f32 0.0, %v1679
        %v1681 = vpop.f32.mrf.mxu0
        %v1682 = vadd.f32 0.0, %v1681
        %1683 = vdwg.mxu0
        %v1684 = vmax.f32 %v1437, %v1597
        %v1685 = vmax.f32 %v1439, %v1599
        %v1686 = vmax.f32 %v1514, %v1674
        %v1687 = vmax.f32 %v1516, %v1676
        %v1688 = vmax.f32 %v1443, %v1603
        %v1689 = vmax.f32 %v1445, %v1605
        %v1690 = vmax.f32 %v1520, %v1680
        %v1691 = vmax.f32 %v1522, %v1682
        %1692 = vst [vmem:[%s198] sm:$0xff] %v1684
        %1693 = vst [vmem:[%s198 + $0x8] sm:$0xff] %v1685
        %1694 = vst [vmem:[%s198 + $0x10] sm:$0xff] %v1686
        %1695 = vst [vmem:[%s198 + $0x18] sm:$0xff] %v1687
        %1696 = vst [vmem:[%s198 + $0x20] sm:$0xff] %v1688
        %1697 = vst [vmem:[%s198 + $0x28] sm:$0xff] %v1689
        %1698 = vst [vmem:[%s198 + $0x30] sm:$0xff] %v1690
        %1699 = vst [vmem:[%s198 + $0x38] sm:$0xff] %v1691
        %p1700 = scmp.lt.s32.totalorder %s16, 1
        %s1701 = scalar_select %p1700, %s16, 1
        %s1702 = smul.addr %s1701, 8
        %s1703 = smul.addr %s1702, 8
        %s1704 = scalar_lea.vmem %s3, %s1703
        // Predicated region
        $region41: #{cnn_forward.3} parent=31 // pred_check
          %p1705 = pneg %p102
        $region42: #{cnn_forward.3} parent=31 // pred_check_branch
          %1707 = sbr.rel (%p1705) target = $region44
        $region43: #{cnn_forward.3} parent=31 // pred_region
          _
        $region44: #{cnn_forward.3} parent=31 // pred_fallthru
          _
      $region32: #{cnn_forward.3} parent=5 // pred_fallthru
        _
      %p1708 = scmp.le.s32.totalorder 2, %s11
      // Predicated region
      $region45: #{cnn_forward.3} parent=5 // pred_check
        %p1709 = pneg %p1708
      $region46: #{cnn_forward.3} parent=5 // pred_check_branch
        %1711 = sbr.rel (%p1709) target = $region48
      $region47: #{cnn_forward.3} parent=5 // pred_region
        %s1712 = ssub.s32 %s11, 2
        // Predicated region
        $region49: #{cnn_forward.3} parent=47 // pred_check
          %p1713 = pneg %p108
        $region50: #{cnn_forward.3} parent=47 // pred_check_branch
          %1715 = sbr.rel (%p1713) target = $region52
        $region51: #{cnn_forward.3} parent=47 // pred_region
          %p1716 = scmp.lt.s32.totalorder %s17, 1
          %s1717 = scalar_select %p1716, %s17, 1
          %s1718 = smul.addr %s1717, 8
          %s1719 = smul.addr %s1718, 8
          %s1720 = scalar_lea.vmem %s3, %s1719
        $region52: #{cnn_forward.3} parent=47 // pred_fallthru
          _
      $region48: #{cnn_forward.3} parent=5 // pred_fallthru
        _
    $region6: #{cnn_forward.3} parent=1 // loop_footer
      %s15 = sadd.s32 1, %s11
    $region7: #{cnn_forward.3} parent=1 // loop_footer_branch
      %10 = sbr.rel target = $region3
    $region8: #{cnn_forward.3} parent=1 // loop_exit
      _
    %1721 = vsyncpa [#allocation3], 1
    %s1722 = scalar_lea.sflag [#allocation3], 1
    %1723 = vsyncpa %s1722, 1
    %1724 = vsyncpa [#allocation5], 1

// kernel: cnn_forward.5
$region0: #{cnn_forward.5}
  #allocation0 [shape = 'u32[]', space=smem, size = 0x4, offset = 0x4, fixed_abs, tag = 'smem constant byte address 0x4 - core index']
  #allocation1 [shape = 'u32[144,128]{1,0:T(1,128)}', space=vmem, size = 0x12000, scoped, tag = 'internal scratch']
  %s0 = inlined_call_operand.vmem [shape: f32[2,3136], index: 0, kind: input, shape index: {}]
  %s1 = inlined_call_operand.vmem [shape: bf16[3136,128], index: 1, kind: input, shape index: {}]
  %s2 = inlined_call_operand.vmem [shape: f32[1,128], index: 2, kind: input, shape index: {}]
  %s3 = inlined_call_operand.vmem [shape: bf16[128,128], index: 3, kind: input, shape index: {}]
  %s4 = inlined_call_operand.vmem [shape: f32[1,128], index: 4, kind: input, shape index: {}]
  %s5 = inlined_call_operand.hbm [shape: f32[2,128], index: 5, kind: output, shape index: {}]
  %s6 = sld [smem:[#allocation0]]
  $region30: #{cnn_forward.5} parent=0
    _
  %s8 = ssub.s32 1, %s6
  %s9 = scalar_select 0, %s8, %s6
  $region1: #{cnn_forward.5} parent=0
    #allocation2 [shape = 'u8[1024]{0}', space=vmem, size = 0x400, scoped, tag = 'output window, operand 0, single buffered']
    #allocation3 [shape = 's32[1]{0}', space=sflag, size = 0x4, scoped, tag = 'scoped memory for cnn_forward.5']
    %10 = vsyncpa [#allocation3], 0
    // Predicated region
    $region2: #{cnn_forward.5} parent=1 // pred_check
      _
    $region3: #{cnn_forward.5} parent=1 // pred_check_branch
      %12 = sbr.rel (0) target = $region5
    $region4: #{cnn_forward.5} parent=1 // pred_region
      _
    $region5: #{cnn_forward.5} parent=1 // pred_fallthru
      _
    // Predicated region
    $region6: #{cnn_forward.5} parent=1 // pred_check
      _
    $region7: #{cnn_forward.5} parent=1 // pred_check_branch
      %14 = sbr.rel (0) target = $region9
    $region8: #{cnn_forward.5} parent=1 // pred_region
      _
    $region9: #{cnn_forward.5} parent=1 // pred_fallthru
      _
    // Predicated region
    $region10: #{cnn_forward.5} parent=1 // pred_check
      _
    $region11: #{cnn_forward.5} parent=1 // pred_check_branch
      %16 = sbr.rel (0) target = $region13
    $region12: #{cnn_forward.5} parent=1 // pred_region
      _
    $region13: #{cnn_forward.5} parent=1 // pred_fallthru
      _
    // Predicated region
    $region14: #{cnn_forward.5} parent=1 // pred_check
      _
    $region15: #{cnn_forward.5} parent=1 // pred_check_branch
      %18 = sbr.rel (0) target = $region17
    $region16: #{cnn_forward.5} parent=1 // pred_region
      _
    $region17: #{cnn_forward.5} parent=1 // pred_fallthru
      _
    // Predicated region
    $region18: #{cnn_forward.5} parent=1 // pred_check
      _
    $region19: #{cnn_forward.5} parent=1 // pred_check_branch
      %20 = sbr.rel (0) target = $region21
    $region20: #{cnn_forward.5} parent=1 // pred_region
      _
    $region21: #{cnn_forward.5} parent=1 // pred_fallthru
      _
    %v22 = vld [vmem:[%s0] sm:$0xff]
    %v23 = vld [vmem:[%s0 + $0x8] sm:$0xff]
    %v24 = vld [vmem:[%s0 + $0x10] sm:$0xff]
    %v25 = vld [vmem:[%s0 + $0x18] sm:$0xff]
    %v26 = vld [vmem:[%s0 + $0x20] sm:$0xff]
    %v27 = vld [vmem:[%s0 + $0x28] sm:$0xff]
    %v28 = vld [vmem:[%s0 + $0x30] sm:$0x3]
    %v36 = vcombine.high %v22, %v22
    %v38 = vunpack.c.l.s4 1983009808
    %v39 = vunpack.c.0.s8 %v38
    %v40 = vlaneseq
    %v41 = vshrl.u32 %v40, 7
    %v42 = vsub.s32 %v39, %v41
    %v43 = vrot.slane %v22, %v42
    %v45 = vunpack.c.l.s4 1983009808
    %v46 = vunpack.c.0.s8 %v45
    %v47 = vlaneseq
    %v48 = vshrl.u32 %v47, 7
    %v49 = vsub.s32 %v46, %v48
    %v50 = vrot.slane %v36, %v49
    %v51 = vcombine.high %v43, %v43
    %v52 = vcombine.high %v50, %v50
    %v53 = vcombine.high %v23, %v23
    %v55 = vunpack.c.l.s4 1983009808
    %v56 = vunpack.c.0.s8 %v55
    %v57 = vlaneseq
    %v58 = vshrl.u32 %v57, 7
    %v59 = vsub.s32 %v56, %v58
    %v60 = vrot.slane %v23, %v59
    %v62 = vunpack.c.l.s4 1983009808
    %v63 = vunpack.c.0.s8 %v62
    %v64 = vlaneseq
    %v65 = vshrl.u32 %v64, 7
    %v66 = vsub.s32 %v63, %v65
    %v67 = vrot.slane %v53, %v66
    %v68 = vcombine.high %v60, %v60
    %v69 = vcombine.high %v67, %v67
    %v70 = vcombine.high %v24, %v24
    %v72 = vunpack.c.l.s4 1983009808
    %v73 = vunpack.c.0.s8 %v72
    %v74 = vlaneseq
    %v75 = vshrl.u32 %v74, 7
    %v76 = vsub.s32 %v73, %v75
    %v77 = vrot.slane %v24, %v76
    %v79 = vunpack.c.l.s4 1983009808
    %v80 = vunpack.c.0.s8 %v79
    %v81 = vlaneseq
    %v82 = vshrl.u32 %v81, 7
    %v83 = vsub.s32 %v80, %v82
    %v84 = vrot.slane %v70, %v83
    %v85 = vcombine.high %v77, %v77
    %v86 = vcombine.high %v84, %v84
    %v87 = vcombine.high %v25, %v25
    %v89 = vunpack.c.l.s4 1983009808
    %v90 = vunpack.c.0.s8 %v89
    %v91 = vlaneseq
    %v92 = vshrl.u32 %v91, 7
    %v93 = vsub.s32 %v90, %v92
    %v94 = vrot.slane %v25, %v93
    %v96 = vunpack.c.l.s4 1983009808
    %v97 = vunpack.c.0.s8 %v96
    %v98 = vlaneseq
    %v99 = vshrl.u32 %v98, 7
    %v100 = vsub.s32 %v97, %v99
    %v101 = vrot.slane %v87, %v100
    %v102 = vcombine.high %v94, %v94
    %v103 = vcombine.high %v101, %v101
    %v104 = vcombine.high %v26, %v26
    %v106 = vunpack.c.l.s4 1983009808
    %v107 = vunpack.c.0.s8 %v106
    %v108 = vlaneseq
    %v109 = vshrl.u32 %v108, 7
    %v110 = vsub.s32 %v107, %v109
    %v111 = vrot.slane %v26, %v110
    %v113 = vunpack.c.l.s4 1983009808
    %v114 = vunpack.c.0.s8 %v113
    %v115 = vlaneseq
    %v116 = vshrl.u32 %v115, 7
    %v117 = vsub.s32 %v114, %v116
    %v118 = vrot.slane %v104, %v117
    %v119 = vcombine.high %v111, %v111
    %v120 = vcombine.high %v118, %v118
    %v121 = vcombine.high %v27, %v27
    %v123 = vunpack.c.l.s4 1983009808
    %v124 = vunpack.c.0.s8 %v123
    %v125 = vlaneseq
    %v126 = vshrl.u32 %v125, 7
    %v127 = vsub.s32 %v124, %v126
    %v128 = vrot.slane %v27, %v127
    %v130 = vunpack.c.l.s4 1983009808
    %v131 = vunpack.c.0.s8 %v130
    %v132 = vlaneseq
    %v133 = vshrl.u32 %v132, 7
    %v134 = vsub.s32 %v131, %v133
    %v135 = vrot.slane %v121, %v134
    %v136 = vcombine.high %v128, %v128
    %v137 = vcombine.high %v135, %v135
    %v139 = vunpack.c.l.s4 1983009808
    %v140 = vunpack.c.0.s8 %v139
    %v141 = vlaneseq
    %v142 = vshrl.u32 %v141, 7
    %v143 = vsub.s32 %v140, %v142
    %v144 = vrot.slane %v28, %v143
    %v170 = vpack.c.bf16 %v43, %v43
    %v171 = vpack.c.bf16 %v51, %v51
    %v172 = vpack.c.bf16 %v50, %v50
    %v173 = vpack.c.bf16 %v52, %v52
    %v174 = vpack.c.bf16 %v60, %v60
    %v175 = vpack.c.bf16 %v68, %v68
    %v176 = vpack.c.bf16 %v67, %v67
    %v177 = vpack.c.bf16 %v69, %v69
    %v178 = vpack.c.bf16 %v77, %v77
    %v179 = vpack.c.bf16 %v85, %v85
    %v180 = vpack.c.bf16 %v84, %v84
    %v181 = vpack.c.bf16 %v86, %v86
    %v182 = vpack.c.bf16 %v94, %v94
    %v183 = vpack.c.bf16 %v102, %v102
    %v184 = vpack.c.bf16 %v101, %v101
    %v185 = vpack.c.bf16 %v103, %v103
    %v186 = vpack.c.bf16 %v111, %v111
    %v187 = vpack.c.bf16 %v119, %v119
    %v188 = vpack.c.bf16 %v118, %v118
    %v189 = vpack.c.bf16 %v120, %v120
    %v190 = vpack.c.bf16 %v128, %v128
    %v191 = vpack.c.bf16 %v136, %v136
    %v192 = vpack.c.bf16 %v135, %v135
    %v193 = vpack.c.bf16 %v137, %v137
    %v194 = vpack.c.bf16 %v144, %v144
    %v195 = vld [vmem:[%s1] sm:$0xf]
    %v196 = vld [vmem:[%s1 + $0x4] sm:$0xf]
    %v197 = vld [vmem:[%s1 + $0x8] sm:$0xf]
    %v198 = vld [vmem:[%s1 + $0xc] sm:$0xf]
    %v199 = vld [vmem:[%s1 + $0x10] sm:$0xf]
    %v200 = vld [vmem:[%s1 + $0x14] sm:$0xf]
    %v201 = vld [vmem:[%s1 + $0x18] sm:$0xf]
    %v202 = vld [vmem:[%s1 + $0x1c] sm:$0xf]
    %v203 = vld [vmem:[%s1 + $0x20] sm:$0xf]
    %v204 = vld [vmem:[%s1 + $0x24] sm:$0xf]
    %v205 = vld [vmem:[%s1 + $0x28] sm:$0xf]
    %v206 = vld [vmem:[%s1 + $0x2c] sm:$0xf]
    %v207 = vld [vmem:[%s1 + $0x30] sm:$0xf]
    %v208 = vld [vmem:[%s1 + $0x34] sm:$0xf]
    %v209 = vld [vmem:[%s1 + $0x38] sm:$0xf]
    %v210 = vld [vmem:[%s1 + $0x3c] sm:$0xf]
    %v211 = vld [vmem:[%s1 + $0x40] sm:$0xf]
    %v212 = vld [vmem:[%s1 + $0x44] sm:$0xf]
    %v213 = vld [vmem:[%s1 + $0x48] sm:$0xf]
    %v214 = vld [vmem:[%s1 + $0x4c] sm:$0xf]
    %v215 = vld [vmem:[%s1 + $0x50] sm:$0xf]
    %v216 = vld [vmem:[%s1 + $0x54] sm:$0xf]
    %v217 = vld [vmem:[%s1 + $0x58] sm:$0xf]
    %v218 = vld [vmem:[%s1 + $0x5c] sm:$0xf]
    %v219 = vld [vmem:[%s1 + $0x60] sm:$0xf]
    %v220 = vld [vmem:[%s1 + $0x64] sm:$0xf]
    %v221 = vld [vmem:[%s1 + $0x68] sm:$0xf]
    %v222 = vld [vmem:[%s1 + $0x6c] sm:$0xf]
    %v223 = vld [vmem:[%s1 + $0x70] sm:$0xf]
    %v224 = vld [vmem:[%s1 + $0x74] sm:$0xf]
    %v225 = vld [vmem:[%s1 + $0x78] sm:$0xf]
    %v226 = vld [vmem:[%s1 + $0x7c] sm:$0xf]
    %v227 = vld [vmem:[%s1 + $0x80] sm:$0xf]
    %v228 = vld [vmem:[%s1 + $0x84] sm:$0xf]
    %v229 = vld [vmem:[%s1 + $0x88] sm:$0xf]
    %v230 = vld [vmem:[%s1 + $0x8c] sm:$0xf]
    %v231 = vld [vmem:[%s1 + $0x90] sm:$0xf]
    %v232 = vld [vmem:[%s1 + $0x94] sm:$0xf]
    %v233 = vld [vmem:[%s1 + $0x98] sm:$0xf]
    %v234 = vld [vmem:[%s1 + $0x9c] sm:$0xf]
    %v235 = vld [vmem:[%s1 + $0xa0] sm:$0xf]
    %v236 = vld [vmem:[%s1 + $0xa4] sm:$0xf]
    %v237 = vld [vmem:[%s1 + $0xa8] sm:$0xf]
    %v238 = vld [vmem:[%s1 + $0xac] sm:$0xf]
    %v239 = vld [vmem:[%s1 + $0xb0] sm:$0xf]
    %v240 = vld [vmem:[%s1 + $0xb4] sm:$0xf]
    %v241 = vld [vmem:[%s1 + $0xb8] sm:$0xf]
    %v242 = vld [vmem:[%s1 + $0xbc] sm:$0xf]
    %v243 = vld [vmem:[%s1 + $0xc0] sm:$0xf]
    %v244 = vld [vmem:[%s1 + $0xc4] sm:$0xf]
    %v245 = vld [vmem:[%s1 + $0xc8] sm:$0xf]
    %v246 = vld [vmem:[%s1 + $0xcc] sm:$0xf]
    %v247 = vld [vmem:[%s1 + $0xd0] sm:$0xf]
    %v248 = vld [vmem:[%s1 + $0xd4] sm:$0xf]
    %v249 = vld [vmem:[%s1 + $0xd8] sm:$0xf]
    %v250 = vld [vmem:[%s1 + $0xdc] sm:$0xf]
    %v251 = vld [vmem:[%s1 + $0xe0] sm:$0xf]
    %v252 = vld [vmem:[%s1 + $0xe4] sm:$0xf]
    %v253 = vld [vmem:[%s1 + $0xe8] sm:$0xf]
    %v254 = vld [vmem:[%s1 + $0xec] sm:$0xf]
    %v255 = vld [vmem:[%s1 + $0xf0] sm:$0xf]
    %v256 = vld [vmem:[%s1 + $0xf4] sm:$0xf]
    %v257 = vld [vmem:[%s1 + $0xf8] sm:$0xf]
    %v258 = vld [vmem:[%s1 + $0xfc] sm:$0xf]
    %v259 = vld [vmem:[%s1 + $0x100] sm:$0xf]
    %v260 = vld [vmem:[%s1 + $0x104] sm:$0xf]
    %v261 = vld [vmem:[%s1 + $0x108] sm:$0xf]
    %v262 = vld [vmem:[%s1 + $0x10c] sm:$0xf]
    %v263 = vld [vmem:[%s1 + $0x110] sm:$0xf]
    %v264 = vld [vmem:[%s1 + $0x114] sm:$0xf]
    %v265 = vld [vmem:[%s1 + $0x118] sm:$0xf]
    %v266 = vld [vmem:[%s1 + $0x11c] sm:$0xf]
    %v267 = vld [vmem:[%s1 + $0x120] sm:$0xf]
    %v268 = vld [vmem:[%s1 + $0x124] sm:$0xf]
    %v269 = vld [vmem:[%s1 + $0x128] sm:$0xf]
    %v270 = vld [vmem:[%s1 + $0x12c] sm:$0xf]
    %v271 = vld [vmem:[%s1 + $0x130] sm:$0xf]
    %v272 = vld [vmem:[%s1 + $0x134] sm:$0xf]
    %v273 = vld [vmem:[%s1 + $0x138] sm:$0xf]
    %v274 = vld [vmem:[%s1 + $0x13c] sm:$0xf]
    %v275 = vld [vmem:[%s1 + $0x140] sm:$0xf]
    %v276 = vld [vmem:[%s1 + $0x144] sm:$0xf]
    %v277 = vld [vmem:[%s1 + $0x148] sm:$0xf]
    %v278 = vld [vmem:[%s1 + $0x14c] sm:$0xf]
    %v279 = vld [vmem:[%s1 + $0x150] sm:$0xf]
    %v280 = vld [vmem:[%s1 + $0x154] sm:$0xf]
    %v281 = vld [vmem:[%s1 + $0x158] sm:$0xf]
    %v282 = vld [vmem:[%s1 + $0x15c] sm:$0xf]
    %v283 = vld [vmem:[%s1 + $0x160] sm:$0xf]
    %v284 = vld [vmem:[%s1 + $0x164] sm:$0xf]
    %v285 = vld [vmem:[%s1 + $0x168] sm:$0xf]
    %v286 = vld [vmem:[%s1 + $0x16c] sm:$0xf]
    %v287 = vld [vmem:[%s1 + $0x170] sm:$0xf]
    %v288 = vld [vmem:[%s1 + $0x174] sm:$0xf]
    %v289 = vld [vmem:[%s1 + $0x178] sm:$0xf]
    %v290 = vld [vmem:[%s1 + $0x17c] sm:$0xf]
    %v291 = vld [vmem:[%s1 + $0x180] sm:$0xf]
    %v292 = vld [vmem:[%s1 + $0x184] sm:$0xf]
    %v293 = vld [vmem:[%s1 + $0x188] sm:$0xf]
    %v294 = vld [vmem:[%s1 + $0x18c] sm:$0xf]
    %v295 = vld [vmem:[%s1 + $0x190] sm:$0xf]
    %v296 = vld [vmem:[%s1 + $0x194] sm:$0xf]
    %v297 = vld [vmem:[%s1 + $0x198] sm:$0xf]
    %v298 = vld [vmem:[%s1 + $0x19c] sm:$0xf]
    %v299 = vld [vmem:[%s1 + $0x1a0] sm:$0xf]
    %v300 = vld [vmem:[%s1 + $0x1a4] sm:$0xf]
    %v301 = vld [vmem:[%s1 + $0x1a8] sm:$0xf]
    %v302 = vld [vmem:[%s1 + $0x1ac] sm:$0xf]
    %v303 = vld [vmem:[%s1 + $0x1b0] sm:$0xf]
    %v304 = vld [vmem:[%s1 + $0x1b4] sm:$0xf]
    %v305 = vld [vmem:[%s1 + $0x1b8] sm:$0xf]
    %v306 = vld [vmem:[%s1 + $0x1bc] sm:$0xf]
    %v307 = vld [vmem:[%s1 + $0x1c0] sm:$0xf]
    %v308 = vld [vmem:[%s1 + $0x1c4] sm:$0xf]
    %v309 = vld [vmem:[%s1 + $0x1c8] sm:$0xf]
    %v310 = vld [vmem:[%s1 + $0x1cc] sm:$0xf]
    %v311 = vld [vmem:[%s1 + $0x1d0] sm:$0xf]
    %v312 = vld [vmem:[%s1 + $0x1d4] sm:$0xf]
    %v313 = vld [vmem:[%s1 + $0x1d8] sm:$0xf]
    %v314 = vld [vmem:[%s1 + $0x1dc] sm:$0xf]
    %v315 = vld [vmem:[%s1 + $0x1e0] sm:$0xf]
    %v316 = vld [vmem:[%s1 + $0x1e4] sm:$0xf]
    %v317 = vld [vmem:[%s1 + $0x1e8] sm:$0xf]
    %v318 = vld [vmem:[%s1 + $0x1ec] sm:$0xf]
    %v319 = vld [vmem:[%s1 + $0x1f0] sm:$0xf]
    %v320 = vld [vmem:[%s1 + $0x1f4] sm:$0xf]
    %v321 = vld [vmem:[%s1 + $0x1f8] sm:$0xf]
    %v322 = vld [vmem:[%s1 + $0x1fc] sm:$0xf]
    %v323 = vld [vmem:[%s1 + $0x200] sm:$0xf]
    %v324 = vld [vmem:[%s1 + $0x204] sm:$0xf]
    %v325 = vld [vmem:[%s1 + $0x208] sm:$0xf]
    %v326 = vld [vmem:[%s1 + $0x20c] sm:$0xf]
    %v327 = vld [vmem:[%s1 + $0x210] sm:$0xf]
    %v328 = vld [vmem:[%s1 + $0x214] sm:$0xf]
    %v329 = vld [vmem:[%s1 + $0x218] sm:$0xf]
    %v330 = vld [vmem:[%s1 + $0x21c] sm:$0xf]
    %v331 = vld [vmem:[%s1 + $0x220] sm:$0xf]
    %v332 = vld [vmem:[%s1 + $0x224] sm:$0xf]
    %v333 = vld [vmem:[%s1 + $0x228] sm:$0xf]
    %v334 = vld [vmem:[%s1 + $0x22c] sm:$0xf]
    %v335 = vld [vmem:[%s1 + $0x230] sm:$0xf]
    %v336 = vld [vmem:[%s1 + $0x234] sm:$0xf]
    %v337 = vld [vmem:[%s1 + $0x238] sm:$0xf]
    %v338 = vld [vmem:[%s1 + $0x23c] sm:$0xf]
    %v339 = vld [vmem:[%s1 + $0x240] sm:$0xf]
    %v340 = vld [vmem:[%s1 + $0x244] sm:$0xf]
    %v341 = vld [vmem:[%s1 + $0x248] sm:$0xf]
    %v342 = vld [vmem:[%s1 + $0x24c] sm:$0xf]
    %v343 = vld [vmem:[%s1 + $0x250] sm:$0xf]
    %v344 = vld [vmem:[%s1 + $0x254] sm:$0xf]
    %v345 = vld [vmem:[%s1 + $0x258] sm:$0xf]
    %v346 = vld [vmem:[%s1 + $0x25c] sm:$0xf]
    %v347 = vld [vmem:[%s1 + $0x260] sm:$0xf]
    %v348 = vld [vmem:[%s1 + $0x264] sm:$0xf]
    %v349 = vld [vmem:[%s1 + $0x268] sm:$0xf]
    %v350 = vld [vmem:[%s1 + $0x26c] sm:$0xf]
    %v351 = vld [vmem:[%s1 + $0x270] sm:$0xf]
    %v352 = vld [vmem:[%s1 + $0x274] sm:$0xf]
    %v353 = vld [vmem:[%s1 + $0x278] sm:$0xf]
    %v354 = vld [vmem:[%s1 + $0x27c] sm:$0xf]
    %v355 = vld [vmem:[%s1 + $0x280] sm:$0xf]
    %v356 = vld [vmem:[%s1 + $0x284] sm:$0xf]
    %v357 = vld [vmem:[%s1 + $0x288] sm:$0xf]
    %v358 = vld [vmem:[%s1 + $0x28c] sm:$0xf]
    %v359 = vld [vmem:[%s1 + $0x290] sm:$0xf]
    %v360 = vld [vmem:[%s1 + $0x294] sm:$0xf]
    %v361 = vld [vmem:[%s1 + $0x298] sm:$0xf]
    %v362 = vld [vmem:[%s1 + $0x29c] sm:$0xf]
    %v363 = vld [vmem:[%s1 + $0x2a0] sm:$0xf]
    %v364 = vld [vmem:[%s1 + $0x2a4] sm:$0xf]
    %v365 = vld [vmem:[%s1 + $0x2a8] sm:$0xf]
    %v366 = vld [vmem:[%s1 + $0x2ac] sm:$0xf]
    %v367 = vld [vmem:[%s1 + $0x2b0] sm:$0xf]
    %v368 = vld [vmem:[%s1 + $0x2b4] sm:$0xf]
    %v369 = vld [vmem:[%s1 + $0x2b8] sm:$0xf]
    %v370 = vld [vmem:[%s1 + $0x2bc] sm:$0xf]
    %v371 = vld [vmem:[%s1 + $0x2c0] sm:$0xf]
    %v372 = vld [vmem:[%s1 + $0x2c4] sm:$0xf]
    %v373 = vld [vmem:[%s1 + $0x2c8] sm:$0xf]
    %v374 = vld [vmem:[%s1 + $0x2cc] sm:$0xf]
    %v375 = vld [vmem:[%s1 + $0x2d0] sm:$0xf]
    %v376 = vld [vmem:[%s1 + $0x2d4] sm:$0xf]
    %v377 = vld [vmem:[%s1 + $0x2d8] sm:$0xf]
    %v378 = vld [vmem:[%s1 + $0x2dc] sm:$0xf]
    %v379 = vld [vmem:[%s1 + $0x2e0] sm:$0xf]
    %v380 = vld [vmem:[%s1 + $0x2e4] sm:$0xf]
    %v381 = vld [vmem:[%s1 + $0x2e8] sm:$0xf]
    %v382 = vld [vmem:[%s1 + $0x2ec] sm:$0xf]
    %v383 = vld [vmem:[%s1 + $0x2f0] sm:$0xf]
    %v384 = vld [vmem:[%s1 + $0x2f4] sm:$0xf]
    %v385 = vld [vmem:[%s1 + $0x2f8] sm:$0xf]
    %v386 = vld [vmem:[%s1 + $0x2fc] sm:$0xf]
    %v387 = vld [vmem:[%s1 + $0x300] sm:$0xf]
    %v388 = vld [vmem:[%s1 + $0x304] sm:$0xf]
    %v389 = vld [vmem:[%s1 + $0x308] sm:$0xf]
    %v390 = vld [vmem:[%s1 + $0x30c] sm:$0xf]
    %v391 = vld [vmem:[%s1 + $0x310] sm:$0xf]
    %v392 = vld [vmem:[%s1 + $0x314] sm:$0xf]
    %v393 = vld [vmem:[%s1 + $0x318] sm:$0xf]
    %v394 = vld [vmem:[%s1 + $0x31c] sm:$0xf]
    %v395 = vld [vmem:[%s1 + $0x320] sm:$0xf]
    %v396 = vld [vmem:[%s1 + $0x324] sm:$0xf]
    %v397 = vld [vmem:[%s1 + $0x328] sm:$0xf]
    %v398 = vld [vmem:[%s1 + $0x32c] sm:$0xf]
    %v399 = vld [vmem:[%s1 + $0x330] sm:$0xf]
    %v400 = vld [vmem:[%s1 + $0x334] sm:$0xf]
    %v401 = vld [vmem:[%s1 + $0x338] sm:$0xf]
    %v402 = vld [vmem:[%s1 + $0x33c] sm:$0xf]
    %v403 = vld [vmem:[%s1 + $0x340] sm:$0xf]
    %v404 = vld [vmem:[%s1 + $0x344] sm:$0xf]
    %v405 = vld [vmem:[%s1 + $0x348] sm:$0xf]
    %v406 = vld [vmem:[%s1 + $0x34c] sm:$0xf]
    %v407 = vld [vmem:[%s1 + $0x350] sm:$0xf]
    %v408 = vld [vmem:[%s1 + $0x354] sm:$0xf]
    %v409 = vld [vmem:[%s1 + $0x358] sm:$0xf]
    %v410 = vld [vmem:[%s1 + $0x35c] sm:$0xf]
    %v411 = vld [vmem:[%s1 + $0x360] sm:$0xf]
    %v412 = vld [vmem:[%s1 + $0x364] sm:$0xf]
    %v413 = vld [vmem:[%s1 + $0x368] sm:$0xf]
    %v414 = vld [vmem:[%s1 + $0x36c] sm:$0xf]
    %v415 = vld [vmem:[%s1 + $0x370] sm:$0xf]
    %v416 = vld [vmem:[%s1 + $0x374] sm:$0xf]
    %v417 = vld [vmem:[%s1 + $0x378] sm:$0xf]
    %v418 = vld [vmem:[%s1 + $0x37c] sm:$0xf]
    %v419 = vld [vmem:[%s1 + $0x380] sm:$0xf]
    %v420 = vld [vmem:[%s1 + $0x384] sm:$0xf]
    %v421 = vld [vmem:[%s1 + $0x388] sm:$0xf]
    %v422 = vld [vmem:[%s1 + $0x38c] sm:$0xf]
    %v423 = vld [vmem:[%s1 + $0x390] sm:$0xf]
    %v424 = vld [vmem:[%s1 + $0x394] sm:$0xf]
    %v425 = vld [vmem:[%s1 + $0x398] sm:$0xf]
    %v426 = vld [vmem:[%s1 + $0x39c] sm:$0xf]
    %v427 = vld [vmem:[%s1 + $0x3a0] sm:$0xf]
    %v428 = vld [vmem:[%s1 + $0x3a4] sm:$0xf]
    %v429 = vld [vmem:[%s1 + $0x3a8] sm:$0xf]
    %v430 = vld [vmem:[%s1 + $0x3ac] sm:$0xf]
    %v431 = vld [vmem:[%s1 + $0x3b0] sm:$0xf]
    %v432 = vld [vmem:[%s1 + $0x3b4] sm:$0xf]
    %v433 = vld [vmem:[%s1 + $0x3b8] sm:$0xf]
    %v434 = vld [vmem:[%s1 + $0x3bc] sm:$0xf]
    %v435 = vld [vmem:[%s1 + $0x3c0] sm:$0xf]
    %v436 = vld [vmem:[%s1 + $0x3c4] sm:$0xf]
    %v437 = vld [vmem:[%s1 + $0x3c8] sm:$0xf]
    %v438 = vld [vmem:[%s1 + $0x3cc] sm:$0xf]
    %v439 = vld [vmem:[%s1 + $0x3d0] sm:$0xf]
    %v440 = vld [vmem:[%s1 + $0x3d4] sm:$0xf]
    %v441 = vld [vmem:[%s1 + $0x3d8] sm:$0xf]
    %v442 = vld [vmem:[%s1 + $0x3dc] sm:$0xf]
    %v443 = vld [vmem:[%s1 + $0x3e0] sm:$0xf]
    %v444 = vld [vmem:[%s1 + $0x3e4] sm:$0xf]
    %v445 = vld [vmem:[%s1 + $0x3e8] sm:$0xf]
    %v446 = vld [vmem:[%s1 + $0x3ec] sm:$0xf]
    %v447 = vld [vmem:[%s1 + $0x3f0] sm:$0xf]
    %v448 = vld [vmem:[%s1 + $0x3f4] sm:$0xf]
    %v449 = vld [vmem:[%s1 + $0x3f8] sm:$0xf]
    %v450 = vld [vmem:[%s1 + $0x3fc] sm:$0xf]
    %v451 = vld [vmem:[%s1 + $0x400] sm:$0xf]
    %v452 = vld [vmem:[%s1 + $0x404] sm:$0xf]
    %v453 = vld [vmem:[%s1 + $0x408] sm:$0xf]
    %v454 = vld [vmem:[%s1 + $0x40c] sm:$0xf]
    %v455 = vld [vmem:[%s1 + $0x410] sm:$0xf]
    %v456 = vld [vmem:[%s1 + $0x414] sm:$0xf]
    %v457 = vld [vmem:[%s1 + $0x418] sm:$0xf]
    %v458 = vld [vmem:[%s1 + $0x41c] sm:$0xf]
    %v459 = vld [vmem:[%s1 + $0x420] sm:$0xf]
    %v460 = vld [vmem:[%s1 + $0x424] sm:$0xf]
    %v461 = vld [vmem:[%s1 + $0x428] sm:$0xf]
    %v462 = vld [vmem:[%s1 + $0x42c] sm:$0xf]
    %v463 = vld [vmem:[%s1 + $0x430] sm:$0xf]
    %v464 = vld [vmem:[%s1 + $0x434] sm:$0xf]
    %v465 = vld [vmem:[%s1 + $0x438] sm:$0xf]
    %v466 = vld [vmem:[%s1 + $0x43c] sm:$0xf]
    %v467 = vld [vmem:[%s1 + $0x440] sm:$0xf]
    %v468 = vld [vmem:[%s1 + $0x444] sm:$0xf]
    %v469 = vld [vmem:[%s1 + $0x448] sm:$0xf]
    %v470 = vld [vmem:[%s1 + $0x44c] sm:$0xf]
    %v471 = vld [vmem:[%s1 + $0x450] sm:$0xf]
    %v472 = vld [vmem:[%s1 + $0x454] sm:$0xf]
    %v473 = vld [vmem:[%s1 + $0x458] sm:$0xf]
    %v474 = vld [vmem:[%s1 + $0x45c] sm:$0xf]
    %v475 = vld [vmem:[%s1 + $0x460] sm:$0xf]
    %v476 = vld [vmem:[%s1 + $0x464] sm:$0xf]
    %v477 = vld [vmem:[%s1 + $0x468] sm:$0xf]
    %v478 = vld [vmem:[%s1 + $0x46c] sm:$0xf]
    %v479 = vld [vmem:[%s1 + $0x470] sm:$0xf]
    %v480 = vld [vmem:[%s1 + $0x474] sm:$0xf]
    %v481 = vld [vmem:[%s1 + $0x478] sm:$0xf]
    %v482 = vld [vmem:[%s1 + $0x47c] sm:$0xf]
    %v483 = vld [vmem:[%s1 + $0x480] sm:$0xf]
    %v484 = vld [vmem:[%s1 + $0x484] sm:$0xf]
    %v485 = vld [vmem:[%s1 + $0x488] sm:$0xf]
    %v486 = vld [vmem:[%s1 + $0x48c] sm:$0xf]
    %v487 = vld [vmem:[%s1 + $0x490] sm:$0xf]
    %v488 = vld [vmem:[%s1 + $0x494] sm:$0xf]
    %v489 = vld [vmem:[%s1 + $0x498] sm:$0xf]
    %v490 = vld [vmem:[%s1 + $0x49c] sm:$0xf]
    %v491 = vld [vmem:[%s1 + $0x4a0] sm:$0xf]
    %v492 = vld [vmem:[%s1 + $0x4a4] sm:$0xf]
    %v493 = vld [vmem:[%s1 + $0x4a8] sm:$0xf]
    %v494 = vld [vmem:[%s1 + $0x4ac] sm:$0xf]
    %v495 = vld [vmem:[%s1 + $0x4b0] sm:$0xf]
    %v496 = vld [vmem:[%s1 + $0x4b4] sm:$0xf]
    %v497 = vld [vmem:[%s1 + $0x4b8] sm:$0xf]
    %v498 = vld [vmem:[%s1 + $0x4bc] sm:$0xf]
    %v499 = vld [vmem:[%s1 + $0x4c0] sm:$0xf]
    %v500 = vld [vmem:[%s1 + $0x4c4] sm:$0xf]
    %v501 = vld [vmem:[%s1 + $0x4c8] sm:$0xf]
    %v502 = vld [vmem:[%s1 + $0x4cc] sm:$0xf]
    %v503 = vld [vmem:[%s1 + $0x4d0] sm:$0xf]
    %v504 = vld [vmem:[%s1 + $0x4d4] sm:$0xf]
    %v505 = vld [vmem:[%s1 + $0x4d8] sm:$0xf]
    %v506 = vld [vmem:[%s1 + $0x4dc] sm:$0xf]
    %v507 = vld [vmem:[%s1 + $0x4e0] sm:$0xf]
    %v508 = vld [vmem:[%s1 + $0x4e4] sm:$0xf]
    %v509 = vld [vmem:[%s1 + $0x4e8] sm:$0xf]
    %v510 = vld [vmem:[%s1 + $0x4ec] sm:$0xf]
    %v511 = vld [vmem:[%s1 + $0x4f0] sm:$0xf]
    %v512 = vld [vmem:[%s1 + $0x4f4] sm:$0xf]
    %v513 = vld [vmem:[%s1 + $0x4f8] sm:$0xf]
    %v514 = vld [vmem:[%s1 + $0x4fc] sm:$0xf]
    %v515 = vld [vmem:[%s1 + $0x500] sm:$0xf]
    %v516 = vld [vmem:[%s1 + $0x504] sm:$0xf]
    %v517 = vld [vmem:[%s1 + $0x508] sm:$0xf]
    %v518 = vld [vmem:[%s1 + $0x50c] sm:$0xf]
    %v519 = vld [vmem:[%s1 + $0x510] sm:$0xf]
    %v520 = vld [vmem:[%s1 + $0x514] sm:$0xf]
    %v521 = vld [vmem:[%s1 + $0x518] sm:$0xf]
    %v522 = vld [vmem:[%s1 + $0x51c] sm:$0xf]
    %v523 = vld [vmem:[%s1 + $0x520] sm:$0xf]
    %v524 = vld [vmem:[%s1 + $0x524] sm:$0xf]
    %v525 = vld [vmem:[%s1 + $0x528] sm:$0xf]
    %v526 = vld [vmem:[%s1 + $0x52c] sm:$0xf]
    %v527 = vld [vmem:[%s1 + $0x530] sm:$0xf]
    %v528 = vld [vmem:[%s1 + $0x534] sm:$0xf]
    %v529 = vld [vmem:[%s1 + $0x538] sm:$0xf]
    %v530 = vld [vmem:[%s1 + $0x53c] sm:$0xf]
    %v531 = vld [vmem:[%s1 + $0x540] sm:$0xf]
    %v532 = vld [vmem:[%s1 + $0x544] sm:$0xf]
    %v533 = vld [vmem:[%s1 + $0x548] sm:$0xf]
    %v534 = vld [vmem:[%s1 + $0x54c] sm:$0xf]
    %v535 = vld [vmem:[%s1 + $0x550] sm:$0xf]
    %v536 = vld [vmem:[%s1 + $0x554] sm:$0xf]
    %v537 = vld [vmem:[%s1 + $0x558] sm:$0xf]
    %v538 = vld [vmem:[%s1 + $0x55c] sm:$0xf]
    %v539 = vld [vmem:[%s1 + $0x560] sm:$0xf]
    %v540 = vld [vmem:[%s1 + $0x564] sm:$0xf]
    %v541 = vld [vmem:[%s1 + $0x568] sm:$0xf]
    %v542 = vld [vmem:[%s1 + $0x56c] sm:$0xf]
    %v543 = vld [vmem:[%s1 + $0x570] sm:$0xf]
    %v544 = vld [vmem:[%s1 + $0x574] sm:$0xf]
    %v545 = vld [vmem:[%s1 + $0x578] sm:$0xf]
    %v546 = vld [vmem:[%s1 + $0x57c] sm:$0xf]
    %v547 = vld [vmem:[%s1 + $0x580] sm:$0xf]
    %v548 = vld [vmem:[%s1 + $0x584] sm:$0xf]
    %v549 = vld [vmem:[%s1 + $0x588] sm:$0xf]
    %v550 = vld [vmem:[%s1 + $0x58c] sm:$0xf]
    %v551 = vld [vmem:[%s1 + $0x590] sm:$0xf]
    %v552 = vld [vmem:[%s1 + $0x594] sm:$0xf]
    %v553 = vld [vmem:[%s1 + $0x598] sm:$0xf]
    %v554 = vld [vmem:[%s1 + $0x59c] sm:$0xf]
    %v555 = vld [vmem:[%s1 + $0x5a0] sm:$0xf]
    %v556 = vld [vmem:[%s1 + $0x5a4] sm:$0xf]
    %v557 = vld [vmem:[%s1 + $0x5a8] sm:$0xf]
    %v558 = vld [vmem:[%s1 + $0x5ac] sm:$0xf]
    %v559 = vld [vmem:[%s1 + $0x5b0] sm:$0xf]
    %v560 = vld [vmem:[%s1 + $0x5b4] sm:$0xf]
    %v561 = vld [vmem:[%s1 + $0x5b8] sm:$0xf]
    %v562 = vld [vmem:[%s1 + $0x5bc] sm:$0xf]
    %v563 = vld [vmem:[%s1 + $0x5c0] sm:$0xf]
    %v564 = vld [vmem:[%s1 + $0x5c4] sm:$0xf]
    %v565 = vld [vmem:[%s1 + $0x5c8] sm:$0xf]
    %v566 = vld [vmem:[%s1 + $0x5cc] sm:$0xf]
    %v567 = vld [vmem:[%s1 + $0x5d0] sm:$0xf]
    %v568 = vld [vmem:[%s1 + $0x5d4] sm:$0xf]
    %v569 = vld [vmem:[%s1 + $0x5d8] sm:$0xf]
    %v570 = vld [vmem:[%s1 + $0x5dc] sm:$0xf]
    %v571 = vld [vmem:[%s1 + $0x5e0] sm:$0xf]
    %v572 = vld [vmem:[%s1 + $0x5e4] sm:$0xf]
    %v573 = vld [vmem:[%s1 + $0x5e8] sm:$0xf]
    %v574 = vld [vmem:[%s1 + $0x5ec] sm:$0xf]
    %v575 = vld [vmem:[%s1 + $0x5f0] sm:$0xf]
    %v576 = vld [vmem:[%s1 + $0x5f4] sm:$0xf]
    %v577 = vld [vmem:[%s1 + $0x5f8] sm:$0xf]
    %v578 = vld [vmem:[%s1 + $0x5fc] sm:$0xf]
    %v579 = vld [vmem:[%s1 + $0x600] sm:$0xf]
    %v580 = vld [vmem:[%s1 + $0x604] sm:$0xf]
    %v581 = vld [vmem:[%s1 + $0x608] sm:$0xf]
    %v582 = vld [vmem:[%s1 + $0x60c] sm:$0xf]
    %v583 = vld [vmem:[%s1 + $0x610] sm:$0xf]
    %v584 = vld [vmem:[%s1 + $0x614] sm:$0xf]
    %v585 = vld [vmem:[%s1 + $0x618] sm:$0xf]
    %v586 = vld [vmem:[%s1 + $0x61c] sm:$0xf]
    %v587 = vld [vmem:[%s2] sm:$0x1]
    %v589 = vlaneseq
    %v590 = vshrl.u32 %v589, 7
    %v591 = vsub.s32 0, %v590
    %v592 = vrot.slane %v587, %v591
    %v986 = vunpack.c.l.b16 %v195
    %v987 = vunpack.c.l.b16 %v196
    %v988 = vunpack.c.l.b16 %v197
    %v989 = vunpack.c.l.b16 %v198
    %v990 = vunpack.c.l.b16 %v199
    %v991 = vunpack.c.l.b16 %v200
    %v992 = vunpack.c.l.b16 %v201
    %v993 = vunpack.c.l.b16 %v202
    %v994 = vunpack.c.l.b16 %v203
    %v995 = vunpack.c.l.b16 %v204
    %v996 = vunpack.c.l.b16 %v205
    %v997 = vunpack.c.l.b16 %v206
    %v998 = vunpack.c.l.b16 %v207
    %v999 = vunpack.c.l.b16 %v208
    %v1000 = vunpack.c.l.b16 %v209
    %v1001 = vunpack.c.l.b16 %v210
    %v1002 = vunpack.c.l.b16 %v211
    %v1003 = vunpack.c.l.b16 %v212
    %v1004 = vunpack.c.l.b16 %v213
    %v1005 = vunpack.c.l.b16 %v214
    %v1006 = vunpack.c.l.b16 %v215
    %v1007 = vunpack.c.l.b16 %v216
    %v1008 = vunpack.c.l.b16 %v217
    %v1009 = vunpack.c.l.b16 %v218
    %v1010 = vunpack.c.l.b16 %v219
    %v1011 = vunpack.c.l.b16 %v220
    %v1012 = vunpack.c.l.b16 %v221
    %v1013 = vunpack.c.l.b16 %v222
    %v1014 = vunpack.c.l.b16 %v223
    %v1015 = vunpack.c.l.b16 %v224
    %v1016 = vunpack.c.l.b16 %v225
    %v1017 = vunpack.c.l.b16 %v226
    %v1018 = vunpack.c.l.b16 %v227
    %v1019 = vunpack.c.l.b16 %v228
    %v1020 = vunpack.c.l.b16 %v229
    %v1021 = vunpack.c.l.b16 %v230
    %v1022 = vunpack.c.l.b16 %v231
    %v1023 = vunpack.c.l.b16 %v232
    %v1024 = vunpack.c.l.b16 %v233
    %v1025 = vunpack.c.l.b16 %v234
    %v1026 = vunpack.c.l.b16 %v235
    %v1027 = vunpack.c.l.b16 %v236
    %v1028 = vunpack.c.l.b16 %v237
    %v1029 = vunpack.c.l.b16 %v238
    %v1030 = vunpack.c.l.b16 %v239
    %v1031 = vunpack.c.l.b16 %v240
    %v1032 = vunpack.c.l.b16 %v241
    %v1033 = vunpack.c.l.b16 %v242
    %v1034 = vunpack.c.l.b16 %v243
    %v1035 = vunpack.c.l.b16 %v244
    %v1036 = vunpack.c.l.b16 %v245
    %v1037 = vunpack.c.l.b16 %v246
    %v1038 = vunpack.c.l.b16 %v247
    %v1039 = vunpack.c.l.b16 %v248
    %v1040 = vunpack.c.l.b16 %v249
    %v1041 = vunpack.c.l.b16 %v250
    %v1042 = vunpack.c.l.b16 %v251
    %v1043 = vunpack.c.l.b16 %v252
    %v1044 = vunpack.c.l.b16 %v253
    %v1045 = vunpack.c.l.b16 %v254
    %v1046 = vunpack.c.l.b16 %v255
    %v1047 = vunpack.c.l.b16 %v256
    %v1048 = vunpack.c.l.b16 %v257
    %v1049 = vunpack.c.l.b16 %v258
    %v1050 = vunpack.c.l.b16 %v259
    %v1051 = vunpack.c.l.b16 %v260
    %v1052 = vunpack.c.l.b16 %v261
    %v1053 = vunpack.c.l.b16 %v262
    %v1054 = vunpack.c.l.b16 %v263
    %v1055 = vunpack.c.l.b16 %v264
    %v1056 = vunpack.c.l.b16 %v265
    %v1057 = vunpack.c.l.b16 %v266
    %v1058 = vunpack.c.l.b16 %v267
    %v1059 = vunpack.c.l.b16 %v268
    %v1060 = vunpack.c.l.b16 %v269
    %v1061 = vunpack.c.l.b16 %v270
    %v1062 = vunpack.c.l.b16 %v271
    %v1063 = vunpack.c.l.b16 %v272
    %v1064 = vunpack.c.l.b16 %v273
    %v1065 = vunpack.c.l.b16 %v274
    %v1066 = vunpack.c.l.b16 %v275
    %v1067 = vunpack.c.l.b16 %v276
    %v1068 = vunpack.c.l.b16 %v277
    %v1069 = vunpack.c.l.b16 %v278
    %v1070 = vunpack.c.l.b16 %v279
    %v1071 = vunpack.c.l.b16 %v280
    %v1072 = vunpack.c.l.b16 %v281
    %v1073 = vunpack.c.l.b16 %v282
    %v1074 = vunpack.c.l.b16 %v283
    %v1075 = vunpack.c.l.b16 %v284
    %v1076 = vunpack.c.l.b16 %v285
    %v1077 = vunpack.c.l.b16 %v286
    %v1078 = vunpack.c.l.b16 %v287
    %v1079 = vunpack.c.l.b16 %v288
    %v1080 = vunpack.c.l.b16 %v289
    %v1081 = vunpack.c.l.b16 %v290
    %v1082 = vunpack.c.l.b16 %v291
    %v1083 = vunpack.c.l.b16 %v292
    %v1084 = vunpack.c.l.b16 %v293
    %v1085 = vunpack.c.l.b16 %v294
    %v1086 = vunpack.c.l.b16 %v295
    %v1087 = vunpack.c.l.b16 %v296
    %v1088 = vunpack.c.l.b16 %v297
    %v1089 = vunpack.c.l.b16 %v298
    %v1090 = vunpack.c.l.b16 %v299
    %v1091 = vunpack.c.l.b16 %v300
    %v1092 = vunpack.c.l.b16 %v301
    %v1093 = vunpack.c.l.b16 %v302
    %v1094 = vunpack.c.l.b16 %v303
    %v1095 = vunpack.c.l.b16 %v304
    %v1096 = vunpack.c.l.b16 %v305
    %v1097 = vunpack.c.l.b16 %v306
    %v1098 = vunpack.c.l.b16 %v307
    %v1099 = vunpack.c.l.b16 %v308
    %v1100 = vunpack.c.l.b16 %v309
    %v1101 = vunpack.c.l.b16 %v310
    %v1102 = vunpack.c.l.b16 %v311
    %v1103 = vunpack.c.l.b16 %v312
    %v1104 = vunpack.c.l.b16 %v313
    %v1105 = vunpack.c.l.b16 %v314
    %v1106 = vunpack.c.l.b16 %v315
    %v1107 = vunpack.c.l.b16 %v316
    %v1108 = vunpack.c.l.b16 %v317
    %v1109 = vunpack.c.l.b16 %v318
    %v1110 = vunpack.c.l.b16 %v319
    %v1111 = vunpack.c.l.b16 %v320
    %v1112 = vunpack.c.l.b16 %v321
    %v1113 = vunpack.c.l.b16 %v322
    %v1114 = vunpack.c.l.b16 %v323
    %v1115 = vunpack.c.l.b16 %v324
    %v1116 = vunpack.c.l.b16 %v325
    %v1117 = vunpack.c.l.b16 %v326
    %v1118 = vunpack.c.l.b16 %v327
    %v1119 = vunpack.c.l.b16 %v328
    %v1120 = vunpack.c.l.b16 %v329
    %v1121 = vunpack.c.l.b16 %v330
    %v1122 = vunpack.c.l.b16 %v331
    %v1123 = vunpack.c.l.b16 %v332
    %v1124 = vunpack.c.l.b16 %v333
    %v1125 = vunpack.c.l.b16 %v334
    %v1126 = vunpack.c.l.b16 %v335
    %v1127 = vunpack.c.l.b16 %v336
    %v1128 = vunpack.c.l.b16 %v337
    %v1129 = vunpack.c.l.b16 %v338
    %v1130 = vunpack.c.l.b16 %v339
    %v1131 = vunpack.c.l.b16 %v340
    %v1132 = vunpack.c.l.b16 %v341
    %v1133 = vunpack.c.l.b16 %v342
    %v1134 = vunpack.c.l.b16 %v343
    %v1135 = vunpack.c.l.b16 %v344
    %v1136 = vunpack.c.l.b16 %v345
    %v1137 = vunpack.c.l.b16 %v346
    %v1138 = vunpack.c.l.b16 %v347
    %v1139 = vunpack.c.l.b16 %v348
    %v1140 = vunpack.c.l.b16 %v349
    %v1141 = vunpack.c.l.b16 %v350
    %v1142 = vunpack.c.l.b16 %v351
    %v1143 = vunpack.c.l.b16 %v352
    %v1144 = vunpack.c.l.b16 %v353
    %v1145 = vunpack.c.l.b16 %v354
    %v1146 = vunpack.c.l.b16 %v355
    %v1147 = vunpack.c.l.b16 %v356
    %v1148 = vunpack.c.l.b16 %v357
    %v1149 = vunpack.c.l.b16 %v358
    %v1150 = vunpack.c.l.b16 %v359
    %v1151 = vunpack.c.l.b16 %v360
    %v1152 = vunpack.c.l.b16 %v361
    %v1153 = vunpack.c.l.b16 %v362
    %v1154 = vunpack.c.l.b16 %v363
    %v1155 = vunpack.c.l.b16 %v364
    %v1156 = vunpack.c.l.b16 %v365
    %v1157 = vunpack.c.l.b16 %v366
    %v1158 = vunpack.c.l.b16 %v367
    %v1159 = vunpack.c.l.b16 %v368
    %v1160 = vunpack.c.l.b16 %v369
    %v1161 = vunpack.c.l.b16 %v370
    %v1162 = vunpack.c.l.b16 %v371
    %v1163 = vunpack.c.l.b16 %v372
    %v1164 = vunpack.c.l.b16 %v373
    %v1165 = vunpack.c.l.b16 %v374
    %v1166 = vunpack.c.l.b16 %v375
    %v1167 = vunpack.c.l.b16 %v376
    %v1168 = vunpack.c.l.b16 %v377
    %v1169 = vunpack.c.l.b16 %v378
    %v1170 = vunpack.c.l.b16 %v379
    %v1171 = vunpack.c.l.b16 %v380
    %v1172 = vunpack.c.l.b16 %v381
    %v1173 = vunpack.c.l.b16 %v382
    %v1174 = vunpack.c.l.b16 %v383
    %v1175 = vunpack.c.l.b16 %v384
    %v1176 = vunpack.c.l.b16 %v385
    %v1177 = vunpack.c.l.b16 %v386
    %v1178 = vunpack.c.l.b16 %v387
    %v1179 = vunpack.c.l.b16 %v388
    %v1180 = vunpack.c.l.b16 %v389
    %v1181 = vunpack.c.l.b16 %v390
    %v1182 = vunpack.c.l.b16 %v391
    %v1183 = vunpack.c.l.b16 %v392
    %v1184 = vunpack.c.l.b16 %v393
    %v1185 = vunpack.c.l.b16 %v394
    %v1186 = vunpack.c.l.b16 %v395
    %v1187 = vunpack.c.l.b16 %v396
    %v1188 = vunpack.c.l.b16 %v397
    %v1189 = vunpack.c.l.b16 %v398
    %v1190 = vunpack.c.l.b16 %v399
    %v1191 = vunpack.c.l.b16 %v400
    %v1192 = vunpack.c.l.b16 %v401
    %v1193 = vunpack.c.l.b16 %v402
    %v1194 = vunpack.c.l.b16 %v403
    %v1195 = vunpack.c.l.b16 %v404
    %v1196 = vunpack.c.l.b16 %v405
    %v1197 = vunpack.c.l.b16 %v406
    %v1198 = vunpack.c.l.b16 %v407
    %v1199 = vunpack.c.l.b16 %v408
    %v1200 = vunpack.c.l.b16 %v409
    %v1201 = vunpack.c.l.b16 %v410
    %v1202 = vunpack.c.l.b16 %v411
    %v1203 = vunpack.c.l.b16 %v412
    %v1204 = vunpack.c.l.b16 %v413
    %v1205 = vunpack.c.l.b16 %v414
    %v1206 = vunpack.c.l.b16 %v415
    %v1207 = vunpack.c.l.b16 %v416
    %v1208 = vunpack.c.l.b16 %v417
    %v1209 = vunpack.c.l.b16 %v418
    %v1210 = vunpack.c.l.b16 %v419
    %v1211 = vunpack.c.l.b16 %v420
    %v1212 = vunpack.c.l.b16 %v421
    %v1213 = vunpack.c.l.b16 %v422
    %v1214 = vunpack.c.l.b16 %v423
    %v1215 = vunpack.c.l.b16 %v424
    %v1216 = vunpack.c.l.b16 %v425
    %v1217 = vunpack.c.l.b16 %v426
    %v1218 = vunpack.c.l.b16 %v427
    %v1219 = vunpack.c.l.b16 %v428
    %v1220 = vunpack.c.l.b16 %v429
    %v1221 = vunpack.c.l.b16 %v430
    %v1222 = vunpack.c.l.b16 %v431
    %v1223 = vunpack.c.l.b16 %v432
    %v1224 = vunpack.c.l.b16 %v433
    %v1225 = vunpack.c.l.b16 %v434
    %v1226 = vunpack.c.l.b16 %v435
    %v1227 = vunpack.c.l.b16 %v436
    %v1228 = vunpack.c.l.b16 %v437
    %v1229 = vunpack.c.l.b16 %v438
    %v1230 = vunpack.c.l.b16 %v439
    %v1231 = vunpack.c.l.b16 %v440
    %v1232 = vunpack.c.l.b16 %v441
    %v1233 = vunpack.c.l.b16 %v442
    %v1234 = vunpack.c.l.b16 %v443
    %v1235 = vunpack.c.l.b16 %v444
    %v1236 = vunpack.c.l.b16 %v445
    %v1237 = vunpack.c.l.b16 %v446
    %v1238 = vunpack.c.l.b16 %v447
    %v1239 = vunpack.c.l.b16 %v448
    %v1240 = vunpack.c.l.b16 %v449
    %v1241 = vunpack.c.l.b16 %v450
    %v1242 = vunpack.c.l.b16 %v451
    %v1243 = vunpack.c.l.b16 %v452
    %v1244 = vunpack.c.l.b16 %v453
    %v1245 = vunpack.c.l.b16 %v454
    %v1246 = vunpack.c.l.b16 %v455
    %v1247 = vunpack.c.l.b16 %v456
    %v1248 = vunpack.c.l.b16 %v457
    %v1249 = vunpack.c.l.b16 %v458
    %v1250 = vunpack.c.l.b16 %v459
    %v1251 = vunpack.c.l.b16 %v460
    %v1252 = vunpack.c.l.b16 %v461
    %v1253 = vunpack.c.l.b16 %v462
    %v1254 = vunpack.c.l.b16 %v463
    %v1255 = vunpack.c.l.b16 %v464
    %v1256 = vunpack.c.l.b16 %v465
    %v1257 = vunpack.c.l.b16 %v466
    %v1258 = vunpack.c.l.b16 %v467
    %v1259 = vunpack.c.l.b16 %v468
    %v1260 = vunpack.c.l.b16 %v469
    %v1261 = vunpack.c.l.b16 %v470
    %v1262 = vunpack.c.l.b16 %v471
    %v1263 = vunpack.c.l.b16 %v472
    %v1264 = vunpack.c.l.b16 %v473
    %v1265 = vunpack.c.l.b16 %v474
    %v1266 = vunpack.c.l.b16 %v475
    %v1267 = vunpack.c.l.b16 %v476
    %v1268 = vunpack.c.l.b16 %v477
    %v1269 = vunpack.c.l.b16 %v478
    %v1270 = vunpack.c.l.b16 %v479
    %v1271 = vunpack.c.l.b16 %v480
    %v1272 = vunpack.c.l.b16 %v481
    %v1273 = vunpack.c.l.b16 %v482
    %v1274 = vunpack.c.l.b16 %v483
    %v1275 = vunpack.c.l.b16 %v484
    %v1276 = vunpack.c.l.b16 %v485
    %v1277 = vunpack.c.l.b16 %v486
    %v1278 = vunpack.c.l.b16 %v487
    %v1279 = vunpack.c.l.b16 %v488
    %v1280 = vunpack.c.l.b16 %v489
    %v1281 = vunpack.c.l.b16 %v490
    %v1282 = vunpack.c.l.b16 %v491
    %v1283 = vunpack.c.l.b16 %v492
    %v1284 = vunpack.c.l.b16 %v493
    %v1285 = vunpack.c.l.b16 %v494
    %v1286 = vunpack.c.l.b16 %v495
    %v1287 = vunpack.c.l.b16 %v496
    %v1288 = vunpack.c.l.b16 %v497
    %v1289 = vunpack.c.l.b16 %v498
    %v1290 = vunpack.c.l.b16 %v499
    %v1291 = vunpack.c.l.b16 %v500
    %v1292 = vunpack.c.l.b16 %v501
    %v1293 = vunpack.c.l.b16 %v502
    %v1294 = vunpack.c.l.b16 %v503
    %v1295 = vunpack.c.l.b16 %v504
    %v1296 = vunpack.c.l.b16 %v505
    %v1297 = vunpack.c.l.b16 %v506
    %v1298 = vunpack.c.l.b16 %v507
    %v1299 = vunpack.c.l.b16 %v508
    %v1300 = vunpack.c.l.b16 %v509
    %v1301 = vunpack.c.l.b16 %v510
    %v1302 = vunpack.c.l.b16 %v511
    %v1303 = vunpack.c.l.b16 %v512
    %v1304 = vunpack.c.l.b16 %v513
    %v1305 = vunpack.c.l.b16 %v514
    %v1306 = vunpack.c.l.b16 %v515
    %v1307 = vunpack.c.l.b16 %v516
    %v1308 = vunpack.c.l.b16 %v517
    %v1309 = vunpack.c.l.b16 %v518
    %v1310 = vunpack.c.l.b16 %v519
    %v1311 = vunpack.c.l.b16 %v520
    %v1312 = vunpack.c.l.b16 %v521
    %v1313 = vunpack.c.l.b16 %v522
    %v1314 = vunpack.c.l.b16 %v523
    %v1315 = vunpack.c.l.b16 %v524
    %v1316 = vunpack.c.l.b16 %v525
    %v1317 = vunpack.c.l.b16 %v526
    %v1318 = vunpack.c.l.b16 %v527
    %v1319 = vunpack.c.l.b16 %v528
    %v1320 = vunpack.c.l.b16 %v529
    %v1321 = vunpack.c.l.b16 %v530
    %v1322 = vunpack.c.l.b16 %v531
    %v1323 = vunpack.c.l.b16 %v532
    %v1324 = vunpack.c.l.b16 %v533
    %v1325 = vunpack.c.l.b16 %v534
    %v1326 = vunpack.c.l.b16 %v535
    %v1327 = vunpack.c.l.b16 %v536
    %v1328 = vunpack.c.l.b16 %v537
    %v1329 = vunpack.c.l.b16 %v538
    %v1330 = vunpack.c.l.b16 %v539
    %v1331 = vunpack.c.l.b16 %v540
    %v1332 = vunpack.c.l.b16 %v541
    %v1333 = vunpack.c.l.b16 %v542
    %v1334 = vunpack.c.l.b16 %v543
    %v1335 = vunpack.c.l.b16 %v544
    %v1336 = vunpack.c.l.b16 %v545
    %v1337 = vunpack.c.l.b16 %v546
    %v1338 = vunpack.c.l.b16 %v547
    %v1339 = vunpack.c.l.b16 %v548
    %v1340 = vunpack.c.l.b16 %v549
    %v1341 = vunpack.c.l.b16 %v550
    %v1342 = vunpack.c.l.b16 %v551
    %v1343 = vunpack.c.l.b16 %v552
    %v1344 = vunpack.c.l.b16 %v553
    %v1345 = vunpack.c.l.b16 %v554
    %v1346 = vunpack.c.l.b16 %v555
    %v1347 = vunpack.c.l.b16 %v556
    %v1348 = vunpack.c.l.b16 %v557
    %v1349 = vunpack.c.l.b16 %v558
    %v1350 = vunpack.c.l.b16 %v559
    %v1351 = vunpack.c.l.b16 %v560
    %v1352 = vunpack.c.l.b16 %v561
    %v1353 = vunpack.c.l.b16 %v562
    %v1354 = vunpack.c.l.b16 %v563
    %v1355 = vunpack.c.l.b16 %v564
    %v1356 = vunpack.c.l.b16 %v565
    %v1357 = vunpack.c.l.b16 %v566
    %v1358 = vunpack.c.l.b16 %v567
    %v1359 = vunpack.c.l.b16 %v568
    %v1360 = vunpack.c.l.b16 %v569
    %v1361 = vunpack.c.l.b16 %v570
    %v1362 = vunpack.c.l.b16 %v571
    %v1363 = vunpack.c.l.b16 %v572
    %v1364 = vunpack.c.l.b16 %v573
    %v1365 = vunpack.c.l.b16 %v574
    %v1366 = vunpack.c.l.b16 %v575
    %v1367 = vunpack.c.l.b16 %v576
    %v1368 = vunpack.c.l.b16 %v577
    %v1369 = vunpack.c.l.b16 %v578
    %v1370 = vunpack.c.l.b16 %v579
    %v1371 = vunpack.c.l.b16 %v580
    %v1372 = vunpack.c.l.b16 %v581
    %v1373 = vunpack.c.l.b16 %v582
    %v1374 = vunpack.c.l.b16 %v583
    %v1375 = vunpack.c.l.b16 %v584
    %v1376 = vunpack.c.l.b16 %v585
    %v1377 = vunpack.c.l.b16 %v586
    %v1378 = vpack.c.b16 %v987, %v986
    %v1379 = vpack.c.b16 %v989, %v988
    %v1380 = vpack.c.b16 %v991, %v990
    %v1381 = vpack.c.b16 %v993, %v992
    %v1382 = vpack.c.b16 %v995, %v994
    %v1383 = vpack.c.b16 %v997, %v996
    %v1384 = vpack.c.b16 %v999, %v998
    %v1385 = vpack.c.b16 %v1001, %v1000
    %v1386 = vpack.c.b16 %v1003, %v1002
    %v1387 = vpack.c.b16 %v1005, %v1004
    %v1388 = vpack.c.b16 %v1007, %v1006
    %v1389 = vpack.c.b16 %v1009, %v1008
    %v1390 = vpack.c.b16 %v1011, %v1010
    %v1391 = vpack.c.b16 %v1013, %v1012
    %v1392 = vpack.c.b16 %v1015, %v1014
    %v1393 = vpack.c.b16 %v1017, %v1016
    %v1394 = vpack.c.b16 %v1019, %v1018
    %v1395 = vpack.c.b16 %v1021, %v1020
    %v1396 = vpack.c.b16 %v1023, %v1022
    %v1397 = vpack.c.b16 %v1025, %v1024
    %v1398 = vpack.c.b16 %v1027, %v1026
    %v1399 = vpack.c.b16 %v1029, %v1028
    %v1400 = vpack.c.b16 %v1031, %v1030
    %v1401 = vpack.c.b16 %v1033, %v1032
    %v1402 = vpack.c.b16 %v1035, %v1034
    %v1403 = vpack.c.b16 %v1037, %v1036
    %v1404 = vpack.c.b16 %v1039, %v1038
    %v1405 = vpack.c.b16 %v1041, %v1040
    %v1406 = vpack.c.b16 %v1043, %v1042
    %v1407 = vpack.c.b16 %v1045, %v1044
    %v1408 = vpack.c.b16 %v1047, %v1046
    %v1409 = vpack.c.b16 %v1049, %v1048
    %v1410 = vpack.c.b16 %v1051, %v1050
    %v1411 = vpack.c.b16 %v1053, %v1052
    %v1412 = vpack.c.b16 %v1055, %v1054
    %v1413 = vpack.c.b16 %v1057, %v1056
    %v1414 = vpack.c.b16 %v1059, %v1058
    %v1415 = vpack.c.b16 %v1061, %v1060
    %v1416 = vpack.c.b16 %v1063, %v1062
    %v1417 = vpack.c.b16 %v1065, %v1064
    %v1418 = vpack.c.b16 %v1067, %v1066
    %v1419 = vpack.c.b16 %v1069, %v1068
    %v1420 = vpack.c.b16 %v1071, %v1070
    %v1421 = vpack.c.b16 %v1073, %v1072
    %v1422 = vpack.c.b16 %v1075, %v1074
    %v1423 = vpack.c.b16 %v1077, %v1076
    %v1424 = vpack.c.b16 %v1079, %v1078
    %v1425 = vpack.c.b16 %v1081, %v1080
    %v1426 = vpack.c.b16 %v1083, %v1082
    %v1427 = vpack.c.b16 %v1085, %v1084
    %v1428 = vpack.c.b16 %v1087, %v1086
    %v1429 = vpack.c.b16 %v1089, %v1088
    %v1430 = vpack.c.b16 %v1091, %v1090
    %v1431 = vpack.c.b16 %v1093, %v1092
    %v1432 = vpack.c.b16 %v1095, %v1094
    %v1433 = vpack.c.b16 %v1097, %v1096
    %v1434 = vpack.c.b16 %v1099, %v1098
    %v1435 = vpack.c.b16 %v1101, %v1100
    %v1436 = vpack.c.b16 %v1103, %v1102
    %v1437 = vpack.c.b16 %v1105, %v1104
    %v1438 = vpack.c.b16 %v1107, %v1106
    %v1439 = vpack.c.b16 %v1109, %v1108
    %v1440 = vpack.c.b16 %v1111, %v1110
    %v1441 = vpack.c.b16 %v1113, %v1112
    %v1442 = vpack.c.b16 %v1115, %v1114
    %v1443 = vpack.c.b16 %v1117, %v1116
    %v1444 = vpack.c.b16 %v1119, %v1118
    %v1445 = vpack.c.b16 %v1121, %v1120
    %v1446 = vpack.c.b16 %v1123, %v1122
    %v1447 = vpack.c.b16 %v1125, %v1124
    %v1448 = vpack.c.b16 %v1127, %v1126
    %v1449 = vpack.c.b16 %v1129, %v1128
    %v1450 = vpack.c.b16 %v1131, %v1130
    %v1451 = vpack.c.b16 %v1133, %v1132
    %v1452 = vpack.c.b16 %v1135, %v1134
    %v1453 = vpack.c.b16 %v1137, %v1136
    %v1454 = vpack.c.b16 %v1139, %v1138
    %v1455 = vpack.c.b16 %v1141, %v1140
    %v1456 = vpack.c.b16 %v1143, %v1142
    %v1457 = vpack.c.b16 %v1145, %v1144
    %v1458 = vpack.c.b16 %v1147, %v1146
    %v1459 = vpack.c.b16 %v1149, %v1148
    %v1460 = vpack.c.b16 %v1151, %v1150
    %v1461 = vpack.c.b16 %v1153, %v1152
    %v1462 = vpack.c.b16 %v1155, %v1154
    %v1463 = vpack.c.b16 %v1157, %v1156
    %v1464 = vpack.c.b16 %v1159, %v1158
    %v1465 = vpack.c.b16 %v1161, %v1160
    %v1466 = vpack.c.b16 %v1163, %v1162
    %v1467 = vpack.c.b16 %v1165, %v1164
    %v1468 = vpack.c.b16 %v1167, %v1166
    %v1469 = vpack.c.b16 %v1169, %v1168
    %v1470 = vpack.c.b16 %v1171, %v1170
    %v1471 = vpack.c.b16 %v1173, %v1172
    %v1472 = vpack.c.b16 %v1175, %v1174
    %v1473 = vpack.c.b16 %v1177, %v1176
    %v1474 = vpack.c.b16 %v1179, %v1178
    %v1475 = vpack.c.b16 %v1181, %v1180
    %v1476 = vpack.c.b16 %v1183, %v1182
    %v1477 = vpack.c.b16 %v1185, %v1184
    %v1478 = vpack.c.b16 %v1187, %v1186
    %v1479 = vpack.c.b16 %v1189, %v1188
    %v1480 = vpack.c.b16 %v1191, %v1190
    %v1481 = vpack.c.b16 %v1193, %v1192
    %v1482 = vpack.c.b16 %v1195, %v1194
    %v1483 = vpack.c.b16 %v1197, %v1196
    %v1484 = vpack.c.b16 %v1199, %v1198
    %v1485 = vpack.c.b16 %v1201, %v1200
    %v1486 = vpack.c.b16 %v1203, %v1202
    %v1487 = vpack.c.b16 %v1205, %v1204
    %v1488 = vpack.c.b16 %v1207, %v1206
    %v1489 = vpack.c.b16 %v1209, %v1208
    %v1490 = vpack.c.b16 %v1211, %v1210
    %v1491 = vpack.c.b16 %v1213, %v1212
    %v1492 = vpack.c.b16 %v1215, %v1214
    %v1493 = vpack.c.b16 %v1217, %v1216
    %v1494 = vpack.c.b16 %v1219, %v1218
    %v1495 = vpack.c.b16 %v1221, %v1220
    %v1496 = vpack.c.b16 %v1223, %v1222
    %v1497 = vpack.c.b16 %v1225, %v1224
    %v1498 = vpack.c.b16 %v1227, %v1226
    %v1499 = vpack.c.b16 %v1229, %v1228
    %v1500 = vpack.c.b16 %v1231, %v1230
    %v1501 = vpack.c.b16 %v1233, %v1232
    %v1502 = vpack.c.b16 %v1235, %v1234
    %v1503 = vpack.c.b16 %v1237, %v1236
    %v1504 = vpack.c.b16 %v1239, %v1238
    %v1505 = vpack.c.b16 %v1241, %v1240
    %v1506 = vpack.c.b16 %v1243, %v1242
    %v1507 = vpack.c.b16 %v1245, %v1244
    %v1508 = vpack.c.b16 %v1247, %v1246
    %v1509 = vpack.c.b16 %v1249, %v1248
    %v1510 = vpack.c.b16 %v1251, %v1250
    %v1511 = vpack.c.b16 %v1253, %v1252
    %v1512 = vpack.c.b16 %v1255, %v1254
    %v1513 = vpack.c.b16 %v1257, %v1256
    %v1514 = vpack.c.b16 %v1259, %v1258
    %v1515 = vpack.c.b16 %v1261, %v1260
    %v1516 = vpack.c.b16 %v1263, %v1262
    %v1517 = vpack.c.b16 %v1265, %v1264
    %v1518 = vpack.c.b16 %v1267, %v1266
    %v1519 = vpack.c.b16 %v1269, %v1268
    %v1520 = vpack.c.b16 %v1271, %v1270
    %v1521 = vpack.c.b16 %v1273, %v1272
    %v1522 = vpack.c.b16 %v1275, %v1274
    %v1523 = vpack.c.b16 %v1277, %v1276
    %v1524 = vpack.c.b16 %v1279, %v1278
    %v1525 = vpack.c.b16 %v1281, %v1280
    %v1526 = vpack.c.b16 %v1283, %v1282
    %v1527 = vpack.c.b16 %v1285, %v1284
    %v1528 = vpack.c.b16 %v1287, %v1286
    %v1529 = vpack.c.b16 %v1289, %v1288
    %v1530 = vpack.c.b16 %v1291, %v1290
    %v1531 = vpack.c.b16 %v1293, %v1292
    %v1532 = vpack.c.b16 %v1295, %v1294
    %v1533 = vpack.c.b16 %v1297, %v1296
    %v1534 = vpack.c.b16 %v1299, %v1298
    %v1535 = vpack.c.b16 %v1301, %v1300
    %v1536 = vpack.c.b16 %v1303, %v1302
    %v1537 = vpack.c.b16 %v1305, %v1304
    %v1538 = vpack.c.b16 %v1307, %v1306
    %v1539 = vpack.c.b16 %v1309, %v1308
    %v1540 = vpack.c.b16 %v1311, %v1310
    %v1541 = vpack.c.b16 %v1313, %v1312
    %v1542 = vpack.c.b16 %v1315, %v1314
    %v1543 = vpack.c.b16 %v1317, %v1316
    %v1544 = vpack.c.b16 %v1319, %v1318
    %v1545 = vpack.c.b16 %v1321, %v1320
    %v1546 = vpack.c.b16 %v1323, %v1322
    %v1547 = vpack.c.b16 %v1325, %v1324
    %v1548 = vpack.c.b16 %v1327, %v1326
    %v1549 = vpack.c.b16 %v1329, %v1328
    %v1550 = vpack.c.b16 %v1331, %v1330
    %v1551 = vpack.c.b16 %v1333, %v1332
    %v1552 = vpack.c.b16 %v1335, %v1334
    %v1553 = vpack.c.b16 %v1337, %v1336
    %v1554 = vpack.c.b16 %v1339, %v1338
    %v1555 = vpack.c.b16 %v1341, %v1340
    %v1556 = vpack.c.b16 %v1343, %v1342
    %v1557 = vpack.c.b16 %v1345, %v1344
    %v1558 = vpack.c.b16 %v1347, %v1346
    %v1559 = vpack.c.b16 %v1349, %v1348
    %v1560 = vpack.c.b16 %v1351, %v1350
    %v1561 = vpack.c.b16 %v1353, %v1352
    %v1562 = vpack.c.b16 %v1355, %v1354
    %v1563 = vpack.c.b16 %v1357, %v1356
    %v1564 = vpack.c.b16 %v1359, %v1358
    %v1565 = vpack.c.b16 %v1361, %v1360
    %v1566 = vpack.c.b16 %v1363, %v1362
    %v1567 = vpack.c.b16 %v1365, %v1364
    %v1568 = vpack.c.b16 %v1367, %v1366
    %v1569 = vpack.c.b16 %v1369, %v1368
    %v1570 = vpack.c.b16 %v1371, %v1370
    %v1571 = vpack.c.b16 %v1373, %v1372
    %v1572 = vpack.c.b16 %v1375, %v1374
    %v1573 = vpack.c.b16 %v1377, %v1376
    %vm1770 = vcmask 523264
    %v1772 = vsel %vm1770, %v194, 0
    %1774 = vmatprep.subr.bf16.mxu0 0
    %1775 = vmatpush1.bf16.msra.mxu0 %v1385
    %1776 = vmatprep.subr.bf16.mxu0 0
    %1777 = vmatpush1.bf16.msra.mxu0 %v1384
    %1778 = vmatprep.subr.bf16.mxu0 0
    %1779 = vmatpush1.bf16.msra.mxu0 %v1383
    %1780 = vmatprep.subr.bf16.mxu0 0
    %1781 = vmatpush1.bf16.msra.mxu0 %v1382
    %1782 = vmatprep.subr.bf16.mxu0 0
    %1783 = vmatpush1.bf16.msra.mxu0 %v1381
    %1784 = vmatprep.subr.bf16.mxu0 0
    %1785 = vmatpush1.bf16.msra.mxu0 %v1380
    %1786 = vmatprep.subr.bf16.mxu0 0
    %1787 = vmatpush1.bf16.msra.mxu0 %v1379
    %1788 = vmatprep.subr.bf16.mxu0 0
    %1789 = vmatpush1.bf16.msra.mxu0 %v1378
    %1790 = vmatprep.subr.bf16.mxu0 0
    %1791 = vmatpush2.bf16.msra.mxu0 %v1393
    %1792 = vmatprep.subr.bf16.mxu0 0
    %1793 = vmatpush2.bf16.msra.mxu0 %v1392
    %1794 = vmatprep.subr.bf16.mxu0 0
    %1795 = vmatpush2.bf16.msra.mxu0 %v1391
    %1796 = vmatprep.subr.bf16.mxu0 0
    %1797 = vmatpush2.bf16.msra.mxu0 %v1390
    %1798 = vmatprep.subr.bf16.mxu0 0
    %1799 = vmatpush2.bf16.msra.mxu0 %v1389
    %1800 = vmatprep.subr.bf16.mxu0 0
    %1801 = vmatpush2.bf16.msra.mxu0 %v1388
    %1802 = vmatprep.subr.bf16.mxu0 0
    %1803 = vmatpush2.bf16.msra.mxu0 %v1387
    %1804 = vmatprep.subr.bf16.mxu0 0
    %1805 = vmatpush2.bf16.msra.mxu0 %v1386
    %1806 = vmatprep.mubr.bf16.mxu0 %v171
    %1807 = vmatmul.mubr.bf16.gmra.mxu0 %v170
    %v1808 = vpop.f32.mrf.mxu0
    %v1809 = vadd.f32 %v592, %v1808
    %v1810 = vpop.f32.mrf.mxu0
    %v1811 = vpop.f32.mrf.mxu0
    %v1812 = vpop.f32.mrf.mxu0
    %1813 = vdwg.mxu0
    %1814 = vmatprep.subr.bf16.mxu0 0
    %1815 = vmatpush1.bf16.msra.mxu0 %v1401
    %1816 = vmatprep.subr.bf16.mxu0 0
    %1817 = vmatpush1.bf16.msra.mxu0 %v1400
    %1818 = vmatprep.subr.bf16.mxu0 0
    %1819 = vmatpush1.bf16.msra.mxu0 %v1399
    %1820 = vmatprep.subr.bf16.mxu0 0
    %1821 = vmatpush1.bf16.msra.mxu0 %v1398
    %1822 = vmatprep.subr.bf16.mxu0 0
    %1823 = vmatpush1.bf16.msra.mxu0 %v1397
    %1824 = vmatprep.subr.bf16.mxu0 0
    %1825 = vmatpush1.bf16.msra.mxu0 %v1396
    %1826 = vmatprep.subr.bf16.mxu0 0
    %1827 = vmatpush1.bf16.msra.mxu0 %v1395
    %1828 = vmatprep.subr.bf16.mxu0 0
    %1829 = vmatpush1.bf16.msra.mxu0 %v1394
    %1830 = vmatprep.subr.bf16.mxu0 0
    %1831 = vmatpush2.bf16.msra.mxu0 %v1409
    %1832 = vmatprep.subr.bf16.mxu0 0
    %1833 = vmatpush2.bf16.msra.mxu0 %v1408
    %1834 = vmatprep.subr.bf16.mxu0 0
    %1835 = vmatpush2.bf16.msra.mxu0 %v1407
    %1836 = vmatprep.subr.bf16.mxu0 0
    %1837 = vmatpush2.bf16.msra.mxu0 %v1406
    %1838 = vmatprep.subr.bf16.mxu0 0
    %1839 = vmatpush2.bf16.msra.mxu0 %v1405
    %1840 = vmatprep.subr.bf16.mxu0 0
    %1841 = vmatpush2.bf16.msra.mxu0 %v1404
    %1842 = vmatprep.subr.bf16.mxu0 0
    %1843 = vmatpush2.bf16.msra.mxu0 %v1403
    %1844 = vmatprep.subr.bf16.mxu0 0
    %1845 = vmatpush2.bf16.msra.mxu0 %v1402
    %1846 = vmatprep.mubr.bf16.mxu0 %v173
    %1847 = vmatmul.mubr.bf16.gmra.mxu0 %v172
    %v1848 = vpop.f32.mrf.mxu0
    %v1849 = vadd.f32 %v1809, %v1848
    %v1850 = vpop.f32.mrf.mxu0
    %v1851 = vpop.f32.mrf.mxu0
    %v1852 = vpop.f32.mrf.mxu0
    %1853 = vdwg.mxu0
    %1854 = vmatprep.subr.bf16.mxu0 0
    %1855 = vmatpush1.bf16.msra.mxu0 %v1417
    %1856 = vmatprep.subr.bf16.mxu0 0
    %1857 = vmatpush1.bf16.msra.mxu0 %v1416
    %1858 = vmatprep.subr.bf16.mxu0 0
    %1859 = vmatpush1.bf16.msra.mxu0 %v1415
    %1860 = vmatprep.subr.bf16.mxu0 0
    %1861 = vmatpush1.bf16.msra.mxu0 %v1414
    %1862 = vmatprep.subr.bf16.mxu0 0
    %1863 = vmatpush1.bf16.msra.mxu0 %v1413
    %1864 = vmatprep.subr.bf16.mxu0 0
    %1865 = vmatpush1.bf16.msra.mxu0 %v1412
    %1866 = vmatprep.subr.bf16.mxu0 0
    %1867 = vmatpush1.bf16.msra.mxu0 %v1411
    %1868 = vmatprep.subr.bf16.mxu0 0
    %1869 = vmatpush1.bf16.msra.mxu0 %v1410
    %1870 = vmatprep.subr.bf16.mxu0 0
    %1871 = vmatpush2.bf16.msra.mxu0 %v1425
    %1872 = vmatprep.subr.bf16.mxu0 0
    %1873 = vmatpush2.bf16.msra.mxu0 %v1424
    %1874 = vmatprep.subr.bf16.mxu0 0
    %1875 = vmatpush2.bf16.msra.mxu0 %v1423
    %1876 = vmatprep.subr.bf16.mxu0 0
    %1877 = vmatpush2.bf16.msra.mxu0 %v1422
    %1878 = vmatprep.subr.bf16.mxu0 0
    %1879 = vmatpush2.bf16.msra.mxu0 %v1421
    %1880 = vmatprep.subr.bf16.mxu0 0
    %1881 = vmatpush2.bf16.msra.mxu0 %v1420
    %1882 = vmatprep.subr.bf16.mxu0 0
    %1883 = vmatpush2.bf16.msra.mxu0 %v1419
    %1884 = vmatprep.subr.bf16.mxu0 0
    %1885 = vmatpush2.bf16.msra.mxu0 %v1418
    %1886 = vmatprep.mubr.bf16.mxu0 %v175
    %1887 = vmatmul.mubr.bf16.gmra.mxu0 %v174
    %v1888 = vpop.f32.mrf.mxu0
    %v1889 = vadd.f32 %v1849, %v1888
    %v1890 = vpop.f32.mrf.mxu0
    %v1891 = vpop.f32.mrf.mxu0
    %v1892 = vpop.f32.mrf.mxu0
    %1893 = vdwg.mxu0
    %1894 = vmatprep.subr.bf16.mxu0 0
    %1895 = vmatpush1.bf16.msra.mxu0 %v1433
    %1896 = vmatprep.subr.bf16.mxu0 0
    %1897 = vmatpush1.bf16.msra.mxu0 %v1432
    %1898 = vmatprep.subr.bf16.mxu0 0
    %1899 = vmatpush1.bf16.msra.mxu0 %v1431
    %1900 = vmatprep.subr.bf16.mxu0 0
    %1901 = vmatpush1.bf16.msra.mxu0 %v1430
    %1902 = vmatprep.subr.bf16.mxu0 0
    %1903 = vmatpush1.bf16.msra.mxu0 %v1429
    %1904 = vmatprep.subr.bf16.mxu0 0
    %1905 = vmatpush1.bf16.msra.mxu0 %v1428
    %1906 = vmatprep.subr.bf16.mxu0 0
    %1907 = vmatpush1.bf16.msra.mxu0 %v1427
    %1908 = vmatprep.subr.bf16.mxu0 0
    %1909 = vmatpush1.bf16.msra.mxu0 %v1426
    %1910 = vmatprep.subr.bf16.mxu0 0
    %1911 = vmatpush2.bf16.msra.mxu0 %v1441
    %1912 = vmatprep.subr.bf16.mxu0 0
    %1913 = vmatpush2.bf16.msra.mxu0 %v1440
    %1914 = vmatprep.subr.bf16.mxu0 0
    %1915 = vmatpush2.bf16.msra.mxu0 %v1439
    %1916 = vmatprep.subr.bf16.mxu0 0
    %1917 = vmatpush2.bf16.msra.mxu0 %v1438
    %1918 = vmatprep.subr.bf16.mxu0 0
    %1919 = vmatpush2.bf16.msra.mxu0 %v1437
    %1920 = vmatprep.subr.bf16.mxu0 0
    %1921 = vmatpush2.bf16.msra.mxu0 %v1436
    %1922 = vmatprep.subr.bf16.mxu0 0
    %1923 = vmatpush2.bf16.msra.mxu0 %v1435
    %1924 = vmatprep.subr.bf16.mxu0 0
    %1925 = vmatpush2.bf16.msra.mxu0 %v1434
    %1926 = vmatprep.mubr.bf16.mxu0 %v177
    %1927 = vmatmul.mubr.bf16.gmra.mxu0 %v176
    %v1928 = vpop.f32.mrf.mxu0
    %v1929 = vadd.f32 %v1889, %v1928
    %v1930 = vpop.f32.mrf.mxu0
    %v1931 = vpop.f32.mrf.mxu0
    %v1932 = vpop.f32.mrf.mxu0
    %1933 = vdwg.mxu0
    %1934 = vmatprep.subr.bf16.mxu0 0
    %1935 = vmatpush1.bf16.msra.mxu0 %v1449
    %1936 = vmatprep.subr.bf16.mxu0 0
    %1937 = vmatpush1.bf16.msra.mxu0 %v1448
    %1938 = vmatprep.subr.bf16.mxu0 0
    %1939 = vmatpush1.bf16.msra.mxu0 %v1447
    %1940 = vmatprep.subr.bf16.mxu0 0
    %1941 = vmatpush1.bf16.msra.mxu0 %v1446
    %1942 = vmatprep.subr.bf16.mxu0 0
    %1943 = vmatpush1.bf16.msra.mxu0 %v1445
    %1944 = vmatprep.subr.bf16.mxu0 0
    %1945 = vmatpush1.bf16.msra.mxu0 %v1444
    %1946 = vmatprep.subr.bf16.mxu0 0
    %1947 = vmatpush1.bf16.msra.mxu0 %v1443
    %1948 = vmatprep.subr.bf16.mxu0 0
    %1949 = vmatpush1.bf16.msra.mxu0 %v1442
    %1950 = vmatprep.subr.bf16.mxu0 0
    %1951 = vmatpush2.bf16.msra.mxu0 %v1457
    %1952 = vmatprep.subr.bf16.mxu0 0
    %1953 = vmatpush2.bf16.msra.mxu0 %v1456
    %1954 = vmatprep.subr.bf16.mxu0 0
    %1955 = vmatpush2.bf16.msra.mxu0 %v1455
    %1956 = vmatprep.subr.bf16.mxu0 0
    %1957 = vmatpush2.bf16.msra.mxu0 %v1454
    %1958 = vmatprep.subr.bf16.mxu0 0
    %1959 = vmatpush2.bf16.msra.mxu0 %v1453
    %1960 = vmatprep.subr.bf16.mxu0 0
    %1961 = vmatpush2.bf16.msra.mxu0 %v1452
    %1962 = vmatprep.subr.bf16.mxu0 0
    %1963 = vmatpush2.bf16.msra.mxu0 %v1451
    %1964 = vmatprep.subr.bf16.mxu0 0
    %1965 = vmatpush2.bf16.msra.mxu0 %v1450
    %1966 = vmatprep.mubr.bf16.mxu0 %v179
    %1967 = vmatmul.mubr.bf16.gmra.mxu0 %v178
    %v1968 = vpop.f32.mrf.mxu0
    %v1969 = vadd.f32 %v1929, %v1968
    %v1970 = vpop.f32.mrf.mxu0
    %v1971 = vpop.f32.mrf.mxu0
    %v1972 = vpop.f32.mrf.mxu0
    %1973 = vdwg.mxu0
    %1974 = vmatprep.subr.bf16.mxu0 0
    %1975 = vmatpush1.bf16.msra.mxu0 %v1465
    %1976 = vmatprep.subr.bf16.mxu0 0
    %1977 = vmatpush1.bf16.msra.mxu0 %v1464
    %1978 = vmatprep.subr.bf16.mxu0 0
    %1979 = vmatpush1.bf16.msra.mxu0 %v1463
    %1980 = vmatprep.subr.bf16.mxu0 0
    %1981 = vmatpush1.bf16.msra.mxu0 %v1462
    %1982 = vmatprep.subr.bf16.mxu0 0
    %1983 = vmatpush1.bf16.msra.mxu0 %v1461
    %1984 = vmatprep.subr.bf16.mxu0 0
    %1985 = vmatpush1.bf16.msra.mxu0 %v1460
    %1986 = vmatprep.subr.bf16.mxu0 0
    %1987 = vmatpush1.bf16.msra.mxu0 %v1459
    %1988 = vmatprep.subr.bf16.mxu0 0
    %1989 = vmatpush1.bf16.msra.mxu0 %v1458
    %1990 = vmatprep.subr.bf16.mxu0 0
    %1991 = vmatpush2.bf16.msra.mxu0 %v1473
    %1992 = vmatprep.subr.bf16.mxu0 0
    %1993 = vmatpush2.bf16.msra.mxu0 %v1472
    %1994 = vmatprep.subr.bf16.mxu0 0
    %1995 = vmatpush2.bf16.msra.mxu0 %v1471
    %1996 = vmatprep.subr.bf16.mxu0 0
    %1997 = vmatpush2.bf16.msra.mxu0 %v1470
    %1998 = vmatprep.subr.bf16.mxu0 0
    %1999 = vmatpush2.bf16.msra.mxu0 %v1469
    %2000 = vmatprep.subr.bf16.mxu0 0
    %2001 = vmatpush2.bf16.msra.mxu0 %v1468
    %2002 = vmatprep.subr.bf16.mxu0 0
    %2003 = vmatpush2.bf16.msra.mxu0 %v1467
    %2004 = vmatprep.subr.bf16.mxu0 0
    %2005 = vmatpush2.bf16.msra.mxu0 %v1466
    %2006 = vmatprep.mubr.bf16.mxu0 %v181
    %2007 = vmatmul.mubr.bf16.gmra.mxu0 %v180
    %v2008 = vpop.f32.mrf.mxu0
    %v2009 = vadd.f32 %v1969, %v2008
    %v2010 = vpop.f32.mrf.mxu0
    %v2011 = vpop.f32.mrf.mxu0
    %v2012 = vpop.f32.mrf.mxu0
    %2013 = vdwg.mxu0
    %2014 = vmatprep.subr.bf16.mxu0 0
    %2015 = vmatpush1.bf16.msra.mxu0 %v1481
    %2016 = vmatprep.subr.bf16.mxu0 0
    %2017 = vmatpush1.bf16.msra.mxu0 %v1480
    %2018 = vmatprep.subr.bf16.mxu0 0
    %2019 = vmatpush1.bf16.msra.mxu0 %v1479
    %2020 = vmatprep.subr.bf16.mxu0 0
    %2021 = vmatpush1.bf16.msra.mxu0 %v1478
    %2022 = vmatprep.subr.bf16.mxu0 0
    %2023 = vmatpush1.bf16.msra.mxu0 %v1477
    %2024 = vmatprep.subr.bf16.mxu0 0
    %2025 = vmatpush1.bf16.msra.mxu0 %v1476
    %2026 = vmatprep.subr.bf16.mxu0 0
    %2027 = vmatpush1.bf16.msra.mxu0 %v1475
    %2028 = vmatprep.subr.bf16.mxu0 0
    %2029 = vmatpush1.bf16.msra.mxu0 %v1474
    %2030 = vmatprep.subr.bf16.mxu0 0
    %2031 = vmatpush2.bf16.msra.mxu0 %v1489
    %2032 = vmatprep.subr.bf16.mxu0 0
    %2033 = vmatpush2.bf16.msra.mxu0 %v1488
    %2034 = vmatprep.subr.bf16.mxu0 0
    %2035 = vmatpush2.bf16.msra.mxu0 %v1487
    %2036 = vmatprep.subr.bf16.mxu0 0
    %2037 = vmatpush2.bf16.msra.mxu0 %v1486
    %2038 = vmatprep.subr.bf16.mxu0 0
    %2039 = vmatpush2.bf16.msra.mxu0 %v1485
    %2040 = vmatprep.subr.bf16.mxu0 0
    %2041 = vmatpush2.bf16.msra.mxu0 %v1484
    %2042 = vmatprep.subr.bf16.mxu0 0
    %2043 = vmatpush2.bf16.msra.mxu0 %v1483
    %2044 = vmatprep.subr.bf16.mxu0 0
    %2045 = vmatpush2.bf16.msra.mxu0 %v1482
    %2046 = vmatprep.mubr.bf16.mxu0 %v183
    %2047 = vmatmul.mubr.bf16.gmra.mxu0 %v182
    %v2048 = vpop.f32.mrf.mxu0
    %v2049 = vadd.f32 %v2009, %v2048
    %v2050 = vpop.f32.mrf.mxu0
    %v2051 = vpop.f32.mrf.mxu0
    %v2052 = vpop.f32.mrf.mxu0
    %2053 = vdwg.mxu0
    %2054 = vmatprep.subr.bf16.mxu0 0
    %2055 = vmatpush1.bf16.msra.mxu0 %v1497
    %2056 = vmatprep.subr.bf16.mxu0 0
    %2057 = vmatpush1.bf16.msra.mxu0 %v1496
    %2058 = vmatprep.subr.bf16.mxu0 0
    %2059 = vmatpush1.bf16.msra.mxu0 %v1495
    %2060 = vmatprep.subr.bf16.mxu0 0
    %2061 = vmatpush1.bf16.msra.mxu0 %v1494
    %2062 = vmatprep.subr.bf16.mxu0 0
    %2063 = vmatpush1.bf16.msra.mxu0 %v1493
    %2064 = vmatprep.subr.bf16.mxu0 0
    %2065 = vmatpush1.bf16.msra.mxu0 %v1492
    %2066 = vmatprep.subr.bf16.mxu0 0
    %2067 = vmatpush1.bf16.msra.mxu0 %v1491
    %2068 = vmatprep.subr.bf16.mxu0 0
    %2069 = vmatpush1.bf16.msra.mxu0 %v1490
    %2070 = vmatprep.subr.bf16.mxu0 0
    %2071 = vmatpush2.bf16.msra.mxu0 %v1505
    %2072 = vmatprep.subr.bf16.mxu0 0
    %2073 = vmatpush2.bf16.msra.mxu0 %v1504
    %2074 = vmatprep.subr.bf16.mxu0 0
    %2075 = vmatpush2.bf16.msra.mxu0 %v1503
    %2076 = vmatprep.subr.bf16.mxu0 0
    %2077 = vmatpush2.bf16.msra.mxu0 %v1502
    %2078 = vmatprep.subr.bf16.mxu0 0
    %2079 = vmatpush2.bf16.msra.mxu0 %v1501
    %2080 = vmatprep.subr.bf16.mxu0 0
    %2081 = vmatpush2.bf16.msra.mxu0 %v1500
    %2082 = vmatprep.subr.bf16.mxu0 0
    %2083 = vmatpush2.bf16.msra.mxu0 %v1499
    %2084 = vmatprep.subr.bf16.mxu0 0
    %2085 = vmatpush2.bf16.msra.mxu0 %v1498
    %2086 = vmatprep.mubr.bf16.mxu0 %v185
    %2087 = vmatmul.mubr.bf16.gmra.mxu0 %v184
    %v2088 = vpop.f32.mrf.mxu0
    %v2089 = vadd.f32 %v2049, %v2088
    %v2090 = vpop.f32.mrf.mxu0
    %v2091 = vpop.f32.mrf.mxu0
    %v2092 = vpop.f32.mrf.mxu0
    %2093 = vdwg.mxu0
    %2094 = vmatprep.subr.bf16.mxu0 0
    %2095 = vmatpush1.bf16.msra.mxu0 %v1513
    %2096 = vmatprep.subr.bf16.mxu0 0
    %2097 = vmatpush1.bf16.msra.mxu0 %v1512
    %2098 = vmatprep.subr.bf16.mxu0 0
    %2099 = vmatpush1.bf16.msra.mxu0 %v1511
    %2100 = vmatprep.subr.bf16.mxu0 0
    %2101 = vmatpush1.bf16.msra.mxu0 %v1510
    %2102 = vmatprep.subr.bf16.mxu0 0
    %2103 = vmatpush1.bf16.msra.mxu0 %v1509
    %2104 = vmatprep.subr.bf16.mxu0 0
    %2105 = vmatpush1.bf16.msra.mxu0 %v1508
    %2106 = vmatprep.subr.bf16.mxu0 0
    %2107 = vmatpush1.bf16.msra.mxu0 %v1507
    %2108 = vmatprep.subr.bf16.mxu0 0
    %2109 = vmatpush1.bf16.msra.mxu0 %v1506
    %2110 = vmatprep.subr.bf16.mxu0 0
    %2111 = vmatpush2.bf16.msra.mxu0 %v1521
    %2112 = vmatprep.subr.bf16.mxu0 0
    %2113 = vmatpush2.bf16.msra.mxu0 %v1520
    %2114 = vmatprep.subr.bf16.mxu0 0
    %2115 = vmatpush2.bf16.msra.mxu0 %v1519
    %2116 = vmatprep.subr.bf16.mxu0 0
    %2117 = vmatpush2.bf16.msra.mxu0 %v1518
    %2118 = vmatprep.subr.bf16.mxu0 0
    %2119 = vmatpush2.bf16.msra.mxu0 %v1517
    %2120 = vmatprep.subr.bf16.mxu0 0
    %2121 = vmatpush2.bf16.msra.mxu0 %v1516
    %2122 = vmatprep.subr.bf16.mxu0 0
    %2123 = vmatpush2.bf16.msra.mxu0 %v1515
    %2124 = vmatprep.subr.bf16.mxu0 0
    %2125 = vmatpush2.bf16.msra.mxu0 %v1514
    %2126 = vmatprep.mubr.bf16.mxu0 %v187
    %2127 = vmatmul.mubr.bf16.gmra.mxu0 %v186
    %v2128 = vpop.f32.mrf.mxu0
    %v2129 = vadd.f32 %v2089, %v2128
    %v2130 = vpop.f32.mrf.mxu0
    %v2131 = vpop.f32.mrf.mxu0
    %v2132 = vpop.f32.mrf.mxu0
    %2133 = vdwg.mxu0
    %2134 = vmatprep.subr.bf16.mxu0 0
    %2135 = vmatpush1.bf16.msra.mxu0 %v1529
    %2136 = vmatprep.subr.bf16.mxu0 0
    %2137 = vmatpush1.bf16.msra.mxu0 %v1528
    %2138 = vmatprep.subr.bf16.mxu0 0
    %2139 = vmatpush1.bf16.msra.mxu0 %v1527
    %2140 = vmatprep.subr.bf16.mxu0 0
    %2141 = vmatpush1.bf16.msra.mxu0 %v1526
    %2142 = vmatprep.subr.bf16.mxu0 0
    %2143 = vmatpush1.bf16.msra.mxu0 %v1525
    %2144 = vmatprep.subr.bf16.mxu0 0
    %2145 = vmatpush1.bf16.msra.mxu0 %v1524
    %2146 = vmatprep.subr.bf16.mxu0 0
    %2147 = vmatpush1.bf16.msra.mxu0 %v1523
    %2148 = vmatprep.subr.bf16.mxu0 0
    %2149 = vmatpush1.bf16.msra.mxu0 %v1522
    %2150 = vmatprep.subr.bf16.mxu0 0
    %2151 = vmatpush2.bf16.msra.mxu0 %v1537
    %2152 = vmatprep.subr.bf16.mxu0 0
    %2153 = vmatpush2.bf16.msra.mxu0 %v1536
    %2154 = vmatprep.subr.bf16.mxu0 0
    %2155 = vmatpush2.bf16.msra.mxu0 %v1535
    %2156 = vmatprep.subr.bf16.mxu0 0
    %2157 = vmatpush2.bf16.msra.mxu0 %v1534
    %2158 = vmatprep.subr.bf16.mxu0 0
    %2159 = vmatpush2.bf16.msra.mxu0 %v1533
    %2160 = vmatprep.subr.bf16.mxu0 0
    %2161 = vmatpush2.bf16.msra.mxu0 %v1532
    %2162 = vmatprep.subr.bf16.mxu0 0
    %2163 = vmatpush2.bf16.msra.mxu0 %v1531
    %2164 = vmatprep.subr.bf16.mxu0 0
    %2165 = vmatpush2.bf16.msra.mxu0 %v1530
    %2166 = vmatprep.mubr.bf16.mxu0 %v189
    %2167 = vmatmul.mubr.bf16.gmra.mxu0 %v188
    %v2168 = vpop.f32.mrf.mxu0
    %v2169 = vadd.f32 %v2129, %v2168
    %v2170 = vpop.f32.mrf.mxu0
    %v2171 = vpop.f32.mrf.mxu0
    %v2172 = vpop.f32.mrf.mxu0
    %2173 = vdwg.mxu0
    %2174 = vmatprep.subr.bf16.mxu0 0
    %2175 = vmatpush1.bf16.msra.mxu0 %v1545
    %2176 = vmatprep.subr.bf16.mxu0 0
    %2177 = vmatpush1.bf16.msra.mxu0 %v1544
    %2178 = vmatprep.subr.bf16.mxu0 0
    %2179 = vmatpush1.bf16.msra.mxu0 %v1543
    %2180 = vmatprep.subr.bf16.mxu0 0
    %2181 = vmatpush1.bf16.msra.mxu0 %v1542
    %2182 = vmatprep.subr.bf16.mxu0 0
    %2183 = vmatpush1.bf16.msra.mxu0 %v1541
    %2184 = vmatprep.subr.bf16.mxu0 0
    %2185 = vmatpush1.bf16.msra.mxu0 %v1540
    %2186 = vmatprep.subr.bf16.mxu0 0
    %2187 = vmatpush1.bf16.msra.mxu0 %v1539
    %2188 = vmatprep.subr.bf16.mxu0 0
    %2189 = vmatpush1.bf16.msra.mxu0 %v1538
    %2190 = vmatprep.subr.bf16.mxu0 0
    %2191 = vmatpush2.bf16.msra.mxu0 %v1553
    %2192 = vmatprep.subr.bf16.mxu0 0
    %2193 = vmatpush2.bf16.msra.mxu0 %v1552
    %2194 = vmatprep.subr.bf16.mxu0 0
    %2195 = vmatpush2.bf16.msra.mxu0 %v1551
    %2196 = vmatprep.subr.bf16.mxu0 0
    %2197 = vmatpush2.bf16.msra.mxu0 %v1550
    %2198 = vmatprep.subr.bf16.mxu0 0
    %2199 = vmatpush2.bf16.msra.mxu0 %v1549
    %2200 = vmatprep.subr.bf16.mxu0 0
    %2201 = vmatpush2.bf16.msra.mxu0 %v1548
    %2202 = vmatprep.subr.bf16.mxu0 0
    %2203 = vmatpush2.bf16.msra.mxu0 %v1547
    %2204 = vmatprep.subr.bf16.mxu0 0
    %2205 = vmatpush2.bf16.msra.mxu0 %v1546
    %2206 = vmatprep.mubr.bf16.mxu0 %v191
    %2207 = vmatmul.mubr.bf16.gmra.mxu0 %v190
    %v2208 = vpop.f32.mrf.mxu0
    %v2209 = vadd.f32 %v2169, %v2208
    %v2210 = vpop.f32.mrf.mxu0
    %v2211 = vpop.f32.mrf.mxu0
    %v2212 = vpop.f32.mrf.mxu0
    %2213 = vdwg.mxu0
    %2214 = vmatprep.subr.bf16.mxu0 0
    %2215 = vmatpush1.bf16.msra.mxu0 %v1561
    %2216 = vmatprep.subr.bf16.mxu0 0
    %2217 = vmatpush1.bf16.msra.mxu0 %v1560
    %2218 = vmatprep.subr.bf16.mxu0 0
    %2219 = vmatpush1.bf16.msra.mxu0 %v1559
    %2220 = vmatprep.subr.bf16.mxu0 0
    %2221 = vmatpush1.bf16.msra.mxu0 %v1558
    %2222 = vmatprep.subr.bf16.mxu0 0
    %2223 = vmatpush1.bf16.msra.mxu0 %v1557
    %2224 = vmatprep.subr.bf16.mxu0 0
    %2225 = vmatpush1.bf16.msra.mxu0 %v1556
    %2226 = vmatprep.subr.bf16.mxu0 0
    %2227 = vmatpush1.bf16.msra.mxu0 %v1555
    %2228 = vmatprep.subr.bf16.mxu0 0
    %2229 = vmatpush1.bf16.msra.mxu0 %v1554
    %2230 = vmatprep.subr.bf16.mxu0 0
    %2231 = vmatpush2.bf16.msra.mxu0 %v1569
    %2232 = vmatprep.subr.bf16.mxu0 0
    %2233 = vmatpush2.bf16.msra.mxu0 %v1568
    %2234 = vmatprep.subr.bf16.mxu0 0
    %2235 = vmatpush2.bf16.msra.mxu0 %v1567
    %2236 = vmatprep.subr.bf16.mxu0 0
    %2237 = vmatpush2.bf16.msra.mxu0 %v1566
    %2238 = vmatprep.subr.bf16.mxu0 0
    %2239 = vmatpush2.bf16.msra.mxu0 %v1565
    %2240 = vmatprep.subr.bf16.mxu0 0
    %2241 = vmatpush2.bf16.msra.mxu0 %v1564
    %2242 = vmatprep.subr.bf16.mxu0 0
    %2243 = vmatpush2.bf16.msra.mxu0 %v1563
    %2244 = vmatprep.subr.bf16.mxu0 0
    %2245 = vmatpush2.bf16.msra.mxu0 %v1562
    %2246 = vmatprep.mubr.bf16.mxu0 %v193
    %2247 = vmatmul.mubr.bf16.gmra.mxu0 %v192
    %v2248 = vpop.f32.mrf.mxu0
    %v2249 = vadd.f32 %v2209, %v2248
    %v2250 = vpop.f32.mrf.mxu0
    %v2251 = vpop.f32.mrf.mxu0
    %v2252 = vpop.f32.mrf.mxu0
    %2253 = vdwg.mxu0
    %2254 = vmatprep.subr.bf16.mxu0 0
    %2255 = vmatpush1.bf16.msra.mxu0 0
    %2256 = vmatprep.subr.bf16.mxu0 0
    %2257 = vmatpush1.bf16.msra.mxu0 0
    %2258 = vmatprep.subr.bf16.mxu0 0
    %2259 = vmatpush1.bf16.msra.mxu0 0
    %2260 = vmatprep.subr.bf16.mxu0 0
    %2261 = vmatpush1.bf16.msra.mxu0 0
    %2262 = vmatprep.subr.bf16.mxu0 0
    %2263 = vmatpush1.bf16.msra.mxu0 %v1573
    %2264 = vmatprep.subr.bf16.mxu0 0
    %2265 = vmatpush1.bf16.msra.mxu0 %v1572
    %2266 = vmatprep.subr.bf16.mxu0 0
    %2267 = vmatpush1.bf16.msra.mxu0 %v1571
    %2268 = vmatprep.subr.bf16.mxu0 0
    %2269 = vmatpush1.bf16.msra.mxu0 %v1570
    %2270 = vmatprep.subr.bf16.mxu0 0
    %2271 = vmatpush2.bf16.msra.mxu0 0
    %2272 = vmatprep.subr.bf16.mxu0 0
    %2273 = vmatpush2.bf16.msra.mxu0 0
    %2274 = vmatprep.subr.bf16.mxu0 0
    %2275 = vmatpush2.bf16.msra.mxu0 0
    %2276 = vmatprep.subr.bf16.mxu0 0
    %2277 = vmatpush2.bf16.msra.mxu0 0
    %2278 = vmatprep.subr.bf16.mxu0 0
    %2279 = vmatpush2.bf16.msra.mxu0 0
    %2280 = vmatprep.subr.bf16.mxu0 0
    %2281 = vmatpush2.bf16.msra.mxu0 0
    %2282 = vmatprep.subr.bf16.mxu0 0
    %2283 = vmatpush2.bf16.msra.mxu0 0
    %2284 = vmatprep.subr.bf16.mxu0 0
    %2285 = vmatpush2.bf16.msra.mxu0 0
    %2286 = vmatprep.mubr.bf16.mxu0 0
    %2287 = vmatmul.mubr.bf16.gmra.mxu0 %v1772
    %v2288 = vpop.f32.mrf.mxu0
    %v2289 = vadd.f32 %v2249, %v2288
    %v2290 = vpop.f32.mrf.mxu0
    %v2291 = vpop.f32.mrf.mxu0
    %v2292 = vpop.f32.mrf.mxu0
    %2293 = vdwg.mxu0
    %v2294 = vmax.f32 %v2289, 0.0
    %v2295 = vpack.c.bf16 %v2294, %v2294
    %v2296 = vld [vmem:[%s3] sm:$0xf]
    %v2297 = vld [vmem:[%s3 + $0x4] sm:$0xf]
    %v2298 = vld [vmem:[%s3 + $0x8] sm:$0xf]
    %v2299 = vld [vmem:[%s3 + $0xc] sm:$0xf]
    %v2300 = vld [vmem:[%s3 + $0x10] sm:$0xf]
    %v2301 = vld [vmem:[%s3 + $0x14] sm:$0xf]
    %v2302 = vld [vmem:[%s3 + $0x18] sm:$0xf]
    %v2303 = vld [vmem:[%s3 + $0x1c] sm:$0xf]
    %v2304 = vld [vmem:[%s3 + $0x20] sm:$0xf]
    %v2305 = vld [vmem:[%s3 + $0x24] sm:$0xf]
    %v2306 = vld [vmem:[%s3 + $0x28] sm:$0xf]
    %v2307 = vld [vmem:[%s3 + $0x2c] sm:$0xf]
    %v2308 = vld [vmem:[%s3 + $0x30] sm:$0xf]
    %v2309 = vld [vmem:[%s3 + $0x34] sm:$0xf]
    %v2310 = vld [vmem:[%s3 + $0x38] sm:$0xf]
    %v2311 = vld [vmem:[%s3 + $0x3c] sm:$0xf]
    %v2312 = vld [vmem:[%s4] sm:$0x1]
    %v2314 = vlaneseq
    %v2315 = vshrl.u32 %v2314, 7
    %v2316 = vsub.s32 0, %v2315
    %v2317 = vrot.slane %v2312, %v2316
    %v2335 = vunpack.c.l.b16 %v2296
    %v2336 = vunpack.c.l.b16 %v2297
    %v2337 = vunpack.c.l.b16 %v2298
    %v2338 = vunpack.c.l.b16 %v2299
    %v2339 = vunpack.c.l.b16 %v2300
    %v2340 = vunpack.c.l.b16 %v2301
    %v2341 = vunpack.c.l.b16 %v2302
    %v2342 = vunpack.c.l.b16 %v2303
    %v2343 = vunpack.c.l.b16 %v2304
    %v2344 = vunpack.c.l.b16 %v2305
    %v2345 = vunpack.c.l.b16 %v2306
    %v2346 = vunpack.c.l.b16 %v2307
    %v2347 = vunpack.c.l.b16 %v2308
    %v2348 = vunpack.c.l.b16 %v2309
    %v2349 = vunpack.c.l.b16 %v2310
    %v2350 = vunpack.c.l.b16 %v2311
    %v2351 = vpack.c.b16 %v2336, %v2335
    %v2352 = vpack.c.b16 %v2338, %v2337
    %v2353 = vpack.c.b16 %v2340, %v2339
    %v2354 = vpack.c.b16 %v2342, %v2341
    %v2355 = vpack.c.b16 %v2344, %v2343
    %v2356 = vpack.c.b16 %v2346, %v2345
    %v2357 = vpack.c.b16 %v2348, %v2347
    %v2358 = vpack.c.b16 %v2350, %v2349
    %2367 = vmatprep.subr.bf16.mxu0 0
    %2368 = vmatpush1.bf16.msra.mxu0 %v2358
    %2369 = vmatprep.subr.bf16.mxu0 0
    %2370 = vmatpush1.bf16.msra.mxu0 %v2357
    %2371 = vmatprep.subr.bf16.mxu0 0
    %2372 = vmatpush1.bf16.msra.mxu0 %v2356
    %2373 = vmatprep.subr.bf16.mxu0 0
    %2374 = vmatpush1.bf16.msra.mxu0 %v2355
    %2375 = vmatprep.subr.bf16.mxu0 0
    %2376 = vmatpush1.bf16.msra.mxu0 %v2354
    %2377 = vmatprep.subr.bf16.mxu0 0
    %2378 = vmatpush1.bf16.msra.mxu0 %v2353
    %2379 = vmatprep.subr.bf16.mxu0 0
    %2380 = vmatpush1.bf16.msra.mxu0 %v2352
    %2381 = vmatprep.subr.bf16.mxu0 0
    %2382 = vmatpush1.bf16.msra.mxu0 %v2351
    %2383 = vmatprep.subr.bf16.mxu0 0
    %2384 = vmatpush2.bf16.msra.mxu0 0
    %2385 = vmatprep.subr.bf16.mxu0 0
    %2386 = vmatpush2.bf16.msra.mxu0 0
    %2387 = vmatprep.subr.bf16.mxu0 0
    %2388 = vmatpush2.bf16.msra.mxu0 0
    %2389 = vmatprep.subr.bf16.mxu0 0
    %2390 = vmatpush2.bf16.msra.mxu0 0
    %2391 = vmatprep.subr.bf16.mxu0 0
    %2392 = vmatpush2.bf16.msra.mxu0 0
    %2393 = vmatprep.subr.bf16.mxu0 0
    %2394 = vmatpush2.bf16.msra.mxu0 0
    %2395 = vmatprep.subr.bf16.mxu0 0
    %2396 = vmatpush2.bf16.msra.mxu0 0
    %2397 = vmatprep.subr.bf16.mxu0 0
    %2398 = vmatpush2.bf16.msra.mxu0 0
    %2399 = vmatprep.mubr.bf16.mxu0 0
    %2400 = vmatmul.mubr.bf16.gmra.mxu0 %v2295
    %v2401 = vpop.f32.mrf.mxu0
    %v2402 = vadd.f32 %v2317, %v2401
    %v2403 = vpop.f32.mrf.mxu0
    %v2404 = vpop.f32.mrf.mxu0
    %v2405 = vpop.f32.mrf.mxu0
    %2406 = vdwg.mxu0
    %2407 = vst [vmem:[#allocation2] sm:$0x3] %v2402
    // Predicated region
    $region22: #{cnn_forward.5} parent=1 // pred_check
      _
    $region23: #{cnn_forward.5} parent=1 // pred_check_branch
      %2409 = sbr.rel (0) target = $region25
    $region24: #{cnn_forward.5} parent=1 // pred_region
      %s2411 = ssub.s32 32, 32
      %2412 = vsyncadd [#allocation3], %s2411
      %s2414 = sshll.u32 [#allocation2], 4
      %s2415 = int_to_ptr.vmem [resolvable:$true] %s2414
      %2417 = dma.vmem_to_hbm [thread:$0]  %s2415, 32, %s5, [#allocation3]
    $region25: #{cnn_forward.5} parent=1 // pred_fallthru
      _
    // Predicated region
    $region26: #{cnn_forward.5} parent=1 // pred_check
      _
    $region27: #{cnn_forward.5} parent=1 // pred_check_branch
      %2419 = sbr.rel (0) target = $region29
    $region28: #{cnn_forward.5} parent=1 // pred_region
      %2420 = dma.done [#allocation3], 32
    $region29: #{cnn_forward.5} parent=1 // pred_fallthru
      _
    %2421 = vsyncpa [#allocation3], 1

// kernel: cnn_forward.4
$region0: #{cnn_forward.4}
  #allocation0 [shape = 'u32[]', space=smem, size = 0x4, offset = 0x4, fixed_abs, tag = 'smem constant byte address 0x4 - core index']
  #allocation1 [shape = 'u32[144,128]{1,0:T(1,128)}', space=vmem, size = 0x12000, scoped, tag = 'internal scratch']
  %s0 = inlined_call_operand.vmem [shape: f32[2,16,512], index: 0, kind: input, shape index: {}]
  %s1 = inlined_call_operand.vmem [shape: bf16[6,512,448], index: 1, kind: input, shape index: {}]
  %s2 = inlined_call_operand.vmem [shape: f32[1,448], index: 2, kind: input, shape index: {}]
  %s3 = inlined_call_operand.vmem [shape: f32[2,7,448], index: 3, kind: output, shape index: {}]
  %s4 = sld [smem:[#allocation0]]
  $region45: #{cnn_forward.4} parent=0
    _
  %s6 = ssub.s32 1, %s4
  %s7 = scalar_select 0, %s6, %s4
  loop: start=0, step=1, limit=4
  $region2: #{cnn_forward.4} parent=0 // loop_pre_header
    _
  $region3: #{cnn_forward.4} parent=0 // loop_header
    %s9 = sphi 0, %s13
    %p10 = scmp.ge.s32.totalorder %s9, 4
    %s19 = sphi 0, %s21
    %s22 = sphi 0, %s19
    %s23 = sphi 0, %s22
    %s39 = sphi 0, %s23
    %s43 = sphi 0, %s43
    %s45 = sphi 0, %s43
    %s46 = sphi 0, %s45
    %s60 = sphi 0, %s46
    %s64 = sphi 0, %s64
    %s66 = sphi 0, %s64
    %s67 = sphi 0, %s66
    %s81 = sphi 0, %s67
    %s87 = sphi 0, %s89
    %s90 = sphi 0, %s87
    %s91 = sphi 0, %s90
    %s107 = sphi 0, %s91
  $region4: #{cnn_forward.4} parent=0 // loop_header_branch
    %12 = sbr.rel (%p10) target = $region8
  $region5: #{cnn_forward.4} parent=0 // loop_body
    %s14 = ssub.s32 %s9, 1
    %s15 = ssub.s32 %s9, 2
    %s16 = sadd.s32 %s9, 1
    %s17 = ssub.s32 %s9, %s16
    %p18 = scmp.eq.s32.totalorder %s17, 0
    %s20 = sadd.s32 %s19, 1
    %s21 = scalar_select %p18, %s19, %s20
    %p24 = pneg %p18
    %p25 = scmp.eq.s32.totalorder %s9, 1
    %p26 = por %p24, %p25
    %p27 = scmp.ne.s32.totalorder %s19, %s22
    %p28 = scmp.eq.s32.totalorder %s9, 0
    %p29 = por %p27, %p28
    %p30 = scmp.ne.s32.totalorder %s19, %s22
    %p31 = scmp.eq.s32.totalorder %s14, 1
    %p32 = por %p30, %p31
    %p33 = scmp.ne.s32.totalorder %s22, %s23
    %p34 = scmp.eq.s32.totalorder %s14, 0
    %p35 = por %p33, %p34
    %p36 = scmp.ne.s32.totalorder %s22, %s23
    %p37 = scmp.eq.s32.totalorder %s15, 1
    %p38 = por %p36, %p37
    %p40 = scmp.ne.s32.totalorder %s23, %s39
    %p41 = scmp.eq.s32.totalorder %s15, 0
    %p42 = por %p40, %p41
    %s44 = sadd.s32 %s43, 1
    %p47 = scmp.eq.s32.totalorder %s9, 1
    %p48 = scmp.ne.s32.totalorder %s43, %s45
    %p49 = scmp.eq.s32.totalorder %s9, 0
    %p50 = por %p48, %p49
    %p51 = scmp.ne.s32.totalorder %s43, %s45
    %p52 = scmp.eq.s32.totalorder %s14, 1
    %p53 = por %p51, %p52
    %p54 = scmp.ne.s32.totalorder %s45, %s46
    %p55 = scmp.eq.s32.totalorder %s14, 0
    %p56 = por %p54, %p55
    %p57 = scmp.ne.s32.totalorder %s45, %s46
    %p58 = scmp.eq.s32.totalorder %s15, 1
    %p59 = por %p57, %p58
    %p61 = scmp.ne.s32.totalorder %s46, %s60
    %p62 = scmp.eq.s32.totalorder %s15, 0
    %p63 = por %p61, %p62
    %s65 = sadd.s32 %s64, 1
    %p68 = scmp.eq.s32.totalorder %s9, 1
    %p69 = scmp.ne.s32.totalorder %s64, %s66
    %p70 = scmp.eq.s32.totalorder %s9, 0
    %p71 = por %p69, %p70
    %p72 = scmp.ne.s32.totalorder %s64, %s66
    %p73 = scmp.eq.s32.totalorder %s14, 1
    %p74 = por %p72, %p73
    %p75 = scmp.ne.s32.totalorder %s66, %s67
    %p76 = scmp.eq.s32.totalorder %s14, 0
    %p77 = por %p75, %p76
    %p78 = scmp.ne.s32.totalorder %s66, %s67
    %p79 = scmp.eq.s32.totalorder %s15, 1
    %p80 = por %p78, %p79
    %p82 = scmp.ne.s32.totalorder %s67, %s81
    %p83 = scmp.eq.s32.totalorder %s15, 0
    %p84 = por %p82, %p83
    %s85 = ssub.s32 %s9, %s16
    %p86 = scmp.eq.s32.totalorder %s85, 0
    %s88 = sadd.s32 %s87, 1
    %s89 = scalar_select %p86, %s87, %s88
    %p92 = pneg %p86
    %p93 = scmp.eq.s32.totalorder %s9, 1
    %p94 = por %p92, %p93
    %p95 = scmp.ne.s32.totalorder %s87, %s90
    %p96 = scmp.eq.s32.totalorder %s9, 0
    %p97 = por %p95, %p96
    %p98 = scmp.ne.s32.totalorder %s87, %s90
    %p99 = scmp.eq.s32.totalorder %s14, 1
    %p100 = por %p98, %p99
    %p101 = scmp.ne.s32.totalorder %s90, %s91
    %p102 = scmp.eq.s32.totalorder %s14, 0
    %p103 = por %p101, %p102
    %p104 = scmp.ne.s32.totalorder %s90, %s91
    %p105 = scmp.eq.s32.totalorder %s15, 1
    %p106 = por %p104, %p105
    %p108 = scmp.ne.s32.totalorder %s91, %s107
    %p109 = scmp.eq.s32.totalorder %s15, 0
    %p110 = por %p108, %p109
    %p111 = scmp.le.s32.totalorder 1, %s9
    %p112 = scmp.lt.s32.totalorder %s9, 3
    %p113 = pnand %p111, %p112
    %p114 = pneg %p113
    // Predicated region
    $region9: #{cnn_forward.4} parent=5 // pred_check
      _
    $region10: #{cnn_forward.4} parent=5 // pred_check_branch
      %116 = sbr.rel (%p113) target = $region12
    $region11: #{cnn_forward.4} parent=5 // pred_region
      %s117 = ssub.s32 %s9, 1
      // Predicated region
      $region13: #{cnn_forward.4} parent=11 // pred_check
        %p118 = pneg %p56
      $region14: #{cnn_forward.4} parent=11 // pred_check_branch
        %120 = sbr.rel (%p118) target = $region16
      $region15: #{cnn_forward.4} parent=11 // pred_region
        _
      $region16: #{cnn_forward.4} parent=11 // pred_fallthru
        _
      // Predicated region
      $region17: #{cnn_forward.4} parent=11 // pred_check
        %p121 = pneg %p77
      $region18: #{cnn_forward.4} parent=11 // pred_check_branch
        %123 = sbr.rel (%p121) target = $region20
      $region19: #{cnn_forward.4} parent=11 // pred_region
        _
      $region20: #{cnn_forward.4} parent=11 // pred_fallthru
        _
    $region12: #{cnn_forward.4} parent=5 // pred_fallthru
      _
    %p124 = scmp.lt.s32.totalorder %s9, 2
    // Predicated region
    $region21: #{cnn_forward.4} parent=5 // pred_check
      %p125 = pneg %p124
    $region22: #{cnn_forward.4} parent=5 // pred_check_branch
      %127 = sbr.rel (%p125) target = $region24
    $region23: #{cnn_forward.4} parent=5 // pred_region
      // Predicated region
      $region25: #{cnn_forward.4} parent=23 // pred_check
        %p128 = pneg %p29
      $region26: #{cnn_forward.4} parent=23 // pred_check_branch
        %130 = sbr.rel (%p128) target = $region28
      $region27: #{cnn_forward.4} parent=23 // pred_region
        %p131 = scmp.lt.s32.totalorder %s9, 1
        %s132 = scalar_select %p131, %s9, 1
        %s133 = smul.addr %s132, 8
        %s134 = smul.addr %s133, 8
        %s135 = scalar_lea.vmem %s0, %s134
      $region28: #{cnn_forward.4} parent=23 // pred_fallthru
        _
    $region24: #{cnn_forward.4} parent=5 // pred_fallthru
      _
    %p136 = scmp.le.s32.totalorder 1, %s9
    %p137 = scmp.lt.s32.totalorder %s9, 3
    %p138 = pnand %p136, %p137
    %p139 = pneg %p138
    // Predicated region
    $region29: #{cnn_forward.4} parent=5 // pred_check
      _
    $region30: #{cnn_forward.4} parent=5 // pred_check_branch
      %141 = sbr.rel (%p138) target = $region32
    $region31: #{cnn_forward.4} parent=5 // pred_region
      %s142 = ssub.s32 %s9, 1
      %p143 = scmp.lt.s32.totalorder %s14, 1
      %s144 = scalar_select %p143, %s14, 1
      %s145 = smul.addr %s144, 8
      %s146 = smul.addr %s145, 8
      %s147 = scalar_lea.vmem %s0, %s146
      %p148 = pneg %p35
      %p149 = pneg %p32
      %p150 = pneg %p56
      %p151 = pneg %p53
      %p152 = pneg %p77
      %p153 = pneg %p74
      %p154 = pneg %p103
      %p155 = pneg %p100
      %p156 = scmp.lt.s32.totalorder %s14, 1
      %s157 = scalar_select %p156, %s14, 1
      %s158 = smul.addr %s157, 4
      %s159 = smul.addr %s158, 8
      %s160 = scalar_lea.vmem %s3, %s159
      %p161 = scmp.lt.s32.totalorder %s14, 1
      %s162 = scalar_select %p161, %s14, 1
      %s163 = smul.addr %s162, 8
      %s164 = smul.addr %s163, 8
      %s165 = scalar_lea.vmem %s0, %s164
      %p166 = scmp.lt.s32.totalorder %s14, 1
      %s167 = scalar_select %p166, %s14, 1
      %s168 = smul.addr %s167, 4
      %s169 = smul.addr %s168, 8
      %s170 = scalar_lea.vmem %s3, %s169
      %v171 = vld [vmem:[%s165] sm:$0xff]
      %v172 = vld [vmem:[%s165 + $0x8] sm:$0xff]
      %v173 = vld [vmem:[%s165 + $0x10] sm:$0xff]
      %v174 = vld [vmem:[%s165 + $0x18] sm:$0xff]
      %v175 = vld [vmem:[%s165 + $0x20] sm:$0x3f]
      %v176 = vld [vmem:[%s165 + $0x28] sm:$0x3f]
      %v177 = vld [vmem:[%s165 + $0x30] sm:$0x3f]
      %v178 = vld [vmem:[%s165 + $0x38] sm:$0x3f]
      %v179 = vpack.c.bf16 %v175, %v171
      %v180 = vpack.c.bf16 %v176, %v172
      %v181 = vpack.c.bf16 %v177, %v173
      %v182 = vpack.c.bf16 %v178, %v174
      %v183 = vld [vmem:[%s1] sm:$0xff]
      %v184 = vld [vmem:[%s1 + $0x8] sm:$0xff]
      %v185 = vld [vmem:[%s1 + $0x10] sm:$0xff]
      %v186 = vld [vmem:[%s1 + $0x18] sm:$0xff]
      %v187 = vld [vmem:[%s1 + $0x20] sm:$0xff]
      %v188 = vld [vmem:[%s1 + $0x28] sm:$0xff]
      %v189 = vld [vmem:[%s1 + $0x30] sm:$0xff]
      %v190 = vld [vmem:[%s1 + $0x38] sm:$0xff]
      %v191 = vld [vmem:[%s1 + $0x40] sm:$0xff]
      %v192 = vld [vmem:[%s1 + $0x48] sm:$0xff]
      %v193 = vld [vmem:[%s1 + $0x50] sm:$0xff]
      %v194 = vld [vmem:[%s1 + $0x58] sm:$0xff]
      %v195 = vld [vmem:[%s1 + $0x60] sm:$0xff]
      %v196 = vld [vmem:[%s1 + $0x68] sm:$0xff]
      %v197 = vld [vmem:[%s1 + $0x70] sm:$0xff]
      %v198 = vld [vmem:[%s1 + $0x78] sm:$0xff]
      %v199 = vld [vmem:[%s1 + $0x80] sm:$0xff]
      %v200 = vld [vmem:[%s1 + $0x88] sm:$0xff]
      %v201 = vld [vmem:[%s1 + $0x90] sm:$0xff]
      %v202 = vld [vmem:[%s1 + $0x98] sm:$0xff]
      %v203 = vld [vmem:[%s1 + $0xa0] sm:$0xff]
      %v204 = vld [vmem:[%s1 + $0xa8] sm:$0xff]
      %v205 = vld [vmem:[%s1 + $0xb0] sm:$0xff]
      %v206 = vld [vmem:[%s1 + $0xb8] sm:$0xff]
      %v207 = vld [vmem:[%s1 + $0xc0] sm:$0xff]
      %v208 = vld [vmem:[%s1 + $0xc8] sm:$0xff]
      %v209 = vld [vmem:[%s1 + $0xd0] sm:$0xff]
      %v210 = vld [vmem:[%s1 + $0xd8] sm:$0xff]
      %v211 = vld [vmem:[%s1 + $0xe0] sm:$0xff]
      %v212 = vld [vmem:[%s1 + $0xe8] sm:$0xff]
      %v213 = vld [vmem:[%s1 + $0xf0] sm:$0xff]
      %v214 = vld [vmem:[%s1 + $0xf8] sm:$0xff]
      %v215 = vld [vmem:[%s1 + $0x100] sm:$0xff]
      %v216 = vld [vmem:[%s1 + $0x108] sm:$0xff]
      %v217 = vld [vmem:[%s1 + $0x110] sm:$0xff]
      %v218 = vld [vmem:[%s1 + $0x118] sm:$0xff]
      %v219 = vld [vmem:[%s1 + $0x120] sm:$0xff]
      %v220 = vld [vmem:[%s1 + $0x128] sm:$0xff]
      %v221 = vld [vmem:[%s1 + $0x130] sm:$0xff]
      %v222 = vld [vmem:[%s1 + $0x138] sm:$0xff]
      %v223 = vld [vmem:[%s1 + $0x140] sm:$0xff]
      %v224 = vld [vmem:[%s1 + $0x148] sm:$0xff]
      %v225 = vld [vmem:[%s1 + $0x150] sm:$0xff]
      %v226 = vld [vmem:[%s1 + $0x158] sm:$0xff]
      %v227 = vld [vmem:[%s1 + $0x160] sm:$0xff]
      %v228 = vld [vmem:[%s1 + $0x168] sm:$0xff]
      %v229 = vld [vmem:[%s1 + $0x170] sm:$0xff]
      %v230 = vld [vmem:[%s1 + $0x178] sm:$0xff]
      %v231 = vld [vmem:[%s1 + $0x180] sm:$0xff]
      %v232 = vld [vmem:[%s1 + $0x188] sm:$0xff]
      %v233 = vld [vmem:[%s1 + $0x190] sm:$0xff]
      %v234 = vld [vmem:[%s1 + $0x198] sm:$0xff]
      %v235 = vld [vmem:[%s1 + $0x1a0] sm:$0xff]
      %v236 = vld [vmem:[%s1 + $0x1a8] sm:$0xff]
      %v237 = vld [vmem:[%s1 + $0x1b0] sm:$0xff]
      %v238 = vld [vmem:[%s1 + $0x1b8] sm:$0xff]
      %v239 = vld [vmem:[%s1 + $0x1c0] sm:$0xff]
      %v240 = vld [vmem:[%s1 + $0x1c8] sm:$0xff]
      %v241 = vld [vmem:[%s1 + $0x1d0] sm:$0xff]
      %v242 = vld [vmem:[%s1 + $0x1d8] sm:$0xff]
      %v243 = vld [vmem:[%s1 + $0x1e0] sm:$0xff]
      %v244 = vld [vmem:[%s1 + $0x1e8] sm:$0xff]
      %v245 = vld [vmem:[%s1 + $0x1f0] sm:$0xff]
      %v246 = vld [vmem:[%s1 + $0x1f8] sm:$0xff]
      %v247 = vld [vmem:[%s1 + $0x200] sm:$0xff]
      %v248 = vld [vmem:[%s1 + $0x208] sm:$0xff]
      %v249 = vld [vmem:[%s1 + $0x210] sm:$0xff]
      %v250 = vld [vmem:[%s1 + $0x218] sm:$0xff]
      %v251 = vld [vmem:[%s1 + $0x220] sm:$0xff]
      %v252 = vld [vmem:[%s1 + $0x228] sm:$0xff]
      %v253 = vld [vmem:[%s1 + $0x230] sm:$0xff]
      %v254 = vld [vmem:[%s1 + $0x238] sm:$0xff]
      %v255 = vld [vmem:[%s1 + $0x240] sm:$0xff]
      %v256 = vld [vmem:[%s1 + $0x248] sm:$0xff]
      %v257 = vld [vmem:[%s1 + $0x250] sm:$0xff]
      %v258 = vld [vmem:[%s1 + $0x258] sm:$0xff]
      %v259 = vld [vmem:[%s1 + $0x260] sm:$0xff]
      %v260 = vld [vmem:[%s1 + $0x268] sm:$0xff]
      %v261 = vld [vmem:[%s1 + $0x270] sm:$0xff]
      %v262 = vld [vmem:[%s1 + $0x278] sm:$0xff]
      %v263 = vld [vmem:[%s1 + $0x280] sm:$0xff]
      %v264 = vld [vmem:[%s1 + $0x288] sm:$0xff]
      %v265 = vld [vmem:[%s1 + $0x290] sm:$0xff]
      %v266 = vld [vmem:[%s1 + $0x298] sm:$0xff]
      %v267 = vld [vmem:[%s1 + $0x2a0] sm:$0xff]
      %v268 = vld [vmem:[%s1 + $0x2a8] sm:$0xff]
      %v269 = vld [vmem:[%s1 + $0x2b0] sm:$0xff]
      %v270 = vld [vmem:[%s1 + $0x2b8] sm:$0xff]
      %v271 = vld [vmem:[%s1 + $0x2c0] sm:$0xff]
      %v272 = vld [vmem:[%s1 + $0x2c8] sm:$0xff]
      %v273 = vld [vmem:[%s1 + $0x2d0] sm:$0xff]
      %v274 = vld [vmem:[%s1 + $0x2d8] sm:$0xff]
      %v275 = vld [vmem:[%s1 + $0x2e0] sm:$0xff]
      %v276 = vld [vmem:[%s1 + $0x2e8] sm:$0xff]
      %v277 = vld [vmem:[%s1 + $0x2f0] sm:$0xff]
      %v278 = vld [vmem:[%s1 + $0x2f8] sm:$0xff]
      %v279 = vld [vmem:[%s1 + $0x300] sm:$0xff]
      %v280 = vld [vmem:[%s1 + $0x308] sm:$0xff]
      %v281 = vld [vmem:[%s1 + $0x310] sm:$0xff]
      %v282 = vld [vmem:[%s1 + $0x318] sm:$0xff]
      %v283 = vld [vmem:[%s1 + $0x320] sm:$0xff]
      %v284 = vld [vmem:[%s1 + $0x328] sm:$0xff]
      %v285 = vld [vmem:[%s1 + $0x330] sm:$0xff]
      %v286 = vld [vmem:[%s1 + $0x338] sm:$0xff]
      %v287 = vld [vmem:[%s1 + $0x340] sm:$0xff]
      %v288 = vld [vmem:[%s1 + $0x348] sm:$0xff]
      %v289 = vld [vmem:[%s1 + $0x350] sm:$0xff]
      %v290 = vld [vmem:[%s1 + $0x358] sm:$0xff]
      %v291 = vld [vmem:[%s1 + $0x360] sm:$0xff]
      %v292 = vld [vmem:[%s1 + $0x368] sm:$0xff]
      %v293 = vld [vmem:[%s1 + $0x370] sm:$0xff]
      %v294 = vld [vmem:[%s1 + $0x378] sm:$0xff]
      %v295 = vld [vmem:[%s1 + $0x380] sm:$0xff]
      %v296 = vld [vmem:[%s1 + $0x388] sm:$0xff]
      %v297 = vld [vmem:[%s1 + $0x390] sm:$0xff]
      %v298 = vld [vmem:[%s1 + $0x398] sm:$0xff]
      %v299 = vld [vmem:[%s1 + $0x3a0] sm:$0xff]
      %v300 = vld [vmem:[%s1 + $0x3a8] sm:$0xff]
      %v301 = vld [vmem:[%s1 + $0x3b0] sm:$0xff]
      %v302 = vld [vmem:[%s1 + $0x3b8] sm:$0xff]
      %v303 = vld [vmem:[%s1 + $0x3c0] sm:$0xff]
      %v304 = vld [vmem:[%s1 + $0x3c8] sm:$0xff]
      %v305 = vld [vmem:[%s1 + $0x3d0] sm:$0xff]
      %v306 = vld [vmem:[%s1 + $0x3d8] sm:$0xff]
      %v307 = vld [vmem:[%s1 + $0x3e0] sm:$0xff]
      %v308 = vld [vmem:[%s1 + $0x3e8] sm:$0xff]
      %v309 = vld [vmem:[%s1 + $0x3f0] sm:$0xff]
      %v310 = vld [vmem:[%s1 + $0x3f8] sm:$0xff]
      %v311 = vld [vmem:[%s165] sm:$0xfe]
      %v312 = vld [vmem:[%s165 + $0x8] sm:$0xfe]
      %v313 = vld [vmem:[%s165 + $0x10] sm:$0xfe]
      %v314 = vld [vmem:[%s165 + $0x18] sm:$0xfe]
      %v315 = vld [vmem:[%s165 + $0x20] sm:$0x7f]
      %v316 = vld [vmem:[%s165 + $0x28] sm:$0x7f]
      %v317 = vld [vmem:[%s165 + $0x30] sm:$0x7f]
      %v318 = vld [vmem:[%s165 + $0x38] sm:$0x7f]
      %v319 = vpack.c.bf16 %v315, %v311
      %v320 = vpack.c.bf16 %v316, %v312
      %v321 = vpack.c.bf16 %v317, %v313
      %v322 = vpack.c.bf16 %v318, %v314
      %s323 = scalar_lea.vmem %s1, 1024
      %v324 = vld [vmem:[%s323] sm:$0xff]
      %v325 = vld [vmem:[%s323 + $0x8] sm:$0xff]
      %v326 = vld [vmem:[%s323 + $0x10] sm:$0xff]
      %v327 = vld [vmem:[%s323 + $0x18] sm:$0xff]
      %v328 = vld [vmem:[%s323 + $0x20] sm:$0xff]
      %v329 = vld [vmem:[%s323 + $0x28] sm:$0xff]
      %v330 = vld [vmem:[%s323 + $0x30] sm:$0xff]
      %v331 = vld [vmem:[%s323 + $0x38] sm:$0xff]
      %v332 = vld [vmem:[%s323 + $0x40] sm:$0xff]
      %v333 = vld [vmem:[%s323 + $0x48] sm:$0xff]
      %v334 = vld [vmem:[%s323 + $0x50] sm:$0xff]
      %v335 = vld [vmem:[%s323 + $0x58] sm:$0xff]
      %v336 = vld [vmem:[%s323 + $0x60] sm:$0xff]
      %v337 = vld [vmem:[%s323 + $0x68] sm:$0xff]
      %v338 = vld [vmem:[%s323 + $0x70] sm:$0xff]
      %v339 = vld [vmem:[%s323 + $0x78] sm:$0xff]
      %v340 = vld [vmem:[%s323 + $0x80] sm:$0xff]
      %v341 = vld [vmem:[%s323 + $0x88] sm:$0xff]
      %v342 = vld [vmem:[%s323 + $0x90] sm:$0xff]
      %v343 = vld [vmem:[%s323 + $0x98] sm:$0xff]
      %v344 = vld [vmem:[%s323 + $0xa0] sm:$0xff]
      %v345 = vld [vmem:[%s323 + $0xa8] sm:$0xff]
      %v346 = vld [vmem:[%s323 + $0xb0] sm:$0xff]
      %v347 = vld [vmem:[%s323 + $0xb8] sm:$0xff]
      %v348 = vld [vmem:[%s323 + $0xc0] sm:$0xff]
      %v349 = vld [vmem:[%s323 + $0xc8] sm:$0xff]
      %v350 = vld [vmem:[%s323 + $0xd0] sm:$0xff]
      %v351 = vld [vmem:[%s323 + $0xd8] sm:$0xff]
      %v352 = vld [vmem:[%s323 + $0xe0] sm:$0xff]
      %v353 = vld [vmem:[%s323 + $0xe8] sm:$0xff]
      %v354 = vld [vmem:[%s323 + $0xf0] sm:$0xff]
      %v355 = vld [vmem:[%s323 + $0xf8] sm:$0xff]
      %v356 = vld [vmem:[%s323 + $0x100] sm:$0xff]
      %v357 = vld [vmem:[%s323 + $0x108] sm:$0xff]
      %v358 = vld [vmem:[%s323 + $0x110] sm:$0xff]
      %v359 = vld [vmem:[%s323 + $0x118] sm:$0xff]
      %v360 = vld [vmem:[%s323 + $0x120] sm:$0xff]
      %v361 = vld [vmem:[%s323 + $0x128] sm:$0xff]
      %v362 = vld [vmem:[%s323 + $0x130] sm:$0xff]
      %v363 = vld [vmem:[%s323 + $0x138] sm:$0xff]
      %v364 = vld [vmem:[%s323 + $0x140] sm:$0xff]
      %v365 = vld [vmem:[%s323 + $0x148] sm:$0xff]
      %v366 = vld [vmem:[%s323 + $0x150] sm:$0xff]
      %v367 = vld [vmem:[%s323 + $0x158] sm:$0xff]
      %v368 = vld [vmem:[%s323 + $0x160] sm:$0xff]
      %v369 = vld [vmem:[%s323 + $0x168] sm:$0xff]
      %v370 = vld [vmem:[%s323 + $0x170] sm:$0xff]
      %v371 = vld [vmem:[%s323 + $0x178] sm:$0xff]
      %v372 = vld [vmem:[%s323 + $0x180] sm:$0xff]
      %v373 = vld [vmem:[%s323 + $0x188] sm:$0xff]
      %v374 = vld [vmem:[%s323 + $0x190] sm:$0xff]
      %v375 = vld [vmem:[%s323 + $0x198] sm:$0xff]
      %v376 = vld [vmem:[%s323 + $0x1a0] sm:$0xff]
      %v377 = vld [vmem:[%s323 + $0x1a8] sm:$0xff]
      %v378 = vld [vmem:[%s323 + $0x1b0] sm:$0xff]
      %v379 = vld [vmem:[%s323 + $0x1b8] sm:$0xff]
      %v380 = vld [vmem:[%s323 + $0x1c0] sm:$0xff]
      %v381 = vld [vmem:[%s323 + $0x1c8] sm:$0xff]
      %v382 = vld [vmem:[%s323 + $0x1d0] sm:$0xff]
      %v383 = vld [vmem:[%s323 + $0x1d8] sm:$0xff]
      %v384 = vld [vmem:[%s323 + $0x1e0] sm:$0xff]
      %v385 = vld [vmem:[%s323 + $0x1e8] sm:$0xff]
      %v386 = vld [vmem:[%s323 + $0x1f0] sm:$0xff]
      %v387 = vld [vmem:[%s323 + $0x1f8] sm:$0xff]
      %v388 = vld [vmem:[%s323 + $0x200] sm:$0xff]
      %v389 = vld [vmem:[%s323 + $0x208] sm:$0xff]
      %v390 = vld [vmem:[%s323 + $0x210] sm:$0xff]
      %v391 = vld [vmem:[%s323 + $0x218] sm:$0xff]
      %v392 = vld [vmem:[%s323 + $0x220] sm:$0xff]
      %v393 = vld [vmem:[%s323 + $0x228] sm:$0xff]
      %v394 = vld [vmem:[%s323 + $0x230] sm:$0xff]
      %v395 = vld [vmem:[%s323 + $0x238] sm:$0xff]
      %v396 = vld [vmem:[%s323 + $0x240] sm:$0xff]
      %v397 = vld [vmem:[%s323 + $0x248] sm:$0xff]
      %v398 = vld [vmem:[%s323 + $0x250] sm:$0xff]
      %v399 = vld [vmem:[%s323 + $0x258] sm:$0xff]
      %v400 = vld [vmem:[%s323 + $0x260] sm:$0xff]
      %v401 = vld [vmem:[%s323 + $0x268] sm:$0xff]
      %v402 = vld [vmem:[%s323 + $0x270] sm:$0xff]
      %v403 = vld [vmem:[%s323 + $0x278] sm:$0xff]
      %v404 = vld [vmem:[%s323 + $0x280] sm:$0xff]
      %v405 = vld [vmem:[%s323 + $0x288] sm:$0xff]
      %v406 = vld [vmem:[%s323 + $0x290] sm:$0xff]
      %v407 = vld [vmem:[%s323 + $0x298] sm:$0xff]
      %v408 = vld [vmem:[%s323 + $0x2a0] sm:$0xff]
      %v409 = vld [vmem:[%s323 + $0x2a8] sm:$0xff]
      %v410 = vld [vmem:[%s323 + $0x2b0] sm:$0xff]
      %v411 = vld [vmem:[%s323 + $0x2b8] sm:$0xff]
      %v412 = vld [vmem:[%s323 + $0x2c0] sm:$0xff]
      %v413 = vld [vmem:[%s323 + $0x2c8] sm:$0xff]
      %v414 = vld [vmem:[%s323 + $0x2d0] sm:$0xff]
      %v415 = vld [vmem:[%s323 + $0x2d8] sm:$0xff]
      %v416 = vld [vmem:[%s323 + $0x2e0] sm:$0xff]
      %v417 = vld [vmem:[%s323 + $0x2e8] sm:$0xff]
      %v418 = vld [vmem:[%s323 + $0x2f0] sm:$0xff]
      %v419 = vld [vmem:[%s323 + $0x2f8] sm:$0xff]
      %v420 = vld [vmem:[%s323 + $0x300] sm:$0xff]
      %v421 = vld [vmem:[%s323 + $0x308] sm:$0xff]
      %v422 = vld [vmem:[%s323 + $0x310] sm:$0xff]
      %v423 = vld [vmem:[%s323 + $0x318] sm:$0xff]
      %v424 = vld [vmem:[%s323 + $0x320] sm:$0xff]
      %v425 = vld [vmem:[%s323 + $0x328] sm:$0xff]
      %v426 = vld [vmem:[%s323 + $0x330] sm:$0xff]
      %v427 = vld [vmem:[%s323 + $0x338] sm:$0xff]
      %v428 = vld [vmem:[%s323 + $0x340] sm:$0xff]
      %v429 = vld [vmem:[%s323 + $0x348] sm:$0xff]
      %v430 = vld [vmem:[%s323 + $0x350] sm:$0xff]
      %v431 = vld [vmem:[%s323 + $0x358] sm:$0xff]
      %v432 = vld [vmem:[%s323 + $0x360] sm:$0xff]
      %v433 = vld [vmem:[%s323 + $0x368] sm:$0xff]
      %v434 = vld [vmem:[%s323 + $0x370] sm:$0xff]
      %v435 = vld [vmem:[%s323 + $0x378] sm:$0xff]
      %v436 = vld [vmem:[%s323 + $0x380] sm:$0xff]
      %v437 = vld [vmem:[%s323 + $0x388] sm:$0xff]
      %v438 = vld [vmem:[%s323 + $0x390] sm:$0xff]
      %v439 = vld [vmem:[%s323 + $0x398] sm:$0xff]
      %v440 = vld [vmem:[%s323 + $0x3a0] sm:$0xff]
      %v441 = vld [vmem:[%s323 + $0x3a8] sm:$0xff]
      %v442 = vld [vmem:[%s323 + $0x3b0] sm:$0xff]
      %v443 = vld [vmem:[%s323 + $0x3b8] sm:$0xff]
      %v444 = vld [vmem:[%s323 + $0x3c0] sm:$0xff]
      %v445 = vld [vmem:[%s323 + $0x3c8] sm:$0xff]
      %v446 = vld [vmem:[%s323 + $0x3d0] sm:$0xff]
      %v447 = vld [vmem:[%s323 + $0x3d8] sm:$0xff]
      %v448 = vld [vmem:[%s323 + $0x3e0] sm:$0xff]
      %v449 = vld [vmem:[%s323 + $0x3e8] sm:$0xff]
      %v450 = vld [vmem:[%s323 + $0x3f0] sm:$0xff]
      %v451 = vld [vmem:[%s323 + $0x3f8] sm:$0xff]
      %v453 = vshrl.u32 %v319, 16
      %v455 = vshll.u32 %v319, 16
      %v457 = vrot.slane %v455, 1
      %v458 = vor.u32 %v453, %v457
      %v460 = vshrl.u32 %v320, 16
      %v462 = vshll.u32 %v320, 16
      %v464 = vrot.slane %v462, 1
      %v465 = vor.u32 %v460, %v464
      %v467 = vshrl.u32 %v321, 16
      %v469 = vshll.u32 %v321, 16
      %v471 = vrot.slane %v469, 1
      %v472 = vor.u32 %v467, %v471
      %v474 = vshrl.u32 %v322, 16
      %v476 = vshll.u32 %v322, 16
      %v478 = vrot.slane %v476, 1
      %v479 = vor.u32 %v474, %v478
      %v612 = vunpack.c.l.b16 %v324
      %v613 = vunpack.c.h.b16 %v324
      %v614 = vunpack.c.l.b16 %v325
      %v615 = vunpack.c.h.b16 %v325
      %v616 = vunpack.c.l.b16 %v326
      %v617 = vunpack.c.h.b16 %v326
      %v618 = vunpack.c.l.b16 %v327
      %v619 = vunpack.c.h.b16 %v327
      %v620 = vunpack.c.l.b16 %v328
      %v621 = vunpack.c.h.b16 %v328
      %v622 = vunpack.c.l.b16 %v329
      %v623 = vunpack.c.h.b16 %v329
      %v624 = vunpack.c.l.b16 %v330
      %v625 = vunpack.c.h.b16 %v330
      %v626 = vunpack.c.l.b16 %v331
      %v627 = vunpack.c.h.b16 %v331
      %v628 = vunpack.c.l.b16 %v332
      %v629 = vunpack.c.h.b16 %v332
      %v630 = vunpack.c.l.b16 %v333
      %v631 = vunpack.c.h.b16 %v333
      %v632 = vunpack.c.l.b16 %v334
      %v633 = vunpack.c.h.b16 %v334
      %v634 = vunpack.c.l.b16 %v335
      %v635 = vunpack.c.h.b16 %v335
      %v636 = vunpack.c.l.b16 %v336
      %v637 = vunpack.c.h.b16 %v336
      %v638 = vunpack.c.l.b16 %v337
      %v639 = vunpack.c.h.b16 %v337
      %v640 = vunpack.c.l.b16 %v338
      %v641 = vunpack.c.h.b16 %v338
      %v642 = vunpack.c.l.b16 %v339
      %v643 = vunpack.c.h.b16 %v339
      %v644 = vunpack.c.l.b16 %v340
      %v645 = vunpack.c.h.b16 %v340
      %v646 = vunpack.c.l.b16 %v341
      %v647 = vunpack.c.h.b16 %v341
      %v648 = vunpack.c.l.b16 %v342
      %v649 = vunpack.c.h.b16 %v342
      %v650 = vunpack.c.l.b16 %v343
      %v651 = vunpack.c.h.b16 %v343
      %v652 = vunpack.c.l.b16 %v344
      %v653 = vunpack.c.h.b16 %v344
      %v654 = vunpack.c.l.b16 %v345
      %v655 = vunpack.c.h.b16 %v345
      %v656 = vunpack.c.l.b16 %v346
      %v657 = vunpack.c.h.b16 %v346
      %v658 = vunpack.c.l.b16 %v347
      %v659 = vunpack.c.h.b16 %v347
      %v660 = vunpack.c.l.b16 %v348
      %v661 = vunpack.c.h.b16 %v348
      %v662 = vunpack.c.l.b16 %v349
      %v663 = vunpack.c.h.b16 %v349
      %v664 = vunpack.c.l.b16 %v350
      %v665 = vunpack.c.h.b16 %v350
      %v666 = vunpack.c.l.b16 %v351
      %v667 = vunpack.c.h.b16 %v351
      %v668 = vunpack.c.l.b16 %v352
      %v669 = vunpack.c.h.b16 %v352
      %v670 = vunpack.c.l.b16 %v353
      %v671 = vunpack.c.h.b16 %v353
      %v672 = vunpack.c.l.b16 %v354
      %v673 = vunpack.c.h.b16 %v354
      %v674 = vunpack.c.l.b16 %v355
      %v675 = vunpack.c.h.b16 %v355
      %v676 = vunpack.c.l.b16 %v356
      %v677 = vunpack.c.h.b16 %v356
      %v678 = vunpack.c.l.b16 %v357
      %v679 = vunpack.c.h.b16 %v357
      %v680 = vunpack.c.l.b16 %v358
      %v681 = vunpack.c.h.b16 %v358
      %v682 = vunpack.c.l.b16 %v359
      %v683 = vunpack.c.h.b16 %v359
      %v684 = vunpack.c.l.b16 %v360
      %v685 = vunpack.c.h.b16 %v360
      %v686 = vunpack.c.l.b16 %v361
      %v687 = vunpack.c.h.b16 %v361
      %v688 = vunpack.c.l.b16 %v362
      %v689 = vunpack.c.h.b16 %v362
      %v690 = vunpack.c.l.b16 %v363
      %v691 = vunpack.c.h.b16 %v363
      %v692 = vunpack.c.l.b16 %v364
      %v693 = vunpack.c.h.b16 %v364
      %v694 = vunpack.c.l.b16 %v365
      %v695 = vunpack.c.h.b16 %v365
      %v696 = vunpack.c.l.b16 %v366
      %v697 = vunpack.c.h.b16 %v366
      %v698 = vunpack.c.l.b16 %v367
      %v699 = vunpack.c.h.b16 %v367
      %v700 = vunpack.c.l.b16 %v368
      %v701 = vunpack.c.h.b16 %v368
      %v702 = vunpack.c.l.b16 %v369
      %v703 = vunpack.c.h.b16 %v369
      %v704 = vunpack.c.l.b16 %v370
      %v705 = vunpack.c.h.b16 %v370
      %v706 = vunpack.c.l.b16 %v371
      %v707 = vunpack.c.h.b16 %v371
      %v708 = vunpack.c.l.b16 %v372
      %v709 = vunpack.c.h.b16 %v372
      %v710 = vunpack.c.l.b16 %v373
      %v711 = vunpack.c.h.b16 %v373
      %v712 = vunpack.c.l.b16 %v374
      %v713 = vunpack.c.h.b16 %v374
      %v714 = vunpack.c.l.b16 %v375
      %v715 = vunpack.c.h.b16 %v375
      %v716 = vunpack.c.l.b16 %v376
      %v717 = vunpack.c.h.b16 %v376
      %v718 = vunpack.c.l.b16 %v377
      %v719 = vunpack.c.h.b16 %v377
      %v720 = vunpack.c.l.b16 %v378
      %v721 = vunpack.c.h.b16 %v378
      %v722 = vunpack.c.l.b16 %v379
      %v723 = vunpack.c.h.b16 %v379
      %v724 = vunpack.c.l.b16 %v380
      %v725 = vunpack.c.h.b16 %v380
      %v726 = vunpack.c.l.b16 %v381
      %v727 = vunpack.c.h.b16 %v381
      %v728 = vunpack.c.l.b16 %v382
      %v729 = vunpack.c.h.b16 %v382
      %v730 = vunpack.c.l.b16 %v383
      %v731 = vunpack.c.h.b16 %v383
      %v732 = vunpack.c.l.b16 %v384
      %v733 = vunpack.c.h.b16 %v384
      %v734 = vunpack.c.l.b16 %v385
      %v735 = vunpack.c.h.b16 %v385
      %v736 = vunpack.c.l.b16 %v386
      %v737 = vunpack.c.h.b16 %v386
      %v738 = vunpack.c.l.b16 %v387
      %v739 = vunpack.c.h.b16 %v387
      %v740 = vunpack.c.l.b16 %v388
      %v741 = vunpack.c.h.b16 %v388
      %v742 = vunpack.c.l.b16 %v389
      %v743 = vunpack.c.h.b16 %v389
      %v744 = vunpack.c.l.b16 %v390
      %v745 = vunpack.c.h.b16 %v390
      %v746 = vunpack.c.l.b16 %v391
      %v747 = vunpack.c.h.b16 %v391
      %v748 = vunpack.c.l.b16 %v392
      %v749 = vunpack.c.h.b16 %v392
      %v750 = vunpack.c.l.b16 %v393
      %v751 = vunpack.c.h.b16 %v393
      %v752 = vunpack.c.l.b16 %v394
      %v753 = vunpack.c.h.b16 %v394
      %v754 = vunpack.c.l.b16 %v395
      %v755 = vunpack.c.h.b16 %v395
      %v756 = vunpack.c.l.b16 %v396
      %v757 = vunpack.c.h.b16 %v396
      %v758 = vunpack.c.l.b16 %v397
      %v759 = vunpack.c.h.b16 %v397
      %v760 = vunpack.c.l.b16 %v398
      %v761 = vunpack.c.h.b16 %v398
      %v762 = vunpack.c.l.b16 %v399
      %v763 = vunpack.c.h.b16 %v399
      %v764 = vunpack.c.l.b16 %v400
      %v765 = vunpack.c.h.b16 %v400
      %v766 = vunpack.c.l.b16 %v401
      %v767 = vunpack.c.h.b16 %v401
      %v768 = vunpack.c.l.b16 %v402
      %v769 = vunpack.c.h.b16 %v402
      %v770 = vunpack.c.l.b16 %v403
      %v771 = vunpack.c.h.b16 %v403
      %v772 = vunpack.c.l.b16 %v404
      %v773 = vunpack.c.h.b16 %v404
      %v774 = vunpack.c.l.b16 %v405
      %v775 = vunpack.c.h.b16 %v405
      %v776 = vunpack.c.l.b16 %v406
      %v777 = vunpack.c.h.b16 %v406
      %v778 = vunpack.c.l.b16 %v407
      %v779 = vunpack.c.h.b16 %v407
      %v780 = vunpack.c.l.b16 %v408
      %v781 = vunpack.c.h.b16 %v408
      %v782 = vunpack.c.l.b16 %v409
      %v783 = vunpack.c.h.b16 %v409
      %v784 = vunpack.c.l.b16 %v410
      %v785 = vunpack.c.h.b16 %v410
      %v786 = vunpack.c.l.b16 %v411
      %v787 = vunpack.c.h.b16 %v411
      %v788 = vunpack.c.l.b16 %v412
      %v789 = vunpack.c.h.b16 %v412
      %v790 = vunpack.c.l.b16 %v413
      %v791 = vunpack.c.h.b16 %v413
      %v792 = vunpack.c.l.b16 %v414
      %v793 = vunpack.c.h.b16 %v414
      %v794 = vunpack.c.l.b16 %v415
      %v795 = vunpack.c.h.b16 %v415
      %v796 = vunpack.c.l.b16 %v416
      %v797 = vunpack.c.h.b16 %v416
      %v798 = vunpack.c.l.b16 %v417
      %v799 = vunpack.c.h.b16 %v417
      %v800 = vunpack.c.l.b16 %v418
      %v801 = vunpack.c.h.b16 %v418
      %v802 = vunpack.c.l.b16 %v419
      %v803 = vunpack.c.h.b16 %v419
      %v804 = vunpack.c.l.b16 %v420
      %v805 = vunpack.c.h.b16 %v420
      %v806 = vunpack.c.l.b16 %v421
      %v807 = vunpack.c.h.b16 %v421
      %v808 = vunpack.c.l.b16 %v422
      %v809 = vunpack.c.h.b16 %v422
      %v810 = vunpack.c.l.b16 %v423
      %v811 = vunpack.c.h.b16 %v423
      %v812 = vunpack.c.l.b16 %v424
      %v813 = vunpack.c.h.b16 %v424
      %v814 = vunpack.c.l.b16 %v425
      %v815 = vunpack.c.h.b16 %v425
      %v816 = vunpack.c.l.b16 %v426
      %v817 = vunpack.c.h.b16 %v426
      %v818 = vunpack.c.l.b16 %v427
      %v819 = vunpack.c.h.b16 %v427
      %v820 = vunpack.c.l.b16 %v428
      %v821 = vunpack.c.h.b16 %v428
      %v822 = vunpack.c.l.b16 %v429
      %v823 = vunpack.c.h.b16 %v429
      %v824 = vunpack.c.l.b16 %v430
      %v825 = vunpack.c.h.b16 %v430
      %v826 = vunpack.c.l.b16 %v431
      %v827 = vunpack.c.h.b16 %v431
      %v828 = vunpack.c.l.b16 %v432
      %v829 = vunpack.c.h.b16 %v432
      %v830 = vunpack.c.l.b16 %v433
      %v831 = vunpack.c.h.b16 %v433
      %v832 = vunpack.c.l.b16 %v434
      %v833 = vunpack.c.h.b16 %v434
      %v834 = vunpack.c.l.b16 %v435
      %v835 = vunpack.c.h.b16 %v435
      %v836 = vunpack.c.l.b16 %v436
      %v837 = vunpack.c.h.b16 %v436
      %v838 = vunpack.c.l.b16 %v437
      %v839 = vunpack.c.h.b16 %v437
      %v840 = vunpack.c.l.b16 %v438
      %v841 = vunpack.c.h.b16 %v438
      %v842 = vunpack.c.l.b16 %v439
      %v843 = vunpack.c.h.b16 %v439
      %v844 = vunpack.c.l.b16 %v440
      %v845 = vunpack.c.h.b16 %v440
      %v846 = vunpack.c.l.b16 %v441
      %v847 = vunpack.c.h.b16 %v441
      %v848 = vunpack.c.l.b16 %v442
      %v849 = vunpack.c.h.b16 %v442
      %v850 = vunpack.c.l.b16 %v443
      %v851 = vunpack.c.h.b16 %v443
      %v852 = vunpack.c.l.b16 %v444
      %v853 = vunpack.c.h.b16 %v444
      %v854 = vunpack.c.l.b16 %v445
      %v855 = vunpack.c.h.b16 %v445
      %v856 = vunpack.c.l.b16 %v446
      %v857 = vunpack.c.h.b16 %v446
      %v858 = vunpack.c.l.b16 %v447
      %v859 = vunpack.c.h.b16 %v447
      %v860 = vunpack.c.l.b16 %v448
      %v861 = vunpack.c.h.b16 %v448
      %v862 = vunpack.c.l.b16 %v449
      %v863 = vunpack.c.h.b16 %v449
      %v864 = vunpack.c.l.b16 %v450
      %v865 = vunpack.c.h.b16 %v450
      %v866 = vunpack.c.l.b16 %v451
      %v867 = vunpack.c.h.b16 %v451
      %v868 = vpack.c.b16 %v616, %v612
      %v869 = vpack.c.b16 %v617, %v613
      %v870 = vpack.c.b16 %v618, %v614
      %v871 = vpack.c.b16 %v619, %v615
      %v872 = vpack.c.b16 %v624, %v620
      %v873 = vpack.c.b16 %v625, %v621
      %v874 = vpack.c.b16 %v626, %v622
      %v875 = vpack.c.b16 %v627, %v623
      %v876 = vpack.c.b16 %v632, %v628
      %v877 = vpack.c.b16 %v633, %v629
      %v878 = vpack.c.b16 %v634, %v630
      %v879 = vpack.c.b16 %v635, %v631
      %v880 = vpack.c.b16 %v640, %v636
      %v881 = vpack.c.b16 %v641, %v637
      %v882 = vpack.c.b16 %v642, %v638
      %v883 = vpack.c.b16 %v643, %v639
      %v884 = vpack.c.b16 %v648, %v644
      %v885 = vpack.c.b16 %v649, %v645
      %v886 = vpack.c.b16 %v650, %v646
      %v887 = vpack.c.b16 %v651, %v647
      %v888 = vpack.c.b16 %v656, %v652
      %v889 = vpack.c.b16 %v657, %v653
      %v890 = vpack.c.b16 %v658, %v654
      %v891 = vpack.c.b16 %v659, %v655
      %v892 = vpack.c.b16 %v664, %v660
      %v893 = vpack.c.b16 %v665, %v661
      %v894 = vpack.c.b16 %v666, %v662
      %v895 = vpack.c.b16 %v667, %v663
      %v896 = vpack.c.b16 %v672, %v668
      %v897 = vpack.c.b16 %v673, %v669
      %v898 = vpack.c.b16 %v674, %v670
      %v899 = vpack.c.b16 %v675, %v671
      %v900 = vpack.c.b16 %v680, %v676
      %v901 = vpack.c.b16 %v681, %v677
      %v902 = vpack.c.b16 %v682, %v678
      %v903 = vpack.c.b16 %v683, %v679
      %v904 = vpack.c.b16 %v688, %v684
      %v905 = vpack.c.b16 %v689, %v685
      %v906 = vpack.c.b16 %v690, %v686
      %v907 = vpack.c.b16 %v691, %v687
      %v908 = vpack.c.b16 %v696, %v692
      %v909 = vpack.c.b16 %v697, %v693
      %v910 = vpack.c.b16 %v698, %v694
      %v911 = vpack.c.b16 %v699, %v695
      %v912 = vpack.c.b16 %v704, %v700
      %v913 = vpack.c.b16 %v705, %v701
      %v914 = vpack.c.b16 %v706, %v702
      %v915 = vpack.c.b16 %v707, %v703
      %v916 = vpack.c.b16 %v712, %v708
      %v917 = vpack.c.b16 %v713, %v709
      %v918 = vpack.c.b16 %v714, %v710
      %v919 = vpack.c.b16 %v715, %v711
      %v920 = vpack.c.b16 %v720, %v716
      %v921 = vpack.c.b16 %v721, %v717
      %v922 = vpack.c.b16 %v722, %v718
      %v923 = vpack.c.b16 %v723, %v719
      %v924 = vpack.c.b16 %v728, %v724
      %v925 = vpack.c.b16 %v729, %v725
      %v926 = vpack.c.b16 %v730, %v726
      %v927 = vpack.c.b16 %v731, %v727
      %v928 = vpack.c.b16 %v736, %v732
      %v929 = vpack.c.b16 %v737, %v733
      %v930 = vpack.c.b16 %v738, %v734
      %v931 = vpack.c.b16 %v739, %v735
      %v932 = vpack.c.b16 %v744, %v740
      %v933 = vpack.c.b16 %v745, %v741
      %v934 = vpack.c.b16 %v746, %v742
      %v935 = vpack.c.b16 %v747, %v743
      %v936 = vpack.c.b16 %v752, %v748
      %v937 = vpack.c.b16 %v753, %v749
      %v938 = vpack.c.b16 %v754, %v750
      %v939 = vpack.c.b16 %v755, %v751
      %v940 = vpack.c.b16 %v760, %v756
      %v941 = vpack.c.b16 %v761, %v757
      %v942 = vpack.c.b16 %v762, %v758
      %v943 = vpack.c.b16 %v763, %v759
      %v944 = vpack.c.b16 %v768, %v764
      %v945 = vpack.c.b16 %v769, %v765
      %v946 = vpack.c.b16 %v770, %v766
      %v947 = vpack.c.b16 %v771, %v767
      %v948 = vpack.c.b16 %v776, %v772
      %v949 = vpack.c.b16 %v777, %v773
      %v950 = vpack.c.b16 %v778, %v774
      %v951 = vpack.c.b16 %v779, %v775
      %v952 = vpack.c.b16 %v784, %v780
      %v953 = vpack.c.b16 %v785, %v781
      %v954 = vpack.c.b16 %v786, %v782
      %v955 = vpack.c.b16 %v787, %v783
      %v956 = vpack.c.b16 %v792, %v788
      %v957 = vpack.c.b16 %v793, %v789
      %v958 = vpack.c.b16 %v794, %v790
      %v959 = vpack.c.b16 %v795, %v791
      %v960 = vpack.c.b16 %v800, %v796
      %v961 = vpack.c.b16 %v801, %v797
      %v962 = vpack.c.b16 %v802, %v798
      %v963 = vpack.c.b16 %v803, %v799
      %v964 = vpack.c.b16 %v808, %v804
      %v965 = vpack.c.b16 %v809, %v805
      %v966 = vpack.c.b16 %v810, %v806
      %v967 = vpack.c.b16 %v811, %v807
      %v968 = vpack.c.b16 %v816, %v812
      %v969 = vpack.c.b16 %v817, %v813
      %v970 = vpack.c.b16 %v818, %v814
      %v971 = vpack.c.b16 %v819, %v815
      %v972 = vpack.c.b16 %v824, %v820
      %v973 = vpack.c.b16 %v825, %v821
      %v974 = vpack.c.b16 %v826, %v822
      %v975 = vpack.c.b16 %v827, %v823
      %v976 = vpack.c.b16 %v832, %v828
      %v977 = vpack.c.b16 %v833, %v829
      %v978 = vpack.c.b16 %v834, %v830
      %v979 = vpack.c.b16 %v835, %v831
      %v980 = vpack.c.b16 %v840, %v836
      %v981 = vpack.c.b16 %v841, %v837
      %v982 = vpack.c.b16 %v842, %v838
      %v983 = vpack.c.b16 %v843, %v839
      %v984 = vpack.c.b16 %v848, %v844
      %v985 = vpack.c.b16 %v849, %v845
      %v986 = vpack.c.b16 %v850, %v846
      %v987 = vpack.c.b16 %v851, %v847
      %v988 = vpack.c.b16 %v856, %v852
      %v989 = vpack.c.b16 %v857, %v853
      %v990 = vpack.c.b16 %v858, %v854
      %v991 = vpack.c.b16 %v859, %v855
      %v992 = vpack.c.b16 %v864, %v860
      %v993 = vpack.c.b16 %v865, %v861
      %v994 = vpack.c.b16 %v866, %v862
      %v995 = vpack.c.b16 %v867, %v863
      %1124 = vmatprep.subr.bf16.mxu0 %v897
      %1125 = vmatpush1.bf16.msra.mxu0 %v896
      %1126 = vmatprep.subr.bf16.mxu0 %v893
      %1127 = vmatpush1.bf16.msra.mxu0 %v892
      %1128 = vmatprep.subr.bf16.mxu0 %v889
      %1129 = vmatpush1.bf16.msra.mxu0 %v888
      %1130 = vmatprep.subr.bf16.mxu0 %v885
      %1131 = vmatpush1.bf16.msra.mxu0 %v884
      %1132 = vmatprep.subr.bf16.mxu0 %v881
      %1133 = vmatpush1.bf16.msra.mxu0 %v880
      %1134 = vmatprep.subr.bf16.mxu0 %v877
      %1135 = vmatpush1.bf16.msra.mxu0 %v876
      %1136 = vmatprep.subr.bf16.mxu0 %v873
      %1137 = vmatpush1.bf16.msra.mxu0 %v872
      %1138 = vmatprep.subr.bf16.mxu0 %v869
      %1139 = vmatpush1.bf16.msra.mxu0 %v868
      %1140 = vmatprep.subr.bf16.mxu0 %v929
      %1141 = vmatpush2.bf16.msra.mxu0 %v928
      %1142 = vmatprep.subr.bf16.mxu0 %v925
      %1143 = vmatpush2.bf16.msra.mxu0 %v924
      %1144 = vmatprep.subr.bf16.mxu0 %v921
      %1145 = vmatpush2.bf16.msra.mxu0 %v920
      %1146 = vmatprep.subr.bf16.mxu0 %v917
      %1147 = vmatpush2.bf16.msra.mxu0 %v916
      %1148 = vmatprep.subr.bf16.mxu0 %v913
      %1149 = vmatpush2.bf16.msra.mxu0 %v912
      %1150 = vmatprep.subr.bf16.mxu0 %v909
      %1151 = vmatpush2.bf16.msra.mxu0 %v908
      %1152 = vmatprep.subr.bf16.mxu0 %v905
      %1153 = vmatpush2.bf16.msra.mxu0 %v904
      %1154 = vmatprep.subr.bf16.mxu0 %v901
      %1155 = vmatpush2.bf16.msra.mxu0 %v900
      %1156 = vmatprep.mubr.bf16.mxu0 %v465
      %1157 = vmatmul.mubr.bf16.gmra.mxu0 %v458
      %v1158 = vpop.f32.mrf.mxu0
      %v1159 = vadd.f32 0.0, %v1158
      %v1160 = vpop.f32.mrf.mxu0
      %v1161 = vadd.f32 0.0, %v1160
      %v1162 = vpop.f32.mrf.mxu0
      %v1163 = vadd.f32 0.0, %v1162
      %v1164 = vpop.f32.mrf.mxu0
      %v1165 = vadd.f32 0.0, %v1164
      %1166 = vdwg.mxu0
      %1167 = vmatprep.subr.bf16.mxu0 %v961
      %1168 = vmatpush1.bf16.msra.mxu0 %v960
      %1169 = vmatprep.subr.bf16.mxu0 %v957
      %1170 = vmatpush1.bf16.msra.mxu0 %v956
      %1171 = vmatprep.subr.bf16.mxu0 %v953
      %1172 = vmatpush1.bf16.msra.mxu0 %v952
      %1173 = vmatprep.subr.bf16.mxu0 %v949
      %1174 = vmatpush1.bf16.msra.mxu0 %v948
      %1175 = vmatprep.subr.bf16.mxu0 %v945
      %1176 = vmatpush1.bf16.msra.mxu0 %v944
      %1177 = vmatprep.subr.bf16.mxu0 %v941
      %1178 = vmatpush1.bf16.msra.mxu0 %v940
      %1179 = vmatprep.subr.bf16.mxu0 %v937
      %1180 = vmatpush1.bf16.msra.mxu0 %v936
      %1181 = vmatprep.subr.bf16.mxu0 %v933
      %1182 = vmatpush1.bf16.msra.mxu0 %v932
      %1183 = vmatprep.subr.bf16.mxu0 %v993
      %1184 = vmatpush2.bf16.msra.mxu0 %v992
      %1185 = vmatprep.subr.bf16.mxu0 %v989
      %1186 = vmatpush2.bf16.msra.mxu0 %v988
      %1187 = vmatprep.subr.bf16.mxu0 %v985
      %1188 = vmatpush2.bf16.msra.mxu0 %v984
      %1189 = vmatprep.subr.bf16.mxu0 %v981
      %1190 = vmatpush2.bf16.msra.mxu0 %v980
      %1191 = vmatprep.subr.bf16.mxu0 %v977
      %1192 = vmatpush2.bf16.msra.mxu0 %v976
      %1193 = vmatprep.subr.bf16.mxu0 %v973
      %1194 = vmatpush2.bf16.msra.mxu0 %v972
      %1195 = vmatprep.subr.bf16.mxu0 %v969
      %1196 = vmatpush2.bf16.msra.mxu0 %v968
      %1197 = vmatprep.subr.bf16.mxu0 %v965
      %1198 = vmatpush2.bf16.msra.mxu0 %v964
      %1199 = vmatprep.mubr.bf16.mxu0 %v479
      %1200 = vmatmul.mubr.bf16.gmra.mxu0 %v472
      %v1201 = vpop.f32.mrf.mxu0
      %v1202 = vadd.f32 %v1159, %v1201
      %v1203 = vpop.f32.mrf.mxu0
      %v1204 = vadd.f32 %v1161, %v1203
      %v1205 = vpop.f32.mrf.mxu0
      %v1206 = vadd.f32 %v1163, %v1205
      %v1207 = vpop.f32.mrf.mxu0
      %v1208 = vadd.f32 %v1165, %v1207
      %1209 = vdwg.mxu0
      %1210 = vmatprep.subr.bf16.mxu0 %v899
      %1211 = vmatpush1.bf16.msra.mxu0 %v898
      %1212 = vmatprep.subr.bf16.mxu0 %v895
      %1213 = vmatpush1.bf16.msra.mxu0 %v894
      %1214 = vmatprep.subr.bf16.mxu0 %v891
      %1215 = vmatpush1.bf16.msra.mxu0 %v890
      %1216 = vmatprep.subr.bf16.mxu0 %v887
      %1217 = vmatpush1.bf16.msra.mxu0 %v886
      %1218 = vmatprep.subr.bf16.mxu0 %v883
      %1219 = vmatpush1.bf16.msra.mxu0 %v882
      %1220 = vmatprep.subr.bf16.mxu0 %v879
      %1221 = vmatpush1.bf16.msra.mxu0 %v878
      %1222 = vmatprep.subr.bf16.mxu0 %v875
      %1223 = vmatpush1.bf16.msra.mxu0 %v874
      %1224 = vmatprep.subr.bf16.mxu0 %v871
      %1225 = vmatpush1.bf16.msra.mxu0 %v870
      %1226 = vmatprep.subr.bf16.mxu0 %v931
      %1227 = vmatpush2.bf16.msra.mxu0 %v930
      %1228 = vmatprep.subr.bf16.mxu0 %v927
      %1229 = vmatpush2.bf16.msra.mxu0 %v926
      %1230 = vmatprep.subr.bf16.mxu0 %v923
      %1231 = vmatpush2.bf16.msra.mxu0 %v922
      %1232 = vmatprep.subr.bf16.mxu0 %v919
      %1233 = vmatpush2.bf16.msra.mxu0 %v918
      %1234 = vmatprep.subr.bf16.mxu0 %v915
      %1235 = vmatpush2.bf16.msra.mxu0 %v914
      %1236 = vmatprep.subr.bf16.mxu0 %v911
      %1237 = vmatpush2.bf16.msra.mxu0 %v910
      %1238 = vmatprep.subr.bf16.mxu0 %v907
      %1239 = vmatpush2.bf16.msra.mxu0 %v906
      %1240 = vmatprep.subr.bf16.mxu0 %v903
      %1241 = vmatpush2.bf16.msra.mxu0 %v902
      %1242 = vmatprep.mubr.bf16.mxu0 %v465
      %1243 = vmatmul.mubr.bf16.gmra.mxu0 %v458
      %v1244 = vpop.f32.mrf.mxu0
      %v1245 = vadd.f32 0.0, %v1244
      %v1246 = vpop.f32.mrf.mxu0
      %v1247 = vadd.f32 0.0, %v1246
      %v1248 = vpop.f32.mrf.mxu0
      %v1249 = vadd.f32 0.0, %v1248
      %v1250 = vpop.f32.mrf.mxu0
      %v1251 = vadd.f32 0.0, %v1250
      %1252 = vdwg.mxu0
      %1253 = vmatprep.subr.bf16.mxu0 %v963
      %1254 = vmatpush1.bf16.msra.mxu0 %v962
      %1255 = vmatprep.subr.bf16.mxu0 %v959
      %1256 = vmatpush1.bf16.msra.mxu0 %v958
      %1257 = vmatprep.subr.bf16.mxu0 %v955
      %1258 = vmatpush1.bf16.msra.mxu0 %v954
      %1259 = vmatprep.subr.bf16.mxu0 %v951
      %1260 = vmatpush1.bf16.msra.mxu0 %v950
      %1261 = vmatprep.subr.bf16.mxu0 %v947
      %1262 = vmatpush1.bf16.msra.mxu0 %v946
      %1263 = vmatprep.subr.bf16.mxu0 %v943
      %1264 = vmatpush1.bf16.msra.mxu0 %v942
      %1265 = vmatprep.subr.bf16.mxu0 %v939
      %1266 = vmatpush1.bf16.msra.mxu0 %v938
      %1267 = vmatprep.subr.bf16.mxu0 %v935
      %1268 = vmatpush1.bf16.msra.mxu0 %v934
      %1269 = vmatprep.subr.bf16.mxu0 %v995
      %1270 = vmatpush2.bf16.msra.mxu0 %v994
      %1271 = vmatprep.subr.bf16.mxu0 %v991
      %1272 = vmatpush2.bf16.msra.mxu0 %v990
      %1273 = vmatprep.subr.bf16.mxu0 %v987
      %1274 = vmatpush2.bf16.msra.mxu0 %v986
      %1275 = vmatprep.subr.bf16.mxu0 %v983
      %1276 = vmatpush2.bf16.msra.mxu0 %v982
      %1277 = vmatprep.subr.bf16.mxu0 %v979
      %1278 = vmatpush2.bf16.msra.mxu0 %v978
      %1279 = vmatprep.subr.bf16.mxu0 %v975
      %1280 = vmatpush2.bf16.msra.mxu0 %v974
      %1281 = vmatprep.subr.bf16.mxu0 %v971
      %1282 = vmatpush2.bf16.msra.mxu0 %v970
      %1283 = vmatprep.subr.bf16.mxu0 %v967
      %1284 = vmatpush2.bf16.msra.mxu0 %v966
      %1285 = vmatprep.mubr.bf16.mxu0 %v479
      %1286 = vmatmul.mubr.bf16.gmra.mxu0 %v472
      %v1287 = vpop.f32.mrf.mxu0
      %v1288 = vadd.f32 %v1245, %v1287
      %v1289 = vpop.f32.mrf.mxu0
      %v1290 = vadd.f32 %v1247, %v1289
      %v1291 = vpop.f32.mrf.mxu0
      %v1292 = vadd.f32 %v1249, %v1291
      %v1293 = vpop.f32.mrf.mxu0
      %v1294 = vadd.f32 %v1251, %v1293
      %1295 = vdwg.mxu0
      %v1424 = vunpack.c.l.b16 %v183
      %v1425 = vunpack.c.h.b16 %v183
      %v1426 = vunpack.c.l.b16 %v184
      %v1427 = vunpack.c.h.b16 %v184
      %v1428 = vunpack.c.l.b16 %v185
      %v1429 = vunpack.c.h.b16 %v185
      %v1430 = vunpack.c.l.b16 %v186
      %v1431 = vunpack.c.h.b16 %v186
      %v1432 = vunpack.c.l.b16 %v187
      %v1433 = vunpack.c.h.b16 %v187
      %v1434 = vunpack.c.l.b16 %v188
      %v1435 = vunpack.c.h.b16 %v188
      %v1436 = vunpack.c.l.b16 %v189
      %v1437 = vunpack.c.h.b16 %v189
      %v1438 = vunpack.c.l.b16 %v190
      %v1439 = vunpack.c.h.b16 %v190
      %v1440 = vunpack.c.l.b16 %v191
      %v1441 = vunpack.c.h.b16 %v191
      %v1442 = vunpack.c.l.b16 %v192
      %v1443 = vunpack.c.h.b16 %v192
      %v1444 = vunpack.c.l.b16 %v193
      %v1445 = vunpack.c.h.b16 %v193
      %v1446 = vunpack.c.l.b16 %v194
      %v1447 = vunpack.c.h.b16 %v194
      %v1448 = vunpack.c.l.b16 %v195
      %v1449 = vunpack.c.h.b16 %v195
      %v1450 = vunpack.c.l.b16 %v196
      %v1451 = vunpack.c.h.b16 %v196
      %v1452 = vunpack.c.l.b16 %v197
      %v1453 = vunpack.c.h.b16 %v197
      %v1454 = vunpack.c.l.b16 %v198
      %v1455 = vunpack.c.h.b16 %v198
      %v1456 = vunpack.c.l.b16 %v199
      %v1457 = vunpack.c.h.b16 %v199
      %v1458 = vunpack.c.l.b16 %v200
      %v1459 = vunpack.c.h.b16 %v200
      %v1460 = vunpack.c.l.b16 %v201
      %v1461 = vunpack.c.h.b16 %v201
      %v1462 = vunpack.c.l.b16 %v202
      %v1463 = vunpack.c.h.b16 %v202
      %v1464 = vunpack.c.l.b16 %v203
      %v1465 = vunpack.c.h.b16 %v203
      %v1466 = vunpack.c.l.b16 %v204
      %v1467 = vunpack.c.h.b16 %v204
      %v1468 = vunpack.c.l.b16 %v205
      %v1469 = vunpack.c.h.b16 %v205
      %v1470 = vunpack.c.l.b16 %v206
      %v1471 = vunpack.c.h.b16 %v206
      %v1472 = vunpack.c.l.b16 %v207
      %v1473 = vunpack.c.h.b16 %v207
      %v1474 = vunpack.c.l.b16 %v208
      %v1475 = vunpack.c.h.b16 %v208
      %v1476 = vunpack.c.l.b16 %v209
      %v1477 = vunpack.c.h.b16 %v209
      %v1478 = vunpack.c.l.b16 %v210
      %v1479 = vunpack.c.h.b16 %v210
      %v1480 = vunpack.c.l.b16 %v211
      %v1481 = vunpack.c.h.b16 %v211
      %v1482 = vunpack.c.l.b16 %v212
      %v1483 = vunpack.c.h.b16 %v212
      %v1484 = vunpack.c.l.b16 %v213
      %v1485 = vunpack.c.h.b16 %v213
      %v1486 = vunpack.c.l.b16 %v214
      %v1487 = vunpack.c.h.b16 %v214
      %v1488 = vunpack.c.l.b16 %v215
      %v1489 = vunpack.c.h.b16 %v215
      %v1490 = vunpack.c.l.b16 %v216
      %v1491 = vunpack.c.h.b16 %v216
      %v1492 = vunpack.c.l.b16 %v217
      %v1493 = vunpack.c.h.b16 %v217
      %v1494 = vunpack.c.l.b16 %v218
      %v1495 = vunpack.c.h.b16 %v218
      %v1496 = vunpack.c.l.b16 %v219
      %v1497 = vunpack.c.h.b16 %v219
      %v1498 = vunpack.c.l.b16 %v220
      %v1499 = vunpack.c.h.b16 %v220
      %v1500 = vunpack.c.l.b16 %v221
      %v1501 = vunpack.c.h.b16 %v221
      %v1502 = vunpack.c.l.b16 %v222
      %v1503 = vunpack.c.h.b16 %v222
      %v1504 = vunpack.c.l.b16 %v223
      %v1505 = vunpack.c.h.b16 %v223
      %v1506 = vunpack.c.l.b16 %v224
      %v1507 = vunpack.c.h.b16 %v224
      %v1508 = vunpack.c.l.b16 %v225
      %v1509 = vunpack.c.h.b16 %v225
      %v1510 = vunpack.c.l.b16 %v226
      %v1511 = vunpack.c.h.b16 %v226
      %v1512 = vunpack.c.l.b16 %v227
      %v1513 = vunpack.c.h.b16 %v227
      %v1514 = vunpack.c.l.b16 %v228
      %v1515 = vunpack.c.h.b16 %v228
      %v1516 = vunpack.c.l.b16 %v229
      %v1517 = vunpack.c.h.b16 %v229
      %v1518 = vunpack.c.l.b16 %v230
      %v1519 = vunpack.c.h.b16 %v230
      %v1520 = vunpack.c.l.b16 %v231
      %v1521 = vunpack.c.h.b16 %v231
      %v1522 = vunpack.c.l.b16 %v232
      %v1523 = vunpack.c.h.b16 %v232
      %v1524 = vunpack.c.l.b16 %v233
      %v1525 = vunpack.c.h.b16 %v233
      %v1526 = vunpack.c.l.b16 %v234
      %v1527 = vunpack.c.h.b16 %v234
      %v1528 = vunpack.c.l.b16 %v235
      %v1529 = vunpack.c.h.b16 %v235
      %v1530 = vunpack.c.l.b16 %v236
      %v1531 = vunpack.c.h.b16 %v236
      %v1532 = vunpack.c.l.b16 %v237
      %v1533 = vunpack.c.h.b16 %v237
      %v1534 = vunpack.c.l.b16 %v238
      %v1535 = vunpack.c.h.b16 %v238
      %v1536 = vunpack.c.l.b16 %v239
      %v1537 = vunpack.c.h.b16 %v239
      %v1538 = vunpack.c.l.b16 %v240
      %v1539 = vunpack.c.h.b16 %v240
      %v1540 = vunpack.c.l.b16 %v241
      %v1541 = vunpack.c.h.b16 %v241
      %v1542 = vunpack.c.l.b16 %v242
      %v1543 = vunpack.c.h.b16 %v242
      %v1544 = vunpack.c.l.b16 %v243
      %v1545 = vunpack.c.h.b16 %v243
      %v1546 = vunpack.c.l.b16 %v244
      %v1547 = vunpack.c.h.b16 %v244
      %v1548 = vunpack.c.l.b16 %v245
      %v1549 = vunpack.c.h.b16 %v245
      %v1550 = vunpack.c.l.b16 %v246
      %v1551 = vunpack.c.h.b16 %v246
      %v1552 = vunpack.c.l.b16 %v247
      %v1553 = vunpack.c.h.b16 %v247
      %v1554 = vunpack.c.l.b16 %v248
      %v1555 = vunpack.c.h.b16 %v248
      %v1556 = vunpack.c.l.b16 %v249
      %v1557 = vunpack.c.h.b16 %v249
      %v1558 = vunpack.c.l.b16 %v250
      %v1559 = vunpack.c.h.b16 %v250
      %v1560 = vunpack.c.l.b16 %v251
      %v1561 = vunpack.c.h.b16 %v251
      %v1562 = vunpack.c.l.b16 %v252
      %v1563 = vunpack.c.h.b16 %v252
      %v1564 = vunpack.c.l.b16 %v253
      %v1565 = vunpack.c.h.b16 %v253
      %v1566 = vunpack.c.l.b16 %v254
      %v1567 = vunpack.c.h.b16 %v254
      %v1568 = vunpack.c.l.b16 %v255
      %v1569 = vunpack.c.h.b16 %v255
      %v1570 = vunpack.c.l.b16 %v256
      %v1571 = vunpack.c.h.b16 %v256
      %v1572 = vunpack.c.l.b16 %v257
      %v1573 = vunpack.c.h.b16 %v257
      %v1574 = vunpack.c.l.b16 %v258
      %v1575 = vunpack.c.h.b16 %v258
      %v1576 = vunpack.c.l.b16 %v259
      %v1577 = vunpack.c.h.b16 %v259
      %v1578 = vunpack.c.l.b16 %v260
      %v1579 = vunpack.c.h.b16 %v260
      %v1580 = vunpack.c.l.b16 %v261
      %v1581 = vunpack.c.h.b16 %v261
      %v1582 = vunpack.c.l.b16 %v262
      %v1583 = vunpack.c.h.b16 %v262
      %v1584 = vunpack.c.l.b16 %v263
      %v1585 = vunpack.c.h.b16 %v263
      %v1586 = vunpack.c.l.b16 %v264
      %v1587 = vunpack.c.h.b16 %v264
      %v1588 = vunpack.c.l.b16 %v265
      %v1589 = vunpack.c.h.b16 %v265
      %v1590 = vunpack.c.l.b16 %v266
      %v1591 = vunpack.c.h.b16 %v266
      %v1592 = vunpack.c.l.b16 %v267
      %v1593 = vunpack.c.h.b16 %v267
      %v1594 = vunpack.c.l.b16 %v268
      %v1595 = vunpack.c.h.b16 %v268
      %v1596 = vunpack.c.l.b16 %v269
      %v1597 = vunpack.c.h.b16 %v269
      %v1598 = vunpack.c.l.b16 %v270
      %v1599 = vunpack.c.h.b16 %v270
      %v1600 = vunpack.c.l.b16 %v271
      %v1601 = vunpack.c.h.b16 %v271
      %v1602 = vunpack.c.l.b16 %v272
      %v1603 = vunpack.c.h.b16 %v272
      %v1604 = vunpack.c.l.b16 %v273
      %v1605 = vunpack.c.h.b16 %v273
      %v1606 = vunpack.c.l.b16 %v274
      %v1607 = vunpack.c.h.b16 %v274
      %v1608 = vunpack.c.l.b16 %v275
      %v1609 = vunpack.c.h.b16 %v275
      %v1610 = vunpack.c.l.b16 %v276
      %v1611 = vunpack.c.h.b16 %v276
      %v1612 = vunpack.c.l.b16 %v277
      %v1613 = vunpack.c.h.b16 %v277
      %v1614 = vunpack.c.l.b16 %v278
      %v1615 = vunpack.c.h.b16 %v278
      %v1616 = vunpack.c.l.b16 %v279
      %v1617 = vunpack.c.h.b16 %v279
      %v1618 = vunpack.c.l.b16 %v280
      %v1619 = vunpack.c.h.b16 %v280
      %v1620 = vunpack.c.l.b16 %v281
      %v1621 = vunpack.c.h.b16 %v281
      %v1622 = vunpack.c.l.b16 %v282
      %v1623 = vunpack.c.h.b16 %v282
      %v1624 = vunpack.c.l.b16 %v283
      %v1625 = vunpack.c.h.b16 %v283
      %v1626 = vunpack.c.l.b16 %v284
      %v1627 = vunpack.c.h.b16 %v284
      %v1628 = vunpack.c.l.b16 %v285
      %v1629 = vunpack.c.h.b16 %v285
      %v1630 = vunpack.c.l.b16 %v286
      %v1631 = vunpack.c.h.b16 %v286
      %v1632 = vunpack.c.l.b16 %v287
      %v1633 = vunpack.c.h.b16 %v287
      %v1634 = vunpack.c.l.b16 %v288
      %v1635 = vunpack.c.h.b16 %v288
      %v1636 = vunpack.c.l.b16 %v289
      %v1637 = vunpack.c.h.b16 %v289
      %v1638 = vunpack.c.l.b16 %v290
      %v1639 = vunpack.c.h.b16 %v290
      %v1640 = vunpack.c.l.b16 %v291
      %v1641 = vunpack.c.h.b16 %v291
      %v1642 = vunpack.c.l.b16 %v292
      %v1643 = vunpack.c.h.b16 %v292
      %v1644 = vunpack.c.l.b16 %v293
      %v1645 = vunpack.c.h.b16 %v293
      %v1646 = vunpack.c.l.b16 %v294
      %v1647 = vunpack.c.h.b16 %v294
      %v1648 = vunpack.c.l.b16 %v295
      %v1649 = vunpack.c.h.b16 %v295
      %v1650 = vunpack.c.l.b16 %v296
      %v1651 = vunpack.c.h.b16 %v296
      %v1652 = vunpack.c.l.b16 %v297
      %v1653 = vunpack.c.h.b16 %v297
      %v1654 = vunpack.c.l.b16 %v298
      %v1655 = vunpack.c.h.b16 %v298
      %v1656 = vunpack.c.l.b16 %v299
      %v1657 = vunpack.c.h.b16 %v299
      %v1658 = vunpack.c.l.b16 %v300
      %v1659 = vunpack.c.h.b16 %v300
      %v1660 = vunpack.c.l.b16 %v301
      %v1661 = vunpack.c.h.b16 %v301
      %v1662 = vunpack.c.l.b16 %v302
      %v1663 = vunpack.c.h.b16 %v302
      %v1664 = vunpack.c.l.b16 %v303
      %v1665 = vunpack.c.h.b16 %v303
      %v1666 = vunpack.c.l.b16 %v304
      %v1667 = vunpack.c.h.b16 %v304
      %v1668 = vunpack.c.l.b16 %v305
      %v1669 = vunpack.c.h.b16 %v305
      %v1670 = vunpack.c.l.b16 %v306
      %v1671 = vunpack.c.h.b16 %v306
      %v1672 = vunpack.c.l.b16 %v307
      %v1673 = vunpack.c.h.b16 %v307
      %v1674 = vunpack.c.l.b16 %v308
      %v1675 = vunpack.c.h.b16 %v308
      %v1676 = vunpack.c.l.b16 %v309
      %v1677 = vunpack.c.h.b16 %v309
      %v1678 = vunpack.c.l.b16 %v310
      %v1679 = vunpack.c.h.b16 %v310
      %v1680 = vpack.c.b16 %v1428, %v1424
      %v1681 = vpack.c.b16 %v1429, %v1425
      %v1682 = vpack.c.b16 %v1430, %v1426
      %v1683 = vpack.c.b16 %v1431, %v1427
      %v1684 = vpack.c.b16 %v1436, %v1432
      %v1685 = vpack.c.b16 %v1437, %v1433
      %v1686 = vpack.c.b16 %v1438, %v1434
      %v1687 = vpack.c.b16 %v1439, %v1435
      %v1688 = vpack.c.b16 %v1444, %v1440
      %v1689 = vpack.c.b16 %v1445, %v1441
      %v1690 = vpack.c.b16 %v1446, %v1442
      %v1691 = vpack.c.b16 %v1447, %v1443
      %v1692 = vpack.c.b16 %v1452, %v1448
      %v1693 = vpack.c.b16 %v1453, %v1449
      %v1694 = vpack.c.b16 %v1454, %v1450
      %v1695 = vpack.c.b16 %v1455, %v1451
      %v1696 = vpack.c.b16 %v1460, %v1456
      %v1697 = vpack.c.b16 %v1461, %v1457
      %v1698 = vpack.c.b16 %v1462, %v1458
      %v1699 = vpack.c.b16 %v1463, %v1459
      %v1700 = vpack.c.b16 %v1468, %v1464
      %v1701 = vpack.c.b16 %v1469, %v1465
      %v1702 = vpack.c.b16 %v1470, %v1466
      %v1703 = vpack.c.b16 %v1471, %v1467
      %v1704 = vpack.c.b16 %v1476, %v1472
      %v1705 = vpack.c.b16 %v1477, %v1473
      %v1706 = vpack.c.b16 %v1478, %v1474
      %v1707 = vpack.c.b16 %v1479, %v1475
      %v1708 = vpack.c.b16 %v1484, %v1480
      %v1709 = vpack.c.b16 %v1485, %v1481
      %v1710 = vpack.c.b16 %v1486, %v1482
      %v1711 = vpack.c.b16 %v1487, %v1483
      %v1712 = vpack.c.b16 %v1492, %v1488
      %v1713 = vpack.c.b16 %v1493, %v1489
      %v1714 = vpack.c.b16 %v1494, %v1490
      %v1715 = vpack.c.b16 %v1495, %v1491
      %v1716 = vpack.c.b16 %v1500, %v1496
      %v1717 = vpack.c.b16 %v1501, %v1497
      %v1718 = vpack.c.b16 %v1502, %v1498
      %v1719 = vpack.c.b16 %v1503, %v1499
      %v1720 = vpack.c.b16 %v1508, %v1504
      %v1721 = vpack.c.b16 %v1509, %v1505
      %v1722 = vpack.c.b16 %v1510, %v1506
      %v1723 = vpack.c.b16 %v1511, %v1507
      %v1724 = vpack.c.b16 %v1516, %v1512
      %v1725 = vpack.c.b16 %v1517, %v1513
      %v1726 = vpack.c.b16 %v1518, %v1514
      %v1727 = vpack.c.b16 %v1519, %v1515
      %v1728 = vpack.c.b16 %v1524, %v1520
      %v1729 = vpack.c.b16 %v1525, %v1521
      %v1730 = vpack.c.b16 %v1526, %v1522
      %v1731 = vpack.c.b16 %v1527, %v1523
      %v1732 = vpack.c.b16 %v1532, %v1528
      %v1733 = vpack.c.b16 %v1533, %v1529
      %v1734 = vpack.c.b16 %v1534, %v1530
      %v1735 = vpack.c.b16 %v1535, %v1531
      %v1736 = vpack.c.b16 %v1540, %v1536
      %v1737 = vpack.c.b16 %v1541, %v1537
      %v1738 = vpack.c.b16 %v1542, %v1538
      %v1739 = vpack.c.b16 %v1543, %v1539
      %v1740 = vpack.c.b16 %v1548, %v1544
      %v1741 = vpack.c.b16 %v1549, %v1545
      %v1742 = vpack.c.b16 %v1550, %v1546
      %v1743 = vpack.c.b16 %v1551, %v1547
      %v1744 = vpack.c.b16 %v1556, %v1552
      %v1745 = vpack.c.b16 %v1557, %v1553
      %v1746 = vpack.c.b16 %v1558, %v1554
      %v1747 = vpack.c.b16 %v1559, %v1555
      %v1748 = vpack.c.b16 %v1564, %v1560
      %v1749 = vpack.c.b16 %v1565, %v1561
      %v1750 = vpack.c.b16 %v1566, %v1562
      %v1751 = vpack.c.b16 %v1567, %v1563
      %v1752 = vpack.c.b16 %v1572, %v1568
      %v1753 = vpack.c.b16 %v1573, %v1569
      %v1754 = vpack.c.b16 %v1574, %v1570
      %v1755 = vpack.c.b16 %v1575, %v1571
      %v1756 = vpack.c.b16 %v1580, %v1576
      %v1757 = vpack.c.b16 %v1581, %v1577
      %v1758 = vpack.c.b16 %v1582, %v1578
      %v1759 = vpack.c.b16 %v1583, %v1579
      %v1760 = vpack.c.b16 %v1588, %v1584
      %v1761 = vpack.c.b16 %v1589, %v1585
      %v1762 = vpack.c.b16 %v1590, %v1586
      %v1763 = vpack.c.b16 %v1591, %v1587
      %v1764 = vpack.c.b16 %v1596, %v1592
      %v1765 = vpack.c.b16 %v1597, %v1593
      %v1766 = vpack.c.b16 %v1598, %v1594
      %v1767 = vpack.c.b16 %v1599, %v1595
      %v1768 = vpack.c.b16 %v1604, %v1600
      %v1769 = vpack.c.b16 %v1605, %v1601
      %v1770 = vpack.c.b16 %v1606, %v1602
      %v1771 = vpack.c.b16 %v1607, %v1603
      %v1772 = vpack.c.b16 %v1612, %v1608
      %v1773 = vpack.c.b16 %v1613, %v1609
      %v1774 = vpack.c.b16 %v1614, %v1610
      %v1775 = vpack.c.b16 %v1615, %v1611
      %v1776 = vpack.c.b16 %v1620, %v1616
      %v1777 = vpack.c.b16 %v1621, %v1617
      %v1778 = vpack.c.b16 %v1622, %v1618
      %v1779 = vpack.c.b16 %v1623, %v1619
      %v1780 = vpack.c.b16 %v1628, %v1624
      %v1781 = vpack.c.b16 %v1629, %v1625
      %v1782 = vpack.c.b16 %v1630, %v1626
      %v1783 = vpack.c.b16 %v1631, %v1627
      %v1784 = vpack.c.b16 %v1636, %v1632
      %v1785 = vpack.c.b16 %v1637, %v1633
      %v1786 = vpack.c.b16 %v1638, %v1634
      %v1787 = vpack.c.b16 %v1639, %v1635
      %v1788 = vpack.c.b16 %v1644, %v1640
      %v1789 = vpack.c.b16 %v1645, %v1641
      %v1790 = vpack.c.b16 %v1646, %v1642
      %v1791 = vpack.c.b16 %v1647, %v1643
      %v1792 = vpack.c.b16 %v1652, %v1648
      %v1793 = vpack.c.b16 %v1653, %v1649
      %v1794 = vpack.c.b16 %v1654, %v1650
      %v1795 = vpack.c.b16 %v1655, %v1651
      %v1796 = vpack.c.b16 %v1660, %v1656
      %v1797 = vpack.c.b16 %v1661, %v1657
      %v1798 = vpack.c.b16 %v1662, %v1658
      %v1799 = vpack.c.b16 %v1663, %v1659
      %v1800 = vpack.c.b16 %v1668, %v1664
      %v1801 = vpack.c.b16 %v1669, %v1665
      %v1802 = vpack.c.b16 %v1670, %v1666
      %v1803 = vpack.c.b16 %v1671, %v1667
      %v1804 = vpack.c.b16 %v1676, %v1672
      %v1805 = vpack.c.b16 %v1677, %v1673
      %v1806 = vpack.c.b16 %v1678, %v1674
      %v1807 = vpack.c.b16 %v1679, %v1675
      %1936 = vmatprep.subr.bf16.mxu0 %v1709
      %1937 = vmatpush1.bf16.msra.mxu0 %v1708
      %1938 = vmatprep.subr.bf16.mxu0 %v1705
      %1939 = vmatpush1.bf16.msra.mxu0 %v1704
      %1940 = vmatprep.subr.bf16.mxu0 %v1701
      %1941 = vmatpush1.bf16.msra.mxu0 %v1700
      %1942 = vmatprep.subr.bf16.mxu0 %v1697
      %1943 = vmatpush1.bf16.msra.mxu0 %v1696
      %1944 = vmatprep.subr.bf16.mxu0 %v1693
      %1945 = vmatpush1.bf16.msra.mxu0 %v1692
      %1946 = vmatprep.subr.bf16.mxu0 %v1689
      %1947 = vmatpush1.bf16.msra.mxu0 %v1688
      %1948 = vmatprep.subr.bf16.mxu0 %v1685
      %1949 = vmatpush1.bf16.msra.mxu0 %v1684
      %1950 = vmatprep.subr.bf16.mxu0 %v1681
      %1951 = vmatpush1.bf16.msra.mxu0 %v1680
      %1952 = vmatprep.subr.bf16.mxu0 %v1741
      %1953 = vmatpush2.bf16.msra.mxu0 %v1740
      %1954 = vmatprep.subr.bf16.mxu0 %v1737
      %1955 = vmatpush2.bf16.msra.mxu0 %v1736
      %1956 = vmatprep.subr.bf16.mxu0 %v1733
      %1957 = vmatpush2.bf16.msra.mxu0 %v1732
      %1958 = vmatprep.subr.bf16.mxu0 %v1729
      %1959 = vmatpush2.bf16.msra.mxu0 %v1728
      %1960 = vmatprep.subr.bf16.mxu0 %v1725
      %1961 = vmatpush2.bf16.msra.mxu0 %v1724
      %1962 = vmatprep.subr.bf16.mxu0 %v1721
      %1963 = vmatpush2.bf16.msra.mxu0 %v1720
      %1964 = vmatprep.subr.bf16.mxu0 %v1717
      %1965 = vmatpush2.bf16.msra.mxu0 %v1716
      %1966 = vmatprep.subr.bf16.mxu0 %v1713
      %1967 = vmatpush2.bf16.msra.mxu0 %v1712
      %1968 = vmatprep.mubr.bf16.mxu0 %v180
      %1969 = vmatmul.mubr.bf16.gmra.mxu0 %v179
      %v1970 = vpop.f32.mrf.mxu0
      %v1971 = vadd.f32 %v1202, %v1970
      %v1972 = vpop.f32.mrf.mxu0
      %v1973 = vadd.f32 %v1204, %v1972
      %v1974 = vpop.f32.mrf.mxu0
      %v1975 = vadd.f32 %v1206, %v1974
      %v1976 = vpop.f32.mrf.mxu0
      %v1977 = vadd.f32 %v1208, %v1976
      %1978 = vdwg.mxu0
      %1979 = vmatprep.subr.bf16.mxu0 %v1773
      %1980 = vmatpush1.bf16.msra.mxu0 %v1772
      %1981 = vmatprep.subr.bf16.mxu0 %v1769
      %1982 = vmatpush1.bf16.msra.mxu0 %v1768
      %1983 = vmatprep.subr.bf16.mxu0 %v1765
      %1984 = vmatpush1.bf16.msra.mxu0 %v1764
      %1985 = vmatprep.subr.bf16.mxu0 %v1761
      %1986 = vmatpush1.bf16.msra.mxu0 %v1760
      %1987 = vmatprep.subr.bf16.mxu0 %v1757
      %1988 = vmatpush1.bf16.msra.mxu0 %v1756
      %1989 = vmatprep.subr.bf16.mxu0 %v1753
      %1990 = vmatpush1.bf16.msra.mxu0 %v1752
      %1991 = vmatprep.subr.bf16.mxu0 %v1749
      %1992 = vmatpush1.bf16.msra.mxu0 %v1748
      %1993 = vmatprep.subr.bf16.mxu0 %v1745
      %1994 = vmatpush1.bf16.msra.mxu0 %v1744
      %1995 = vmatprep.subr.bf16.mxu0 %v1805
      %1996 = vmatpush2.bf16.msra.mxu0 %v1804
      %1997 = vmatprep.subr.bf16.mxu0 %v1801
      %1998 = vmatpush2.bf16.msra.mxu0 %v1800
      %1999 = vmatprep.subr.bf16.mxu0 %v1797
      %2000 = vmatpush2.bf16.msra.mxu0 %v1796
      %2001 = vmatprep.subr.bf16.mxu0 %v1793
      %2002 = vmatpush2.bf16.msra.mxu0 %v1792
      %2003 = vmatprep.subr.bf16.mxu0 %v1789
      %2004 = vmatpush2.bf16.msra.mxu0 %v1788
      %2005 = vmatprep.subr.bf16.mxu0 %v1785
      %2006 = vmatpush2.bf16.msra.mxu0 %v1784
      %2007 = vmatprep.subr.bf16.mxu0 %v1781
      %2008 = vmatpush2.bf16.msra.mxu0 %v1780
      %2009 = vmatprep.subr.bf16.mxu0 %v1777
      %2010 = vmatpush2.bf16.msra.mxu0 %v1776
      %2011 = vmatprep.mubr.bf16.mxu0 %v182
      %2012 = vmatmul.mubr.bf16.gmra.mxu0 %v181
      %v2013 = vpop.f32.mrf.mxu0
      %v2014 = vadd.f32 %v1971, %v2013
      %v2015 = vpop.f32.mrf.mxu0
      %v2016 = vadd.f32 %v1973, %v2015
      %v2017 = vpop.f32.mrf.mxu0
      %v2018 = vadd.f32 %v1975, %v2017
      %v2019 = vpop.f32.mrf.mxu0
      %v2020 = vadd.f32 %v1977, %v2019
      %2021 = vdwg.mxu0
      %2022 = vmatprep.subr.bf16.mxu0 %v1711
      %2023 = vmatpush1.bf16.msra.mxu0 %v1710
      %2024 = vmatprep.subr.bf16.mxu0 %v1707
      %2025 = vmatpush1.bf16.msra.mxu0 %v1706
      %2026 = vmatprep.subr.bf16.mxu0 %v1703
      %2027 = vmatpush1.bf16.msra.mxu0 %v1702
      %2028 = vmatprep.subr.bf16.mxu0 %v1699
      %2029 = vmatpush1.bf16.msra.mxu0 %v1698
      %2030 = vmatprep.subr.bf16.mxu0 %v1695
      %2031 = vmatpush1.bf16.msra.mxu0 %v1694
      %2032 = vmatprep.subr.bf16.mxu0 %v1691
      %2033 = vmatpush1.bf16.msra.mxu0 %v1690
      %2034 = vmatprep.subr.bf16.mxu0 %v1687
      %2035 = vmatpush1.bf16.msra.mxu0 %v1686
      %2036 = vmatprep.subr.bf16.mxu0 %v1683
      %2037 = vmatpush1.bf16.msra.mxu0 %v1682
      %2038 = vmatprep.subr.bf16.mxu0 %v1743
      %2039 = vmatpush2.bf16.msra.mxu0 %v1742
      %2040 = vmatprep.subr.bf16.mxu0 %v1739
      %2041 = vmatpush2.bf16.msra.mxu0 %v1738
      %2042 = vmatprep.subr.bf16.mxu0 %v1735
      %2043 = vmatpush2.bf16.msra.mxu0 %v1734
      %2044 = vmatprep.subr.bf16.mxu0 %v1731
      %2045 = vmatpush2.bf16.msra.mxu0 %v1730
      %2046 = vmatprep.subr.bf16.mxu0 %v1727
      %2047 = vmatpush2.bf16.msra.mxu0 %v1726
      %2048 = vmatprep.subr.bf16.mxu0 %v1723
      %2049 = vmatpush2.bf16.msra.mxu0 %v1722
      %2050 = vmatprep.subr.bf16.mxu0 %v1719
      %2051 = vmatpush2.bf16.msra.mxu0 %v1718
      %2052 = vmatprep.subr.bf16.mxu0 %v1715
      %2053 = vmatpush2.bf16.msra.mxu0 %v1714
      %2054 = vmatprep.mubr.bf16.mxu0 %v180
      %2055 = vmatmul.mubr.bf16.gmra.mxu0 %v179
      %v2056 = vpop.f32.mrf.mxu0
      %v2057 = vadd.f32 %v1288, %v2056
      %v2058 = vpop.f32.mrf.mxu0
      %v2059 = vadd.f32 %v1290, %v2058
      %v2060 = vpop.f32.mrf.mxu0
      %v2061 = vadd.f32 %v1292, %v2060
      %v2062 = vpop.f32.mrf.mxu0
      %v2063 = vadd.f32 %v1294, %v2062
      %2064 = vdwg.mxu0
      %2065 = vmatprep.subr.bf16.mxu0 %v1775
      %2066 = vmatpush1.bf16.msra.mxu0 %v1774
      %2067 = vmatprep.subr.bf16.mxu0 %v1771
      %2068 = vmatpush1.bf16.msra.mxu0 %v1770
      %2069 = vmatprep.subr.bf16.mxu0 %v1767
      %2070 = vmatpush1.bf16.msra.mxu0 %v1766
      %2071 = vmatprep.subr.bf16.mxu0 %v1763
      %2072 = vmatpush1.bf16.msra.mxu0 %v1762
      %2073 = vmatprep.subr.bf16.mxu0 %v1759
      %2074 = vmatpush1.bf16.msra.mxu0 %v1758
      %2075 = vmatprep.subr.bf16.mxu0 %v1755
      %2076 = vmatpush1.bf16.msra.mxu0 %v1754
      %2077 = vmatprep.subr.bf16.mxu0 %v1751
      %2078 = vmatpush1.bf16.msra.mxu0 %v1750
      %2079 = vmatprep.subr.bf16.mxu0 %v1747
      %2080 = vmatpush1.bf16.msra.mxu0 %v1746
      %2081 = vmatprep.subr.bf16.mxu0 %v1807
      %2082 = vmatpush2.bf16.msra.mxu0 %v1806
      %2083 = vmatprep.subr.bf16.mxu0 %v1803
      %2084 = vmatpush2.bf16.msra.mxu0 %v1802
      %2085 = vmatprep.subr.bf16.mxu0 %v1799
      %2086 = vmatpush2.bf16.msra.mxu0 %v1798
      %2087 = vmatprep.subr.bf16.mxu0 %v1795
      %2088 = vmatpush2.bf16.msra.mxu0 %v1794
      %2089 = vmatprep.subr.bf16.mxu0 %v1791
      %2090 = vmatpush2.bf16.msra.mxu0 %v1790
      %2091 = vmatprep.subr.bf16.mxu0 %v1787
      %2092 = vmatpush2.bf16.msra.mxu0 %v1786
      %2093 = vmatprep.subr.bf16.mxu0 %v1783
      %2094 = vmatpush2.bf16.msra.mxu0 %v1782
      %2095 = vmatprep.subr.bf16.mxu0 %v1779
      %2096 = vmatpush2.bf16.msra.mxu0 %v1778
      %2097 = vmatprep.mubr.bf16.mxu0 %v182
      %2098 = vmatmul.mubr.bf16.gmra.mxu0 %v181
      %v2099 = vpop.f32.mrf.mxu0
      %v2100 = vadd.f32 %v2057, %v2099
      %v2101 = vpop.f32.mrf.mxu0
      %v2102 = vadd.f32 %v2059, %v2101
      %v2103 = vpop.f32.mrf.mxu0
      %v2104 = vadd.f32 %v2061, %v2103
      %v2105 = vpop.f32.mrf.mxu0
      %v2106 = vadd.f32 %v2063, %v2105
      %2107 = vdwg.mxu0
      %v2108 = vld [vmem:[%s165] sm:$0xfc]
      %v2109 = vld [vmem:[%s165 + $0x8] sm:$0xfc]
      %v2110 = vld [vmem:[%s165 + $0x10] sm:$0xfc]
      %v2111 = vld [vmem:[%s165 + $0x18] sm:$0xfc]
      %v2112 = vld [vmem:[%s165 + $0x20] sm:$0xff]
      %v2113 = vld [vmem:[%s165 + $0x28] sm:$0xff]
      %v2114 = vld [vmem:[%s165 + $0x30] sm:$0xff]
      %v2115 = vld [vmem:[%s165 + $0x38] sm:$0xff]
      %v2116 = vpack.c.bf16 %v2112, %v2108
      %v2117 = vpack.c.bf16 %v2113, %v2109
      %v2118 = vpack.c.bf16 %v2114, %v2110
      %v2119 = vpack.c.bf16 %v2115, %v2111
      %s2120 = scalar_lea.vmem %s1, 2048
      %v2121 = vld [vmem:[%s2120] sm:$0xff]
      %v2122 = vld [vmem:[%s2120 + $0x8] sm:$0xff]
      %v2123 = vld [vmem:[%s2120 + $0x10] sm:$0xff]
      %v2124 = vld [vmem:[%s2120 + $0x18] sm:$0xff]
      %v2125 = vld [vmem:[%s2120 + $0x20] sm:$0xff]
      %v2126 = vld [vmem:[%s2120 + $0x28] sm:$0xff]
      %v2127 = vld [vmem:[%s2120 + $0x30] sm:$0xff]
      %v2128 = vld [vmem:[%s2120 + $0x38] sm:$0xff]
      %v2129 = vld [vmem:[%s2120 + $0x40] sm:$0xff]
      %v2130 = vld [vmem:[%s2120 + $0x48] sm:$0xff]
      %v2131 = vld [vmem:[%s2120 + $0x50] sm:$0xff]
      %v2132 = vld [vmem:[%s2120 + $0x58] sm:$0xff]
      %v2133 = vld [vmem:[%s2120 + $0x60] sm:$0xff]
      %v2134 = vld [vmem:[%s2120 + $0x68] sm:$0xff]
      %v2135 = vld [vmem:[%s2120 + $0x70] sm:$0xff]
      %v2136 = vld [vmem:[%s2120 + $0x78] sm:$0xff]
      %v2137 = vld [vmem:[%s2120 + $0x80] sm:$0xff]
      %v2138 = vld [vmem:[%s2120 + $0x88] sm:$0xff]
      %v2139 = vld [vmem:[%s2120 + $0x90] sm:$0xff]
      %v2140 = vld [vmem:[%s2120 + $0x98] sm:$0xff]
      %v2141 = vld [vmem:[%s2120 + $0xa0] sm:$0xff]
      %v2142 = vld [vmem:[%s2120 + $0xa8] sm:$0xff]
      %v2143 = vld [vmem:[%s2120 + $0xb0] sm:$0xff]
      %v2144 = vld [vmem:[%s2120 + $0xb8] sm:$0xff]
      %v2145 = vld [vmem:[%s2120 + $0xc0] sm:$0xff]
      %v2146 = vld [vmem:[%s2120 + $0xc8] sm:$0xff]
      %v2147 = vld [vmem:[%s2120 + $0xd0] sm:$0xff]
      %v2148 = vld [vmem:[%s2120 + $0xd8] sm:$0xff]
      %v2149 = vld [vmem:[%s2120 + $0xe0] sm:$0xff]
      %v2150 = vld [vmem:[%s2120 + $0xe8] sm:$0xff]
      %v2151 = vld [vmem:[%s2120 + $0xf0] sm:$0xff]
      %v2152 = vld [vmem:[%s2120 + $0xf8] sm:$0xff]
      %v2153 = vld [vmem:[%s2120 + $0x100] sm:$0xff]
      %v2154 = vld [vmem:[%s2120 + $0x108] sm:$0xff]
      %v2155 = vld [vmem:[%s2120 + $0x110] sm:$0xff]
      %v2156 = vld [vmem:[%s2120 + $0x118] sm:$0xff]
      %v2157 = vld [vmem:[%s2120 + $0x120] sm:$0xff]
      %v2158 = vld [vmem:[%s2120 + $0x128] sm:$0xff]
      %v2159 = vld [vmem:[%s2120 + $0x130] sm:$0xff]
      %v2160 = vld [vmem:[%s2120 + $0x138] sm:$0xff]
      %v2161 = vld [vmem:[%s2120 + $0x140] sm:$0xff]
      %v2162 = vld [vmem:[%s2120 + $0x148] sm:$0xff]
      %v2163 = vld [vmem:[%s2120 + $0x150] sm:$0xff]
      %v2164 = vld [vmem:[%s2120 + $0x158] sm:$0xff]
      %v2165 = vld [vmem:[%s2120 + $0x160] sm:$0xff]
      %v2166 = vld [vmem:[%s2120 + $0x168] sm:$0xff]
      %v2167 = vld [vmem:[%s2120 + $0x170] sm:$0xff]
      %v2168 = vld [vmem:[%s2120 + $0x178] sm:$0xff]
      %v2169 = vld [vmem:[%s2120 + $0x180] sm:$0xff]
      %v2170 = vld [vmem:[%s2120 + $0x188] sm:$0xff]
      %v2171 = vld [vmem:[%s2120 + $0x190] sm:$0xff]
      %v2172 = vld [vmem:[%s2120 + $0x198] sm:$0xff]
      %v2173 = vld [vmem:[%s2120 + $0x1a0] sm:$0xff]
      %v2174 = vld [vmem:[%s2120 + $0x1a8] sm:$0xff]
      %v2175 = vld [vmem:[%s2120 + $0x1b0] sm:$0xff]
      %v2176 = vld [vmem:[%s2120 + $0x1b8] sm:$0xff]
      %v2177 = vld [vmem:[%s2120 + $0x1c0] sm:$0xff]
      %v2178 = vld [vmem:[%s2120 + $0x1c8] sm:$0xff]
      %v2179 = vld [vmem:[%s2120 + $0x1d0] sm:$0xff]
      %v2180 = vld [vmem:[%s2120 + $0x1d8] sm:$0xff]
      %v2181 = vld [vmem:[%s2120 + $0x1e0] sm:$0xff]
      %v2182 = vld [vmem:[%s2120 + $0x1e8] sm:$0xff]
      %v2183 = vld [vmem:[%s2120 + $0x1f0] sm:$0xff]
      %v2184 = vld [vmem:[%s2120 + $0x1f8] sm:$0xff]
      %v2185 = vld [vmem:[%s2120 + $0x200] sm:$0xff]
      %v2186 = vld [vmem:[%s2120 + $0x208] sm:$0xff]
      %v2187 = vld [vmem:[%s2120 + $0x210] sm:$0xff]
      %v2188 = vld [vmem:[%s2120 + $0x218] sm:$0xff]
      %v2189 = vld [vmem:[%s2120 + $0x220] sm:$0xff]
      %v2190 = vld [vmem:[%s2120 + $0x228] sm:$0xff]
      %v2191 = vld [vmem:[%s2120 + $0x230] sm:$0xff]
      %v2192 = vld [vmem:[%s2120 + $0x238] sm:$0xff]
      %v2193 = vld [vmem:[%s2120 + $0x240] sm:$0xff]
      %v2194 = vld [vmem:[%s2120 + $0x248] sm:$0xff]
      %v2195 = vld [vmem:[%s2120 + $0x250] sm:$0xff]
      %v2196 = vld [vmem:[%s2120 + $0x258] sm:$0xff]
      %v2197 = vld [vmem:[%s2120 + $0x260] sm:$0xff]
      %v2198 = vld [vmem:[%s2120 + $0x268] sm:$0xff]
      %v2199 = vld [vmem:[%s2120 + $0x270] sm:$0xff]
      %v2200 = vld [vmem:[%s2120 + $0x278] sm:$0xff]
      %v2201 = vld [vmem:[%s2120 + $0x280] sm:$0xff]
      %v2202 = vld [vmem:[%s2120 + $0x288] sm:$0xff]
      %v2203 = vld [vmem:[%s2120 + $0x290] sm:$0xff]
      %v2204 = vld [vmem:[%s2120 + $0x298] sm:$0xff]
      %v2205 = vld [vmem:[%s2120 + $0x2a0] sm:$0xff]
      %v2206 = vld [vmem:[%s2120 + $0x2a8] sm:$0xff]
      %v2207 = vld [vmem:[%s2120 + $0x2b0] sm:$0xff]
      %v2208 = vld [vmem:[%s2120 + $0x2b8] sm:$0xff]
      %v2209 = vld [vmem:[%s2120 + $0x2c0] sm:$0xff]
      %v2210 = vld [vmem:[%s2120 + $0x2c8] sm:$0xff]
      %v2211 = vld [vmem:[%s2120 + $0x2d0] sm:$0xff]
      %v2212 = vld [vmem:[%s2120 + $0x2d8] sm:$0xff]
      %v2213 = vld [vmem:[%s2120 + $0x2e0] sm:$0xff]
      %v2214 = vld [vmem:[%s2120 + $0x2e8] sm:$0xff]
      %v2215 = vld [vmem:[%s2120 + $0x2f0] sm:$0xff]
      %v2216 = vld [vmem:[%s2120 + $0x2f8] sm:$0xff]
      %v2217 = vld [vmem:[%s2120 + $0x300] sm:$0xff]
      %v2218 = vld [vmem:[%s2120 + $0x308] sm:$0xff]
      %v2219 = vld [vmem:[%s2120 + $0x310] sm:$0xff]
      %v2220 = vld [vmem:[%s2120 + $0x318] sm:$0xff]
      %v2221 = vld [vmem:[%s2120 + $0x320] sm:$0xff]
      %v2222 = vld [vmem:[%s2120 + $0x328] sm:$0xff]
      %v2223 = vld [vmem:[%s2120 + $0x330] sm:$0xff]
      %v2224 = vld [vmem:[%s2120 + $0x338] sm:$0xff]
      %v2225 = vld [vmem:[%s2120 + $0x340] sm:$0xff]
      %v2226 = vld [vmem:[%s2120 + $0x348] sm:$0xff]
      %v2227 = vld [vmem:[%s2120 + $0x350] sm:$0xff]
      %v2228 = vld [vmem:[%s2120 + $0x358] sm:$0xff]
      %v2229 = vld [vmem:[%s2120 + $0x360] sm:$0xff]
      %v2230 = vld [vmem:[%s2120 + $0x368] sm:$0xff]
      %v2231 = vld [vmem:[%s2120 + $0x370] sm:$0xff]
      %v2232 = vld [vmem:[%s2120 + $0x378] sm:$0xff]
      %v2233 = vld [vmem:[%s2120 + $0x380] sm:$0xff]
      %v2234 = vld [vmem:[%s2120 + $0x388] sm:$0xff]
      %v2235 = vld [vmem:[%s2120 + $0x390] sm:$0xff]
      %v2236 = vld [vmem:[%s2120 + $0x398] sm:$0xff]
      %v2237 = vld [vmem:[%s2120 + $0x3a0] sm:$0xff]
      %v2238 = vld [vmem:[%s2120 + $0x3a8] sm:$0xff]
      %v2239 = vld [vmem:[%s2120 + $0x3b0] sm:$0xff]
      %v2240 = vld [vmem:[%s2120 + $0x3b8] sm:$0xff]
      %v2241 = vld [vmem:[%s2120 + $0x3c0] sm:$0xff]
      %v2242 = vld [vmem:[%s2120 + $0x3c8] sm:$0xff]
      %v2243 = vld [vmem:[%s2120 + $0x3d0] sm:$0xff]
      %v2244 = vld [vmem:[%s2120 + $0x3d8] sm:$0xff]
      %v2245 = vld [vmem:[%s2120 + $0x3e0] sm:$0xff]
      %v2246 = vld [vmem:[%s2120 + $0x3e8] sm:$0xff]
      %v2247 = vld [vmem:[%s2120 + $0x3f0] sm:$0xff]
      %v2248 = vld [vmem:[%s2120 + $0x3f8] sm:$0xff]
      %v2253 = vrot.slane %v2116, 1
      %v2254 = vrot.slane %v2117, 1
      %v2255 = vrot.slane %v2118, 1
      %v2256 = vrot.slane %v2119, 1
      %v2389 = vunpack.c.l.b16 %v2121
      %v2390 = vunpack.c.h.b16 %v2121
      %v2391 = vunpack.c.l.b16 %v2122
      %v2392 = vunpack.c.h.b16 %v2122
      %v2393 = vunpack.c.l.b16 %v2123
      %v2394 = vunpack.c.h.b16 %v2123
      %v2395 = vunpack.c.l.b16 %v2124
      %v2396 = vunpack.c.h.b16 %v2124
      %v2397 = vunpack.c.l.b16 %v2125
      %v2398 = vunpack.c.h.b16 %v2125
      %v2399 = vunpack.c.l.b16 %v2126
      %v2400 = vunpack.c.h.b16 %v2126
      %v2401 = vunpack.c.l.b16 %v2127
      %v2402 = vunpack.c.h.b16 %v2127
      %v2403 = vunpack.c.l.b16 %v2128
      %v2404 = vunpack.c.h.b16 %v2128
      %v2405 = vunpack.c.l.b16 %v2129
      %v2406 = vunpack.c.h.b16 %v2129
      %v2407 = vunpack.c.l.b16 %v2130
      %v2408 = vunpack.c.h.b16 %v2130
      %v2409 = vunpack.c.l.b16 %v2131
      %v2410 = vunpack.c.h.b16 %v2131
      %v2411 = vunpack.c.l.b16 %v2132
      %v2412 = vunpack.c.h.b16 %v2132
      %v2413 = vunpack.c.l.b16 %v2133
      %v2414 = vunpack.c.h.b16 %v2133
      %v2415 = vunpack.c.l.b16 %v2134
      %v2416 = vunpack.c.h.b16 %v2134
      %v2417 = vunpack.c.l.b16 %v2135
      %v2418 = vunpack.c.h.b16 %v2135
      %v2419 = vunpack.c.l.b16 %v2136
      %v2420 = vunpack.c.h.b16 %v2136
      %v2421 = vunpack.c.l.b16 %v2137
      %v2422 = vunpack.c.h.b16 %v2137
      %v2423 = vunpack.c.l.b16 %v2138
      %v2424 = vunpack.c.h.b16 %v2138
      %v2425 = vunpack.c.l.b16 %v2139
      %v2426 = vunpack.c.h.b16 %v2139
      %v2427 = vunpack.c.l.b16 %v2140
      %v2428 = vunpack.c.h.b16 %v2140
      %v2429 = vunpack.c.l.b16 %v2141
      %v2430 = vunpack.c.h.b16 %v2141
      %v2431 = vunpack.c.l.b16 %v2142
      %v2432 = vunpack.c.h.b16 %v2142
      %v2433 = vunpack.c.l.b16 %v2143
      %v2434 = vunpack.c.h.b16 %v2143
      %v2435 = vunpack.c.l.b16 %v2144
      %v2436 = vunpack.c.h.b16 %v2144
      %v2437 = vunpack.c.l.b16 %v2145
      %v2438 = vunpack.c.h.b16 %v2145
      %v2439 = vunpack.c.l.b16 %v2146
      %v2440 = vunpack.c.h.b16 %v2146
      %v2441 = vunpack.c.l.b16 %v2147
      %v2442 = vunpack.c.h.b16 %v2147
      %v2443 = vunpack.c.l.b16 %v2148
      %v2444 = vunpack.c.h.b16 %v2148
      %v2445 = vunpack.c.l.b16 %v2149
      %v2446 = vunpack.c.h.b16 %v2149
      %v2447 = vunpack.c.l.b16 %v2150
      %v2448 = vunpack.c.h.b16 %v2150
      %v2449 = vunpack.c.l.b16 %v2151
      %v2450 = vunpack.c.h.b16 %v2151
      %v2451 = vunpack.c.l.b16 %v2152
      %v2452 = vunpack.c.h.b16 %v2152
      %v2453 = vunpack.c.l.b16 %v2153
      %v2454 = vunpack.c.h.b16 %v2153
      %v2455 = vunpack.c.l.b16 %v2154
      %v2456 = vunpack.c.h.b16 %v2154
      %v2457 = vunpack.c.l.b16 %v2155
      %v2458 = vunpack.c.h.b16 %v2155
      %v2459 = vunpack.c.l.b16 %v2156
      %v2460 = vunpack.c.h.b16 %v2156
      %v2461 = vunpack.c.l.b16 %v2157
      %v2462 = vunpack.c.h.b16 %v2157
      %v2463 = vunpack.c.l.b16 %v2158
      %v2464 = vunpack.c.h.b16 %v2158
      %v2465 = vunpack.c.l.b16 %v2159
      %v2466 = vunpack.c.h.b16 %v2159
      %v2467 = vunpack.c.l.b16 %v2160
      %v2468 = vunpack.c.h.b16 %v2160
      %v2469 = vunpack.c.l.b16 %v2161
      %v2470 = vunpack.c.h.b16 %v2161
      %v2471 = vunpack.c.l.b16 %v2162
      %v2472 = vunpack.c.h.b16 %v2162
      %v2473 = vunpack.c.l.b16 %v2163
      %v2474 = vunpack.c.h.b16 %v2163
      %v2475 = vunpack.c.l.b16 %v2164
      %v2476 = vunpack.c.h.b16 %v2164
      %v2477 = vunpack.c.l.b16 %v2165
      %v2478 = vunpack.c.h.b16 %v2165
      %v2479 = vunpack.c.l.b16 %v2166
      %v2480 = vunpack.c.h.b16 %v2166
      %v2481 = vunpack.c.l.b16 %v2167
      %v2482 = vunpack.c.h.b16 %v2167
      %v2483 = vunpack.c.l.b16 %v2168
      %v2484 = vunpack.c.h.b16 %v2168
      %v2485 = vunpack.c.l.b16 %v2169
      %v2486 = vunpack.c.h.b16 %v2169
      %v2487 = vunpack.c.l.b16 %v2170
      %v2488 = vunpack.c.h.b16 %v2170
      %v2489 = vunpack.c.l.b16 %v2171
      %v2490 = vunpack.c.h.b16 %v2171
      %v2491 = vunpack.c.l.b16 %v2172
      %v2492 = vunpack.c.h.b16 %v2172
      %v2493 = vunpack.c.l.b16 %v2173
      %v2494 = vunpack.c.h.b16 %v2173
      %v2495 = vunpack.c.l.b16 %v2174
      %v2496 = vunpack.c.h.b16 %v2174
      %v2497 = vunpack.c.l.b16 %v2175
      %v2498 = vunpack.c.h.b16 %v2175
      %v2499 = vunpack.c.l.b16 %v2176
      %v2500 = vunpack.c.h.b16 %v2176
      %v2501 = vunpack.c.l.b16 %v2177
      %v2502 = vunpack.c.h.b16 %v2177
      %v2503 = vunpack.c.l.b16 %v2178
      %v2504 = vunpack.c.h.b16 %v2178
      %v2505 = vunpack.c.l.b16 %v2179
      %v2506 = vunpack.c.h.b16 %v2179
      %v2507 = vunpack.c.l.b16 %v2180
      %v2508 = vunpack.c.h.b16 %v2180
      %v2509 = vunpack.c.l.b16 %v2181
      %v2510 = vunpack.c.h.b16 %v2181
      %v2511 = vunpack.c.l.b16 %v2182
      %v2512 = vunpack.c.h.b16 %v2182
      %v2513 = vunpack.c.l.b16 %v2183
      %v2514 = vunpack.c.h.b16 %v2183
      %v2515 = vunpack.c.l.b16 %v2184
      %v2516 = vunpack.c.h.b16 %v2184
      %v2517 = vunpack.c.l.b16 %v2185
      %v2518 = vunpack.c.h.b16 %v2185
      %v2519 = vunpack.c.l.b16 %v2186
      %v2520 = vunpack.c.h.b16 %v2186
      %v2521 = vunpack.c.l.b16 %v2187
      %v2522 = vunpack.c.h.b16 %v2187
      %v2523 = vunpack.c.l.b16 %v2188
      %v2524 = vunpack.c.h.b16 %v2188
      %v2525 = vunpack.c.l.b16 %v2189
      %v2526 = vunpack.c.h.b16 %v2189
      %v2527 = vunpack.c.l.b16 %v2190
      %v2528 = vunpack.c.h.b16 %v2190
      %v2529 = vunpack.c.l.b16 %v2191
      %v2530 = vunpack.c.h.b16 %v2191
      %v2531 = vunpack.c.l.b16 %v2192
      %v2532 = vunpack.c.h.b16 %v2192
      %v2533 = vunpack.c.l.b16 %v2193
      %v2534 = vunpack.c.h.b16 %v2193
      %v2535 = vunpack.c.l.b16 %v2194
      %v2536 = vunpack.c.h.b16 %v2194
      %v2537 = vunpack.c.l.b16 %v2195
      %v2538 = vunpack.c.h.b16 %v2195
      %v2539 = vunpack.c.l.b16 %v2196
      %v2540 = vunpack.c.h.b16 %v2196
      %v2541 = vunpack.c.l.b16 %v2197
      %v2542 = vunpack.c.h.b16 %v2197
      %v2543 = vunpack.c.l.b16 %v2198
      %v2544 = vunpack.c.h.b16 %v2198
      %v2545 = vunpack.c.l.b16 %v2199
      %v2546 = vunpack.c.h.b16 %v2199
      %v2547 = vunpack.c.l.b16 %v2200
      %v2548 = vunpack.c.h.b16 %v2200
      %v2549 = vunpack.c.l.b16 %v2201
      %v2550 = vunpack.c.h.b16 %v2201
      %v2551 = vunpack.c.l.b16 %v2202
      %v2552 = vunpack.c.h.b16 %v2202
      %v2553 = vunpack.c.l.b16 %v2203
      %v2554 = vunpack.c.h.b16 %v2203
      %v2555 = vunpack.c.l.b16 %v2204
      %v2556 = vunpack.c.h.b16 %v2204
      %v2557 = vunpack.c.l.b16 %v2205
      %v2558 = vunpack.c.h.b16 %v2205
      %v2559 = vunpack.c.l.b16 %v2206
      %v2560 = vunpack.c.h.b16 %v2206
      %v2561 = vunpack.c.l.b16 %v2207
      %v2562 = vunpack.c.h.b16 %v2207
      %v2563 = vunpack.c.l.b16 %v2208
      %v2564 = vunpack.c.h.b16 %v2208
      %v2565 = vunpack.c.l.b16 %v2209
      %v2566 = vunpack.c.h.b16 %v2209
      %v2567 = vunpack.c.l.b16 %v2210
      %v2568 = vunpack.c.h.b16 %v2210
      %v2569 = vunpack.c.l.b16 %v2211
      %v2570 = vunpack.c.h.b16 %v2211
      %v2571 = vunpack.c.l.b16 %v2212
      %v2572 = vunpack.c.h.b16 %v2212
      %v2573 = vunpack.c.l.b16 %v2213
      %v2574 = vunpack.c.h.b16 %v2213
      %v2575 = vunpack.c.l.b16 %v2214
      %v2576 = vunpack.c.h.b16 %v2214
      %v2577 = vunpack.c.l.b16 %v2215
      %v2578 = vunpack.c.h.b16 %v2215
      %v2579 = vunpack.c.l.b16 %v2216
      %v2580 = vunpack.c.h.b16 %v2216
      %v2581 = vunpack.c.l.b16 %v2217
      %v2582 = vunpack.c.h.b16 %v2217
      %v2583 = vunpack.c.l.b16 %v2218
      %v2584 = vunpack.c.h.b16 %v2218
      %v2585 = vunpack.c.l.b16 %v2219
      %v2586 = vunpack.c.h.b16 %v2219
      %v2587 = vunpack.c.l.b16 %v2220
      %v2588 = vunpack.c.h.b16 %v2220
      %v2589 = vunpack.c.l.b16 %v2221
      %v2590 = vunpack.c.h.b16 %v2221
      %v2591 = vunpack.c.l.b16 %v2222
      %v2592 = vunpack.c.h.b16 %v2222
      %v2593 = vunpack.c.l.b16 %v2223
      %v2594 = vunpack.c.h.b16 %v2223
      %v2595 = vunpack.c.l.b16 %v2224
      %v2596 = vunpack.c.h.b16 %v2224
      %v2597 = vunpack.c.l.b16 %v2225
      %v2598 = vunpack.c.h.b16 %v2225
      %v2599 = vunpack.c.l.b16 %v2226
      %v2600 = vunpack.c.h.b16 %v2226
      %v2601 = vunpack.c.l.b16 %v2227
      %v2602 = vunpack.c.h.b16 %v2227
      %v2603 = vunpack.c.l.b16 %v2228
      %v2604 = vunpack.c.h.b16 %v2228
      %v2605 = vunpack.c.l.b16 %v2229
      %v2606 = vunpack.c.h.b16 %v2229
      %v2607 = vunpack.c.l.b16 %v2230
      %v2608 = vunpack.c.h.b16 %v2230
      %v2609 = vunpack.c.l.b16 %v2231
      %v2610 = vunpack.c.h.b16 %v2231
      %v2611 = vunpack.c.l.b16 %v2232
      %v2612 = vunpack.c.h.b16 %v2232
      %v2613 = vunpack.c.l.b16 %v2233
      %v2614 = vunpack.c.h.b16 %v2233
      %v2615 = vunpack.c.l.b16 %v2234
      %v2616 = vunpack.c.h.b16 %v2234
      %v2617 = vunpack.c.l.b16 %v2235
      %v2618 = vunpack.c.h.b16 %v2235
      %v2619 = vunpack.c.l.b16 %v2236
      %v2620 = vunpack.c.h.b16 %v2236
      %v2621 = vunpack.c.l.b16 %v2237
      %v2622 = vunpack.c.h.b16 %v2237
      %v2623 = vunpack.c.l.b16 %v2238
      %v2624 = vunpack.c.h.b16 %v2238
      %v2625 = vunpack.c.l.b16 %v2239
      %v2626 = vunpack.c.h.b16 %v2239
      %v2627 = vunpack.c.l.b16 %v2240
      %v2628 = vunpack.c.h.b16 %v2240
      %v2629 = vunpack.c.l.b16 %v2241
      %v2630 = vunpack.c.h.b16 %v2241
      %v2631 = vunpack.c.l.b16 %v2242
      %v2632 = vunpack.c.h.b16 %v2242
      %v2633 = vunpack.c.l.b16 %v2243
      %v2634 = vunpack.c.h.b16 %v2243
      %v2635 = vunpack.c.l.b16 %v2244
      %v2636 = vunpack.c.h.b16 %v2244
      %v2637 = vunpack.c.l.b16 %v2245
      %v2638 = vunpack.c.h.b16 %v2245
      %v2639 = vunpack.c.l.b16 %v2246
      %v2640 = vunpack.c.h.b16 %v2246
      %v2641 = vunpack.c.l.b16 %v2247
      %v2642 = vunpack.c.h.b16 %v2247
      %v2643 = vunpack.c.l.b16 %v2248
      %v2644 = vunpack.c.h.b16 %v2248
      %v2645 = vpack.c.b16 %v2393, %v2389
      %v2646 = vpack.c.b16 %v2394, %v2390
      %v2647 = vpack.c.b16 %v2395, %v2391
      %v2648 = vpack.c.b16 %v2396, %v2392
      %v2649 = vpack.c.b16 %v2401, %v2397
      %v2650 = vpack.c.b16 %v2402, %v2398
      %v2651 = vpack.c.b16 %v2403, %v2399
      %v2652 = vpack.c.b16 %v2404, %v2400
      %v2653 = vpack.c.b16 %v2409, %v2405
      %v2654 = vpack.c.b16 %v2410, %v2406
      %v2655 = vpack.c.b16 %v2411, %v2407
      %v2656 = vpack.c.b16 %v2412, %v2408
      %v2657 = vpack.c.b16 %v2417, %v2413
      %v2658 = vpack.c.b16 %v2418, %v2414
      %v2659 = vpack.c.b16 %v2419, %v2415
      %v2660 = vpack.c.b16 %v2420, %v2416
      %v2661 = vpack.c.b16 %v2425, %v2421
      %v2662 = vpack.c.b16 %v2426, %v2422
      %v2663 = vpack.c.b16 %v2427, %v2423
      %v2664 = vpack.c.b16 %v2428, %v2424
      %v2665 = vpack.c.b16 %v2433, %v2429
      %v2666 = vpack.c.b16 %v2434, %v2430
      %v2667 = vpack.c.b16 %v2435, %v2431
      %v2668 = vpack.c.b16 %v2436, %v2432
      %v2669 = vpack.c.b16 %v2441, %v2437
      %v2670 = vpack.c.b16 %v2442, %v2438
      %v2671 = vpack.c.b16 %v2443, %v2439
      %v2672 = vpack.c.b16 %v2444, %v2440
      %v2673 = vpack.c.b16 %v2449, %v2445
      %v2674 = vpack.c.b16 %v2450, %v2446
      %v2675 = vpack.c.b16 %v2451, %v2447
      %v2676 = vpack.c.b16 %v2452, %v2448
      %v2677 = vpack.c.b16 %v2457, %v2453
      %v2678 = vpack.c.b16 %v2458, %v2454
      %v2679 = vpack.c.b16 %v2459, %v2455
      %v2680 = vpack.c.b16 %v2460, %v2456
      %v2681 = vpack.c.b16 %v2465, %v2461
      %v2682 = vpack.c.b16 %v2466, %v2462
      %v2683 = vpack.c.b16 %v2467, %v2463
      %v2684 = vpack.c.b16 %v2468, %v2464
      %v2685 = vpack.c.b16 %v2473, %v2469
      %v2686 = vpack.c.b16 %v2474, %v2470
      %v2687 = vpack.c.b16 %v2475, %v2471
      %v2688 = vpack.c.b16 %v2476, %v2472
      %v2689 = vpack.c.b16 %v2481, %v2477
      %v2690 = vpack.c.b16 %v2482, %v2478
      %v2691 = vpack.c.b16 %v2483, %v2479
      %v2692 = vpack.c.b16 %v2484, %v2480
      %v2693 = vpack.c.b16 %v2489, %v2485
      %v2694 = vpack.c.b16 %v2490, %v2486
      %v2695 = vpack.c.b16 %v2491, %v2487
      %v2696 = vpack.c.b16 %v2492, %v2488
      %v2697 = vpack.c.b16 %v2497, %v2493
      %v2698 = vpack.c.b16 %v2498, %v2494
      %v2699 = vpack.c.b16 %v2499, %v2495
      %v2700 = vpack.c.b16 %v2500, %v2496
      %v2701 = vpack.c.b16 %v2505, %v2501
      %v2702 = vpack.c.b16 %v2506, %v2502
      %v2703 = vpack.c.b16 %v2507, %v2503
      %v2704 = vpack.c.b16 %v2508, %v2504
      %v2705 = vpack.c.b16 %v2513, %v2509
      %v2706 = vpack.c.b16 %v2514, %v2510
      %v2707 = vpack.c.b16 %v2515, %v2511
      %v2708 = vpack.c.b16 %v2516, %v2512
      %v2709 = vpack.c.b16 %v2521, %v2517
      %v2710 = vpack.c.b16 %v2522, %v2518
      %v2711 = vpack.c.b16 %v2523, %v2519
      %v2712 = vpack.c.b16 %v2524, %v2520
      %v2713 = vpack.c.b16 %v2529, %v2525
      %v2714 = vpack.c.b16 %v2530, %v2526
      %v2715 = vpack.c.b16 %v2531, %v2527
      %v2716 = vpack.c.b16 %v2532, %v2528
      %v2717 = vpack.c.b16 %v2537, %v2533
      %v2718 = vpack.c.b16 %v2538, %v2534
      %v2719 = vpack.c.b16 %v2539, %v2535
      %v2720 = vpack.c.b16 %v2540, %v2536
      %v2721 = vpack.c.b16 %v2545, %v2541
      %v2722 = vpack.c.b16 %v2546, %v2542
      %v2723 = vpack.c.b16 %v2547, %v2543
      %v2724 = vpack.c.b16 %v2548, %v2544
      %v2725 = vpack.c.b16 %v2553, %v2549
      %v2726 = vpack.c.b16 %v2554, %v2550
      %v2727 = vpack.c.b16 %v2555, %v2551
      %v2728 = vpack.c.b16 %v2556, %v2552
      %v2729 = vpack.c.b16 %v2561, %v2557
      %v2730 = vpack.c.b16 %v2562, %v2558
      %v2731 = vpack.c.b16 %v2563, %v2559
      %v2732 = vpack.c.b16 %v2564, %v2560
      %v2733 = vpack.c.b16 %v2569, %v2565
      %v2734 = vpack.c.b16 %v2570, %v2566
      %v2735 = vpack.c.b16 %v2571, %v2567
      %v2736 = vpack.c.b16 %v2572, %v2568
      %v2737 = vpack.c.b16 %v2577, %v2573
      %v2738 = vpack.c.b16 %v2578, %v2574
      %v2739 = vpack.c.b16 %v2579, %v2575
      %v2740 = vpack.c.b16 %v2580, %v2576
      %v2741 = vpack.c.b16 %v2585, %v2581
      %v2742 = vpack.c.b16 %v2586, %v2582
      %v2743 = vpack.c.b16 %v2587, %v2583
      %v2744 = vpack.c.b16 %v2588, %v2584
      %v2745 = vpack.c.b16 %v2593, %v2589
      %v2746 = vpack.c.b16 %v2594, %v2590
      %v2747 = vpack.c.b16 %v2595, %v2591
      %v2748 = vpack.c.b16 %v2596, %v2592
      %v2749 = vpack.c.b16 %v2601, %v2597
      %v2750 = vpack.c.b16 %v2602, %v2598
      %v2751 = vpack.c.b16 %v2603, %v2599
      %v2752 = vpack.c.b16 %v2604, %v2600
      %v2753 = vpack.c.b16 %v2609, %v2605
      %v2754 = vpack.c.b16 %v2610, %v2606
      %v2755 = vpack.c.b16 %v2611, %v2607
      %v2756 = vpack.c.b16 %v2612, %v2608
      %v2757 = vpack.c.b16 %v2617, %v2613
      %v2758 = vpack.c.b16 %v2618, %v2614
      %v2759 = vpack.c.b16 %v2619, %v2615
      %v2760 = vpack.c.b16 %v2620, %v2616
      %v2761 = vpack.c.b16 %v2625, %v2621
      %v2762 = vpack.c.b16 %v2626, %v2622
      %v2763 = vpack.c.b16 %v2627, %v2623
      %v2764 = vpack.c.b16 %v2628, %v2624
      %v2765 = vpack.c.b16 %v2633, %v2629
      %v2766 = vpack.c.b16 %v2634, %v2630
      %v2767 = vpack.c.b16 %v2635, %v2631
      %v2768 = vpack.c.b16 %v2636, %v2632
      %v2769 = vpack.c.b16 %v2641, %v2637
      %v2770 = vpack.c.b16 %v2642, %v2638
      %v2771 = vpack.c.b16 %v2643, %v2639
      %v2772 = vpack.c.b16 %v2644, %v2640
      %2901 = vmatprep.subr.bf16.mxu0 %v2674
      %2902 = vmatpush1.bf16.msra.mxu0 %v2673
      %2903 = vmatprep.subr.bf16.mxu0 %v2670
      %2904 = vmatpush1.bf16.msra.mxu0 %v2669
      %2905 = vmatprep.subr.bf16.mxu0 %v2666
      %2906 = vmatpush1.bf16.msra.mxu0 %v2665
      %2907 = vmatprep.subr.bf16.mxu0 %v2662
      %2908 = vmatpush1.bf16.msra.mxu0 %v2661
      %2909 = vmatprep.subr.bf16.mxu0 %v2658
      %2910 = vmatpush1.bf16.msra.mxu0 %v2657
      %2911 = vmatprep.subr.bf16.mxu0 %v2654
      %2912 = vmatpush1.bf16.msra.mxu0 %v2653
      %2913 = vmatprep.subr.bf16.mxu0 %v2650
      %2914 = vmatpush1.bf16.msra.mxu0 %v2649
      %2915 = vmatprep.subr.bf16.mxu0 %v2646
      %2916 = vmatpush1.bf16.msra.mxu0 %v2645
      %2917 = vmatprep.subr.bf16.mxu0 %v2706
      %2918 = vmatpush2.bf16.msra.mxu0 %v2705
      %2919 = vmatprep.subr.bf16.mxu0 %v2702
      %2920 = vmatpush2.bf16.msra.mxu0 %v2701
      %2921 = vmatprep.subr.bf16.mxu0 %v2698
      %2922 = vmatpush2.bf16.msra.mxu0 %v2697
      %2923 = vmatprep.subr.bf16.mxu0 %v2694
      %2924 = vmatpush2.bf16.msra.mxu0 %v2693
      %2925 = vmatprep.subr.bf16.mxu0 %v2690
      %2926 = vmatpush2.bf16.msra.mxu0 %v2689
      %2927 = vmatprep.subr.bf16.mxu0 %v2686
      %2928 = vmatpush2.bf16.msra.mxu0 %v2685
      %2929 = vmatprep.subr.bf16.mxu0 %v2682
      %2930 = vmatpush2.bf16.msra.mxu0 %v2681
      %2931 = vmatprep.subr.bf16.mxu0 %v2678
      %2932 = vmatpush2.bf16.msra.mxu0 %v2677
      %2933 = vmatprep.mubr.bf16.mxu0 %v2254
      %2934 = vmatmul.mubr.bf16.gmra.mxu0 %v2253
      %v2935 = vpop.f32.mrf.mxu0
      %v2936 = vadd.f32 0.0, %v2935
      %v2937 = vpop.f32.mrf.mxu0
      %v2938 = vadd.f32 0.0, %v2937
      %v2939 = vpop.f32.mrf.mxu0
      %v2940 = vadd.f32 0.0, %v2939
      %v2941 = vpop.f32.mrf.mxu0
      %v2942 = vadd.f32 0.0, %v2941
      %2943 = vdwg.mxu0
      %2944 = vmatprep.subr.bf16.mxu0 %v2738
      %2945 = vmatpush1.bf16.msra.mxu0 %v2737
      %2946 = vmatprep.subr.bf16.mxu0 %v2734
      %2947 = vmatpush1.bf16.msra.mxu0 %v2733
      %2948 = vmatprep.subr.bf16.mxu0 %v2730
      %2949 = vmatpush1.bf16.msra.mxu0 %v2729
      %2950 = vmatprep.subr.bf16.mxu0 %v2726
      %2951 = vmatpush1.bf16.msra.mxu0 %v2725
      %2952 = vmatprep.subr.bf16.mxu0 %v2722
      %2953 = vmatpush1.bf16.msra.mxu0 %v2721
      %2954 = vmatprep.subr.bf16.mxu0 %v2718
      %2955 = vmatpush1.bf16.msra.mxu0 %v2717
      %2956 = vmatprep.subr.bf16.mxu0 %v2714
      %2957 = vmatpush1.bf16.msra.mxu0 %v2713
      %2958 = vmatprep.subr.bf16.mxu0 %v2710
      %2959 = vmatpush1.bf16.msra.mxu0 %v2709
      %2960 = vmatprep.subr.bf16.mxu0 %v2770
      %2961 = vmatpush2.bf16.msra.mxu0 %v2769
      %2962 = vmatprep.subr.bf16.mxu0 %v2766
      %2963 = vmatpush2.bf16.msra.mxu0 %v2765
      %2964 = vmatprep.subr.bf16.mxu0 %v2762
      %2965 = vmatpush2.bf16.msra.mxu0 %v2761
      %2966 = vmatprep.subr.bf16.mxu0 %v2758
      %2967 = vmatpush2.bf16.msra.mxu0 %v2757
      %2968 = vmatprep.subr.bf16.mxu0 %v2754
      %2969 = vmatpush2.bf16.msra.mxu0 %v2753
      %2970 = vmatprep.subr.bf16.mxu0 %v2750
      %2971 = vmatpush2.bf16.msra.mxu0 %v2749
      %2972 = vmatprep.subr.bf16.mxu0 %v2746
      %2973 = vmatpush2.bf16.msra.mxu0 %v2745
      %2974 = vmatprep.subr.bf16.mxu0 %v2742
      %2975 = vmatpush2.bf16.msra.mxu0 %v2741
      %2976 = vmatprep.mubr.bf16.mxu0 %v2256
      %2977 = vmatmul.mubr.bf16.gmra.mxu0 %v2255
      %v2978 = vpop.f32.mrf.mxu0
      %v2979 = vadd.f32 %v2936, %v2978
      %v2980 = vpop.f32.mrf.mxu0
      %v2981 = vadd.f32 %v2938, %v2980
      %v2982 = vpop.f32.mrf.mxu0
      %v2983 = vadd.f32 %v2940, %v2982
      %v2984 = vpop.f32.mrf.mxu0
      %v2985 = vadd.f32 %v2942, %v2984
      %2986 = vdwg.mxu0
      %2987 = vmatprep.subr.bf16.mxu0 %v2676
      %2988 = vmatpush1.bf16.msra.mxu0 %v2675
      %2989 = vmatprep.subr.bf16.mxu0 %v2672
      %2990 = vmatpush1.bf16.msra.mxu0 %v2671
      %2991 = vmatprep.subr.bf16.mxu0 %v2668
      %2992 = vmatpush1.bf16.msra.mxu0 %v2667
      %2993 = vmatprep.subr.bf16.mxu0 %v2664
      %2994 = vmatpush1.bf16.msra.mxu0 %v2663
      %2995 = vmatprep.subr.bf16.mxu0 %v2660
      %2996 = vmatpush1.bf16.msra.mxu0 %v2659
      %2997 = vmatprep.subr.bf16.mxu0 %v2656
      %2998 = vmatpush1.bf16.msra.mxu0 %v2655
      %2999 = vmatprep.subr.bf16.mxu0 %v2652
      %3000 = vmatpush1.bf16.msra.mxu0 %v2651
      %3001 = vmatprep.subr.bf16.mxu0 %v2648
      %3002 = vmatpush1.bf16.msra.mxu0 %v2647
      %3003 = vmatprep.subr.bf16.mxu0 %v2708
      %3004 = vmatpush2.bf16.msra.mxu0 %v2707
      %3005 = vmatprep.subr.bf16.mxu0 %v2704
      %3006 = vmatpush2.bf16.msra.mxu0 %v2703
      %3007 = vmatprep.subr.bf16.mxu0 %v2700
      %3008 = vmatpush2.bf16.msra.mxu0 %v2699
      %3009 = vmatprep.subr.bf16.mxu0 %v2696
      %3010 = vmatpush2.bf16.msra.mxu0 %v2695
      %3011 = vmatprep.subr.bf16.mxu0 %v2692
      %3012 = vmatpush2.bf16.msra.mxu0 %v2691
      %3013 = vmatprep.subr.bf16.mxu0 %v2688
      %3014 = vmatpush2.bf16.msra.mxu0 %v2687
      %3015 = vmatprep.subr.bf16.mxu0 %v2684
      %3016 = vmatpush2.bf16.msra.mxu0 %v2683
      %3017 = vmatprep.subr.bf16.mxu0 %v2680
      %3018 = vmatpush2.bf16.msra.mxu0 %v2679
      %3019 = vmatprep.mubr.bf16.mxu0 %v2254
      %3020 = vmatmul.mubr.bf16.gmra.mxu0 %v2253
      %v3021 = vpop.f32.mrf.mxu0
      %v3022 = vadd.f32 0.0, %v3021
      %v3023 = vpop.f32.mrf.mxu0
      %v3024 = vadd.f32 0.0, %v3023
      %v3025 = vpop.f32.mrf.mxu0
      %v3026 = vadd.f32 0.0, %v3025
      %v3027 = vpop.f32.mrf.mxu0
      %v3028 = vadd.f32 0.0, %v3027
      %3029 = vdwg.mxu0
      %3030 = vmatprep.subr.bf16.mxu0 %v2740
      %3031 = vmatpush1.bf16.msra.mxu0 %v2739
      %3032 = vmatprep.subr.bf16.mxu0 %v2736
      %3033 = vmatpush1.bf16.msra.mxu0 %v2735
      %3034 = vmatprep.subr.bf16.mxu0 %v2732
      %3035 = vmatpush1.bf16.msra.mxu0 %v2731
      %3036 = vmatprep.subr.bf16.mxu0 %v2728
      %3037 = vmatpush1.bf16.msra.mxu0 %v2727
      %3038 = vmatprep.subr.bf16.mxu0 %v2724
      %3039 = vmatpush1.bf16.msra.mxu0 %v2723
      %3040 = vmatprep.subr.bf16.mxu0 %v2720
      %3041 = vmatpush1.bf16.msra.mxu0 %v2719
      %3042 = vmatprep.subr.bf16.mxu0 %v2716
      %3043 = vmatpush1.bf16.msra.mxu0 %v2715
      %3044 = vmatprep.subr.bf16.mxu0 %v2712
      %3045 = vmatpush1.bf16.msra.mxu0 %v2711
      %3046 = vmatprep.subr.bf16.mxu0 %v2772
      %3047 = vmatpush2.bf16.msra.mxu0 %v2771
      %3048 = vmatprep.subr.bf16.mxu0 %v2768
      %3049 = vmatpush2.bf16.msra.mxu0 %v2767
      %3050 = vmatprep.subr.bf16.mxu0 %v2764
      %3051 = vmatpush2.bf16.msra.mxu0 %v2763
      %3052 = vmatprep.subr.bf16.mxu0 %v2760
      %3053 = vmatpush2.bf16.msra.mxu0 %v2759
      %3054 = vmatprep.subr.bf16.mxu0 %v2756
      %3055 = vmatpush2.bf16.msra.mxu0 %v2755
      %3056 = vmatprep.subr.bf16.mxu0 %v2752
      %3057 = vmatpush2.bf16.msra.mxu0 %v2751
      %3058 = vmatprep.subr.bf16.mxu0 %v2748
      %3059 = vmatpush2.bf16.msra.mxu0 %v2747
      %3060 = vmatprep.subr.bf16.mxu0 %v2744
      %3061 = vmatpush2.bf16.msra.mxu0 %v2743
      %3062 = vmatprep.mubr.bf16.mxu0 %v2256
      %3063 = vmatmul.mubr.bf16.gmra.mxu0 %v2255
      %v3064 = vpop.f32.mrf.mxu0
      %v3065 = vadd.f32 %v3022, %v3064
      %v3066 = vpop.f32.mrf.mxu0
      %v3067 = vadd.f32 %v3024, %v3066
      %v3068 = vpop.f32.mrf.mxu0
      %v3069 = vadd.f32 %v3026, %v3068
      %v3070 = vpop.f32.mrf.mxu0
      %v3071 = vadd.f32 %v3028, %v3070
      %3072 = vdwg.mxu0
      %v3073 = vadd.f32 %v2014, %v2979
      %v3074 = vadd.f32 %v2016, %v2981
      %v3075 = vadd.f32 %v2100, %v3065
      %v3076 = vadd.f32 %v2102, %v3067
      %v3077 = vadd.f32 %v2018, %v2983
      %v3078 = vadd.f32 %v2020, %v2985
      %v3079 = vadd.f32 %v2104, %v3069
      %v3080 = vadd.f32 %v2106, %v3071
      %s3081 = scalar_lea.vmem %s1, 3072
      %v3082 = vld [vmem:[%s3081] sm:$0xff]
      %v3083 = vld [vmem:[%s3081 + $0x8] sm:$0xff]
      %v3084 = vld [vmem:[%s3081 + $0x10] sm:$0xff]
      %v3085 = vld [vmem:[%s3081 + $0x18] sm:$0xff]
      %v3086 = vld [vmem:[%s3081 + $0x20] sm:$0xff]
      %v3087 = vld [vmem:[%s3081 + $0x28] sm:$0xff]
      %v3088 = vld [vmem:[%s3081 + $0x30] sm:$0xff]
      %v3089 = vld [vmem:[%s3081 + $0x38] sm:$0xff]
      %v3090 = vld [vmem:[%s3081 + $0x40] sm:$0xff]
      %v3091 = vld [vmem:[%s3081 + $0x48] sm:$0xff]
      %v3092 = vld [vmem:[%s3081 + $0x50] sm:$0xff]
      %v3093 = vld [vmem:[%s3081 + $0x58] sm:$0xff]
      %v3094 = vld [vmem:[%s3081 + $0x60] sm:$0xff]
      %v3095 = vld [vmem:[%s3081 + $0x68] sm:$0xff]
      %v3096 = vld [vmem:[%s3081 + $0x70] sm:$0xff]
      %v3097 = vld [vmem:[%s3081 + $0x78] sm:$0xff]
      %v3098 = vld [vmem:[%s3081 + $0x80] sm:$0xff]
      %v3099 = vld [vmem:[%s3081 + $0x88] sm:$0xff]
      %v3100 = vld [vmem:[%s3081 + $0x90] sm:$0xff]
      %v3101 = vld [vmem:[%s3081 + $0x98] sm:$0xff]
      %v3102 = vld [vmem:[%s3081 + $0xa0] sm:$0xff]
      %v3103 = vld [vmem:[%s3081 + $0xa8] sm:$0xff]
      %v3104 = vld [vmem:[%s3081 + $0xb0] sm:$0xff]
      %v3105 = vld [vmem:[%s3081 + $0xb8] sm:$0xff]
      %v3106 = vld [vmem:[%s3081 + $0xc0] sm:$0xff]
      %v3107 = vld [vmem:[%s3081 + $0xc8] sm:$0xff]
      %v3108 = vld [vmem:[%s3081 + $0xd0] sm:$0xff]
      %v3109 = vld [vmem:[%s3081 + $0xd8] sm:$0xff]
      %v3110 = vld [vmem:[%s3081 + $0xe0] sm:$0xff]
      %v3111 = vld [vmem:[%s3081 + $0xe8] sm:$0xff]
      %v3112 = vld [vmem:[%s3081 + $0xf0] sm:$0xff]
      %v3113 = vld [vmem:[%s3081 + $0xf8] sm:$0xff]
      %v3114 = vld [vmem:[%s3081 + $0x100] sm:$0xff]
      %v3115 = vld [vmem:[%s3081 + $0x108] sm:$0xff]
      %v3116 = vld [vmem:[%s3081 + $0x110] sm:$0xff]
      %v3117 = vld [vmem:[%s3081 + $0x118] sm:$0xff]
      %v3118 = vld [vmem:[%s3081 + $0x120] sm:$0xff]
      %v3119 = vld [vmem:[%s3081 + $0x128] sm:$0xff]
      %v3120 = vld [vmem:[%s3081 + $0x130] sm:$0xff]
      %v3121 = vld [vmem:[%s3081 + $0x138] sm:$0xff]
      %v3122 = vld [vmem:[%s3081 + $0x140] sm:$0xff]
      %v3123 = vld [vmem:[%s3081 + $0x148] sm:$0xff]
      %v3124 = vld [vmem:[%s3081 + $0x150] sm:$0xff]
      %v3125 = vld [vmem:[%s3081 + $0x158] sm:$0xff]
      %v3126 = vld [vmem:[%s3081 + $0x160] sm:$0xff]
      %v3127 = vld [vmem:[%s3081 + $0x168] sm:$0xff]
      %v3128 = vld [vmem:[%s3081 + $0x170] sm:$0xff]
      %v3129 = vld [vmem:[%s3081 + $0x178] sm:$0xff]
      %v3130 = vld [vmem:[%s3081 + $0x180] sm:$0xff]
      %v3131 = vld [vmem:[%s3081 + $0x188] sm:$0xff]
      %v3132 = vld [vmem:[%s3081 + $0x190] sm:$0xff]
      %v3133 = vld [vmem:[%s3081 + $0x198] sm:$0xff]
      %v3134 = vld [vmem:[%s3081 + $0x1a0] sm:$0xff]
      %v3135 = vld [vmem:[%s3081 + $0x1a8] sm:$0xff]
      %v3136 = vld [vmem:[%s3081 + $0x1b0] sm:$0xff]
      %v3137 = vld [vmem:[%s3081 + $0x1b8] sm:$0xff]
      %v3138 = vld [vmem:[%s3081 + $0x1c0] sm:$0xff]
      %v3139 = vld [vmem:[%s3081 + $0x1c8] sm:$0xff]
      %v3140 = vld [vmem:[%s3081 + $0x1d0] sm:$0xff]
      %v3141 = vld [vmem:[%s3081 + $0x1d8] sm:$0xff]
      %v3142 = vld [vmem:[%s3081 + $0x1e0] sm:$0xff]
      %v3143 = vld [vmem:[%s3081 + $0x1e8] sm:$0xff]
      %v3144 = vld [vmem:[%s3081 + $0x1f0] sm:$0xff]
      %v3145 = vld [vmem:[%s3081 + $0x1f8] sm:$0xff]
      %v3146 = vld [vmem:[%s3081 + $0x200] sm:$0xff]
      %v3147 = vld [vmem:[%s3081 + $0x208] sm:$0xff]
      %v3148 = vld [vmem:[%s3081 + $0x210] sm:$0xff]
      %v3149 = vld [vmem:[%s3081 + $0x218] sm:$0xff]
      %v3150 = vld [vmem:[%s3081 + $0x220] sm:$0xff]
      %v3151 = vld [vmem:[%s3081 + $0x228] sm:$0xff]
      %v3152 = vld [vmem:[%s3081 + $0x230] sm:$0xff]
      %v3153 = vld [vmem:[%s3081 + $0x238] sm:$0xff]
      %v3154 = vld [vmem:[%s3081 + $0x240] sm:$0xff]
      %v3155 = vld [vmem:[%s3081 + $0x248] sm:$0xff]
      %v3156 = vld [vmem:[%s3081 + $0x250] sm:$0xff]
      %v3157 = vld [vmem:[%s3081 + $0x258] sm:$0xff]
      %v3158 = vld [vmem:[%s3081 + $0x260] sm:$0xff]
      %v3159 = vld [vmem:[%s3081 + $0x268] sm:$0xff]
      %v3160 = vld [vmem:[%s3081 + $0x270] sm:$0xff]
      %v3161 = vld [vmem:[%s3081 + $0x278] sm:$0xff]
      %v3162 = vld [vmem:[%s3081 + $0x280] sm:$0xff]
      %v3163 = vld [vmem:[%s3081 + $0x288] sm:$0xff]
      %v3164 = vld [vmem:[%s3081 + $0x290] sm:$0xff]
      %v3165 = vld [vmem:[%s3081 + $0x298] sm:$0xff]
      %v3166 = vld [vmem:[%s3081 + $0x2a0] sm:$0xff]
      %v3167 = vld [vmem:[%s3081 + $0x2a8] sm:$0xff]
      %v3168 = vld [vmem:[%s3081 + $0x2b0] sm:$0xff]
      %v3169 = vld [vmem:[%s3081 + $0x2b8] sm:$0xff]
      %v3170 = vld [vmem:[%s3081 + $0x2c0] sm:$0xff]
      %v3171 = vld [vmem:[%s3081 + $0x2c8] sm:$0xff]
      %v3172 = vld [vmem:[%s3081 + $0x2d0] sm:$0xff]
      %v3173 = vld [vmem:[%s3081 + $0x2d8] sm:$0xff]
      %v3174 = vld [vmem:[%s3081 + $0x2e0] sm:$0xff]
      %v3175 = vld [vmem:[%s3081 + $0x2e8] sm:$0xff]
      %v3176 = vld [vmem:[%s3081 + $0x2f0] sm:$0xff]
      %v3177 = vld [vmem:[%s3081 + $0x2f8] sm:$0xff]
      %v3178 = vld [vmem:[%s3081 + $0x300] sm:$0xff]
      %v3179 = vld [vmem:[%s3081 + $0x308] sm:$0xff]
      %v3180 = vld [vmem:[%s3081 + $0x310] sm:$0xff]
      %v3181 = vld [vmem:[%s3081 + $0x318] sm:$0xff]
      %v3182 = vld [vmem:[%s3081 + $0x320] sm:$0xff]
      %v3183 = vld [vmem:[%s3081 + $0x328] sm:$0xff]
      %v3184 = vld [vmem:[%s3081 + $0x330] sm:$0xff]
      %v3185 = vld [vmem:[%s3081 + $0x338] sm:$0xff]
      %v3186 = vld [vmem:[%s3081 + $0x340] sm:$0xff]
      %v3187 = vld [vmem:[%s3081 + $0x348] sm:$0xff]
      %v3188 = vld [vmem:[%s3081 + $0x350] sm:$0xff]
      %v3189 = vld [vmem:[%s3081 + $0x358] sm:$0xff]
      %v3190 = vld [vmem:[%s3081 + $0x360] sm:$0xff]
      %v3191 = vld [vmem:[%s3081 + $0x368] sm:$0xff]
      %v3192 = vld [vmem:[%s3081 + $0x370] sm:$0xff]
      %v3193 = vld [vmem:[%s3081 + $0x378] sm:$0xff]
      %v3194 = vld [vmem:[%s3081 + $0x380] sm:$0xff]
      %v3195 = vld [vmem:[%s3081 + $0x388] sm:$0xff]
      %v3196 = vld [vmem:[%s3081 + $0x390] sm:$0xff]
      %v3197 = vld [vmem:[%s3081 + $0x398] sm:$0xff]
      %v3198 = vld [vmem:[%s3081 + $0x3a0] sm:$0xff]
      %v3199 = vld [vmem:[%s3081 + $0x3a8] sm:$0xff]
      %v3200 = vld [vmem:[%s3081 + $0x3b0] sm:$0xff]
      %v3201 = vld [vmem:[%s3081 + $0x3b8] sm:$0xff]
      %v3202 = vld [vmem:[%s3081 + $0x3c0] sm:$0xff]
      %v3203 = vld [vmem:[%s3081 + $0x3c8] sm:$0xff]
      %v3204 = vld [vmem:[%s3081 + $0x3d0] sm:$0xff]
      %v3205 = vld [vmem:[%s3081 + $0x3d8] sm:$0xff]
      %v3206 = vld [vmem:[%s3081 + $0x3e0] sm:$0xff]
      %v3207 = vld [vmem:[%s3081 + $0x3e8] sm:$0xff]
      %v3208 = vld [vmem:[%s3081 + $0x3f0] sm:$0xff]
      %v3209 = vld [vmem:[%s3081 + $0x3f8] sm:$0xff]
      %s3210 = scalar_lea.vmem %s1, 4096
      %v3211 = vld [vmem:[%s3210] sm:$0xff]
      %v3212 = vld [vmem:[%s3210 + $0x8] sm:$0xff]
      %v3213 = vld [vmem:[%s3210 + $0x10] sm:$0xff]
      %v3214 = vld [vmem:[%s3210 + $0x18] sm:$0xff]
      %v3215 = vld [vmem:[%s3210 + $0x20] sm:$0xff]
      %v3216 = vld [vmem:[%s3210 + $0x28] sm:$0xff]
      %v3217 = vld [vmem:[%s3210 + $0x30] sm:$0xff]
      %v3218 = vld [vmem:[%s3210 + $0x38] sm:$0xff]
      %v3219 = vld [vmem:[%s3210 + $0x40] sm:$0xff]
      %v3220 = vld [vmem:[%s3210 + $0x48] sm:$0xff]
      %v3221 = vld [vmem:[%s3210 + $0x50] sm:$0xff]
      %v3222 = vld [vmem:[%s3210 + $0x58] sm:$0xff]
      %v3223 = vld [vmem:[%s3210 + $0x60] sm:$0xff]
      %v3224 = vld [vmem:[%s3210 + $0x68] sm:$0xff]
      %v3225 = vld [vmem:[%s3210 + $0x70] sm:$0xff]
      %v3226 = vld [vmem:[%s3210 + $0x78] sm:$0xff]
      %v3227 = vld [vmem:[%s3210 + $0x80] sm:$0xff]
      %v3228 = vld [vmem:[%s3210 + $0x88] sm:$0xff]
      %v3229 = vld [vmem:[%s3210 + $0x90] sm:$0xff]
      %v3230 = vld [vmem:[%s3210 + $0x98] sm:$0xff]
      %v3231 = vld [vmem:[%s3210 + $0xa0] sm:$0xff]
      %v3232 = vld [vmem:[%s3210 + $0xa8] sm:$0xff]
      %v3233 = vld [vmem:[%s3210 + $0xb0] sm:$0xff]
      %v3234 = vld [vmem:[%s3210 + $0xb8] sm:$0xff]
      %v3235 = vld [vmem:[%s3210 + $0xc0] sm:$0xff]
      %v3236 = vld [vmem:[%s3210 + $0xc8] sm:$0xff]
      %v3237 = vld [vmem:[%s3210 + $0xd0] sm:$0xff]
      %v3238 = vld [vmem:[%s3210 + $0xd8] sm:$0xff]
      %v3239 = vld [vmem:[%s3210 + $0xe0] sm:$0xff]
      %v3240 = vld [vmem:[%s3210 + $0xe8] sm:$0xff]
      %v3241 = vld [vmem:[%s3210 + $0xf0] sm:$0xff]
      %v3242 = vld [vmem:[%s3210 + $0xf8] sm:$0xff]
      %v3243 = vld [vmem:[%s3210 + $0x100] sm:$0xff]
      %v3244 = vld [vmem:[%s3210 + $0x108] sm:$0xff]
      %v3245 = vld [vmem:[%s3210 + $0x110] sm:$0xff]
      %v3246 = vld [vmem:[%s3210 + $0x118] sm:$0xff]
      %v3247 = vld [vmem:[%s3210 + $0x120] sm:$0xff]
      %v3248 = vld [vmem:[%s3210 + $0x128] sm:$0xff]
      %v3249 = vld [vmem:[%s3210 + $0x130] sm:$0xff]
      %v3250 = vld [vmem:[%s3210 + $0x138] sm:$0xff]
      %v3251 = vld [vmem:[%s3210 + $0x140] sm:$0xff]
      %v3252 = vld [vmem:[%s3210 + $0x148] sm:$0xff]
      %v3253 = vld [vmem:[%s3210 + $0x150] sm:$0xff]
      %v3254 = vld [vmem:[%s3210 + $0x158] sm:$0xff]
      %v3255 = vld [vmem:[%s3210 + $0x160] sm:$0xff]
      %v3256 = vld [vmem:[%s3210 + $0x168] sm:$0xff]
      %v3257 = vld [vmem:[%s3210 + $0x170] sm:$0xff]
      %v3258 = vld [vmem:[%s3210 + $0x178] sm:$0xff]
      %v3259 = vld [vmem:[%s3210 + $0x180] sm:$0xff]
      %v3260 = vld [vmem:[%s3210 + $0x188] sm:$0xff]
      %v3261 = vld [vmem:[%s3210 + $0x190] sm:$0xff]
      %v3262 = vld [vmem:[%s3210 + $0x198] sm:$0xff]
      %v3263 = vld [vmem:[%s3210 + $0x1a0] sm:$0xff]
      %v3264 = vld [vmem:[%s3210 + $0x1a8] sm:$0xff]
      %v3265 = vld [vmem:[%s3210 + $0x1b0] sm:$0xff]
      %v3266 = vld [vmem:[%s3210 + $0x1b8] sm:$0xff]
      %v3267 = vld [vmem:[%s3210 + $0x1c0] sm:$0xff]
      %v3268 = vld [vmem:[%s3210 + $0x1c8] sm:$0xff]
      %v3269 = vld [vmem:[%s3210 + $0x1d0] sm:$0xff]
      %v3270 = vld [vmem:[%s3210 + $0x1d8] sm:$0xff]
      %v3271 = vld [vmem:[%s3210 + $0x1e0] sm:$0xff]
      %v3272 = vld [vmem:[%s3210 + $0x1e8] sm:$0xff]
      %v3273 = vld [vmem:[%s3210 + $0x1f0] sm:$0xff]
      %v3274 = vld [vmem:[%s3210 + $0x1f8] sm:$0xff]
      %v3275 = vld [vmem:[%s3210 + $0x200] sm:$0xff]
      %v3276 = vld [vmem:[%s3210 + $0x208] sm:$0xff]
      %v3277 = vld [vmem:[%s3210 + $0x210] sm:$0xff]
      %v3278 = vld [vmem:[%s3210 + $0x218] sm:$0xff]
      %v3279 = vld [vmem:[%s3210 + $0x220] sm:$0xff]
      %v3280 = vld [vmem:[%s3210 + $0x228] sm:$0xff]
      %v3281 = vld [vmem:[%s3210 + $0x230] sm:$0xff]
      %v3282 = vld [vmem:[%s3210 + $0x238] sm:$0xff]
      %v3283 = vld [vmem:[%s3210 + $0x240] sm:$0xff]
      %v3284 = vld [vmem:[%s3210 + $0x248] sm:$0xff]
      %v3285 = vld [vmem:[%s3210 + $0x250] sm:$0xff]
      %v3286 = vld [vmem:[%s3210 + $0x258] sm:$0xff]
      %v3287 = vld [vmem:[%s3210 + $0x260] sm:$0xff]
      %v3288 = vld [vmem:[%s3210 + $0x268] sm:$0xff]
      %v3289 = vld [vmem:[%s3210 + $0x270] sm:$0xff]
      %v3290 = vld [vmem:[%s3210 + $0x278] sm:$0xff]
      %v3291 = vld [vmem:[%s3210 + $0x280] sm:$0xff]
      %v3292 = vld [vmem:[%s3210 + $0x288] sm:$0xff]
      %v3293 = vld [vmem:[%s3210 + $0x290] sm:$0xff]
      %v3294 = vld [vmem:[%s3210 + $0x298] sm:$0xff]
      %v3295 = vld [vmem:[%s3210 + $0x2a0] sm:$0xff]
      %v3296 = vld [vmem:[%s3210 + $0x2a8] sm:$0xff]
      %v3297 = vld [vmem:[%s3210 + $0x2b0] sm:$0xff]
      %v3298 = vld [vmem:[%s3210 + $0x2b8] sm:$0xff]
      %v3299 = vld [vmem:[%s3210 + $0x2c0] sm:$0xff]
      %v3300 = vld [vmem:[%s3210 + $0x2c8] sm:$0xff]
      %v3301 = vld [vmem:[%s3210 + $0x2d0] sm:$0xff]
      %v3302 = vld [vmem:[%s3210 + $0x2d8] sm:$0xff]
      %v3303 = vld [vmem:[%s3210 + $0x2e0] sm:$0xff]
      %v3304 = vld [vmem:[%s3210 + $0x2e8] sm:$0xff]
      %v3305 = vld [vmem:[%s3210 + $0x2f0] sm:$0xff]
      %v3306 = vld [vmem:[%s3210 + $0x2f8] sm:$0xff]
      %v3307 = vld [vmem:[%s3210 + $0x300] sm:$0xff]
      %v3308 = vld [vmem:[%s3210 + $0x308] sm:$0xff]
      %v3309 = vld [vmem:[%s3210 + $0x310] sm:$0xff]
      %v3310 = vld [vmem:[%s3210 + $0x318] sm:$0xff]
      %v3311 = vld [vmem:[%s3210 + $0x320] sm:$0xff]
      %v3312 = vld [vmem:[%s3210 + $0x328] sm:$0xff]
      %v3313 = vld [vmem:[%s3210 + $0x330] sm:$0xff]
      %v3314 = vld [vmem:[%s3210 + $0x338] sm:$0xff]
      %v3315 = vld [vmem:[%s3210 + $0x340] sm:$0xff]
      %v3316 = vld [vmem:[%s3210 + $0x348] sm:$0xff]
      %v3317 = vld [vmem:[%s3210 + $0x350] sm:$0xff]
      %v3318 = vld [vmem:[%s3210 + $0x358] sm:$0xff]
      %v3319 = vld [vmem:[%s3210 + $0x360] sm:$0xff]
      %v3320 = vld [vmem:[%s3210 + $0x368] sm:$0xff]
      %v3321 = vld [vmem:[%s3210 + $0x370] sm:$0xff]
      %v3322 = vld [vmem:[%s3210 + $0x378] sm:$0xff]
      %v3323 = vld [vmem:[%s3210 + $0x380] sm:$0xff]
      %v3324 = vld [vmem:[%s3210 + $0x388] sm:$0xff]
      %v3325 = vld [vmem:[%s3210 + $0x390] sm:$0xff]
      %v3326 = vld [vmem:[%s3210 + $0x398] sm:$0xff]
      %v3327 = vld [vmem:[%s3210 + $0x3a0] sm:$0xff]
      %v3328 = vld [vmem:[%s3210 + $0x3a8] sm:$0xff]
      %v3329 = vld [vmem:[%s3210 + $0x3b0] sm:$0xff]
      %v3330 = vld [vmem:[%s3210 + $0x3b8] sm:$0xff]
      %v3331 = vld [vmem:[%s3210 + $0x3c0] sm:$0xff]
      %v3332 = vld [vmem:[%s3210 + $0x3c8] sm:$0xff]
      %v3333 = vld [vmem:[%s3210 + $0x3d0] sm:$0xff]
      %v3334 = vld [vmem:[%s3210 + $0x3d8] sm:$0xff]
      %v3335 = vld [vmem:[%s3210 + $0x3e0] sm:$0xff]
      %v3336 = vld [vmem:[%s3210 + $0x3e8] sm:$0xff]
      %v3337 = vld [vmem:[%s3210 + $0x3f0] sm:$0xff]
      %v3338 = vld [vmem:[%s3210 + $0x3f8] sm:$0xff]
      %v3467 = vunpack.c.l.b16 %v3211
      %v3468 = vunpack.c.h.b16 %v3211
      %v3469 = vunpack.c.l.b16 %v3212
      %v3470 = vunpack.c.h.b16 %v3212
      %v3471 = vunpack.c.l.b16 %v3213
      %v3472 = vunpack.c.h.b16 %v3213
      %v3473 = vunpack.c.l.b16 %v3214
      %v3474 = vunpack.c.h.b16 %v3214
      %v3475 = vunpack.c.l.b16 %v3215
      %v3476 = vunpack.c.h.b16 %v3215
      %v3477 = vunpack.c.l.b16 %v3216
      %v3478 = vunpack.c.h.b16 %v3216
      %v3479 = vunpack.c.l.b16 %v3217
      %v3480 = vunpack.c.h.b16 %v3217
      %v3481 = vunpack.c.l.b16 %v3218
      %v3482 = vunpack.c.h.b16 %v3218
      %v3483 = vunpack.c.l.b16 %v3219
      %v3484 = vunpack.c.h.b16 %v3219
      %v3485 = vunpack.c.l.b16 %v3220
      %v3486 = vunpack.c.h.b16 %v3220
      %v3487 = vunpack.c.l.b16 %v3221
      %v3488 = vunpack.c.h.b16 %v3221
      %v3489 = vunpack.c.l.b16 %v3222
      %v3490 = vunpack.c.h.b16 %v3222
      %v3491 = vunpack.c.l.b16 %v3223
      %v3492 = vunpack.c.h.b16 %v3223
      %v3493 = vunpack.c.l.b16 %v3224
      %v3494 = vunpack.c.h.b16 %v3224
      %v3495 = vunpack.c.l.b16 %v3225
      %v3496 = vunpack.c.h.b16 %v3225
      %v3497 = vunpack.c.l.b16 %v3226
      %v3498 = vunpack.c.h.b16 %v3226
      %v3499 = vunpack.c.l.b16 %v3227
      %v3500 = vunpack.c.h.b16 %v3227
      %v3501 = vunpack.c.l.b16 %v3228
      %v3502 = vunpack.c.h.b16 %v3228
      %v3503 = vunpack.c.l.b16 %v3229
      %v3504 = vunpack.c.h.b16 %v3229
      %v3505 = vunpack.c.l.b16 %v3230
      %v3506 = vunpack.c.h.b16 %v3230
      %v3507 = vunpack.c.l.b16 %v3231
      %v3508 = vunpack.c.h.b16 %v3231
      %v3509 = vunpack.c.l.b16 %v3232
      %v3510 = vunpack.c.h.b16 %v3232
      %v3511 = vunpack.c.l.b16 %v3233
      %v3512 = vunpack.c.h.b16 %v3233
      %v3513 = vunpack.c.l.b16 %v3234
      %v3514 = vunpack.c.h.b16 %v3234
      %v3515 = vunpack.c.l.b16 %v3235
      %v3516 = vunpack.c.h.b16 %v3235
      %v3517 = vunpack.c.l.b16 %v3236
      %v3518 = vunpack.c.h.b16 %v3236
      %v3519 = vunpack.c.l.b16 %v3237
      %v3520 = vunpack.c.h.b16 %v3237
      %v3521 = vunpack.c.l.b16 %v3238
      %v3522 = vunpack.c.h.b16 %v3238
      %v3523 = vunpack.c.l.b16 %v3239
      %v3524 = vunpack.c.h.b16 %v3239
      %v3525 = vunpack.c.l.b16 %v3240
      %v3526 = vunpack.c.h.b16 %v3240
      %v3527 = vunpack.c.l.b16 %v3241
      %v3528 = vunpack.c.h.b16 %v3241
      %v3529 = vunpack.c.l.b16 %v3242
      %v3530 = vunpack.c.h.b16 %v3242
      %v3531 = vunpack.c.l.b16 %v3243
      %v3532 = vunpack.c.h.b16 %v3243
      %v3533 = vunpack.c.l.b16 %v3244
      %v3534 = vunpack.c.h.b16 %v3244
      %v3535 = vunpack.c.l.b16 %v3245
      %v3536 = vunpack.c.h.b16 %v3245
      %v3537 = vunpack.c.l.b16 %v3246
      %v3538 = vunpack.c.h.b16 %v3246
      %v3539 = vunpack.c.l.b16 %v3247
      %v3540 = vunpack.c.h.b16 %v3247
      %v3541 = vunpack.c.l.b16 %v3248
      %v3542 = vunpack.c.h.b16 %v3248
      %v3543 = vunpack.c.l.b16 %v3249
      %v3544 = vunpack.c.h.b16 %v3249
      %v3545 = vunpack.c.l.b16 %v3250
      %v3546 = vunpack.c.h.b16 %v3250
      %v3547 = vunpack.c.l.b16 %v3251
      %v3548 = vunpack.c.h.b16 %v3251
      %v3549 = vunpack.c.l.b16 %v3252
      %v3550 = vunpack.c.h.b16 %v3252
      %v3551 = vunpack.c.l.b16 %v3253
      %v3552 = vunpack.c.h.b16 %v3253
      %v3553 = vunpack.c.l.b16 %v3254
      %v3554 = vunpack.c.h.b16 %v3254
      %v3555 = vunpack.c.l.b16 %v3255
      %v3556 = vunpack.c.h.b16 %v3255
      %v3557 = vunpack.c.l.b16 %v3256
      %v3558 = vunpack.c.h.b16 %v3256
      %v3559 = vunpack.c.l.b16 %v3257
      %v3560 = vunpack.c.h.b16 %v3257
      %v3561 = vunpack.c.l.b16 %v3258
      %v3562 = vunpack.c.h.b16 %v3258
      %v3563 = vunpack.c.l.b16 %v3259
      %v3564 = vunpack.c.h.b16 %v3259
      %v3565 = vunpack.c.l.b16 %v3260
      %v3566 = vunpack.c.h.b16 %v3260
      %v3567 = vunpack.c.l.b16 %v3261
      %v3568 = vunpack.c.h.b16 %v3261
      %v3569 = vunpack.c.l.b16 %v3262
      %v3570 = vunpack.c.h.b16 %v3262
      %v3571 = vunpack.c.l.b16 %v3263
      %v3572 = vunpack.c.h.b16 %v3263
      %v3573 = vunpack.c.l.b16 %v3264
      %v3574 = vunpack.c.h.b16 %v3264
      %v3575 = vunpack.c.l.b16 %v3265
      %v3576 = vunpack.c.h.b16 %v3265
      %v3577 = vunpack.c.l.b16 %v3266
      %v3578 = vunpack.c.h.b16 %v3266
      %v3579 = vunpack.c.l.b16 %v3267
      %v3580 = vunpack.c.h.b16 %v3267
      %v3581 = vunpack.c.l.b16 %v3268
      %v3582 = vunpack.c.h.b16 %v3268
      %v3583 = vunpack.c.l.b16 %v3269
      %v3584 = vunpack.c.h.b16 %v3269
      %v3585 = vunpack.c.l.b16 %v3270
      %v3586 = vunpack.c.h.b16 %v3270
      %v3587 = vunpack.c.l.b16 %v3271
      %v3588 = vunpack.c.h.b16 %v3271
      %v3589 = vunpack.c.l.b16 %v3272
      %v3590 = vunpack.c.h.b16 %v3272
      %v3591 = vunpack.c.l.b16 %v3273
      %v3592 = vunpack.c.h.b16 %v3273
      %v3593 = vunpack.c.l.b16 %v3274
      %v3594 = vunpack.c.h.b16 %v3274
      %v3595 = vunpack.c.l.b16 %v3275
      %v3596 = vunpack.c.h.b16 %v3275
      %v3597 = vunpack.c.l.b16 %v3276
      %v3598 = vunpack.c.h.b16 %v3276
      %v3599 = vunpack.c.l.b16 %v3277
      %v3600 = vunpack.c.h.b16 %v3277
      %v3601 = vunpack.c.l.b16 %v3278
      %v3602 = vunpack.c.h.b16 %v3278
      %v3603 = vunpack.c.l.b16 %v3279
      %v3604 = vunpack.c.h.b16 %v3279
      %v3605 = vunpack.c.l.b16 %v3280
      %v3606 = vunpack.c.h.b16 %v3280
      %v3607 = vunpack.c.l.b16 %v3281
      %v3608 = vunpack.c.h.b16 %v3281
      %v3609 = vunpack.c.l.b16 %v3282
      %v3610 = vunpack.c.h.b16 %v3282
      %v3611 = vunpack.c.l.b16 %v3283
      %v3612 = vunpack.c.h.b16 %v3283
      %v3613 = vunpack.c.l.b16 %v3284
      %v3614 = vunpack.c.h.b16 %v3284
      %v3615 = vunpack.c.l.b16 %v3285
      %v3616 = vunpack.c.h.b16 %v3285
      %v3617 = vunpack.c.l.b16 %v3286
      %v3618 = vunpack.c.h.b16 %v3286
      %v3619 = vunpack.c.l.b16 %v3287
      %v3620 = vunpack.c.h.b16 %v3287
      %v3621 = vunpack.c.l.b16 %v3288
      %v3622 = vunpack.c.h.b16 %v3288
      %v3623 = vunpack.c.l.b16 %v3289
      %v3624 = vunpack.c.h.b16 %v3289
      %v3625 = vunpack.c.l.b16 %v3290
      %v3626 = vunpack.c.h.b16 %v3290
      %v3627 = vunpack.c.l.b16 %v3291
      %v3628 = vunpack.c.h.b16 %v3291
      %v3629 = vunpack.c.l.b16 %v3292
      %v3630 = vunpack.c.h.b16 %v3292
      %v3631 = vunpack.c.l.b16 %v3293
      %v3632 = vunpack.c.h.b16 %v3293
      %v3633 = vunpack.c.l.b16 %v3294
      %v3634 = vunpack.c.h.b16 %v3294
      %v3635 = vunpack.c.l.b16 %v3295
      %v3636 = vunpack.c.h.b16 %v3295
      %v3637 = vunpack.c.l.b16 %v3296
      %v3638 = vunpack.c.h.b16 %v3296
      %v3639 = vunpack.c.l.b16 %v3297
      %v3640 = vunpack.c.h.b16 %v3297
      %v3641 = vunpack.c.l.b16 %v3298
      %v3642 = vunpack.c.h.b16 %v3298
      %v3643 = vunpack.c.l.b16 %v3299
      %v3644 = vunpack.c.h.b16 %v3299
      %v3645 = vunpack.c.l.b16 %v3300
      %v3646 = vunpack.c.h.b16 %v3300
      %v3647 = vunpack.c.l.b16 %v3301
      %v3648 = vunpack.c.h.b16 %v3301
      %v3649 = vunpack.c.l.b16 %v3302
      %v3650 = vunpack.c.h.b16 %v3302
      %v3651 = vunpack.c.l.b16 %v3303
      %v3652 = vunpack.c.h.b16 %v3303
      %v3653 = vunpack.c.l.b16 %v3304
      %v3654 = vunpack.c.h.b16 %v3304
      %v3655 = vunpack.c.l.b16 %v3305
      %v3656 = vunpack.c.h.b16 %v3305
      %v3657 = vunpack.c.l.b16 %v3306
      %v3658 = vunpack.c.h.b16 %v3306
      %v3659 = vunpack.c.l.b16 %v3307
      %v3660 = vunpack.c.h.b16 %v3307
      %v3661 = vunpack.c.l.b16 %v3308
      %v3662 = vunpack.c.h.b16 %v3308
      %v3663 = vunpack.c.l.b16 %v3309
      %v3664 = vunpack.c.h.b16 %v3309
      %v3665 = vunpack.c.l.b16 %v3310
      %v3666 = vunpack.c.h.b16 %v3310
      %v3667 = vunpack.c.l.b16 %v3311
      %v3668 = vunpack.c.h.b16 %v3311
      %v3669 = vunpack.c.l.b16 %v3312
      %v3670 = vunpack.c.h.b16 %v3312
      %v3671 = vunpack.c.l.b16 %v3313
      %v3672 = vunpack.c.h.b16 %v3313
      %v3673 = vunpack.c.l.b16 %v3314
      %v3674 = vunpack.c.h.b16 %v3314
      %v3675 = vunpack.c.l.b16 %v3315
      %v3676 = vunpack.c.h.b16 %v3315
      %v3677 = vunpack.c.l.b16 %v3316
      %v3678 = vunpack.c.h.b16 %v3316
      %v3679 = vunpack.c.l.b16 %v3317
      %v3680 = vunpack.c.h.b16 %v3317
      %v3681 = vunpack.c.l.b16 %v3318
      %v3682 = vunpack.c.h.b16 %v3318
      %v3683 = vunpack.c.l.b16 %v3319
      %v3684 = vunpack.c.h.b16 %v3319
      %v3685 = vunpack.c.l.b16 %v3320
      %v3686 = vunpack.c.h.b16 %v3320
      %v3687 = vunpack.c.l.b16 %v3321
      %v3688 = vunpack.c.h.b16 %v3321
      %v3689 = vunpack.c.l.b16 %v3322
      %v3690 = vunpack.c.h.b16 %v3322
      %v3691 = vunpack.c.l.b16 %v3323
      %v3692 = vunpack.c.h.b16 %v3323
      %v3693 = vunpack.c.l.b16 %v3324
      %v3694 = vunpack.c.h.b16 %v3324
      %v3695 = vunpack.c.l.b16 %v3325
      %v3696 = vunpack.c.h.b16 %v3325
      %v3697 = vunpack.c.l.b16 %v3326
      %v3698 = vunpack.c.h.b16 %v3326
      %v3699 = vunpack.c.l.b16 %v3327
      %v3700 = vunpack.c.h.b16 %v3327
      %v3701 = vunpack.c.l.b16 %v3328
      %v3702 = vunpack.c.h.b16 %v3328
      %v3703 = vunpack.c.l.b16 %v3329
      %v3704 = vunpack.c.h.b16 %v3329
      %v3705 = vunpack.c.l.b16 %v3330
      %v3706 = vunpack.c.h.b16 %v3330
      %v3707 = vunpack.c.l.b16 %v3331
      %v3708 = vunpack.c.h.b16 %v3331
      %v3709 = vunpack.c.l.b16 %v3332
      %v3710 = vunpack.c.h.b16 %v3332
      %v3711 = vunpack.c.l.b16 %v3333
      %v3712 = vunpack.c.h.b16 %v3333
      %v3713 = vunpack.c.l.b16 %v3334
      %v3714 = vunpack.c.h.b16 %v3334
      %v3715 = vunpack.c.l.b16 %v3335
      %v3716 = vunpack.c.h.b16 %v3335
      %v3717 = vunpack.c.l.b16 %v3336
      %v3718 = vunpack.c.h.b16 %v3336
      %v3719 = vunpack.c.l.b16 %v3337
      %v3720 = vunpack.c.h.b16 %v3337
      %v3721 = vunpack.c.l.b16 %v3338
      %v3722 = vunpack.c.h.b16 %v3338
      %v3723 = vpack.c.b16 %v3471, %v3467
      %v3724 = vpack.c.b16 %v3472, %v3468
      %v3725 = vpack.c.b16 %v3473, %v3469
      %v3726 = vpack.c.b16 %v3474, %v3470
      %v3727 = vpack.c.b16 %v3479, %v3475
      %v3728 = vpack.c.b16 %v3480, %v3476
      %v3729 = vpack.c.b16 %v3481, %v3477
      %v3730 = vpack.c.b16 %v3482, %v3478
      %v3731 = vpack.c.b16 %v3487, %v3483
      %v3732 = vpack.c.b16 %v3488, %v3484
      %v3733 = vpack.c.b16 %v3489, %v3485
      %v3734 = vpack.c.b16 %v3490, %v3486
      %v3735 = vpack.c.b16 %v3495, %v3491
      %v3736 = vpack.c.b16 %v3496, %v3492
      %v3737 = vpack.c.b16 %v3497, %v3493
      %v3738 = vpack.c.b16 %v3498, %v3494
      %v3739 = vpack.c.b16 %v3503, %v3499
      %v3740 = vpack.c.b16 %v3504, %v3500
      %v3741 = vpack.c.b16 %v3505, %v3501
      %v3742 = vpack.c.b16 %v3506, %v3502
      %v3743 = vpack.c.b16 %v3511, %v3507
      %v3744 = vpack.c.b16 %v3512, %v3508
      %v3745 = vpack.c.b16 %v3513, %v3509
      %v3746 = vpack.c.b16 %v3514, %v3510
      %v3747 = vpack.c.b16 %v3519, %v3515
      %v3748 = vpack.c.b16 %v3520, %v3516
      %v3749 = vpack.c.b16 %v3521, %v3517
      %v3750 = vpack.c.b16 %v3522, %v3518
      %v3751 = vpack.c.b16 %v3527, %v3523
      %v3752 = vpack.c.b16 %v3528, %v3524
      %v3753 = vpack.c.b16 %v3529, %v3525
      %v3754 = vpack.c.b16 %v3530, %v3526
      %v3755 = vpack.c.b16 %v3535, %v3531
      %v3756 = vpack.c.b16 %v3536, %v3532
      %v3757 = vpack.c.b16 %v3537, %v3533
      %v3758 = vpack.c.b16 %v3538, %v3534
      %v3759 = vpack.c.b16 %v3543, %v3539
      %v3760 = vpack.c.b16 %v3544, %v3540
      %v3761 = vpack.c.b16 %v3545, %v3541
      %v3762 = vpack.c.b16 %v3546, %v3542
      %v3763 = vpack.c.b16 %v3551, %v3547
      %v3764 = vpack.c.b16 %v3552, %v3548
      %v3765 = vpack.c.b16 %v3553, %v3549
      %v3766 = vpack.c.b16 %v3554, %v3550
      %v3767 = vpack.c.b16 %v3559, %v3555
      %v3768 = vpack.c.b16 %v3560, %v3556
      %v3769 = vpack.c.b16 %v3561, %v3557
      %v3770 = vpack.c.b16 %v3562, %v3558
      %v3771 = vpack.c.b16 %v3567, %v3563
      %v3772 = vpack.c.b16 %v3568, %v3564
      %v3773 = vpack.c.b16 %v3569, %v3565
      %v3774 = vpack.c.b16 %v3570, %v3566
      %v3775 = vpack.c.b16 %v3575, %v3571
      %v3776 = vpack.c.b16 %v3576, %v3572
      %v3777 = vpack.c.b16 %v3577, %v3573
      %v3778 = vpack.c.b16 %v3578, %v3574
      %v3779 = vpack.c.b16 %v3583, %v3579
      %v3780 = vpack.c.b16 %v3584, %v3580
      %v3781 = vpack.c.b16 %v3585, %v3581
      %v3782 = vpack.c.b16 %v3586, %v3582
      %v3783 = vpack.c.b16 %v3591, %v3587
      %v3784 = vpack.c.b16 %v3592, %v3588
      %v3785 = vpack.c.b16 %v3593, %v3589
      %v3786 = vpack.c.b16 %v3594, %v3590
      %v3787 = vpack.c.b16 %v3599, %v3595
      %v3788 = vpack.c.b16 %v3600, %v3596
      %v3789 = vpack.c.b16 %v3601, %v3597
      %v3790 = vpack.c.b16 %v3602, %v3598
      %v3791 = vpack.c.b16 %v3607, %v3603
      %v3792 = vpack.c.b16 %v3608, %v3604
      %v3793 = vpack.c.b16 %v3609, %v3605
      %v3794 = vpack.c.b16 %v3610, %v3606
      %v3795 = vpack.c.b16 %v3615, %v3611
      %v3796 = vpack.c.b16 %v3616, %v3612
      %v3797 = vpack.c.b16 %v3617, %v3613
      %v3798 = vpack.c.b16 %v3618, %v3614
      %v3799 = vpack.c.b16 %v3623, %v3619
      %v3800 = vpack.c.b16 %v3624, %v3620
      %v3801 = vpack.c.b16 %v3625, %v3621
      %v3802 = vpack.c.b16 %v3626, %v3622
      %v3803 = vpack.c.b16 %v3631, %v3627
      %v3804 = vpack.c.b16 %v3632, %v3628
      %v3805 = vpack.c.b16 %v3633, %v3629
      %v3806 = vpack.c.b16 %v3634, %v3630
      %v3807 = vpack.c.b16 %v3639, %v3635
      %v3808 = vpack.c.b16 %v3640, %v3636
      %v3809 = vpack.c.b16 %v3641, %v3637
      %v3810 = vpack.c.b16 %v3642, %v3638
      %v3811 = vpack.c.b16 %v3647, %v3643
      %v3812 = vpack.c.b16 %v3648, %v3644
      %v3813 = vpack.c.b16 %v3649, %v3645
      %v3814 = vpack.c.b16 %v3650, %v3646
      %v3815 = vpack.c.b16 %v3655, %v3651
      %v3816 = vpack.c.b16 %v3656, %v3652
      %v3817 = vpack.c.b16 %v3657, %v3653
      %v3818 = vpack.c.b16 %v3658, %v3654
      %v3819 = vpack.c.b16 %v3663, %v3659
      %v3820 = vpack.c.b16 %v3664, %v3660
      %v3821 = vpack.c.b16 %v3665, %v3661
      %v3822 = vpack.c.b16 %v3666, %v3662
      %v3823 = vpack.c.b16 %v3671, %v3667
      %v3824 = vpack.c.b16 %v3672, %v3668
      %v3825 = vpack.c.b16 %v3673, %v3669
      %v3826 = vpack.c.b16 %v3674, %v3670
      %v3827 = vpack.c.b16 %v3679, %v3675
      %v3828 = vpack.c.b16 %v3680, %v3676
      %v3829 = vpack.c.b16 %v3681, %v3677
      %v3830 = vpack.c.b16 %v3682, %v3678
      %v3831 = vpack.c.b16 %v3687, %v3683
      %v3832 = vpack.c.b16 %v3688, %v3684
      %v3833 = vpack.c.b16 %v3689, %v3685
      %v3834 = vpack.c.b16 %v3690, %v3686
      %v3835 = vpack.c.b16 %v3695, %v3691
      %v3836 = vpack.c.b16 %v3696, %v3692
      %v3837 = vpack.c.b16 %v3697, %v3693
      %v3838 = vpack.c.b16 %v3698, %v3694
      %v3839 = vpack.c.b16 %v3703, %v3699
      %v3840 = vpack.c.b16 %v3704, %v3700
      %v3841 = vpack.c.b16 %v3705, %v3701
      %v3842 = vpack.c.b16 %v3706, %v3702
      %v3843 = vpack.c.b16 %v3711, %v3707
      %v3844 = vpack.c.b16 %v3712, %v3708
      %v3845 = vpack.c.b16 %v3713, %v3709
      %v3846 = vpack.c.b16 %v3714, %v3710
      %v3847 = vpack.c.b16 %v3719, %v3715
      %v3848 = vpack.c.b16 %v3720, %v3716
      %v3849 = vpack.c.b16 %v3721, %v3717
      %v3850 = vpack.c.b16 %v3722, %v3718
      %3979 = vmatprep.subr.bf16.mxu0 %v3752
      %3980 = vmatpush1.bf16.msra.mxu0 %v3751
      %3981 = vmatprep.subr.bf16.mxu0 %v3748
      %3982 = vmatpush1.bf16.msra.mxu0 %v3747
      %3983 = vmatprep.subr.bf16.mxu0 %v3744
      %3984 = vmatpush1.bf16.msra.mxu0 %v3743
      %3985 = vmatprep.subr.bf16.mxu0 %v3740
      %3986 = vmatpush1.bf16.msra.mxu0 %v3739
      %3987 = vmatprep.subr.bf16.mxu0 %v3736
      %3988 = vmatpush1.bf16.msra.mxu0 %v3735
      %3989 = vmatprep.subr.bf16.mxu0 %v3732
      %3990 = vmatpush1.bf16.msra.mxu0 %v3731
      %3991 = vmatprep.subr.bf16.mxu0 %v3728
      %3992 = vmatpush1.bf16.msra.mxu0 %v3727
      %3993 = vmatprep.subr.bf16.mxu0 %v3724
      %3994 = vmatpush1.bf16.msra.mxu0 %v3723
      %3995 = vmatprep.subr.bf16.mxu0 %v3784
      %3996 = vmatpush2.bf16.msra.mxu0 %v3783
      %3997 = vmatprep.subr.bf16.mxu0 %v3780
      %3998 = vmatpush2.bf16.msra.mxu0 %v3779
      %3999 = vmatprep.subr.bf16.mxu0 %v3776
      %4000 = vmatpush2.bf16.msra.mxu0 %v3775
      %4001 = vmatprep.subr.bf16.mxu0 %v3772
      %4002 = vmatpush2.bf16.msra.mxu0 %v3771
      %4003 = vmatprep.subr.bf16.mxu0 %v3768
      %4004 = vmatpush2.bf16.msra.mxu0 %v3767
      %4005 = vmatprep.subr.bf16.mxu0 %v3764
      %4006 = vmatpush2.bf16.msra.mxu0 %v3763
      %4007 = vmatprep.subr.bf16.mxu0 %v3760
      %4008 = vmatpush2.bf16.msra.mxu0 %v3759
      %4009 = vmatprep.subr.bf16.mxu0 %v3756
      %4010 = vmatpush2.bf16.msra.mxu0 %v3755
      %4011 = vmatprep.mubr.bf16.mxu0 %v465
      %4012 = vmatmul.mubr.bf16.gmra.mxu0 %v458
      %v4013 = vpop.f32.mrf.mxu0
      %v4014 = vadd.f32 0.0, %v4013
      %v4015 = vpop.f32.mrf.mxu0
      %v4016 = vadd.f32 0.0, %v4015
      %v4017 = vpop.f32.mrf.mxu0
      %v4018 = vadd.f32 0.0, %v4017
      %v4019 = vpop.f32.mrf.mxu0
      %v4020 = vadd.f32 0.0, %v4019
      %4021 = vdwg.mxu0
      %4022 = vmatprep.subr.bf16.mxu0 %v3816
      %4023 = vmatpush1.bf16.msra.mxu0 %v3815
      %4024 = vmatprep.subr.bf16.mxu0 %v3812
      %4025 = vmatpush1.bf16.msra.mxu0 %v3811
      %4026 = vmatprep.subr.bf16.mxu0 %v3808
      %4027 = vmatpush1.bf16.msra.mxu0 %v3807
      %4028 = vmatprep.subr.bf16.mxu0 %v3804
      %4029 = vmatpush1.bf16.msra.mxu0 %v3803
      %4030 = vmatprep.subr.bf16.mxu0 %v3800
      %4031 = vmatpush1.bf16.msra.mxu0 %v3799
      %4032 = vmatprep.subr.bf16.mxu0 %v3796
      %4033 = vmatpush1.bf16.msra.mxu0 %v3795
      %4034 = vmatprep.subr.bf16.mxu0 %v3792
      %4035 = vmatpush1.bf16.msra.mxu0 %v3791
      %4036 = vmatprep.subr.bf16.mxu0 %v3788
      %4037 = vmatpush1.bf16.msra.mxu0 %v3787
      %4038 = vmatprep.subr.bf16.mxu0 %v3848
      %4039 = vmatpush2.bf16.msra.mxu0 %v3847
      %4040 = vmatprep.subr.bf16.mxu0 %v3844
      %4041 = vmatpush2.bf16.msra.mxu0 %v3843
      %4042 = vmatprep.subr.bf16.mxu0 %v3840
      %4043 = vmatpush2.bf16.msra.mxu0 %v3839
      %4044 = vmatprep.subr.bf16.mxu0 %v3836
      %4045 = vmatpush2.bf16.msra.mxu0 %v3835
      %4046 = vmatprep.subr.bf16.mxu0 %v3832
      %4047 = vmatpush2.bf16.msra.mxu0 %v3831
      %4048 = vmatprep.subr.bf16.mxu0 %v3828
      %4049 = vmatpush2.bf16.msra.mxu0 %v3827
      %4050 = vmatprep.subr.bf16.mxu0 %v3824
      %4051 = vmatpush2.bf16.msra.mxu0 %v3823
      %4052 = vmatprep.subr.bf16.mxu0 %v3820
      %4053 = vmatpush2.bf16.msra.mxu0 %v3819
      %4054 = vmatprep.mubr.bf16.mxu0 %v479
      %4055 = vmatmul.mubr.bf16.gmra.mxu0 %v472
      %v4056 = vpop.f32.mrf.mxu0
      %v4057 = vadd.f32 %v4014, %v4056
      %v4058 = vpop.f32.mrf.mxu0
      %v4059 = vadd.f32 %v4016, %v4058
      %v4060 = vpop.f32.mrf.mxu0
      %v4061 = vadd.f32 %v4018, %v4060
      %v4062 = vpop.f32.mrf.mxu0
      %v4063 = vadd.f32 %v4020, %v4062
      %4064 = vdwg.mxu0
      %4065 = vmatprep.subr.bf16.mxu0 %v3754
      %4066 = vmatpush1.bf16.msra.mxu0 %v3753
      %4067 = vmatprep.subr.bf16.mxu0 %v3750
      %4068 = vmatpush1.bf16.msra.mxu0 %v3749
      %4069 = vmatprep.subr.bf16.mxu0 %v3746
      %4070 = vmatpush1.bf16.msra.mxu0 %v3745
      %4071 = vmatprep.subr.bf16.mxu0 %v3742
      %4072 = vmatpush1.bf16.msra.mxu0 %v3741
      %4073 = vmatprep.subr.bf16.mxu0 %v3738
      %4074 = vmatpush1.bf16.msra.mxu0 %v3737
      %4075 = vmatprep.subr.bf16.mxu0 %v3734
      %4076 = vmatpush1.bf16.msra.mxu0 %v3733
      %4077 = vmatprep.subr.bf16.mxu0 %v3730
      %4078 = vmatpush1.bf16.msra.mxu0 %v3729
      %4079 = vmatprep.subr.bf16.mxu0 %v3726
      %4080 = vmatpush1.bf16.msra.mxu0 %v3725
      %4081 = vmatprep.subr.bf16.mxu0 %v3786
      %4082 = vmatpush2.bf16.msra.mxu0 %v3785
      %4083 = vmatprep.subr.bf16.mxu0 %v3782
      %4084 = vmatpush2.bf16.msra.mxu0 %v3781
      %4085 = vmatprep.subr.bf16.mxu0 %v3778
      %4086 = vmatpush2.bf16.msra.mxu0 %v3777
      %4087 = vmatprep.subr.bf16.mxu0 %v3774
      %4088 = vmatpush2.bf16.msra.mxu0 %v3773
      %4089 = vmatprep.subr.bf16.mxu0 %v3770
      %4090 = vmatpush2.bf16.msra.mxu0 %v3769
      %4091 = vmatprep.subr.bf16.mxu0 %v3766
      %4092 = vmatpush2.bf16.msra.mxu0 %v3765
      %4093 = vmatprep.subr.bf16.mxu0 %v3762
      %4094 = vmatpush2.bf16.msra.mxu0 %v3761
      %4095 = vmatprep.subr.bf16.mxu0 %v3758
      %4096 = vmatpush2.bf16.msra.mxu0 %v3757
      %4097 = vmatprep.mubr.bf16.mxu0 %v465
      %4098 = vmatmul.mubr.bf16.gmra.mxu0 %v458
      %v4099 = vpop.f32.mrf.mxu0
      %v4100 = vadd.f32 0.0, %v4099
      %v4101 = vpop.f32.mrf.mxu0
      %v4102 = vadd.f32 0.0, %v4101
      %v4103 = vpop.f32.mrf.mxu0
      %v4104 = vadd.f32 0.0, %v4103
      %v4105 = vpop.f32.mrf.mxu0
      %v4106 = vadd.f32 0.0, %v4105
      %4107 = vdwg.mxu0
      %4108 = vmatprep.subr.bf16.mxu0 %v3818
      %4109 = vmatpush1.bf16.msra.mxu0 %v3817
      %4110 = vmatprep.subr.bf16.mxu0 %v3814
      %4111 = vmatpush1.bf16.msra.mxu0 %v3813
      %4112 = vmatprep.subr.bf16.mxu0 %v3810
      %4113 = vmatpush1.bf16.msra.mxu0 %v3809
      %4114 = vmatprep.subr.bf16.mxu0 %v3806
      %4115 = vmatpush1.bf16.msra.mxu0 %v3805
      %4116 = vmatprep.subr.bf16.mxu0 %v3802
      %4117 = vmatpush1.bf16.msra.mxu0 %v3801
      %4118 = vmatprep.subr.bf16.mxu0 %v3798
      %4119 = vmatpush1.bf16.msra.mxu0 %v3797
      %4120 = vmatprep.subr.bf16.mxu0 %v3794
      %4121 = vmatpush1.bf16.msra.mxu0 %v3793
      %4122 = vmatprep.subr.bf16.mxu0 %v3790
      %4123 = vmatpush1.bf16.msra.mxu0 %v3789
      %4124 = vmatprep.subr.bf16.mxu0 %v3850
      %4125 = vmatpush2.bf16.msra.mxu0 %v3849
      %4126 = vmatprep.subr.bf16.mxu0 %v3846
      %4127 = vmatpush2.bf16.msra.mxu0 %v3845
      %4128 = vmatprep.subr.bf16.mxu0 %v3842
      %4129 = vmatpush2.bf16.msra.mxu0 %v3841
      %4130 = vmatprep.subr.bf16.mxu0 %v3838
      %4131 = vmatpush2.bf16.msra.mxu0 %v3837
      %4132 = vmatprep.subr.bf16.mxu0 %v3834
      %4133 = vmatpush2.bf16.msra.mxu0 %v3833
      %4134 = vmatprep.subr.bf16.mxu0 %v3830
      %4135 = vmatpush2.bf16.msra.mxu0 %v3829
      %4136 = vmatprep.subr.bf16.mxu0 %v3826
      %4137 = vmatpush2.bf16.msra.mxu0 %v3825
      %4138 = vmatprep.subr.bf16.mxu0 %v3822
      %4139 = vmatpush2.bf16.msra.mxu0 %v3821
      %4140 = vmatprep.mubr.bf16.mxu0 %v479
      %4141 = vmatmul.mubr.bf16.gmra.mxu0 %v472
      %v4142 = vpop.f32.mrf.mxu0
      %v4143 = vadd.f32 %v4100, %v4142
      %v4144 = vpop.f32.mrf.mxu0
      %v4145 = vadd.f32 %v4102, %v4144
      %v4146 = vpop.f32.mrf.mxu0
      %v4147 = vadd.f32 %v4104, %v4146
      %v4148 = vpop.f32.mrf.mxu0
      %v4149 = vadd.f32 %v4106, %v4148
      %4150 = vdwg.mxu0
      %v4279 = vunpack.c.l.b16 %v3082
      %v4280 = vunpack.c.h.b16 %v3082
      %v4281 = vunpack.c.l.b16 %v3083
      %v4282 = vunpack.c.h.b16 %v3083
      %v4283 = vunpack.c.l.b16 %v3084
      %v4284 = vunpack.c.h.b16 %v3084
      %v4285 = vunpack.c.l.b16 %v3085
      %v4286 = vunpack.c.h.b16 %v3085
      %v4287 = vunpack.c.l.b16 %v3086
      %v4288 = vunpack.c.h.b16 %v3086
      %v4289 = vunpack.c.l.b16 %v3087
      %v4290 = vunpack.c.h.b16 %v3087
      %v4291 = vunpack.c.l.b16 %v3088
      %v4292 = vunpack.c.h.b16 %v3088
      %v4293 = vunpack.c.l.b16 %v3089
      %v4294 = vunpack.c.h.b16 %v3089
      %v4295 = vunpack.c.l.b16 %v3090
      %v4296 = vunpack.c.h.b16 %v3090
      %v4297 = vunpack.c.l.b16 %v3091
      %v4298 = vunpack.c.h.b16 %v3091
      %v4299 = vunpack.c.l.b16 %v3092
      %v4300 = vunpack.c.h.b16 %v3092
      %v4301 = vunpack.c.l.b16 %v3093
      %v4302 = vunpack.c.h.b16 %v3093
      %v4303 = vunpack.c.l.b16 %v3094
      %v4304 = vunpack.c.h.b16 %v3094
      %v4305 = vunpack.c.l.b16 %v3095
      %v4306 = vunpack.c.h.b16 %v3095
      %v4307 = vunpack.c.l.b16 %v3096
      %v4308 = vunpack.c.h.b16 %v3096
      %v4309 = vunpack.c.l.b16 %v3097
      %v4310 = vunpack.c.h.b16 %v3097
      %v4311 = vunpack.c.l.b16 %v3098
      %v4312 = vunpack.c.h.b16 %v3098
      %v4313 = vunpack.c.l.b16 %v3099
      %v4314 = vunpack.c.h.b16 %v3099
      %v4315 = vunpack.c.l.b16 %v3100
      %v4316 = vunpack.c.h.b16 %v3100
      %v4317 = vunpack.c.l.b16 %v3101
      %v4318 = vunpack.c.h.b16 %v3101
      %v4319 = vunpack.c.l.b16 %v3102
      %v4320 = vunpack.c.h.b16 %v3102
      %v4321 = vunpack.c.l.b16 %v3103
      %v4322 = vunpack.c.h.b16 %v3103
      %v4323 = vunpack.c.l.b16 %v3104
      %v4324 = vunpack.c.h.b16 %v3104
      %v4325 = vunpack.c.l.b16 %v3105
      %v4326 = vunpack.c.h.b16 %v3105
      %v4327 = vunpack.c.l.b16 %v3106
      %v4328 = vunpack.c.h.b16 %v3106
      %v4329 = vunpack.c.l.b16 %v3107
      %v4330 = vunpack.c.h.b16 %v3107
      %v4331 = vunpack.c.l.b16 %v3108
      %v4332 = vunpack.c.h.b16 %v3108
      %v4333 = vunpack.c.l.b16 %v3109
      %v4334 = vunpack.c.h.b16 %v3109
      %v4335 = vunpack.c.l.b16 %v3110
      %v4336 = vunpack.c.h.b16 %v3110
      %v4337 = vunpack.c.l.b16 %v3111
      %v4338 = vunpack.c.h.b16 %v3111
      %v4339 = vunpack.c.l.b16 %v3112
      %v4340 = vunpack.c.h.b16 %v3112
      %v4341 = vunpack.c.l.b16 %v3113
      %v4342 = vunpack.c.h.b16 %v3113
      %v4343 = vunpack.c.l.b16 %v3114
      %v4344 = vunpack.c.h.b16 %v3114
      %v4345 = vunpack.c.l.b16 %v3115
      %v4346 = vunpack.c.h.b16 %v3115
      %v4347 = vunpack.c.l.b16 %v3116
      %v4348 = vunpack.c.h.b16 %v3116
      %v4349 = vunpack.c.l.b16 %v3117
      %v4350 = vunpack.c.h.b16 %v3117
      %v4351 = vunpack.c.l.b16 %v3118
      %v4352 = vunpack.c.h.b16 %v3118
      %v4353 = vunpack.c.l.b16 %v3119
      %v4354 = vunpack.c.h.b16 %v3119
      %v4355 = vunpack.c.l.b16 %v3120
      %v4356 = vunpack.c.h.b16 %v3120
      %v4357 = vunpack.c.l.b16 %v3121
      %v4358 = vunpack.c.h.b16 %v3121
      %v4359 = vunpack.c.l.b16 %v3122
      %v4360 = vunpack.c.h.b16 %v3122
      %v4361 = vunpack.c.l.b16 %v3123
      %v4362 = vunpack.c.h.b16 %v3123
      %v4363 = vunpack.c.l.b16 %v3124
      %v4364 = vunpack.c.h.b16 %v3124
      %v4365 = vunpack.c.l.b16 %v3125
      %v4366 = vunpack.c.h.b16 %v3125
      %v4367 = vunpack.c.l.b16 %v3126
      %v4368 = vunpack.c.h.b16 %v3126
      %v4369 = vunpack.c.l.b16 %v3127
      %v4370 = vunpack.c.h.b16 %v3127
      %v4371 = vunpack.c.l.b16 %v3128
      %v4372 = vunpack.c.h.b16 %v3128
      %v4373 = vunpack.c.l.b16 %v3129
      %v4374 = vunpack.c.h.b16 %v3129
      %v4375 = vunpack.c.l.b16 %v3130
      %v4376 = vunpack.c.h.b16 %v3130
      %v4377 = vunpack.c.l.b16 %v3131
      %v4378 = vunpack.c.h.b16 %v3131
      %v4379 = vunpack.c.l.b16 %v3132
      %v4380 = vunpack.c.h.b16 %v3132
      %v4381 = vunpack.c.l.b16 %v3133
      %v4382 = vunpack.c.h.b16 %v3133
      %v4383 = vunpack.c.l.b16 %v3134
      %v4384 = vunpack.c.h.b16 %v3134
      %v4385 = vunpack.c.l.b16 %v3135
      %v4386 = vunpack.c.h.b16 %v3135
      %v4387 = vunpack.c.l.b16 %v3136
      %v4388 = vunpack.c.h.b16 %v3136
      %v4389 = vunpack.c.l.b16 %v3137
      %v4390 = vunpack.c.h.b16 %v3137
      %v4391 = vunpack.c.l.b16 %v3138
      %v4392 = vunpack.c.h.b16 %v3138
      %v4393 = vunpack.c.l.b16 %v3139
      %v4394 = vunpack.c.h.b16 %v3139
      %v4395 = vunpack.c.l.b16 %v3140
      %v4396 = vunpack.c.h.b16 %v3140
      %v4397 = vunpack.c.l.b16 %v3141
      %v4398 = vunpack.c.h.b16 %v3141
      %v4399 = vunpack.c.l.b16 %v3142
      %v4400 = vunpack.c.h.b16 %v3142
      %v4401 = vunpack.c.l.b16 %v3143
      %v4402 = vunpack.c.h.b16 %v3143
      %v4403 = vunpack.c.l.b16 %v3144
      %v4404 = vunpack.c.h.b16 %v3144
      %v4405 = vunpack.c.l.b16 %v3145
      %v4406 = vunpack.c.h.b16 %v3145
      %v4407 = vunpack.c.l.b16 %v3146
      %v4408 = vunpack.c.h.b16 %v3146
      %v4409 = vunpack.c.l.b16 %v3147
      %v4410 = vunpack.c.h.b16 %v3147
      %v4411 = vunpack.c.l.b16 %v3148
      %v4412 = vunpack.c.h.b16 %v3148
      %v4413 = vunpack.c.l.b16 %v3149
      %v4414 = vunpack.c.h.b16 %v3149
      %v4415 = vunpack.c.l.b16 %v3150
      %v4416 = vunpack.c.h.b16 %v3150
      %v4417 = vunpack.c.l.b16 %v3151
      %v4418 = vunpack.c.h.b16 %v3151
      %v4419 = vunpack.c.l.b16 %v3152
      %v4420 = vunpack.c.h.b16 %v3152
      %v4421 = vunpack.c.l.b16 %v3153
      %v4422 = vunpack.c.h.b16 %v3153
      %v4423 = vunpack.c.l.b16 %v3154
      %v4424 = vunpack.c.h.b16 %v3154
      %v4425 = vunpack.c.l.b16 %v3155
      %v4426 = vunpack.c.h.b16 %v3155
      %v4427 = vunpack.c.l.b16 %v3156
      %v4428 = vunpack.c.h.b16 %v3156
      %v4429 = vunpack.c.l.b16 %v3157
      %v4430 = vunpack.c.h.b16 %v3157
      %v4431 = vunpack.c.l.b16 %v3158
      %v4432 = vunpack.c.h.b16 %v3158
      %v4433 = vunpack.c.l.b16 %v3159
      %v4434 = vunpack.c.h.b16 %v3159
      %v4435 = vunpack.c.l.b16 %v3160
      %v4436 = vunpack.c.h.b16 %v3160
      %v4437 = vunpack.c.l.b16 %v3161
      %v4438 = vunpack.c.h.b16 %v3161
      %v4439 = vunpack.c.l.b16 %v3162
      %v4440 = vunpack.c.h.b16 %v3162
      %v4441 = vunpack.c.l.b16 %v3163
      %v4442 = vunpack.c.h.b16 %v3163
      %v4443 = vunpack.c.l.b16 %v3164
      %v4444 = vunpack.c.h.b16 %v3164
      %v4445 = vunpack.c.l.b16 %v3165
      %v4446 = vunpack.c.h.b16 %v3165
      %v4447 = vunpack.c.l.b16 %v3166
      %v4448 = vunpack.c.h.b16 %v3166
      %v4449 = vunpack.c.l.b16 %v3167
      %v4450 = vunpack.c.h.b16 %v3167
      %v4451 = vunpack.c.l.b16 %v3168
      %v4452 = vunpack.c.h.b16 %v3168
      %v4453 = vunpack.c.l.b16 %v3169
      %v4454 = vunpack.c.h.b16 %v3169
      %v4455 = vunpack.c.l.b16 %v3170
      %v4456 = vunpack.c.h.b16 %v3170
      %v4457 = vunpack.c.l.b16 %v3171
      %v4458 = vunpack.c.h.b16 %v3171
      %v4459 = vunpack.c.l.b16 %v3172
      %v4460 = vunpack.c.h.b16 %v3172
      %v4461 = vunpack.c.l.b16 %v3173
      %v4462 = vunpack.c.h.b16 %v3173
      %v4463 = vunpack.c.l.b16 %v3174
      %v4464 = vunpack.c.h.b16 %v3174
      %v4465 = vunpack.c.l.b16 %v3175
      %v4466 = vunpack.c.h.b16 %v3175
      %v4467 = vunpack.c.l.b16 %v3176
      %v4468 = vunpack.c.h.b16 %v3176
      %v4469 = vunpack.c.l.b16 %v3177
      %v4470 = vunpack.c.h.b16 %v3177
      %v4471 = vunpack.c.l.b16 %v3178
      %v4472 = vunpack.c.h.b16 %v3178
      %v4473 = vunpack.c.l.b16 %v3179
      %v4474 = vunpack.c.h.b16 %v3179
      %v4475 = vunpack.c.l.b16 %v3180
      %v4476 = vunpack.c.h.b16 %v3180
      %v4477 = vunpack.c.l.b16 %v3181
      %v4478 = vunpack.c.h.b16 %v3181
      %v4479 = vunpack.c.l.b16 %v3182
      %v4480 = vunpack.c.h.b16 %v3182
      %v4481 = vunpack.c.l.b16 %v3183
      %v4482 = vunpack.c.h.b16 %v3183
      %v4483 = vunpack.c.l.b16 %v3184
      %v4484 = vunpack.c.h.b16 %v3184
      %v4485 = vunpack.c.l.b16 %v3185
      %v4486 = vunpack.c.h.b16 %v3185
      %v4487 = vunpack.c.l.b16 %v3186
      %v4488 = vunpack.c.h.b16 %v3186
      %v4489 = vunpack.c.l.b16 %v3187
      %v4490 = vunpack.c.h.b16 %v3187
      %v4491 = vunpack.c.l.b16 %v3188
      %v4492 = vunpack.c.h.b16 %v3188
      %v4493 = vunpack.c.l.b16 %v3189
      %v4494 = vunpack.c.h.b16 %v3189
      %v4495 = vunpack.c.l.b16 %v3190
      %v4496 = vunpack.c.h.b16 %v3190
      %v4497 = vunpack.c.l.b16 %v3191
      %v4498 = vunpack.c.h.b16 %v3191
      %v4499 = vunpack.c.l.b16 %v3192
      %v4500 = vunpack.c.h.b16 %v3192
      %v4501 = vunpack.c.l.b16 %v3193
      %v4502 = vunpack.c.h.b16 %v3193
      %v4503 = vunpack.c.l.b16 %v3194
      %v4504 = vunpack.c.h.b16 %v3194
      %v4505 = vunpack.c.l.b16 %v3195
      %v4506 = vunpack.c.h.b16 %v3195
      %v4507 = vunpack.c.l.b16 %v3196
      %v4508 = vunpack.c.h.b16 %v3196
      %v4509 = vunpack.c.l.b16 %v3197
      %v4510 = vunpack.c.h.b16 %v3197
      %v4511 = vunpack.c.l.b16 %v3198
      %v4512 = vunpack.c.h.b16 %v3198
      %v4513 = vunpack.c.l.b16 %v3199
      %v4514 = vunpack.c.h.b16 %v3199
      %v4515 = vunpack.c.l.b16 %v3200
      %v4516 = vunpack.c.h.b16 %v3200
      %v4517 = vunpack.c.l.b16 %v3201
      %v4518 = vunpack.c.h.b16 %v3201
      %v4519 = vunpack.c.l.b16 %v3202
      %v4520 = vunpack.c.h.b16 %v3202
      %v4521 = vunpack.c.l.b16 %v3203
      %v4522 = vunpack.c.h.b16 %v3203
      %v4523 = vunpack.c.l.b16 %v3204
      %v4524 = vunpack.c.h.b16 %v3204
      %v4525 = vunpack.c.l.b16 %v3205
      %v4526 = vunpack.c.h.b16 %v3205
      %v4527 = vunpack.c.l.b16 %v3206
      %v4528 = vunpack.c.h.b16 %v3206
      %v4529 = vunpack.c.l.b16 %v3207
      %v4530 = vunpack.c.h.b16 %v3207
      %v4531 = vunpack.c.l.b16 %v3208
      %v4532 = vunpack.c.h.b16 %v3208
      %v4533 = vunpack.c.l.b16 %v3209
      %v4534 = vunpack.c.h.b16 %v3209
      %v4535 = vpack.c.b16 %v4283, %v4279
      %v4536 = vpack.c.b16 %v4284, %v4280
      %v4537 = vpack.c.b16 %v4285, %v4281
      %v4538 = vpack.c.b16 %v4286, %v4282
      %v4539 = vpack.c.b16 %v4291, %v4287
      %v4540 = vpack.c.b16 %v4292, %v4288
      %v4541 = vpack.c.b16 %v4293, %v4289
      %v4542 = vpack.c.b16 %v4294, %v4290
      %v4543 = vpack.c.b16 %v4299, %v4295
      %v4544 = vpack.c.b16 %v4300, %v4296
      %v4545 = vpack.c.b16 %v4301, %v4297
      %v4546 = vpack.c.b16 %v4302, %v4298
      %v4547 = vpack.c.b16 %v4307, %v4303
      %v4548 = vpack.c.b16 %v4308, %v4304
      %v4549 = vpack.c.b16 %v4309, %v4305
      %v4550 = vpack.c.b16 %v4310, %v4306
      %v4551 = vpack.c.b16 %v4315, %v4311
      %v4552 = vpack.c.b16 %v4316, %v4312
      %v4553 = vpack.c.b16 %v4317, %v4313
      %v4554 = vpack.c.b16 %v4318, %v4314
      %v4555 = vpack.c.b16 %v4323, %v4319
      %v4556 = vpack.c.b16 %v4324, %v4320
      %v4557 = vpack.c.b16 %v4325, %v4321
      %v4558 = vpack.c.b16 %v4326, %v4322
      %v4559 = vpack.c.b16 %v4331, %v4327
      %v4560 = vpack.c.b16 %v4332, %v4328
      %v4561 = vpack.c.b16 %v4333, %v4329
      %v4562 = vpack.c.b16 %v4334, %v4330
      %v4563 = vpack.c.b16 %v4339, %v4335
      %v4564 = vpack.c.b16 %v4340, %v4336
      %v4565 = vpack.c.b16 %v4341, %v4337
      %v4566 = vpack.c.b16 %v4342, %v4338
      %v4567 = vpack.c.b16 %v4347, %v4343
      %v4568 = vpack.c.b16 %v4348, %v4344
      %v4569 = vpack.c.b16 %v4349, %v4345
      %v4570 = vpack.c.b16 %v4350, %v4346
      %v4571 = vpack.c.b16 %v4355, %v4351
      %v4572 = vpack.c.b16 %v4356, %v4352
      %v4573 = vpack.c.b16 %v4357, %v4353
      %v4574 = vpack.c.b16 %v4358, %v4354
      %v4575 = vpack.c.b16 %v4363, %v4359
      %v4576 = vpack.c.b16 %v4364, %v4360
      %v4577 = vpack.c.b16 %v4365, %v4361
      %v4578 = vpack.c.b16 %v4366, %v4362
      %v4579 = vpack.c.b16 %v4371, %v4367
      %v4580 = vpack.c.b16 %v4372, %v4368
      %v4581 = vpack.c.b16 %v4373, %v4369
      %v4582 = vpack.c.b16 %v4374, %v4370
      %v4583 = vpack.c.b16 %v4379, %v4375
      %v4584 = vpack.c.b16 %v4380, %v4376
      %v4585 = vpack.c.b16 %v4381, %v4377
      %v4586 = vpack.c.b16 %v4382, %v4378
      %v4587 = vpack.c.b16 %v4387, %v4383
      %v4588 = vpack.c.b16 %v4388, %v4384
      %v4589 = vpack.c.b16 %v4389, %v4385
      %v4590 = vpack.c.b16 %v4390, %v4386
      %v4591 = vpack.c.b16 %v4395, %v4391
      %v4592 = vpack.c.b16 %v4396, %v4392
      %v4593 = vpack.c.b16 %v4397, %v4393
      %v4594 = vpack.c.b16 %v4398, %v4394
      %v4595 = vpack.c.b16 %v4403, %v4399
      %v4596 = vpack.c.b16 %v4404, %v4400
      %v4597 = vpack.c.b16 %v4405, %v4401
      %v4598 = vpack.c.b16 %v4406, %v4402
      %v4599 = vpack.c.b16 %v4411, %v4407
      %v4600 = vpack.c.b16 %v4412, %v4408
      %v4601 = vpack.c.b16 %v4413, %v4409
      %v4602 = vpack.c.b16 %v4414, %v4410
      %v4603 = vpack.c.b16 %v4419, %v4415
      %v4604 = vpack.c.b16 %v4420, %v4416
      %v4605 = vpack.c.b16 %v4421, %v4417
      %v4606 = vpack.c.b16 %v4422, %v4418
      %v4607 = vpack.c.b16 %v4427, %v4423
      %v4608 = vpack.c.b16 %v4428, %v4424
      %v4609 = vpack.c.b16 %v4429, %v4425
      %v4610 = vpack.c.b16 %v4430, %v4426
      %v4611 = vpack.c.b16 %v4435, %v4431
      %v4612 = vpack.c.b16 %v4436, %v4432
      %v4613 = vpack.c.b16 %v4437, %v4433
      %v4614 = vpack.c.b16 %v4438, %v4434
      %v4615 = vpack.c.b16 %v4443, %v4439
      %v4616 = vpack.c.b16 %v4444, %v4440
      %v4617 = vpack.c.b16 %v4445, %v4441
      %v4618 = vpack.c.b16 %v4446, %v4442
      %v4619 = vpack.c.b16 %v4451, %v4447
      %v4620 = vpack.c.b16 %v4452, %v4448
      %v4621 = vpack.c.b16 %v4453, %v4449
      %v4622 = vpack.c.b16 %v4454, %v4450
      %v4623 = vpack.c.b16 %v4459, %v4455
      %v4624 = vpack.c.b16 %v4460, %v4456
      %v4625 = vpack.c.b16 %v4461, %v4457
      %v4626 = vpack.c.b16 %v4462, %v4458
      %v4627 = vpack.c.b16 %v4467, %v4463
      %v4628 = vpack.c.b16 %v4468, %v4464
      %v4629 = vpack.c.b16 %v4469, %v4465
      %v4630 = vpack.c.b16 %v4470, %v4466
      %v4631 = vpack.c.b16 %v4475, %v4471
      %v4632 = vpack.c.b16 %v4476, %v4472
      %v4633 = vpack.c.b16 %v4477, %v4473
      %v4634 = vpack.c.b16 %v4478, %v4474
      %v4635 = vpack.c.b16 %v4483, %v4479
      %v4636 = vpack.c.b16 %v4484, %v4480
      %v4637 = vpack.c.b16 %v4485, %v4481
      %v4638 = vpack.c.b16 %v4486, %v4482
      %v4639 = vpack.c.b16 %v4491, %v4487
      %v4640 = vpack.c.b16 %v4492, %v4488
      %v4641 = vpack.c.b16 %v4493, %v4489
      %v4642 = vpack.c.b16 %v4494, %v4490
      %v4643 = vpack.c.b16 %v4499, %v4495
      %v4644 = vpack.c.b16 %v4500, %v4496
      %v4645 = vpack.c.b16 %v4501, %v4497
      %v4646 = vpack.c.b16 %v4502, %v4498
      %v4647 = vpack.c.b16 %v4507, %v4503
      %v4648 = vpack.c.b16 %v4508, %v4504
      %v4649 = vpack.c.b16 %v4509, %v4505
      %v4650 = vpack.c.b16 %v4510, %v4506
      %v4651 = vpack.c.b16 %v4515, %v4511
      %v4652 = vpack.c.b16 %v4516, %v4512
      %v4653 = vpack.c.b16 %v4517, %v4513
      %v4654 = vpack.c.b16 %v4518, %v4514
      %v4655 = vpack.c.b16 %v4523, %v4519
      %v4656 = vpack.c.b16 %v4524, %v4520
      %v4657 = vpack.c.b16 %v4525, %v4521
      %v4658 = vpack.c.b16 %v4526, %v4522
      %v4659 = vpack.c.b16 %v4531, %v4527
      %v4660 = vpack.c.b16 %v4532, %v4528
      %v4661 = vpack.c.b16 %v4533, %v4529
      %v4662 = vpack.c.b16 %v4534, %v4530
      %4791 = vmatprep.subr.bf16.mxu0 %v4564
      %4792 = vmatpush1.bf16.msra.mxu0 %v4563
      %4793 = vmatprep.subr.bf16.mxu0 %v4560
      %4794 = vmatpush1.bf16.msra.mxu0 %v4559
      %4795 = vmatprep.subr.bf16.mxu0 %v4556
      %4796 = vmatpush1.bf16.msra.mxu0 %v4555
      %4797 = vmatprep.subr.bf16.mxu0 %v4552
      %4798 = vmatpush1.bf16.msra.mxu0 %v4551
      %4799 = vmatprep.subr.bf16.mxu0 %v4548
      %4800 = vmatpush1.bf16.msra.mxu0 %v4547
      %4801 = vmatprep.subr.bf16.mxu0 %v4544
      %4802 = vmatpush1.bf16.msra.mxu0 %v4543
      %4803 = vmatprep.subr.bf16.mxu0 %v4540
      %4804 = vmatpush1.bf16.msra.mxu0 %v4539
      %4805 = vmatprep.subr.bf16.mxu0 %v4536
      %4806 = vmatpush1.bf16.msra.mxu0 %v4535
      %4807 = vmatprep.subr.bf16.mxu0 %v4596
      %4808 = vmatpush2.bf16.msra.mxu0 %v4595
      %4809 = vmatprep.subr.bf16.mxu0 %v4592
      %4810 = vmatpush2.bf16.msra.mxu0 %v4591
      %4811 = vmatprep.subr.bf16.mxu0 %v4588
      %4812 = vmatpush2.bf16.msra.mxu0 %v4587
      %4813 = vmatprep.subr.bf16.mxu0 %v4584
      %4814 = vmatpush2.bf16.msra.mxu0 %v4583
      %4815 = vmatprep.subr.bf16.mxu0 %v4580
      %4816 = vmatpush2.bf16.msra.mxu0 %v4579
      %4817 = vmatprep.subr.bf16.mxu0 %v4576
      %4818 = vmatpush2.bf16.msra.mxu0 %v4575
      %4819 = vmatprep.subr.bf16.mxu0 %v4572
      %4820 = vmatpush2.bf16.msra.mxu0 %v4571
      %4821 = vmatprep.subr.bf16.mxu0 %v4568
      %4822 = vmatpush2.bf16.msra.mxu0 %v4567
      %4823 = vmatprep.mubr.bf16.mxu0 %v180
      %4824 = vmatmul.mubr.bf16.gmra.mxu0 %v179
      %v4825 = vpop.f32.mrf.mxu0
      %v4826 = vadd.f32 %v4057, %v4825
      %v4827 = vpop.f32.mrf.mxu0
      %v4828 = vadd.f32 %v4059, %v4827
      %v4829 = vpop.f32.mrf.mxu0
      %v4830 = vadd.f32 %v4061, %v4829
      %v4831 = vpop.f32.mrf.mxu0
      %v4832 = vadd.f32 %v4063, %v4831
      %4833 = vdwg.mxu0
      %4834 = vmatprep.subr.bf16.mxu0 %v4628
      %4835 = vmatpush1.bf16.msra.mxu0 %v4627
      %4836 = vmatprep.subr.bf16.mxu0 %v4624
      %4837 = vmatpush1.bf16.msra.mxu0 %v4623
      %4838 = vmatprep.subr.bf16.mxu0 %v4620
      %4839 = vmatpush1.bf16.msra.mxu0 %v4619
      %4840 = vmatprep.subr.bf16.mxu0 %v4616
      %4841 = vmatpush1.bf16.msra.mxu0 %v4615
      %4842 = vmatprep.subr.bf16.mxu0 %v4612
      %4843 = vmatpush1.bf16.msra.mxu0 %v4611
      %4844 = vmatprep.subr.bf16.mxu0 %v4608
      %4845 = vmatpush1.bf16.msra.mxu0 %v4607
      %4846 = vmatprep.subr.bf16.mxu0 %v4604
      %4847 = vmatpush1.bf16.msra.mxu0 %v4603
      %4848 = vmatprep.subr.bf16.mxu0 %v4600
      %4849 = vmatpush1.bf16.msra.mxu0 %v4599
      %4850 = vmatprep.subr.bf16.mxu0 %v4660
      %4851 = vmatpush2.bf16.msra.mxu0 %v4659
      %4852 = vmatprep.subr.bf16.mxu0 %v4656
      %4853 = vmatpush2.bf16.msra.mxu0 %v4655
      %4854 = vmatprep.subr.bf16.mxu0 %v4652
      %4855 = vmatpush2.bf16.msra.mxu0 %v4651
      %4856 = vmatprep.subr.bf16.mxu0 %v4648
      %4857 = vmatpush2.bf16.msra.mxu0 %v4647
      %4858 = vmatprep.subr.bf16.mxu0 %v4644
      %4859 = vmatpush2.bf16.msra.mxu0 %v4643
      %4860 = vmatprep.subr.bf16.mxu0 %v4640
      %4861 = vmatpush2.bf16.msra.mxu0 %v4639
      %4862 = vmatprep.subr.bf16.mxu0 %v4636
      %4863 = vmatpush2.bf16.msra.mxu0 %v4635
      %4864 = vmatprep.subr.bf16.mxu0 %v4632
      %4865 = vmatpush2.bf16.msra.mxu0 %v4631
      %4866 = vmatprep.mubr.bf16.mxu0 %v182
      %4867 = vmatmul.mubr.bf16.gmra.mxu0 %v181
      %v4868 = vpop.f32.mrf.mxu0
      %v4869 = vadd.f32 %v4826, %v4868
      %v4870 = vpop.f32.mrf.mxu0
      %v4871 = vadd.f32 %v4828, %v4870
      %v4872 = vpop.f32.mrf.mxu0
      %v4873 = vadd.f32 %v4830, %v4872
      %v4874 = vpop.f32.mrf.mxu0
      %v4875 = vadd.f32 %v4832, %v4874
      %4876 = vdwg.mxu0
      %4877 = vmatprep.subr.bf16.mxu0 %v4566
      %4878 = vmatpush1.bf16.msra.mxu0 %v4565
      %4879 = vmatprep.subr.bf16.mxu0 %v4562
      %4880 = vmatpush1.bf16.msra.mxu0 %v4561
      %4881 = vmatprep.subr.bf16.mxu0 %v4558
      %4882 = vmatpush1.bf16.msra.mxu0 %v4557
      %4883 = vmatprep.subr.bf16.mxu0 %v4554
      %4884 = vmatpush1.bf16.msra.mxu0 %v4553
      %4885 = vmatprep.subr.bf16.mxu0 %v4550
      %4886 = vmatpush1.bf16.msra.mxu0 %v4549
      %4887 = vmatprep.subr.bf16.mxu0 %v4546
      %4888 = vmatpush1.bf16.msra.mxu0 %v4545
      %4889 = vmatprep.subr.bf16.mxu0 %v4542
      %4890 = vmatpush1.bf16.msra.mxu0 %v4541
      %4891 = vmatprep.subr.bf16.mxu0 %v4538
      %4892 = vmatpush1.bf16.msra.mxu0 %v4537
      %4893 = vmatprep.subr.bf16.mxu0 %v4598
      %4894 = vmatpush2.bf16.msra.mxu0 %v4597
      %4895 = vmatprep.subr.bf16.mxu0 %v4594
      %4896 = vmatpush2.bf16.msra.mxu0 %v4593
      %4897 = vmatprep.subr.bf16.mxu0 %v4590
      %4898 = vmatpush2.bf16.msra.mxu0 %v4589
      %4899 = vmatprep.subr.bf16.mxu0 %v4586
      %4900 = vmatpush2.bf16.msra.mxu0 %v4585
      %4901 = vmatprep.subr.bf16.mxu0 %v4582
      %4902 = vmatpush2.bf16.msra.mxu0 %v4581
      %4903 = vmatprep.subr.bf16.mxu0 %v4578
      %4904 = vmatpush2.bf16.msra.mxu0 %v4577
      %4905 = vmatprep.subr.bf16.mxu0 %v4574
      %4906 = vmatpush2.bf16.msra.mxu0 %v4573
      %4907 = vmatprep.subr.bf16.mxu0 %v4570
      %4908 = vmatpush2.bf16.msra.mxu0 %v4569
      %4909 = vmatprep.mubr.bf16.mxu0 %v180
      %4910 = vmatmul.mubr.bf16.gmra.mxu0 %v179
      %v4911 = vpop.f32.mrf.mxu0
      %v4912 = vadd.f32 %v4143, %v4911
      %v4913 = vpop.f32.mrf.mxu0
      %v4914 = vadd.f32 %v4145, %v4913
      %v4915 = vpop.f32.mrf.mxu0
      %v4916 = vadd.f32 %v4147, %v4915
      %v4917 = vpop.f32.mrf.mxu0
      %v4918 = vadd.f32 %v4149, %v4917
      %4919 = vdwg.mxu0
      %4920 = vmatprep.subr.bf16.mxu0 %v4630
      %4921 = vmatpush1.bf16.msra.mxu0 %v4629
      %4922 = vmatprep.subr.bf16.mxu0 %v4626
      %4923 = vmatpush1.bf16.msra.mxu0 %v4625
      %4924 = vmatprep.subr.bf16.mxu0 %v4622
      %4925 = vmatpush1.bf16.msra.mxu0 %v4621
      %4926 = vmatprep.subr.bf16.mxu0 %v4618
      %4927 = vmatpush1.bf16.msra.mxu0 %v4617
      %4928 = vmatprep.subr.bf16.mxu0 %v4614
      %4929 = vmatpush1.bf16.msra.mxu0 %v4613
      %4930 = vmatprep.subr.bf16.mxu0 %v4610
      %4931 = vmatpush1.bf16.msra.mxu0 %v4609
      %4932 = vmatprep.subr.bf16.mxu0 %v4606
      %4933 = vmatpush1.bf16.msra.mxu0 %v4605
      %4934 = vmatprep.subr.bf16.mxu0 %v4602
      %4935 = vmatpush1.bf16.msra.mxu0 %v4601
      %4936 = vmatprep.subr.bf16.mxu0 %v4662
      %4937 = vmatpush2.bf16.msra.mxu0 %v4661
      %4938 = vmatprep.subr.bf16.mxu0 %v4658
      %4939 = vmatpush2.bf16.msra.mxu0 %v4657
      %4940 = vmatprep.subr.bf16.mxu0 %v4654
      %4941 = vmatpush2.bf16.msra.mxu0 %v4653
      %4942 = vmatprep.subr.bf16.mxu0 %v4650
      %4943 = vmatpush2.bf16.msra.mxu0 %v4649
      %4944 = vmatprep.subr.bf16.mxu0 %v4646
      %4945 = vmatpush2.bf16.msra.mxu0 %v4645
      %4946 = vmatprep.subr.bf16.mxu0 %v4642
      %4947 = vmatpush2.bf16.msra.mxu0 %v4641
      %4948 = vmatprep.subr.bf16.mxu0 %v4638
      %4949 = vmatpush2.bf16.msra.mxu0 %v4637
      %4950 = vmatprep.subr.bf16.mxu0 %v4634
      %4951 = vmatpush2.bf16.msra.mxu0 %v4633
      %4952 = vmatprep.mubr.bf16.mxu0 %v182
      %4953 = vmatmul.mubr.bf16.gmra.mxu0 %v181
      %v4954 = vpop.f32.mrf.mxu0
      %v4955 = vadd.f32 %v4912, %v4954
      %v4956 = vpop.f32.mrf.mxu0
      %v4957 = vadd.f32 %v4914, %v4956
      %v4958 = vpop.f32.mrf.mxu0
      %v4959 = vadd.f32 %v4916, %v4958
      %v4960 = vpop.f32.mrf.mxu0
      %v4961 = vadd.f32 %v4918, %v4960
      %4962 = vdwg.mxu0
      %s4963 = scalar_lea.vmem %s1, 5120
      %v4964 = vld [vmem:[%s4963] sm:$0xff]
      %v4965 = vld [vmem:[%s4963 + $0x8] sm:$0xff]
      %v4966 = vld [vmem:[%s4963 + $0x10] sm:$0xff]
      %v4967 = vld [vmem:[%s4963 + $0x18] sm:$0xff]
      %v4968 = vld [vmem:[%s4963 + $0x20] sm:$0xff]
      %v4969 = vld [vmem:[%s4963 + $0x28] sm:$0xff]
      %v4970 = vld [vmem:[%s4963 + $0x30] sm:$0xff]
      %v4971 = vld [vmem:[%s4963 + $0x38] sm:$0xff]
      %v4972 = vld [vmem:[%s4963 + $0x40] sm:$0xff]
      %v4973 = vld [vmem:[%s4963 + $0x48] sm:$0xff]
      %v4974 = vld [vmem:[%s4963 + $0x50] sm:$0xff]
      %v4975 = vld [vmem:[%s4963 + $0x58] sm:$0xff]
      %v4976 = vld [vmem:[%s4963 + $0x60] sm:$0xff]
      %v4977 = vld [vmem:[%s4963 + $0x68] sm:$0xff]
      %v4978 = vld [vmem:[%s4963 + $0x70] sm:$0xff]
      %v4979 = vld [vmem:[%s4963 + $0x78] sm:$0xff]
      %v4980 = vld [vmem:[%s4963 + $0x80] sm:$0xff]
      %v4981 = vld [vmem:[%s4963 + $0x88] sm:$0xff]
      %v4982 = vld [vmem:[%s4963 + $0x90] sm:$0xff]
      %v4983 = vld [vmem:[%s4963 + $0x98] sm:$0xff]
      %v4984 = vld [vmem:[%s4963 + $0xa0] sm:$0xff]
      %v4985 = vld [vmem:[%s4963 + $0xa8] sm:$0xff]
      %v4986 = vld [vmem:[%s4963 + $0xb0] sm:$0xff]
      %v4987 = vld [vmem:[%s4963 + $0xb8] sm:$0xff]
      %v4988 = vld [vmem:[%s4963 + $0xc0] sm:$0xff]
      %v4989 = vld [vmem:[%s4963 + $0xc8] sm:$0xff]
      %v4990 = vld [vmem:[%s4963 + $0xd0] sm:$0xff]
      %v4991 = vld [vmem:[%s4963 + $0xd8] sm:$0xff]
      %v4992 = vld [vmem:[%s4963 + $0xe0] sm:$0xff]
      %v4993 = vld [vmem:[%s4963 + $0xe8] sm:$0xff]
      %v4994 = vld [vmem:[%s4963 + $0xf0] sm:$0xff]
      %v4995 = vld [vmem:[%s4963 + $0xf8] sm:$0xff]
      %v4996 = vld [vmem:[%s4963 + $0x100] sm:$0xff]
      %v4997 = vld [vmem:[%s4963 + $0x108] sm:$0xff]
      %v4998 = vld [vmem:[%s4963 + $0x110] sm:$0xff]
      %v4999 = vld [vmem:[%s4963 + $0x118] sm:$0xff]
      %v5000 = vld [vmem:[%s4963 + $0x120] sm:$0xff]
      %v5001 = vld [vmem:[%s4963 + $0x128] sm:$0xff]
      %v5002 = vld [vmem:[%s4963 + $0x130] sm:$0xff]
      %v5003 = vld [vmem:[%s4963 + $0x138] sm:$0xff]
      %v5004 = vld [vmem:[%s4963 + $0x140] sm:$0xff]
      %v5005 = vld [vmem:[%s4963 + $0x148] sm:$0xff]
      %v5006 = vld [vmem:[%s4963 + $0x150] sm:$0xff]
      %v5007 = vld [vmem:[%s4963 + $0x158] sm:$0xff]
      %v5008 = vld [vmem:[%s4963 + $0x160] sm:$0xff]
      %v5009 = vld [vmem:[%s4963 + $0x168] sm:$0xff]
      %v5010 = vld [vmem:[%s4963 + $0x170] sm:$0xff]
      %v5011 = vld [vmem:[%s4963 + $0x178] sm:$0xff]
      %v5012 = vld [vmem:[%s4963 + $0x180] sm:$0xff]
      %v5013 = vld [vmem:[%s4963 + $0x188] sm:$0xff]
      %v5014 = vld [vmem:[%s4963 + $0x190] sm:$0xff]
      %v5015 = vld [vmem:[%s4963 + $0x198] sm:$0xff]
      %v5016 = vld [vmem:[%s4963 + $0x1a0] sm:$0xff]
      %v5017 = vld [vmem:[%s4963 + $0x1a8] sm:$0xff]
      %v5018 = vld [vmem:[%s4963 + $0x1b0] sm:$0xff]
      %v5019 = vld [vmem:[%s4963 + $0x1b8] sm:$0xff]
      %v5020 = vld [vmem:[%s4963 + $0x1c0] sm:$0xff]
      %v5021 = vld [vmem:[%s4963 + $0x1c8] sm:$0xff]
      %v5022 = vld [vmem:[%s4963 + $0x1d0] sm:$0xff]
      %v5023 = vld [vmem:[%s4963 + $0x1d8] sm:$0xff]
      %v5024 = vld [vmem:[%s4963 + $0x1e0] sm:$0xff]
      %v5025 = vld [vmem:[%s4963 + $0x1e8] sm:$0xff]
      %v5026 = vld [vmem:[%s4963 + $0x1f0] sm:$0xff]
      %v5027 = vld [vmem:[%s4963 + $0x1f8] sm:$0xff]
      %v5028 = vld [vmem:[%s4963 + $0x200] sm:$0xff]
      %v5029 = vld [vmem:[%s4963 + $0x208] sm:$0xff]
      %v5030 = vld [vmem:[%s4963 + $0x210] sm:$0xff]
      %v5031 = vld [vmem:[%s4963 + $0x218] sm:$0xff]
      %v5032 = vld [vmem:[%s4963 + $0x220] sm:$0xff]
      %v5033 = vld [vmem:[%s4963 + $0x228] sm:$0xff]
      %v5034 = vld [vmem:[%s4963 + $0x230] sm:$0xff]
      %v5035 = vld [vmem:[%s4963 + $0x238] sm:$0xff]
      %v5036 = vld [vmem:[%s4963 + $0x240] sm:$0xff]
      %v5037 = vld [vmem:[%s4963 + $0x248] sm:$0xff]
      %v5038 = vld [vmem:[%s4963 + $0x250] sm:$0xff]
      %v5039 = vld [vmem:[%s4963 + $0x258] sm:$0xff]
      %v5040 = vld [vmem:[%s4963 + $0x260] sm:$0xff]
      %v5041 = vld [vmem:[%s4963 + $0x268] sm:$0xff]
      %v5042 = vld [vmem:[%s4963 + $0x270] sm:$0xff]
      %v5043 = vld [vmem:[%s4963 + $0x278] sm:$0xff]
      %v5044 = vld [vmem:[%s4963 + $0x280] sm:$0xff]
      %v5045 = vld [vmem:[%s4963 + $0x288] sm:$0xff]
      %v5046 = vld [vmem:[%s4963 + $0x290] sm:$0xff]
      %v5047 = vld [vmem:[%s4963 + $0x298] sm:$0xff]
      %v5048 = vld [vmem:[%s4963 + $0x2a0] sm:$0xff]
      %v5049 = vld [vmem:[%s4963 + $0x2a8] sm:$0xff]
      %v5050 = vld [vmem:[%s4963 + $0x2b0] sm:$0xff]
      %v5051 = vld [vmem:[%s4963 + $0x2b8] sm:$0xff]
      %v5052 = vld [vmem:[%s4963 + $0x2c0] sm:$0xff]
      %v5053 = vld [vmem:[%s4963 + $0x2c8] sm:$0xff]
      %v5054 = vld [vmem:[%s4963 + $0x2d0] sm:$0xff]
      %v5055 = vld [vmem:[%s4963 + $0x2d8] sm:$0xff]
      %v5056 = vld [vmem:[%s4963 + $0x2e0] sm:$0xff]
      %v5057 = vld [vmem:[%s4963 + $0x2e8] sm:$0xff]
      %v5058 = vld [vmem:[%s4963 + $0x2f0] sm:$0xff]
      %v5059 = vld [vmem:[%s4963 + $0x2f8] sm:$0xff]
      %v5060 = vld [vmem:[%s4963 + $0x300] sm:$0xff]
      %v5061 = vld [vmem:[%s4963 + $0x308] sm:$0xff]
      %v5062 = vld [vmem:[%s4963 + $0x310] sm:$0xff]
      %v5063 = vld [vmem:[%s4963 + $0x318] sm:$0xff]
      %v5064 = vld [vmem:[%s4963 + $0x320] sm:$0xff]
      %v5065 = vld [vmem:[%s4963 + $0x328] sm:$0xff]
      %v5066 = vld [vmem:[%s4963 + $0x330] sm:$0xff]
      %v5067 = vld [vmem:[%s4963 + $0x338] sm:$0xff]
      %v5068 = vld [vmem:[%s4963 + $0x340] sm:$0xff]
      %v5069 = vld [vmem:[%s4963 + $0x348] sm:$0xff]
      %v5070 = vld [vmem:[%s4963 + $0x350] sm:$0xff]
      %v5071 = vld [vmem:[%s4963 + $0x358] sm:$0xff]
      %v5072 = vld [vmem:[%s4963 + $0x360] sm:$0xff]
      %v5073 = vld [vmem:[%s4963 + $0x368] sm:$0xff]
      %v5074 = vld [vmem:[%s4963 + $0x370] sm:$0xff]
      %v5075 = vld [vmem:[%s4963 + $0x378] sm:$0xff]
      %v5076 = vld [vmem:[%s4963 + $0x380] sm:$0xff]
      %v5077 = vld [vmem:[%s4963 + $0x388] sm:$0xff]
      %v5078 = vld [vmem:[%s4963 + $0x390] sm:$0xff]
      %v5079 = vld [vmem:[%s4963 + $0x398] sm:$0xff]
      %v5080 = vld [vmem:[%s4963 + $0x3a0] sm:$0xff]
      %v5081 = vld [vmem:[%s4963 + $0x3a8] sm:$0xff]
      %v5082 = vld [vmem:[%s4963 + $0x3b0] sm:$0xff]
      %v5083 = vld [vmem:[%s4963 + $0x3b8] sm:$0xff]
      %v5084 = vld [vmem:[%s4963 + $0x3c0] sm:$0xff]
      %v5085 = vld [vmem:[%s4963 + $0x3c8] sm:$0xff]
      %v5086 = vld [vmem:[%s4963 + $0x3d0] sm:$0xff]
      %v5087 = vld [vmem:[%s4963 + $0x3d8] sm:$0xff]
      %v5088 = vld [vmem:[%s4963 + $0x3e0] sm:$0xff]
      %v5089 = vld [vmem:[%s4963 + $0x3e8] sm:$0xff]
      %v5090 = vld [vmem:[%s4963 + $0x3f0] sm:$0xff]
      %v5091 = vld [vmem:[%s4963 + $0x3f8] sm:$0xff]
      %v5220 = vunpack.c.l.b16 %v4964
      %v5221 = vunpack.c.h.b16 %v4964
      %v5222 = vunpack.c.l.b16 %v4965
      %v5223 = vunpack.c.h.b16 %v4965
      %v5224 = vunpack.c.l.b16 %v4966
      %v5225 = vunpack.c.h.b16 %v4966
      %v5226 = vunpack.c.l.b16 %v4967
      %v5227 = vunpack.c.h.b16 %v4967
      %v5228 = vunpack.c.l.b16 %v4968
      %v5229 = vunpack.c.h.b16 %v4968
      %v5230 = vunpack.c.l.b16 %v4969
      %v5231 = vunpack.c.h.b16 %v4969
      %v5232 = vunpack.c.l.b16 %v4970
      %v5233 = vunpack.c.h.b16 %v4970
      %v5234 = vunpack.c.l.b16 %v4971
      %v5235 = vunpack.c.h.b16 %v4971
      %v5236 = vunpack.c.l.b16 %v4972
      %v5237 = vunpack.c.h.b16 %v4972
      %v5238 = vunpack.c.l.b16 %v4973
      %v5239 = vunpack.c.h.b16 %v4973
      %v5240 = vunpack.c.l.b16 %v4974
      %v5241 = vunpack.c.h.b16 %v4974
      %v5242 = vunpack.c.l.b16 %v4975
      %v5243 = vunpack.c.h.b16 %v4975
      %v5244 = vunpack.c.l.b16 %v4976
      %v5245 = vunpack.c.h.b16 %v4976
      %v5246 = vunpack.c.l.b16 %v4977
      %v5247 = vunpack.c.h.b16 %v4977
      %v5248 = vunpack.c.l.b16 %v4978
      %v5249 = vunpack.c.h.b16 %v4978
      %v5250 = vunpack.c.l.b16 %v4979
      %v5251 = vunpack.c.h.b16 %v4979
      %v5252 = vunpack.c.l.b16 %v4980
      %v5253 = vunpack.c.h.b16 %v4980
      %v5254 = vunpack.c.l.b16 %v4981
      %v5255 = vunpack.c.h.b16 %v4981
      %v5256 = vunpack.c.l.b16 %v4982
      %v5257 = vunpack.c.h.b16 %v4982
      %v5258 = vunpack.c.l.b16 %v4983
      %v5259 = vunpack.c.h.b16 %v4983
      %v5260 = vunpack.c.l.b16 %v4984
      %v5261 = vunpack.c.h.b16 %v4984
      %v5262 = vunpack.c.l.b16 %v4985
      %v5263 = vunpack.c.h.b16 %v4985
      %v5264 = vunpack.c.l.b16 %v4986
      %v5265 = vunpack.c.h.b16 %v4986
      %v5266 = vunpack.c.l.b16 %v4987
      %v5267 = vunpack.c.h.b16 %v4987
      %v5268 = vunpack.c.l.b16 %v4988
      %v5269 = vunpack.c.h.b16 %v4988
      %v5270 = vunpack.c.l.b16 %v4989
      %v5271 = vunpack.c.h.b16 %v4989
      %v5272 = vunpack.c.l.b16 %v4990
      %v5273 = vunpack.c.h.b16 %v4990
      %v5274 = vunpack.c.l.b16 %v4991
      %v5275 = vunpack.c.h.b16 %v4991
      %v5276 = vunpack.c.l.b16 %v4992
      %v5277 = vunpack.c.h.b16 %v4992
      %v5278 = vunpack.c.l.b16 %v4993
      %v5279 = vunpack.c.h.b16 %v4993
      %v5280 = vunpack.c.l.b16 %v4994
      %v5281 = vunpack.c.h.b16 %v4994
      %v5282 = vunpack.c.l.b16 %v4995
      %v5283 = vunpack.c.h.b16 %v4995
      %v5284 = vunpack.c.l.b16 %v4996
      %v5285 = vunpack.c.h.b16 %v4996
      %v5286 = vunpack.c.l.b16 %v4997
      %v5287 = vunpack.c.h.b16 %v4997
      %v5288 = vunpack.c.l.b16 %v4998
      %v5289 = vunpack.c.h.b16 %v4998
      %v5290 = vunpack.c.l.b16 %v4999
      %v5291 = vunpack.c.h.b16 %v4999
      %v5292 = vunpack.c.l.b16 %v5000
      %v5293 = vunpack.c.h.b16 %v5000
      %v5294 = vunpack.c.l.b16 %v5001
      %v5295 = vunpack.c.h.b16 %v5001
      %v5296 = vunpack.c.l.b16 %v5002
      %v5297 = vunpack.c.h.b16 %v5002
      %v5298 = vunpack.c.l.b16 %v5003
      %v5299 = vunpack.c.h.b16 %v5003
      %v5300 = vunpack.c.l.b16 %v5004
      %v5301 = vunpack.c.h.b16 %v5004
      %v5302 = vunpack.c.l.b16 %v5005
      %v5303 = vunpack.c.h.b16 %v5005
      %v5304 = vunpack.c.l.b16 %v5006
      %v5305 = vunpack.c.h.b16 %v5006
      %v5306 = vunpack.c.l.b16 %v5007
      %v5307 = vunpack.c.h.b16 %v5007
      %v5308 = vunpack.c.l.b16 %v5008
      %v5309 = vunpack.c.h.b16 %v5008
      %v5310 = vunpack.c.l.b16 %v5009
      %v5311 = vunpack.c.h.b16 %v5009
      %v5312 = vunpack.c.l.b16 %v5010
      %v5313 = vunpack.c.h.b16 %v5010
      %v5314 = vunpack.c.l.b16 %v5011
      %v5315 = vunpack.c.h.b16 %v5011
      %v5316 = vunpack.c.l.b16 %v5012
      %v5317 = vunpack.c.h.b16 %v5012
      %v5318 = vunpack.c.l.b16 %v5013
      %v5319 = vunpack.c.h.b16 %v5013
      %v5320 = vunpack.c.l.b16 %v5014
      %v5321 = vunpack.c.h.b16 %v5014
      %v5322 = vunpack.c.l.b16 %v5015
      %v5323 = vunpack.c.h.b16 %v5015
      %v5324 = vunpack.c.l.b16 %v5016
      %v5325 = vunpack.c.h.b16 %v5016
      %v5326 = vunpack.c.l.b16 %v5017
      %v5327 = vunpack.c.h.b16 %v5017
      %v5328 = vunpack.c.l.b16 %v5018
      %v5329 = vunpack.c.h.b16 %v5018
      %v5330 = vunpack.c.l.b16 %v5019
      %v5331 = vunpack.c.h.b16 %v5019
      %v5332 = vunpack.c.l.b16 %v5020
      %v5333 = vunpack.c.h.b16 %v5020
      %v5334 = vunpack.c.l.b16 %v5021
      %v5335 = vunpack.c.h.b16 %v5021
      %v5336 = vunpack.c.l.b16 %v5022
      %v5337 = vunpack.c.h.b16 %v5022
      %v5338 = vunpack.c.l.b16 %v5023
      %v5339 = vunpack.c.h.b16 %v5023
      %v5340 = vunpack.c.l.b16 %v5024
      %v5341 = vunpack.c.h.b16 %v5024
      %v5342 = vunpack.c.l.b16 %v5025
      %v5343 = vunpack.c.h.b16 %v5025
      %v5344 = vunpack.c.l.b16 %v5026
      %v5345 = vunpack.c.h.b16 %v5026
      %v5346 = vunpack.c.l.b16 %v5027
      %v5347 = vunpack.c.h.b16 %v5027
      %v5348 = vunpack.c.l.b16 %v5028
      %v5349 = vunpack.c.h.b16 %v5028
      %v5350 = vunpack.c.l.b16 %v5029
      %v5351 = vunpack.c.h.b16 %v5029
      %v5352 = vunpack.c.l.b16 %v5030
      %v5353 = vunpack.c.h.b16 %v5030
      %v5354 = vunpack.c.l.b16 %v5031
      %v5355 = vunpack.c.h.b16 %v5031
      %v5356 = vunpack.c.l.b16 %v5032
      %v5357 = vunpack.c.h.b16 %v5032
      %v5358 = vunpack.c.l.b16 %v5033
      %v5359 = vunpack.c.h.b16 %v5033
      %v5360 = vunpack.c.l.b16 %v5034
      %v5361 = vunpack.c.h.b16 %v5034
      %v5362 = vunpack.c.l.b16 %v5035
      %v5363 = vunpack.c.h.b16 %v5035
      %v5364 = vunpack.c.l.b16 %v5036
      %v5365 = vunpack.c.h.b16 %v5036
      %v5366 = vunpack.c.l.b16 %v5037
      %v5367 = vunpack.c.h.b16 %v5037
      %v5368 = vunpack.c.l.b16 %v5038
      %v5369 = vunpack.c.h.b16 %v5038
      %v5370 = vunpack.c.l.b16 %v5039
      %v5371 = vunpack.c.h.b16 %v5039
      %v5372 = vunpack.c.l.b16 %v5040
      %v5373 = vunpack.c.h.b16 %v5040
      %v5374 = vunpack.c.l.b16 %v5041
      %v5375 = vunpack.c.h.b16 %v5041
      %v5376 = vunpack.c.l.b16 %v5042
      %v5377 = vunpack.c.h.b16 %v5042
      %v5378 = vunpack.c.l.b16 %v5043
      %v5379 = vunpack.c.h.b16 %v5043
      %v5380 = vunpack.c.l.b16 %v5044
      %v5381 = vunpack.c.h.b16 %v5044
      %v5382 = vunpack.c.l.b16 %v5045
      %v5383 = vunpack.c.h.b16 %v5045
      %v5384 = vunpack.c.l.b16 %v5046
      %v5385 = vunpack.c.h.b16 %v5046
      %v5386 = vunpack.c.l.b16 %v5047
      %v5387 = vunpack.c.h.b16 %v5047
      %v5388 = vunpack.c.l.b16 %v5048
      %v5389 = vunpack.c.h.b16 %v5048
      %v5390 = vunpack.c.l.b16 %v5049
      %v5391 = vunpack.c.h.b16 %v5049
      %v5392 = vunpack.c.l.b16 %v5050
      %v5393 = vunpack.c.h.b16 %v5050
      %v5394 = vunpack.c.l.b16 %v5051
      %v5395 = vunpack.c.h.b16 %v5051
      %v5396 = vunpack.c.l.b16 %v5052
      %v5397 = vunpack.c.h.b16 %v5052
      %v5398 = vunpack.c.l.b16 %v5053
      %v5399 = vunpack.c.h.b16 %v5053
      %v5400 = vunpack.c.l.b16 %v5054
      %v5401 = vunpack.c.h.b16 %v5054
      %v5402 = vunpack.c.l.b16 %v5055
      %v5403 = vunpack.c.h.b16 %v5055
      %v5404 = vunpack.c.l.b16 %v5056
      %v5405 = vunpack.c.h.b16 %v5056
      %v5406 = vunpack.c.l.b16 %v5057
      %v5407 = vunpack.c.h.b16 %v5057
      %v5408 = vunpack.c.l.b16 %v5058
      %v5409 = vunpack.c.h.b16 %v5058
      %v5410 = vunpack.c.l.b16 %v5059
      %v5411 = vunpack.c.h.b16 %v5059
      %v5412 = vunpack.c.l.b16 %v5060
      %v5413 = vunpack.c.h.b16 %v5060
      %v5414 = vunpack.c.l.b16 %v5061
      %v5415 = vunpack.c.h.b16 %v5061
      %v5416 = vunpack.c.l.b16 %v5062
      %v5417 = vunpack.c.h.b16 %v5062
      %v5418 = vunpack.c.l.b16 %v5063
      %v5419 = vunpack.c.h.b16 %v5063
      %v5420 = vunpack.c.l.b16 %v5064
      %v5421 = vunpack.c.h.b16 %v5064
      %v5422 = vunpack.c.l.b16 %v5065
      %v5423 = vunpack.c.h.b16 %v5065
      %v5424 = vunpack.c.l.b16 %v5066
      %v5425 = vunpack.c.h.b16 %v5066
      %v5426 = vunpack.c.l.b16 %v5067
      %v5427 = vunpack.c.h.b16 %v5067
      %v5428 = vunpack.c.l.b16 %v5068
      %v5429 = vunpack.c.h.b16 %v5068
      %v5430 = vunpack.c.l.b16 %v5069
      %v5431 = vunpack.c.h.b16 %v5069
      %v5432 = vunpack.c.l.b16 %v5070
      %v5433 = vunpack.c.h.b16 %v5070
      %v5434 = vunpack.c.l.b16 %v5071
      %v5435 = vunpack.c.h.b16 %v5071
      %v5436 = vunpack.c.l.b16 %v5072
      %v5437 = vunpack.c.h.b16 %v5072
      %v5438 = vunpack.c.l.b16 %v5073
      %v5439 = vunpack.c.h.b16 %v5073
      %v5440 = vunpack.c.l.b16 %v5074
      %v5441 = vunpack.c.h.b16 %v5074
      %v5442 = vunpack.c.l.b16 %v5075
      %v5443 = vunpack.c.h.b16 %v5075
      %v5444 = vunpack.c.l.b16 %v5076
      %v5445 = vunpack.c.h.b16 %v5076
      %v5446 = vunpack.c.l.b16 %v5077
      %v5447 = vunpack.c.h.b16 %v5077
      %v5448 = vunpack.c.l.b16 %v5078
      %v5449 = vunpack.c.h.b16 %v5078
      %v5450 = vunpack.c.l.b16 %v5079
      %v5451 = vunpack.c.h.b16 %v5079
      %v5452 = vunpack.c.l.b16 %v5080
      %v5453 = vunpack.c.h.b16 %v5080
      %v5454 = vunpack.c.l.b16 %v5081
      %v5455 = vunpack.c.h.b16 %v5081
      %v5456 = vunpack.c.l.b16 %v5082
      %v5457 = vunpack.c.h.b16 %v5082
      %v5458 = vunpack.c.l.b16 %v5083
      %v5459 = vunpack.c.h.b16 %v5083
      %v5460 = vunpack.c.l.b16 %v5084
      %v5461 = vunpack.c.h.b16 %v5084
      %v5462 = vunpack.c.l.b16 %v5085
      %v5463 = vunpack.c.h.b16 %v5085
      %v5464 = vunpack.c.l.b16 %v5086
      %v5465 = vunpack.c.h.b16 %v5086
      %v5466 = vunpack.c.l.b16 %v5087
      %v5467 = vunpack.c.h.b16 %v5087
      %v5468 = vunpack.c.l.b16 %v5088
      %v5469 = vunpack.c.h.b16 %v5088
      %v5470 = vunpack.c.l.b16 %v5089
      %v5471 = vunpack.c.h.b16 %v5089
      %v5472 = vunpack.c.l.b16 %v5090
      %v5473 = vunpack.c.h.b16 %v5090
      %v5474 = vunpack.c.l.b16 %v5091
      %v5475 = vunpack.c.h.b16 %v5091
      %v5476 = vpack.c.b16 %v5224, %v5220
      %v5477 = vpack.c.b16 %v5225, %v5221
      %v5478 = vpack.c.b16 %v5226, %v5222
      %v5479 = vpack.c.b16 %v5227, %v5223
      %v5480 = vpack.c.b16 %v5232, %v5228
      %v5481 = vpack.c.b16 %v5233, %v5229
      %v5482 = vpack.c.b16 %v5234, %v5230
      %v5483 = vpack.c.b16 %v5235, %v5231
      %v5484 = vpack.c.b16 %v5240, %v5236
      %v5485 = vpack.c.b16 %v5241, %v5237
      %v5486 = vpack.c.b16 %v5242, %v5238
      %v5487 = vpack.c.b16 %v5243, %v5239
      %v5488 = vpack.c.b16 %v5248, %v5244
      %v5489 = vpack.c.b16 %v5249, %v5245
      %v5490 = vpack.c.b16 %v5250, %v5246
      %v5491 = vpack.c.b16 %v5251, %v5247
      %v5492 = vpack.c.b16 %v5256, %v5252
      %v5493 = vpack.c.b16 %v5257, %v5253
      %v5494 = vpack.c.b16 %v5258, %v5254
      %v5495 = vpack.c.b16 %v5259, %v5255
      %v5496 = vpack.c.b16 %v5264, %v5260
      %v5497 = vpack.c.b16 %v5265, %v5261
      %v5498 = vpack.c.b16 %v5266, %v5262
      %v5499 = vpack.c.b16 %v5267, %v5263
      %v5500 = vpack.c.b16 %v5272, %v5268
      %v5501 = vpack.c.b16 %v5273, %v5269
      %v5502 = vpack.c.b16 %v5274, %v5270
      %v5503 = vpack.c.b16 %v5275, %v5271
      %v5504 = vpack.c.b16 %v5280, %v5276
      %v5505 = vpack.c.b16 %v5281, %v5277
      %v5506 = vpack.c.b16 %v5282, %v5278
      %v5507 = vpack.c.b16 %v5283, %v5279
      %v5508 = vpack.c.b16 %v5288, %v5284
      %v5509 = vpack.c.b16 %v5289, %v5285
      %v5510 = vpack.c.b16 %v5290, %v5286
      %v5511 = vpack.c.b16 %v5291, %v5287
      %v5512 = vpack.c.b16 %v5296, %v5292
      %v5513 = vpack.c.b16 %v5297, %v5293
      %v5514 = vpack.c.b16 %v5298, %v5294
      %v5515 = vpack.c.b16 %v5299, %v5295
      %v5516 = vpack.c.b16 %v5304, %v5300
      %v5517 = vpack.c.b16 %v5305, %v5301
      %v5518 = vpack.c.b16 %v5306, %v5302
      %v5519 = vpack.c.b16 %v5307, %v5303
      %v5520 = vpack.c.b16 %v5312, %v5308
      %v5521 = vpack.c.b16 %v5313, %v5309
      %v5522 = vpack.c.b16 %v5314, %v5310
      %v5523 = vpack.c.b16 %v5315, %v5311
      %v5524 = vpack.c.b16 %v5320, %v5316
      %v5525 = vpack.c.b16 %v5321, %v5317
      %v5526 = vpack.c.b16 %v5322, %v5318
      %v5527 = vpack.c.b16 %v5323, %v5319
      %v5528 = vpack.c.b16 %v5328, %v5324
      %v5529 = vpack.c.b16 %v5329, %v5325
      %v5530 = vpack.c.b16 %v5330, %v5326
      %v5531 = vpack.c.b16 %v5331, %v5327
      %v5532 = vpack.c.b16 %v5336, %v5332
      %v5533 = vpack.c.b16 %v5337, %v5333
      %v5534 = vpack.c.b16 %v5338, %v5334
      %v5535 = vpack.c.b16 %v5339, %v5335
      %v5536 = vpack.c.b16 %v5344, %v5340
      %v5537 = vpack.c.b16 %v5345, %v5341
      %v5538 = vpack.c.b16 %v5346, %v5342
      %v5539 = vpack.c.b16 %v5347, %v5343
      %v5540 = vpack.c.b16 %v5352, %v5348
      %v5541 = vpack.c.b16 %v5353, %v5349
      %v5542 = vpack.c.b16 %v5354, %v5350
      %v5543 = vpack.c.b16 %v5355, %v5351
      %v5544 = vpack.c.b16 %v5360, %v5356
      %v5545 = vpack.c.b16 %v5361, %v5357
      %v5546 = vpack.c.b16 %v5362, %v5358
      %v5547 = vpack.c.b16 %v5363, %v5359
      %v5548 = vpack.c.b16 %v5368, %v5364
      %v5549 = vpack.c.b16 %v5369, %v5365
      %v5550 = vpack.c.b16 %v5370, %v5366
      %v5551 = vpack.c.b16 %v5371, %v5367
      %v5552 = vpack.c.b16 %v5376, %v5372
      %v5553 = vpack.c.b16 %v5377, %v5373
      %v5554 = vpack.c.b16 %v5378, %v5374
      %v5555 = vpack.c.b16 %v5379, %v5375
      %v5556 = vpack.c.b16 %v5384, %v5380
      %v5557 = vpack.c.b16 %v5385, %v5381
      %v5558 = vpack.c.b16 %v5386, %v5382
      %v5559 = vpack.c.b16 %v5387, %v5383
      %v5560 = vpack.c.b16 %v5392, %v5388
      %v5561 = vpack.c.b16 %v5393, %v5389
      %v5562 = vpack.c.b16 %v5394, %v5390
      %v5563 = vpack.c.b16 %v5395, %v5391
      %v5564 = vpack.c.b16 %v5400, %v5396
      %v5565 = vpack.c.b16 %v5401, %v5397
      %v5566 = vpack.c.b16 %v5402, %v5398
      %v5567 = vpack.c.b16 %v5403, %v5399
      %v5568 = vpack.c.b16 %v5408, %v5404
      %v5569 = vpack.c.b16 %v5409, %v5405
      %v5570 = vpack.c.b16 %v5410, %v5406
      %v5571 = vpack.c.b16 %v5411, %v5407
      %v5572 = vpack.c.b16 %v5416, %v5412
      %v5573 = vpack.c.b16 %v5417, %v5413
      %v5574 = vpack.c.b16 %v5418, %v5414
      %v5575 = vpack.c.b16 %v5419, %v5415
      %v5576 = vpack.c.b16 %v5424, %v5420
      %v5577 = vpack.c.b16 %v5425, %v5421
      %v5578 = vpack.c.b16 %v5426, %v5422
      %v5579 = vpack.c.b16 %v5427, %v5423
      %v5580 = vpack.c.b16 %v5432, %v5428
      %v5581 = vpack.c.b16 %v5433, %v5429
      %v5582 = vpack.c.b16 %v5434, %v5430
      %v5583 = vpack.c.b16 %v5435, %v5431
      %v5584 = vpack.c.b16 %v5440, %v5436
      %v5585 = vpack.c.b16 %v5441, %v5437
      %v5586 = vpack.c.b16 %v5442, %v5438
      %v5587 = vpack.c.b16 %v5443, %v5439
      %v5588 = vpack.c.b16 %v5448, %v5444
      %v5589 = vpack.c.b16 %v5449, %v5445
      %v5590 = vpack.c.b16 %v5450, %v5446
      %v5591 = vpack.c.b16 %v5451, %v5447
      %v5592 = vpack.c.b16 %v5456, %v5452
      %v5593 = vpack.c.b16 %v5457, %v5453
      %v5594 = vpack.c.b16 %v5458, %v5454
      %v5595 = vpack.c.b16 %v5459, %v5455
      %v5596 = vpack.c.b16 %v5464, %v5460
      %v5597 = vpack.c.b16 %v5465, %v5461
      %v5598 = vpack.c.b16 %v5466, %v5462
      %v5599 = vpack.c.b16 %v5467, %v5463
      %v5600 = vpack.c.b16 %v5472, %v5468
      %v5601 = vpack.c.b16 %v5473, %v5469
      %v5602 = vpack.c.b16 %v5474, %v5470
      %v5603 = vpack.c.b16 %v5475, %v5471
      %5732 = vmatprep.subr.bf16.mxu0 %v5505
      %5733 = vmatpush1.bf16.msra.mxu0 %v5504
      %5734 = vmatprep.subr.bf16.mxu0 %v5501
      %5735 = vmatpush1.bf16.msra.mxu0 %v5500
      %5736 = vmatprep.subr.bf16.mxu0 %v5497
      %5737 = vmatpush1.bf16.msra.mxu0 %v5496
      %5738 = vmatprep.subr.bf16.mxu0 %v5493
      %5739 = vmatpush1.bf16.msra.mxu0 %v5492
      %5740 = vmatprep.subr.bf16.mxu0 %v5489
      %5741 = vmatpush1.bf16.msra.mxu0 %v5488
      %5742 = vmatprep.subr.bf16.mxu0 %v5485
      %5743 = vmatpush1.bf16.msra.mxu0 %v5484
      %5744 = vmatprep.subr.bf16.mxu0 %v5481
      %5745 = vmatpush1.bf16.msra.mxu0 %v5480
      %5746 = vmatprep.subr.bf16.mxu0 %v5477
      %5747 = vmatpush1.bf16.msra.mxu0 %v5476
      %5748 = vmatprep.subr.bf16.mxu0 %v5537
      %5749 = vmatpush2.bf16.msra.mxu0 %v5536
      %5750 = vmatprep.subr.bf16.mxu0 %v5533
      %5751 = vmatpush2.bf16.msra.mxu0 %v5532
      %5752 = vmatprep.subr.bf16.mxu0 %v5529
      %5753 = vmatpush2.bf16.msra.mxu0 %v5528
      %5754 = vmatprep.subr.bf16.mxu0 %v5525
      %5755 = vmatpush2.bf16.msra.mxu0 %v5524
      %5756 = vmatprep.subr.bf16.mxu0 %v5521
      %5757 = vmatpush2.bf16.msra.mxu0 %v5520
      %5758 = vmatprep.subr.bf16.mxu0 %v5517
      %5759 = vmatpush2.bf16.msra.mxu0 %v5516
      %5760 = vmatprep.subr.bf16.mxu0 %v5513
      %5761 = vmatpush2.bf16.msra.mxu0 %v5512
      %5762 = vmatprep.subr.bf16.mxu0 %v5509
      %5763 = vmatpush2.bf16.msra.mxu0 %v5508
      %5764 = vmatprep.mubr.bf16.mxu0 %v2254
      %5765 = vmatmul.mubr.bf16.gmra.mxu0 %v2253
      %v5766 = vpop.f32.mrf.mxu0
      %v5767 = vadd.f32 0.0, %v5766
      %v5768 = vpop.f32.mrf.mxu0
      %v5769 = vadd.f32 0.0, %v5768
      %v5770 = vpop.f32.mrf.mxu0
      %v5771 = vadd.f32 0.0, %v5770
      %v5772 = vpop.f32.mrf.mxu0
      %v5773 = vadd.f32 0.0, %v5772
      %5774 = vdwg.mxu0
      %5775 = vmatprep.subr.bf16.mxu0 %v5569
      %5776 = vmatpush1.bf16.msra.mxu0 %v5568
      %5777 = vmatprep.subr.bf16.mxu0 %v5565
      %5778 = vmatpush1.bf16.msra.mxu0 %v5564
      %5779 = vmatprep.subr.bf16.mxu0 %v5561
      %5780 = vmatpush1.bf16.msra.mxu0 %v5560
      %5781 = vmatprep.subr.bf16.mxu0 %v5557
      %5782 = vmatpush1.bf16.msra.mxu0 %v5556
      %5783 = vmatprep.subr.bf16.mxu0 %v5553
      %5784 = vmatpush1.bf16.msra.mxu0 %v5552
      %5785 = vmatprep.subr.bf16.mxu0 %v5549
      %5786 = vmatpush1.bf16.msra.mxu0 %v5548
      %5787 = vmatprep.subr.bf16.mxu0 %v5545
      %5788 = vmatpush1.bf16.msra.mxu0 %v5544
      %5789 = vmatprep.subr.bf16.mxu0 %v5541
      %5790 = vmatpush1.bf16.msra.mxu0 %v5540
      %5791 = vmatprep.subr.bf16.mxu0 %v5601
      %5792 = vmatpush2.bf16.msra.mxu0 %v5600
      %5793 = vmatprep.subr.bf16.mxu0 %v5597
      %5794 = vmatpush2.bf16.msra.mxu0 %v5596
      %5795 = vmatprep.subr.bf16.mxu0 %v5593
      %5796 = vmatpush2.bf16.msra.mxu0 %v5592
      %5797 = vmatprep.subr.bf16.mxu0 %v5589
      %5798 = vmatpush2.bf16.msra.mxu0 %v5588
      %5799 = vmatprep.subr.bf16.mxu0 %v5585
      %5800 = vmatpush2.bf16.msra.mxu0 %v5584
      %5801 = vmatprep.subr.bf16.mxu0 %v5581
      %5802 = vmatpush2.bf16.msra.mxu0 %v5580
      %5803 = vmatprep.subr.bf16.mxu0 %v5577
      %5804 = vmatpush2.bf16.msra.mxu0 %v5576
      %5805 = vmatprep.subr.bf16.mxu0 %v5573
      %5806 = vmatpush2.bf16.msra.mxu0 %v5572
      %5807 = vmatprep.mubr.bf16.mxu0 %v2256
      %5808 = vmatmul.mubr.bf16.gmra.mxu0 %v2255
      %v5809 = vpop.f32.mrf.mxu0
      %v5810 = vadd.f32 %v5767, %v5809
      %v5811 = vpop.f32.mrf.mxu0
      %v5812 = vadd.f32 %v5769, %v5811
      %v5813 = vpop.f32.mrf.mxu0
      %v5814 = vadd.f32 %v5771, %v5813
      %v5815 = vpop.f32.mrf.mxu0
      %v5816 = vadd.f32 %v5773, %v5815
      %5817 = vdwg.mxu0
      %5818 = vmatprep.subr.bf16.mxu0 %v5507
      %5819 = vmatpush1.bf16.msra.mxu0 %v5506
      %5820 = vmatprep.subr.bf16.mxu0 %v5503
      %5821 = vmatpush1.bf16.msra.mxu0 %v5502
      %5822 = vmatprep.subr.bf16.mxu0 %v5499
      %5823 = vmatpush1.bf16.msra.mxu0 %v5498
      %5824 = vmatprep.subr.bf16.mxu0 %v5495
      %5825 = vmatpush1.bf16.msra.mxu0 %v5494
      %5826 = vmatprep.subr.bf16.mxu0 %v5491
      %5827 = vmatpush1.bf16.msra.mxu0 %v5490
      %5828 = vmatprep.subr.bf16.mxu0 %v5487
      %5829 = vmatpush1.bf16.msra.mxu0 %v5486
      %5830 = vmatprep.subr.bf16.mxu0 %v5483
      %5831 = vmatpush1.bf16.msra.mxu0 %v5482
      %5832 = vmatprep.subr.bf16.mxu0 %v5479
      %5833 = vmatpush1.bf16.msra.mxu0 %v5478
      %5834 = vmatprep.subr.bf16.mxu0 %v5539
      %5835 = vmatpush2.bf16.msra.mxu0 %v5538
      %5836 = vmatprep.subr.bf16.mxu0 %v5535
      %5837 = vmatpush2.bf16.msra.mxu0 %v5534
      %5838 = vmatprep.subr.bf16.mxu0 %v5531
      %5839 = vmatpush2.bf16.msra.mxu0 %v5530
      %5840 = vmatprep.subr.bf16.mxu0 %v5527
      %5841 = vmatpush2.bf16.msra.mxu0 %v5526
      %5842 = vmatprep.subr.bf16.mxu0 %v5523
      %5843 = vmatpush2.bf16.msra.mxu0 %v5522
      %5844 = vmatprep.subr.bf16.mxu0 %v5519
      %5845 = vmatpush2.bf16.msra.mxu0 %v5518
      %5846 = vmatprep.subr.bf16.mxu0 %v5515
      %5847 = vmatpush2.bf16.msra.mxu0 %v5514
      %5848 = vmatprep.subr.bf16.mxu0 %v5511
      %5849 = vmatpush2.bf16.msra.mxu0 %v5510
      %5850 = vmatprep.mubr.bf16.mxu0 %v2254
      %5851 = vmatmul.mubr.bf16.gmra.mxu0 %v2253
      %v5852 = vpop.f32.mrf.mxu0
      %v5853 = vadd.f32 0.0, %v5852
      %v5854 = vpop.f32.mrf.mxu0
      %v5855 = vadd.f32 0.0, %v5854
      %v5856 = vpop.f32.mrf.mxu0
      %v5857 = vadd.f32 0.0, %v5856
      %v5858 = vpop.f32.mrf.mxu0
      %v5859 = vadd.f32 0.0, %v5858
      %5860 = vdwg.mxu0
      %5861 = vmatprep.subr.bf16.mxu0 %v5571
      %5862 = vmatpush1.bf16.msra.mxu0 %v5570
      %5863 = vmatprep.subr.bf16.mxu0 %v5567
      %5864 = vmatpush1.bf16.msra.mxu0 %v5566
      %5865 = vmatprep.subr.bf16.mxu0 %v5563
      %5866 = vmatpush1.bf16.msra.mxu0 %v5562
      %5867 = vmatprep.subr.bf16.mxu0 %v5559
      %5868 = vmatpush1.bf16.msra.mxu0 %v5558
      %5869 = vmatprep.subr.bf16.mxu0 %v5555
      %5870 = vmatpush1.bf16.msra.mxu0 %v5554
      %5871 = vmatprep.subr.bf16.mxu0 %v5551
      %5872 = vmatpush1.bf16.msra.mxu0 %v5550
      %5873 = vmatprep.subr.bf16.mxu0 %v5547
      %5874 = vmatpush1.bf16.msra.mxu0 %v5546
      %5875 = vmatprep.subr.bf16.mxu0 %v5543
      %5876 = vmatpush1.bf16.msra.mxu0 %v5542
      %5877 = vmatprep.subr.bf16.mxu0 %v5603
      %5878 = vmatpush2.bf16.msra.mxu0 %v5602
      %5879 = vmatprep.subr.bf16.mxu0 %v5599
      %5880 = vmatpush2.bf16.msra.mxu0 %v5598
      %5881 = vmatprep.subr.bf16.mxu0 %v5595
      %5882 = vmatpush2.bf16.msra.mxu0 %v5594
      %5883 = vmatprep.subr.bf16.mxu0 %v5591
      %5884 = vmatpush2.bf16.msra.mxu0 %v5590
      %5885 = vmatprep.subr.bf16.mxu0 %v5587
      %5886 = vmatpush2.bf16.msra.mxu0 %v5586
      %5887 = vmatprep.subr.bf16.mxu0 %v5583
      %5888 = vmatpush2.bf16.msra.mxu0 %v5582
      %5889 = vmatprep.subr.bf16.mxu0 %v5579
      %5890 = vmatpush2.bf16.msra.mxu0 %v5578
      %5891 = vmatprep.subr.bf16.mxu0 %v5575
      %5892 = vmatpush2.bf16.msra.mxu0 %v5574
      %5893 = vmatprep.mubr.bf16.mxu0 %v2256
      %5894 = vmatmul.mubr.bf16.gmra.mxu0 %v2255
      %v5895 = vpop.f32.mrf.mxu0
      %v5896 = vadd.f32 %v5853, %v5895
      %v5897 = vpop.f32.mrf.mxu0
      %v5898 = vadd.f32 %v5855, %v5897
      %v5899 = vpop.f32.mrf.mxu0
      %v5900 = vadd.f32 %v5857, %v5899
      %v5901 = vpop.f32.mrf.mxu0
      %v5902 = vadd.f32 %v5859, %v5901
      %5903 = vdwg.mxu0
      %v5904 = vadd.f32 %v4869, %v5810
      %v5905 = vadd.f32 %v4871, %v5812
      %v5906 = vadd.f32 %v4955, %v5896
      %v5907 = vadd.f32 %v4957, %v5898
      %v5908 = vadd.f32 %v4873, %v5814
      %v5909 = vadd.f32 %v4875, %v5816
      %v5910 = vadd.f32 %v4959, %v5900
      %v5911 = vadd.f32 %v4961, %v5902
      %v5912 = vmax.f32 %v3073, %v5904
      %v5913 = vmax.f32 %v3074, %v5905
      %v5914 = vmax.f32 %v3075, %v5906
      %v5915 = vmax.f32 %v3076, %v5907
      %v5916 = vmax.f32 %v3077, %v5908
      %v5917 = vmax.f32 %v3078, %v5909
      %v5918 = vmax.f32 %v3079, %v5910
      %v5919 = vmax.f32 %v3080, %v5911
      %v5920 = vld [vmem:[%s2] sm:$0xf]
      %v5922 = vlaneseq
      %v5923 = vshrl.u32 %v5922, 7
      %v5924 = vsub.s32 0, %v5923
      %v5925 = vrot.slane %v5920, %v5924
      %v5926 = vlaneseq
      %v5927 = vshrl.u32 %v5926, 7
      %v5928 = vsub.s32 1, %v5927
      %v5929 = vrot.slane %v5920, %v5928
      %v5930 = vlaneseq
      %v5931 = vshrl.u32 %v5930, 7
      %v5932 = vsub.s32 2, %v5931
      %v5933 = vrot.slane %v5920, %v5932
      %v5934 = vlaneseq
      %v5935 = vshrl.u32 %v5934, 7
      %v5936 = vsub.s32 3, %v5935
      %v5937 = vrot.slane %v5920, %v5936
      %v5942 = vadd.f32 %v5912, %v5925
      %v5943 = vadd.f32 %v5913, %v5929
      %v5944 = vadd.f32 %v5914, %v5933
      %v5945 = vadd.f32 %v5915, %v5937
      %v5946 = vadd.f32 %v5916, %v5925
      %v5947 = vadd.f32 %v5917, %v5929
      %v5948 = vadd.f32 %v5918, %v5933
      %v5949 = vadd.f32 %v5919, %v5937
      %v5950 = vmax.f32 %v5942, 0.0
      %v5951 = vmax.f32 %v5943, 0.0
      %v5952 = vmax.f32 %v5944, 0.0
      %v5953 = vmax.f32 %v5945, 0.0
      %v5954 = vmax.f32 %v5946, 0.0
      %v5955 = vmax.f32 %v5947, 0.0
      %v5956 = vmax.f32 %v5948, 0.0
      %v5957 = vmax.f32 %v5949, 0.0
      %v5958 = vlaneseq
      %v5959 = vshrl.u32 %v5958, 7
      %v5960 = vlaneseq
      %v5961 = vand.u32 %v5960, 127
      %vm5962 = vcmp.ge.s32.totalorder %v5959, 0
      %vm5963 = vcmp.lt.s32.totalorder %v5959, 7
      %vm5964 = vmand %vm5962, %vm5963
      %v5965 = vmul.u32 %v5959, 2
      %vm5966 = vcmp.eq.s32.totalorder %v5961, %v5965
      %vm5967 = vmand %vm5964, %vm5966
      %v5968 = vsel %vm5967, 1, 0
      %v5969 = vcvt.s32.f32 %v5968
      %v5970 = vadd.s32 %v5965, 1
      %vm5971 = vcmp.eq.s32.totalorder %v5961, %v5970
      %vm5972 = vmand %vm5964, %vm5971
      %v5973 = vsel %vm5972, 1, 0
      %v5974 = vcvt.s32.f32 %v5973
      %vm5975 = vcmask 113664
      %v5977 = vsel %vm5975, %v5969, 0
      %vm5979 = vcmask 1045504
      %v5981 = vsel %vm5979, %v5954, 0
      %v5984 = vsel %vm5979, %v5955, 0
      %v5987 = vsel %vm5979, %v5956, 0
      %v5990 = vsel %vm5979, %v5957, 0
      %5992 = vmatprep.subr.mxu0 0.0
      %5993 = vmatpush1.msra.mxu0 0.0
      %5994 = vmatprep.subr.mxu0 0.0
      %5995 = vmatpush1.msra.mxu0 0.0
      %5996 = vmatprep.subr.mxu0 0.0
      %5997 = vmatpush1.msra.mxu0 0.0
      %5998 = vmatprep.subr.mxu0 0.0
      %5999 = vmatpush1.msra.mxu0 0.0
      %6000 = vmatprep.subr.mxu0 0.0
      %6001 = vmatpush1.msra.mxu0 0.0
      %6002 = vmatprep.subr.mxu0 0.0
      %6003 = vmatpush1.msra.mxu0 0.0
      %6004 = vmatprep.subr.mxu0 0.0
      %6005 = vmatpush1.msra.mxu0 0.0
      %6006 = vmatprep.subr.mxu0 0.0
      %6007 = vmatpush1.msra.mxu0 0.0
      %6008 = vmatprep.subr.mxu0 0.0
      %6009 = vmatpush1.msra.mxu0 0.0
      %6010 = vmatprep.subr.mxu0 0.0
      %6011 = vmatpush1.msra.mxu0 0.0
      %6012 = vmatprep.subr.mxu0 0.0
      %6013 = vmatpush1.msra.mxu0 0.0
      %6014 = vmatprep.subr.mxu0 0.0
      %6015 = vmatpush1.msra.mxu0 0.0
      %6016 = vmatprep.subr.mxu0 0.0
      %6017 = vmatpush1.msra.mxu0 0.0
      %6018 = vmatprep.subr.mxu0 0.0
      %6019 = vmatpush1.msra.mxu0 0.0
      %6020 = vmatprep.subr.mxu0 %v5984
      %6021 = vmatpush1.msra.mxu0 %v5981
      %6022 = vmatprep.subr.mxu0 %v5951
      %6023 = vmatpush1.msra.mxu0 %v5950
      %6024 = vmatprep.subr.mxu0 0.0
      %6025 = vmatpush2.msra.mxu0 0.0
      %6026 = vmatprep.subr.mxu0 0.0
      %6027 = vmatpush2.msra.mxu0 0.0
      %6028 = vmatprep.subr.mxu0 0.0
      %6029 = vmatpush2.msra.mxu0 0.0
      %6030 = vmatprep.subr.mxu0 0.0
      %6031 = vmatpush2.msra.mxu0 0.0
      %6032 = vmatprep.subr.mxu0 0.0
      %6033 = vmatpush2.msra.mxu0 0.0
      %6034 = vmatprep.subr.mxu0 0.0
      %6035 = vmatpush2.msra.mxu0 0.0
      %6036 = vmatprep.subr.mxu0 0.0
      %6037 = vmatpush2.msra.mxu0 0.0
      %6038 = vmatprep.subr.mxu0 0.0
      %6039 = vmatpush2.msra.mxu0 0.0
      %6040 = vmatprep.subr.mxu0 0.0
      %6041 = vmatpush2.msra.mxu0 0.0
      %6042 = vmatprep.subr.mxu0 0.0
      %6043 = vmatpush2.msra.mxu0 0.0
      %6044 = vmatprep.subr.mxu0 0.0
      %6045 = vmatpush2.msra.mxu0 0.0
      %6046 = vmatprep.subr.mxu0 0.0
      %6047 = vmatpush2.msra.mxu0 0.0
      %6048 = vmatprep.subr.mxu0 0.0
      %6049 = vmatpush2.msra.mxu0 0.0
      %6050 = vmatprep.subr.mxu0 0.0
      %6051 = vmatpush2.msra.mxu0 0.0
      %6052 = vmatprep.subr.mxu0 0.0
      %6053 = vmatpush2.msra.mxu0 0.0
      %6054 = vmatprep.subr.mxu0 0.0
      %6055 = vmatpush2.msra.mxu0 0.0
      %6056 = vmatprep.mubr.f32.mxu0 0.0
      %6057 = vmatmul.mubr.f32.gmra.mxu0 %v5977
      %v6058 = vpop.f32.mrf.mxu0
      %v6059 = vadd.f32 0.0, %v6058
      %v6060 = vpop.f32.mrf.mxu0
      %v6061 = vadd.f32 0.0, %v6060
      %6062 = vdwg.mxu0
      %6063 = vmatprep.subr.mxu0 0.0
      %6064 = vmatpush1.msra.mxu0 0.0
      %6065 = vmatprep.subr.mxu0 0.0
      %6066 = vmatpush1.msra.mxu0 0.0
      %6067 = vmatprep.subr.mxu0 0.0
      %6068 = vmatpush1.msra.mxu0 0.0
      %6069 = vmatprep.subr.mxu0 0.0
      %6070 = vmatpush1.msra.mxu0 0.0
      %6071 = vmatprep.subr.mxu0 0.0
      %6072 = vmatpush1.msra.mxu0 0.0
      %6073 = vmatprep.subr.mxu0 0.0
      %6074 = vmatpush1.msra.mxu0 0.0
      %6075 = vmatprep.subr.mxu0 0.0
      %6076 = vmatpush1.msra.mxu0 0.0
      %6077 = vmatprep.subr.mxu0 0.0
      %6078 = vmatpush1.msra.mxu0 0.0
      %6079 = vmatprep.subr.mxu0 0.0
      %6080 = vmatpush1.msra.mxu0 0.0
      %6081 = vmatprep.subr.mxu0 0.0
      %6082 = vmatpush1.msra.mxu0 0.0
      %6083 = vmatprep.subr.mxu0 0.0
      %6084 = vmatpush1.msra.mxu0 0.0
      %6085 = vmatprep.subr.mxu0 0.0
      %6086 = vmatpush1.msra.mxu0 0.0
      %6087 = vmatprep.subr.mxu0 0.0
      %6088 = vmatpush1.msra.mxu0 0.0
      %6089 = vmatprep.subr.mxu0 0.0
      %6090 = vmatpush1.msra.mxu0 0.0
      %6091 = vmatprep.subr.mxu0 %v5990
      %6092 = vmatpush1.msra.mxu0 %v5987
      %6093 = vmatprep.subr.mxu0 %v5953
      %6094 = vmatpush1.msra.mxu0 %v5952
      %6095 = vmatprep.subr.mxu0 0.0
      %6096 = vmatpush2.msra.mxu0 0.0
      %6097 = vmatprep.subr.mxu0 0.0
      %6098 = vmatpush2.msra.mxu0 0.0
      %6099 = vmatprep.subr.mxu0 0.0
      %6100 = vmatpush2.msra.mxu0 0.0
      %6101 = vmatprep.subr.mxu0 0.0
      %6102 = vmatpush2.msra.mxu0 0.0
      %6103 = vmatprep.subr.mxu0 0.0
      %6104 = vmatpush2.msra.mxu0 0.0
      %6105 = vmatprep.subr.mxu0 0.0
      %6106 = vmatpush2.msra.mxu0 0.0
      %6107 = vmatprep.subr.mxu0 0.0
      %6108 = vmatpush2.msra.mxu0 0.0
      %6109 = vmatprep.subr.mxu0 0.0
      %6110 = vmatpush2.msra.mxu0 0.0
      %6111 = vmatprep.subr.mxu0 0.0
      %6112 = vmatpush2.msra.mxu0 0.0
      %6113 = vmatprep.subr.mxu0 0.0
      %6114 = vmatpush2.msra.mxu0 0.0
      %6115 = vmatprep.subr.mxu0 0.0
      %6116 = vmatpush2.msra.mxu0 0.0
      %6117 = vmatprep.subr.mxu0 0.0
      %6118 = vmatpush2.msra.mxu0 0.0
      %6119 = vmatprep.subr.mxu0 0.0
      %6120 = vmatpush2.msra.mxu0 0.0
      %6121 = vmatprep.subr.mxu0 0.0
      %6122 = vmatpush2.msra.mxu0 0.0
      %6123 = vmatprep.subr.mxu0 0.0
      %6124 = vmatpush2.msra.mxu0 0.0
      %6125 = vmatprep.subr.mxu0 0.0
      %6126 = vmatpush2.msra.mxu0 0.0
      %6127 = vmatprep.mubr.f32.mxu0 0.0
      %6128 = vmatmul.mubr.f32.gmra.mxu0 %v5977
      %v6129 = vpop.f32.mrf.mxu0
      %v6130 = vadd.f32 0.0, %v6129
      %v6131 = vpop.f32.mrf.mxu0
      %v6132 = vadd.f32 0.0, %v6131
      %6133 = vdwg.mxu0
      %v6135 = vsel %vm5975, %v5974, 0
      %6137 = vmatprep.subr.mxu0 0.0
      %6138 = vmatpush1.msra.mxu0 0.0
      %6139 = vmatprep.subr.mxu0 0.0
      %6140 = vmatpush1.msra.mxu0 0.0
      %6141 = vmatprep.subr.mxu0 0.0
      %6142 = vmatpush1.msra.mxu0 0.0
      %6143 = vmatprep.subr.mxu0 0.0
      %6144 = vmatpush1.msra.mxu0 0.0
      %6145 = vmatprep.subr.mxu0 0.0
      %6146 = vmatpush1.msra.mxu0 0.0
      %6147 = vmatprep.subr.mxu0 0.0
      %6148 = vmatpush1.msra.mxu0 0.0
      %6149 = vmatprep.subr.mxu0 0.0
      %6150 = vmatpush1.msra.mxu0 0.0
      %6151 = vmatprep.subr.mxu0 0.0
      %6152 = vmatpush1.msra.mxu0 0.0
      %6153 = vmatprep.subr.mxu0 0.0
      %6154 = vmatpush1.msra.mxu0 0.0
      %6155 = vmatprep.subr.mxu0 0.0
      %6156 = vmatpush1.msra.mxu0 0.0
      %6157 = vmatprep.subr.mxu0 0.0
      %6158 = vmatpush1.msra.mxu0 0.0
      %6159 = vmatprep.subr.mxu0 0.0
      %6160 = vmatpush1.msra.mxu0 0.0
      %6161 = vmatprep.subr.mxu0 0.0
      %6162 = vmatpush1.msra.mxu0 0.0
      %6163 = vmatprep.subr.mxu0 0.0
      %6164 = vmatpush1.msra.mxu0 0.0
      %6165 = vmatprep.subr.mxu0 %v5984
      %6166 = vmatpush1.msra.mxu0 %v5981
      %6167 = vmatprep.subr.mxu0 %v5951
      %6168 = vmatpush1.msra.mxu0 %v5950
      %6169 = vmatprep.subr.mxu0 0.0
      %6170 = vmatpush2.msra.mxu0 0.0
      %6171 = vmatprep.subr.mxu0 0.0
      %6172 = vmatpush2.msra.mxu0 0.0
      %6173 = vmatprep.subr.mxu0 0.0
      %6174 = vmatpush2.msra.mxu0 0.0
      %6175 = vmatprep.subr.mxu0 0.0
      %6176 = vmatpush2.msra.mxu0 0.0
      %6177 = vmatprep.subr.mxu0 0.0
      %6178 = vmatpush2.msra.mxu0 0.0
      %6179 = vmatprep.subr.mxu0 0.0
      %6180 = vmatpush2.msra.mxu0 0.0
      %6181 = vmatprep.subr.mxu0 0.0
      %6182 = vmatpush2.msra.mxu0 0.0
      %6183 = vmatprep.subr.mxu0 0.0
      %6184 = vmatpush2.msra.mxu0 0.0
      %6185 = vmatprep.subr.mxu0 0.0
      %6186 = vmatpush2.msra.mxu0 0.0
      %6187 = vmatprep.subr.mxu0 0.0
      %6188 = vmatpush2.msra.mxu0 0.0
      %6189 = vmatprep.subr.mxu0 0.0
      %6190 = vmatpush2.msra.mxu0 0.0
      %6191 = vmatprep.subr.mxu0 0.0
      %6192 = vmatpush2.msra.mxu0 0.0
      %6193 = vmatprep.subr.mxu0 0.0
      %6194 = vmatpush2.msra.mxu0 0.0
      %6195 = vmatprep.subr.mxu0 0.0
      %6196 = vmatpush2.msra.mxu0 0.0
      %6197 = vmatprep.subr.mxu0 0.0
      %6198 = vmatpush2.msra.mxu0 0.0
      %6199 = vmatprep.subr.mxu0 0.0
      %6200 = vmatpush2.msra.mxu0 0.0
      %6201 = vmatprep.mubr.f32.mxu0 0.0
      %6202 = vmatmul.mubr.f32.gmra.mxu0 %v6135
      %v6203 = vpop.f32.mrf.mxu0
      %v6204 = vadd.f32 0.0, %v6203
      %v6205 = vpop.f32.mrf.mxu0
      %v6206 = vadd.f32 0.0, %v6205
      %6207 = vdwg.mxu0
      %6208 = vmatprep.subr.mxu0 0.0
      %6209 = vmatpush1.msra.mxu0 0.0
      %6210 = vmatprep.subr.mxu0 0.0
      %6211 = vmatpush1.msra.mxu0 0.0
      %6212 = vmatprep.subr.mxu0 0.0
      %6213 = vmatpush1.msra.mxu0 0.0
      %6214 = vmatprep.subr.mxu0 0.0
      %6215 = vmatpush1.msra.mxu0 0.0
      %6216 = vmatprep.subr.mxu0 0.0
      %6217 = vmatpush1.msra.mxu0 0.0
      %6218 = vmatprep.subr.mxu0 0.0
      %6219 = vmatpush1.msra.mxu0 0.0
      %6220 = vmatprep.subr.mxu0 0.0
      %6221 = vmatpush1.msra.mxu0 0.0
      %6222 = vmatprep.subr.mxu0 0.0
      %6223 = vmatpush1.msra.mxu0 0.0
      %6224 = vmatprep.subr.mxu0 0.0
      %6225 = vmatpush1.msra.mxu0 0.0
      %6226 = vmatprep.subr.mxu0 0.0
      %6227 = vmatpush1.msra.mxu0 0.0
      %6228 = vmatprep.subr.mxu0 0.0
      %6229 = vmatpush1.msra.mxu0 0.0
      %6230 = vmatprep.subr.mxu0 0.0
      %6231 = vmatpush1.msra.mxu0 0.0
      %6232 = vmatprep.subr.mxu0 0.0
      %6233 = vmatpush1.msra.mxu0 0.0
      %6234 = vmatprep.subr.mxu0 0.0
      %6235 = vmatpush1.msra.mxu0 0.0
      %6236 = vmatprep.subr.mxu0 %v5990
      %6237 = vmatpush1.msra.mxu0 %v5987
      %6238 = vmatprep.subr.mxu0 %v5953
      %6239 = vmatpush1.msra.mxu0 %v5952
      %6240 = vmatprep.subr.mxu0 0.0
      %6241 = vmatpush2.msra.mxu0 0.0
      %6242 = vmatprep.subr.mxu0 0.0
      %6243 = vmatpush2.msra.mxu0 0.0
      %6244 = vmatprep.subr.mxu0 0.0
      %6245 = vmatpush2.msra.mxu0 0.0
      %6246 = vmatprep.subr.mxu0 0.0
      %6247 = vmatpush2.msra.mxu0 0.0
      %6248 = vmatprep.subr.mxu0 0.0
      %6249 = vmatpush2.msra.mxu0 0.0
      %6250 = vmatprep.subr.mxu0 0.0
      %6251 = vmatpush2.msra.mxu0 0.0
      %6252 = vmatprep.subr.mxu0 0.0
      %6253 = vmatpush2.msra.mxu0 0.0
      %6254 = vmatprep.subr.mxu0 0.0
      %6255 = vmatpush2.msra.mxu0 0.0
      %6256 = vmatprep.subr.mxu0 0.0
      %6257 = vmatpush2.msra.mxu0 0.0
      %6258 = vmatprep.subr.mxu0 0.0
      %6259 = vmatpush2.msra.mxu0 0.0
      %6260 = vmatprep.subr.mxu0 0.0
      %6261 = vmatpush2.msra.mxu0 0.0
      %6262 = vmatprep.subr.mxu0 0.0
      %6263 = vmatpush2.msra.mxu0 0.0
      %6264 = vmatprep.subr.mxu0 0.0
      %6265 = vmatpush2.msra.mxu0 0.0
      %6266 = vmatprep.subr.mxu0 0.0
      %6267 = vmatpush2.msra.mxu0 0.0
      %6268 = vmatprep.subr.mxu0 0.0
      %6269 = vmatpush2.msra.mxu0 0.0
      %6270 = vmatprep.subr.mxu0 0.0
      %6271 = vmatpush2.msra.mxu0 0.0
      %6272 = vmatprep.mubr.f32.mxu0 0.0
      %6273 = vmatmul.mubr.f32.gmra.mxu0 %v6135
      %v6274 = vpop.f32.mrf.mxu0
      %v6275 = vadd.f32 0.0, %v6274
      %v6276 = vpop.f32.mrf.mxu0
      %v6277 = vadd.f32 0.0, %v6276
      %6278 = vdwg.mxu0
      %v6279 = vmax.f32 %v6059, %v6204
      %v6280 = vmax.f32 %v6061, %v6206
      %v6281 = vmax.f32 %v6130, %v6275
      %v6282 = vmax.f32 %v6132, %v6277
      %6283 = vst [vmem:[%s170] sm:$0x7f] %v6279
      %6284 = vst [vmem:[%s170 + $0x8] sm:$0x7f] %v6280
      %6285 = vst [vmem:[%s170 + $0x10] sm:$0x7f] %v6281
      %vm6286 = vcmask 522240
      %6287 = vst.msk [vmem:[%s170 + $0x18] sm:$0x7f] %vm6286, %v6282
      %p6288 = scmp.lt.s32.totalorder %s14, 1
      %s6289 = scalar_select %p6288, %s14, 1
      %s6290 = smul.addr %s6289, 4
      %s6291 = smul.addr %s6290, 8
      %s6292 = scalar_lea.vmem %s3, %s6291
      // Predicated region
      $region33: #{cnn_forward.4} parent=31 // pred_check
        %p6293 = pneg %p100
      $region34: #{cnn_forward.4} parent=31 // pred_check_branch
        %6295 = sbr.rel (%p6293) target = $region36
      $region35: #{cnn_forward.4} parent=31 // pred_region
        _
      $region36: #{cnn_forward.4} parent=31 // pred_fallthru
        _
    $region32: #{cnn_forward.4} parent=5 // pred_fallthru
      _
    %p6296 = scmp.le.s32.totalorder 2, %s9
    // Predicated region
    $region37: #{cnn_forward.4} parent=5 // pred_check
      %p6297 = pneg %p6296
    $region38: #{cnn_forward.4} parent=5 // pred_check_branch
      %6299 = sbr.rel (%p6297) target = $region40
    $region39: #{cnn_forward.4} parent=5 // pred_region
      %s6300 = ssub.s32 %s9, 2
      // Predicated region
      $region41: #{cnn_forward.4} parent=39 // pred_check
        %p6301 = pneg %p106
      $region42: #{cnn_forward.4} parent=39 // pred_check_branch
        %6303 = sbr.rel (%p6301) target = $region44
      $region43: #{cnn_forward.4} parent=39 // pred_region
        %p6304 = scmp.lt.s32.totalorder %s15, 1
        %s6305 = scalar_select %p6304, %s15, 1
        %s6306 = smul.addr %s6305, 4
        %s6307 = smul.addr %s6306, 8
        %s6308 = scalar_lea.vmem %s3, %s6307
      $region44: #{cnn_forward.4} parent=39 // pred_fallthru
        _
    $region40: #{cnn_forward.4} parent=5 // pred_fallthru
      _
  $region6: #{cnn_forward.4} parent=0 // loop_footer
    %s13 = sadd.s32 1, %s9
  $region7: #{cnn_forward.4} parent=0 // loop_footer_branch
    %8 = sbr.rel target = $region3
  $region8: #{cnn_forward.4} parent=0 // loop_exit
    _

</llo_original>
